<compile_context>
chip_gen: v7x
topology: tpu7x:2x2x1
jax: 0.10.0
libtpu: 0.0.40
codegen_flags: <defaults>
</compile_context>

<pallas_src>
import math
import functools

import jax
import jax.numpy as jnp
from jax.experimental import pallas as pl
from jax.experimental.pallas import tpu as pltpu

# -------------------- reduced-width ResNet-50 configuration -----------------
BASE = 8                                  # torchvision uses 64
PLANES = (BASE, 2 * BASE, 4 * BASE, 8 * BASE)
BLOCKS = (3, 4, 6, 3)                     # resnet50 block counts
EXP = 4                                   # Bottleneck.expansion
NUM_CLASSES = 1000                        # model_resnet.fc.out_features
USE_BOTTLENECK = True                     # module default
NEW_CLS = False                           # module default (bottleneck unused)
BN_EPS = 1e-5

LANE = 128                                # lane padding for channel dims
KSUB = 16                                 # K (sublane) padding for bf16 weights
MAX_TM = 256                              # tall M tile for the large-M layers


def _round_up(x, m):
    return ((x + m - 1) // m) * m


# ------------------------------- Pallas kernels ------------------------------
def _matmul_bn_kernel(a_ref, w_ref, ss_ref, o_ref, *, relu):
    """o = relu?((a @ W) * scale + shift).  Full-K block, W resident."""
    acc = jnp.dot(a_ref[...], w_ref[...], preferred_element_type=jnp.float32)
    out = acc * ss_ref[0:1, :] + ss_ref[1:2, :]
    if relu:
        out = jnp.maximum(out, 0.0)
    o_ref[...] = out.astype(o_ref.dtype)


def _bottleneck_tail_kernel(a_ref, w2_ref, ss2_ref, w3_ref, ss3_ref, r_ref, o_ref):
    """Fused conv2(3x3 via im2col patches)+BN+ReLU -> conv3(1x1)+BN+res+ReLU.

    The conv2 activation lives only in VMEM/vregs; never written to HBM."""
    h = jnp.dot(a_ref[...], w2_ref[...], preferred_element_type=jnp.float32)
    h = jnp.maximum(h * ss2_ref[0:1, :] + ss2_ref[1:2, :], 0.0)
    out = jnp.dot(h.astype(jnp.bfloat16), w3_ref[...],
                  preferred_element_type=jnp.float32)
    out = out * ss3_ref[0:1, :] + ss3_ref[1:2, :] + r_ref[...].astype(jnp.float32)
    o_ref[...] = jnp.maximum(out, 0.0).astype(o_ref.dtype)


# ------------------------------ kernel wrappers -------------------------------
def _m_tiling(M):
    """Full-M single-step block for small M; 256-row tiles for large M."""
    if M <= MAX_TM:
        return M, M
    return _round_up(M, MAX_TM), MAX_TM


def fused_matmul(a, w, ss, *, relu, out_dtype=jnp.bfloat16):
    """relu?((a @ W) * scale + shift) with pre-padded bf16 W and (2, Np) f32 BN."""
    M, K = a.shape
    Kp, Np = w.shape
    if K != Kp:                              # stem only (real image channels)
        a = jnp.pad(a, ((0, 0), (0, Kp - K)))
    Mp, tm = _m_tiling(M)
    if Mp != M:                              # never triggers in this script
        a = jnp.pad(a, ((0, Mp - M), (0, 0)))
    flops = 2 * Mp * Kp * Np
    bytes_accessed = (Mp * Kp * 2 + Kp * Np * 2 + 2 * Np * 4
                      + Mp * Np * jnp.dtype(out_dtype).itemsize)
    out = pl.pallas_call(
        functools.partial(_matmul_bn_kernel, relu=relu),
        out_shape=jax.ShapeDtypeStruct((Mp, Np), out_dtype),
        grid_spec=pltpu.PrefetchScalarGridSpec(
            num_scalar_prefetch=0,
            grid=(Mp // tm,),
            in_specs=[
                pl.BlockSpec((tm, Kp), lambda i: (i, 0)),   # A tiled over M
                pl.BlockSpec((Kp, Np), lambda i: (0, 0)),   # W resident
                pl.BlockSpec((2, Np), lambda i: (0, 0)),    # packed scale/shift
            ],
            out_specs=pl.BlockSpec((tm, Np), lambda i: (i, 0)),
        ),
        compiler_params=pltpu.CompilerParams(dimension_semantics=("parallel",)),
        cost_estimate=pl.CostEstimate(flops=flops, transcendentals=0,
                                      bytes_accessed=bytes_accessed),
    )(a, w, ss)
    return out if Mp == M else out[:M]


def fused_bottleneck_tail(a, w2, ss2, w3, ss3, residual):
    """Single pallas_call for conv2+BN+ReLU -> conv3+BN+residual+ReLU (bf16 out)."""
    M, K = a.shape
    _, P = w2.shape
    _, Np = w3.shape
    Mp, tm = _m_tiling(M)
    if Mp != M:                              # never triggers in this script
        a = jnp.pad(a, ((0, Mp - M), (0, 0)))
        residual = jnp.pad(residual, ((0, Mp - M), (0, 0)))
    flops = 2 * Mp * K * P + 2 * Mp * P * Np
    bytes_accessed = (Mp * K * 2 + K * P * 2 + 2 * P * 4 + P * Np * 2
                      + 2 * Np * 4 + 2 * Mp * Np * 2)
    out = pl.pallas_call(
        _bottleneck_tail_kernel,
        out_shape=jax.ShapeDtypeStruct((Mp, Np), jnp.bfloat16),
        grid_spec=pltpu.PrefetchScalarGridSpec(
            num_scalar_prefetch=0,
            grid=(Mp // tm,),
            in_specs=[
                pl.BlockSpec((tm, K), lambda i: (i, 0)),    # conv2 patches
                pl.BlockSpec((K, P), lambda i: (0, 0)),     # W2 resident
                pl.BlockSpec((2, P), lambda i: (0, 0)),     # BN2
                pl.BlockSpec((P, Np), lambda i: (0, 0)),    # W3 resident
                pl.BlockSpec((2, Np), lambda i: (0, 0)),    # BN3
                pl.BlockSpec((tm, Np), lambda i: (i, 0)),   # residual (bf16)
            ],
            out_specs=pl.BlockSpec((tm, Np), lambda i: (i, 0)),
        ),
        compiler_params=pltpu.CompilerParams(dimension_semantics=("parallel",)),
        cost_estimate=pl.CostEstimate(flops=flops, transcendentals=0,
                                      bytes_accessed=bytes_accessed),
    )(a, w2, ss2, w3, ss3, residual)
    return out if Mp == M else out[:M]


# ------------------------------ conv / pool glue ------------------------------
def _im2col(x_nhwc, kh, kw, stride, padding):
    """Zero-padded patch extraction (bf16 glue).  Returns (B*Ho*Wo, kh*kw*C)."""
    B, H, W, C = x_nhwc.shape
    xp = jnp.pad(x_nhwc, ((0, 0), (padding, padding), (padding, padding), (0, 0)))
    Ho = (H + 2 * padding - kh) // stride + 1
    Wo = (W + 2 * padding - kw) // stride + 1
    cols = []
    for i in range(kh):
        for j in range(kw):
            cols.append(xp[:, i:i + stride * Ho:stride, j:j + stride * Wo:stride, :])
    patches = jnp.concatenate(cols, axis=-1)           # (B, Ho, Wo, kh*kw*C) bf16
    return patches.reshape(B * Ho * Wo, kh * kw * C), Ho, Wo


def conv_bn(x_nhwc, cp, relu):
    """conv2d (no bias) + inference BN (+ ReLU).  Output stays channel-padded bf16."""
    B, H, W, C = x_nhwc.shape
    kh, kw, stride, pad = cp['kh'], cp['kw'], cp['stride'], cp['pad']
    if kh == 1 and kw == 1 and pad == 0:
        xs = x_nhwc[:, ::stride, ::stride, :]
        Ho, Wo = xs.shape[1], xs.shape[2]
        a = xs.reshape(B * Ho * Wo, C)
    else:
        a, Ho, Wo = _im2col(x_nhwc, kh, kw, stride, pad)
    out = fused_matmul(a, cp['w'], cp['ss'], relu=relu)
    return out.reshape(B, Ho, Wo, cp['w'].shape[1])


def maxpool_3x3_s2_p1(x_nhwc):
    # Tiny op: fold max over the 9 shifted views in plain jnp (XLA fuses it).
    B, H, W, C = x_nhwc.shape
    xp = jnp.pad(x_nhwc, ((0, 0), (1, 1), (1, 1), (0, 0)),
                 constant_values=-jnp.inf)
    Ho = (H + 2 - 3) // 2 + 1
    Wo = (W + 2 - 3) // 2 + 1
    out = None
    for i in range(3):
        for j in range(3):
            v = xp[:, i:i + 2 * Ho:2, j:j + 2 * Wo:2, :]
            out = v if out is None else jnp.maximum(out, v)
    return out


# ------------------------------- model forward --------------------------------
def bottleneck_block(x, blk):
    h1 = conv_bn(x, blk['conv1'], relu=True)                      # 1x1 reduce
    a, Ho, Wo = _im2col(h1, 3, 3, blk['conv2']['stride'], 1)      # bf16 patches
    identity = conv_bn(x, blk['ds'], relu=False) if 'ds' in blk else x
    B = x.shape[0]
    Np = blk['conv3']['w'].shape[1]
    res2d = identity.reshape(B * Ho * Wo, Np)                     # bf16, no copy
    out = fused_bottleneck_tail(a, blk['conv2']['w'], blk['conv2']['ss'],
                                blk['conv3']['w'], blk['conv3']['ss'], res2d)
    return out.reshape(B, Ho, Wo, Np)


def resnetfc_forward(params, x_nchw):
    """Returns (x, y) exactly like ResNetFc.forward (defaults: new_cls=False)."""
    x = jnp.transpose(x_nchw, (0, 2, 3, 1)).astype(jnp.bfloat16)  # NCHW -> NHWC
    x = conv_bn(x, params['conv1'], relu=True)
    x = maxpool_3x3_s2_p1(x)
    for blocks in params['layers']:
        for blk in blocks:
            x = bottleneck_block(x, blk)
    B, H, W, Cp = x.shape
    feat_dim = PLANES[-1] * EXP
    # AdaptiveAvgPool2d((1,1)) + view(B, -1): padded lanes are exactly 0, so a
    # plain mean + slice to real channels is exact.
    feats = jnp.mean(x.astype(jnp.float32).reshape(B, H * W, Cp), axis=1)[:, :feat_dim]
    if USE_BOTTLENECK and NEW_CLS:
        bt = params['bottleneck']
        feats = fused_matmul(feats.astype(jnp.bfloat16), bt['w'], bt['ss'],
                             relu=False, out_dtype=jnp.float32)[:, :bt['n_out']]
    fc = params['fc']
    y = fused_matmul(feats.astype(jnp.bfloat16), fc['w'], fc['ss'],
                     relu=False, out_dtype=jnp.float32)[:, :fc['n_out']]
    return feats, y


# ------------------------- deterministic parameter init -----------------------
class _KeyGen:
    def __init__(self, key):
        self._key = key

    def __call__(self):
        self._key, sub = jax.random.split(self._key)
        return sub


def _conv_w(key, cout, cin, kh, kw):
    fan_in = cin * kh * kw
    return jax.random.normal(key, (cout, cin, kh, kw), jnp.float32) / math.sqrt(fan_in)


def _bn_scale_shift(key, c):
    k1, k2, k3, k4 = jax.random.split(key, 4)
    gamma = 1.0 + 0.1 * jax.random.normal(k1, (c,), jnp.float32)
    beta = 0.1 * jax.random.normal(k2, (c,), jnp.float32)
    mean = 0.1 * jax.random.normal(k3, (c,), jnp.float32)
    var = 1.0 + 0.1 * jax.random.uniform(k4, (c,), jnp.float32)
    scale = gamma / jnp.sqrt(var + BN_EPS)
    shift = beta - mean * scale
    return scale, shift


def _prep_conv(kg, cout, cin, cin_carried, kh, kw, stride, pad):
    """Build one conv's params pre-transformed for the kernels.

    The weight is laid out per-tap with `cin_carried` channel slots (zeros for
    padded input lanes) so the lane-padded activation can be consumed directly;
    cout is lane-padded, with scale/shift = 0 on padded lanes (outputs stay 0)."""
    w = _conv_w(kg(), cout, cin, kh, kw)                 # (cout, cin, kh, kw)
    scale, shift = _bn_scale_shift(kg(), cout)
    Np = _round_up(cout, LANE)
    w4 = jnp.transpose(w, (2, 3, 1, 0))                  # (kh, kw, cin, cout)
    w4 = jnp.pad(w4, ((0, 0), (0, 0), (0, cin_carried - cin), (0, Np - cout)))
    K = kh * kw * cin_carried
    Kp = _round_up(K, KSUB)
    wmat = jnp.pad(w4.reshape(K, Np), ((0, Kp - K), (0, 0))).astype(jnp.bfloat16)
    ss = jnp.pad(jnp.stack([scale, shift]), ((0, 0), (0, Np - cout)))
    return {'w': wmat, 'ss': ss, 'kh': kh, 'kw': kw, 'stride': stride, 'pad': pad}


def _prep_linear(kg, in_dim, out_dim):
    w = jax.random.normal(kg(), (in_dim, out_dim), jnp.float32) / math.sqrt(in_dim)
    b = 0.01 * jax.random.normal(kg(), (out_dim,), jnp.float32)
    Kp = _round_up(in_dim, KSUB)
    Np = _round_up(out_dim, LANE)
    w_p = jnp.pad(w, ((0, Kp - in_dim), (0, Np - out_dim))).astype(jnp.bfloat16)
    ss = jnp.stack([jnp.ones((out_dim,), jnp.float32), b])
    ss_p = jnp.pad(ss, ((0, 0), (0, Np - out_dim)))
    return {'w': w_p, 'ss': ss_p, 'n_out': out_dim}


def build_params(key):
    kg = _KeyGen(key)

    def carried(c):                      # lane-padded channel count of activations
        return _round_up(c, LANE)

    p = {'conv1': _prep_conv(kg, BASE, 3, 3, 7, 7, stride=2, pad=3)}
    layers = []
    inplanes = BASE
    for li, (nblocks, planes) in enumerate(zip(BLOCKS, PLANES)):
        layer_stride = 1 if li == 0 else 2
        blocks = []
        for bi in range(nblocks):
            s = layer_stride if bi == 0 else 1
            blk = {
                'conv1': _prep_conv(kg, planes, inplanes, carried(inplanes),
                                    1, 1, stride=1, pad=0),
                'conv2': _prep_conv(kg, planes, planes, carried(planes),
                                    3, 3, stride=s, pad=1),
                'conv3': _prep_conv(kg, planes * EXP, planes, carried(planes),
                                    1, 1, stride=1, pad=0),
            }
            if s != 1 or inplanes != planes * EXP:
                blk['ds'] = _prep_conv(kg, planes * EXP, inplanes, carried(inplanes),
                                       1, 1, stride=s, pad=0)
            blocks.append(blk)
            inplanes = planes * EXP
        layers.append(blocks)
    p['layers'] = layers
    feat_dim = inplanes                                   # 256 at BASE=8
    p['fc'] = _prep_linear(kg, feat_dim, NUM_CLASSES)
    if NEW_CLS and USE_BOTTLENECK:
        p['bottleneck'] = _prep_linear(kg, feat_dim, 256)
    return p


# ------------------------------------ main -------------------------------------
if __name__ == "__main__":
    root = jax.random.PRNGKey(0)
    pkey, xkey = jax.random.split(root)
    params = build_params(pkey)
    # Small NCHW input consistent with the module (3-channel image); 64x64 keeps
    # the 1/32 downsampling of the backbone meaningful (final feature map 2x2).
    x = jax.random.normal(xkey, (2, 3, 64, 64), jnp.float32)

    fwd = jax.jit(functools.partial(resnetfc_forward, params))
    feats, logits = fwd(x)
    jax.block_until_ready((feats, logits))

    feat_dim = PLANES[-1] * EXP
    assert feats.shape == (2, feat_dim), feats.shape
    assert logits.shape == (2, NUM_CLASSES), logits.shape
    assert bool(jnp.all(jnp.isfinite(feats))) and bool(jnp.all(jnp.isfinite(logits)))
    print("KERNEL_OK")
</pallas_src>

<mosaic_0001>
module attributes {stable_mosaic.version = 11 : i64} {
  func.func @_matmul_bn_kernel(%arg0: i32, %arg1: memref<256x160xbf16, #tpu.memory_space<vmem>>, %arg2: memref<160x128xbf16, #tpu.memory_space<vmem>>, %arg3: memref<2x128xf32, #tpu.memory_space<vmem>>, %arg4: memref<256x128xbf16, #tpu.memory_space<vmem>>) attributes {dimension_semantics = [#tpu.dimension_semantics<parallel>], iteration_bounds = array<i64: 8>, scalar_prefetch = 0 : i64, scratch_operands = 0 : i64, tpu.core_type = #tpu.core_type<tc>, window_params = [{transform_indices = @transform_0, window_bounds = array<i64: 256, 160>}, {pipeline_mode = #tpu.pipeline_mode<synchronous>, transform_indices = @transform_1, window_bounds = array<i64: 160, 128>}, {pipeline_mode = #tpu.pipeline_mode<synchronous>, transform_indices = @transform_2, window_bounds = array<i64: 2, 128>}, {transform_indices = @transform_3, window_bounds = array<i64: 256, 128>}]} {
    %c0 = arith.constant 0 : index
    %c0_0 = arith.constant 0 : index
    %0 = vector.load %arg1[%c0, %c0_0] : memref<256x160xbf16, #tpu.memory_space<vmem>>, vector<256x160xbf16>
    %c0_1 = arith.constant 0 : index
    %c0_2 = arith.constant 0 : index
    %1 = vector.load %arg2[%c0_1, %c0_2] : memref<160x128xbf16, #tpu.memory_space<vmem>>, vector<160x128xbf16>
    %cst = arith.constant dense<0.000000e+00> : vector<256x128xf32>
    %2 = tpu.matmul %0, %1, %cst {dimension_numbers = #tpu.dot_dimension_numbers<[1], [0], [0], [1], [0, 0, 1, 1], [], []>} : vector<256x160xbf16>, vector<160x128xbf16>, vector<256x128xf32> -> vector<256x128xf32>
    %c0_3 = arith.constant 0 : index
    %c0_4 = arith.constant 0 : index
    %3 = vector.load %arg3[%c0_3, %c0_4] : memref<2x128xf32, #tpu.memory_space<vmem>>, vector<1x128xf32>
    %4 = vector.broadcast %3 : vector<1x128xf32> to vector<256x128xf32>
    %5 = arith.mulf %2, %4 : vector<256x128xf32>
    %c1 = arith.constant 1 : index
    %c0_5 = arith.constant 0 : index
    %6 = vector.load %arg3[%c1, %c0_5] : memref<2x128xf32, #tpu.memory_space<vmem>>, vector<1x128xf32>
    %7 = vector.broadcast %6 : vector<1x128xf32> to vector<256x128xf32>
    %8 = arith.addf %5, %7 : vector<256x128xf32>
    %cst_6 = arith.constant 0.000000e+00 : f32
    %9 = vector.broadcast %cst_6 : f32 to vector<256x128xf32>
    %10 = arith.maximumf %8, %9 : vector<256x128xf32>
    %11 = arith.truncf %10 : vector<256x128xf32> to vector<256x128xbf16>
    %c0_7 = arith.constant 0 : index
    %c0_8 = arith.constant 0 : index
    %12 = vector.load %arg4[%c0_7, %c0_8] : memref<256x128xbf16, #tpu.memory_space<vmem>>, vector<256x128xbf16>
    tpu.vector_store %arg4[%c0_7, %c0_8], %11 {strides = array<i32>} : memref<256x128xbf16, #tpu.memory_space<vmem>>, vector<256x128xbf16>,
    return
  }
  func.func @transform_0(%arg0: i32) -> (i32, i32) {
    %c0_i32 = arith.constant 0 : i32
    %c0_i32_0 = arith.constant 0 : i32
    return %arg0, %c0_i32 : i32, i32
  }
  func.func @transform_1(%arg0: i32) -> (i32, i32) {
    %c0_i32 = arith.constant 0 : i32
    %c0_i32_0 = arith.constant 0 : i32
    %c0_i32_1 = arith.constant 0 : i32
    return %c0_i32, %c0_i32_0 : i32, i32
  }
  func.func @transform_2(%arg0: i32) -> (i32, i32) {
    %c0_i32 = arith.constant 0 : i32
    %c0_i32_0 = arith.constant 0 : i32
    %c0_i32_1 = arith.constant 0 : i32
    return %c0_i32, %c0_i32_0 : i32, i32
  }
  func.func @transform_3(%arg0: i32) -> (i32, i32) {
    %c0_i32 = arith.constant 0 : i32
    %c0_i32_0 = arith.constant 0 : i32
    return %arg0, %c0_i32 : i32, i32
  }
}

module attributes {stable_mosaic.version = 11 : i64} {
  func.func @_matmul_bn_kernel(%arg0: i32, %arg1: memref<256x128xbf16, #tpu.memory_space<vmem>>, %arg2: memref<128x128xbf16, #tpu.memory_space<vmem>>, %arg3: memref<2x128xf32, #tpu.memory_space<vmem>>, %arg4: memref<256x128xbf16, #tpu.memory_space<vmem>>) attributes {dimension_semantics = [#tpu.dimension_semantics<parallel>], iteration_bounds = array<i64: 2>, scalar_prefetch = 0 : i64, scratch_operands = 0 : i64, tpu.core_type = #tpu.core_type<tc>, window_params = [{transform_indices = @transform_0, window_bounds = array<i64: 256, 128>}, {pipeline_mode = #tpu.pipeline_mode<synchronous>, transform_indices = @transform_1, window_bounds = array<i64: 128, 128>}, {pipeline_mode = #tpu.pipeline_mode<synchronous>, transform_indices = @transform_2, window_bounds = array<i64: 2, 128>}, {transform_indices = @transform_3, window_bounds = array<i64: 256, 128>}]} {
    %c0 = arith.constant 0 : index
    %c0_0 = arith.constant 0 : index
    %0 = vector.load %arg1[%c0, %c0_0] : memref<256x128xbf16, #tpu.memory_space<vmem>>, vector<256x128xbf16>
    %c0_1 = arith.constant 0 : index
    %c0_2 = arith.constant 0 : index
    %1 = vector.load %arg2[%c0_1, %c0_2] : memref<128x128xbf16, #tpu.memory_space<vmem>>, vector<128x128xbf16>
    %cst = arith.constant dense<0.000000e+00> : vector<256x128xf32>
    %2 = tpu.matmul %0, %1, %cst {dimension_numbers = #tpu.dot_dimension_numbers<[1], [0], [0], [1], [0, 0, 1, 1], [], []>} : vector<256x128xbf16>, vector<128x128xbf16>, vector<256x128xf32> -> vector<256x128xf32>
    %c0_3 = arith.constant 0 : index
    %c0_4 = arith.constant 0 : index
    %3 = vector.load %arg3[%c0_3, %c0_4] : memref<2x128xf32, #tpu.memory_space<vmem>>, vector<1x128xf32>
    %4 = vector.broadcast %3 : vector<1x128xf32> to vector<256x128xf32>
    %5 = arith.mulf %2, %4 : vector<256x128xf32>
    %c1 = arith.constant 1 : index
    %c0_5 = arith.constant 0 : index
    %6 = vector.load %arg3[%c1, %c0_5] : memref<2x128xf32, #tpu.memory_space<vmem>>, vector<1x128xf32>
    %7 = vector.broadcast %6 : vector<1x128xf32> to vector<256x128xf32>
    %8 = arith.addf %5, %7 : vector<256x128xf32>
    %cst_6 = arith.constant 0.000000e+00 : f32
    %9 = vector.broadcast %cst_6 : f32 to vector<256x128xf32>
    %10 = arith.maximumf %8, %9 : vector<256x128xf32>
    %11 = arith.truncf %10 : vector<256x128xf32> to vector<256x128xbf16>
    %c0_7 = arith.constant 0 : index
    %c0_8 = arith.constant 0 : index
    %12 = vector.load %arg4[%c0_7, %c0_8] : memref<256x128xbf16, #tpu.memory_space<vmem>>, vector<256x128xbf16>
    tpu.vector_store %arg4[%c0_7, %c0_8], %11 {strides = array<i32>} : memref<256x128xbf16, #tpu.memory_space<vmem>>, vector<256x128xbf16>,
    return
  }
  func.func @transform_0(%arg0: i32) -> (i32, i32) {
    %c0_i32 = arith.constant 0 : i32
    %c0_i32_0 = arith.constant 0 : i32
    return %arg0, %c0_i32 : i32, i32
  }
  func.func @transform_1(%arg0: i32) -> (i32, i32) {
    %c0_i32 = arith.constant 0 : i32
    %c0_i32_0 = arith.constant 0 : i32
    %c0_i32_1 = arith.constant 0 : i32
    return %c0_i32, %c0_i32_0 : i32, i32
  }
  func.func @transform_2(%arg0: i32) -> (i32, i32) {
    %c0_i32 = arith.constant 0 : i32
    %c0_i32_0 = arith.constant 0 : i32
    %c0_i32_1 = arith.constant 0 : i32
    return %c0_i32, %c0_i32_0 : i32, i32
  }
  func.func @transform_3(%arg0: i32) -> (i32, i32) {
    %c0_i32 = arith.constant 0 : i32
    %c0_i32_0 = arith.constant 0 : i32
    return %arg0, %c0_i32 : i32, i32
  }
}

module attributes {stable_mosaic.version = 11 : i64} {
  func.func @_matmul_bn_kernel(%arg0: i32, %arg1: memref<256x128xbf16, #tpu.memory_space<vmem>>, %arg2: memref<128x128xbf16, #tpu.memory_space<vmem>>, %arg3: memref<2x128xf32, #tpu.memory_space<vmem>>, %arg4: memref<256x128xbf16, #tpu.memory_space<vmem>>) attributes {dimension_semantics = [#tpu.dimension_semantics<parallel>], iteration_bounds = array<i64: 2>, scalar_prefetch = 0 : i64, scratch_operands = 0 : i64, tpu.core_type = #tpu.core_type<tc>, window_params = [{transform_indices = @transform_0, window_bounds = array<i64: 256, 128>}, {pipeline_mode = #tpu.pipeline_mode<synchronous>, transform_indices = @transform_1, window_bounds = array<i64: 128, 128>}, {pipeline_mode = #tpu.pipeline_mode<synchronous>, transform_indices = @transform_2, window_bounds = array<i64: 2, 128>}, {transform_indices = @transform_3, window_bounds = array<i64: 256, 128>}]} {
    %c0 = arith.constant 0 : index
    %c0_0 = arith.constant 0 : index
    %0 = vector.load %arg1[%c0, %c0_0] : memref<256x128xbf16, #tpu.memory_space<vmem>>, vector<256x128xbf16>
    %c0_1 = arith.constant 0 : index
    %c0_2 = arith.constant 0 : index
    %1 = vector.load %arg2[%c0_1, %c0_2] : memref<128x128xbf16, #tpu.memory_space<vmem>>, vector<128x128xbf16>
    %cst = arith.constant dense<0.000000e+00> : vector<256x128xf32>
    %2 = tpu.matmul %0, %1, %cst {dimension_numbers = #tpu.dot_dimension_numbers<[1], [0], [0], [1], [0, 0, 1, 1], [], []>} : vector<256x128xbf16>, vector<128x128xbf16>, vector<256x128xf32> -> vector<256x128xf32>
    %c0_3 = arith.constant 0 : index
    %c0_4 = arith.constant 0 : index
    %3 = vector.load %arg3[%c0_3, %c0_4] : memref<2x128xf32, #tpu.memory_space<vmem>>, vector<1x128xf32>
    %4 = vector.broadcast %3 : vector<1x128xf32> to vector<256x128xf32>
    %5 = arith.mulf %2, %4 : vector<256x128xf32>
    %c1 = arith.constant 1 : index
    %c0_5 = arith.constant 0 : index
    %6 = vector.load %arg3[%c1, %c0_5] : memref<2x128xf32, #tpu.memory_space<vmem>>, vector<1x128xf32>
    %7 = vector.broadcast %6 : vector<1x128xf32> to vector<256x128xf32>
    %8 = arith.addf %5, %7 : vector<256x128xf32>
    %9 = arith.truncf %8 : vector<256x128xf32> to vector<256x128xbf16>
    %c0_6 = arith.constant 0 : index
    %c0_7 = arith.constant 0 : index
    %10 = vector.load %arg4[%c0_6, %c0_7] : memref<256x128xbf16, #tpu.memory_space<vmem>>, vector<256x128xbf16>
    tpu.vector_store %arg4[%c0_6, %c0_7], %9 {strides = array<i32>} : memref<256x128xbf16, #tpu.memory_space<vmem>>, vector<256x128xbf16>,
    return
  }
  func.func @transform_0(%arg0: i32) -> (i32, i32) {
    %c0_i32 = arith.constant 0 : i32
    %c0_i32_0 = arith.constant 0 : i32
    return %arg0, %c0_i32 : i32, i32
  }
  func.func @transform_1(%arg0: i32) -> (i32, i32) {
    %c0_i32 = arith.constant 0 : i32
    %c0_i32_0 = arith.constant 0 : i32
    %c0_i32_1 = arith.constant 0 : i32
    return %c0_i32, %c0_i32_0 : i32, i32
  }
  func.func @transform_2(%arg0: i32) -> (i32, i32) {
    %c0_i32 = arith.constant 0 : i32
    %c0_i32_0 = arith.constant 0 : i32
    %c0_i32_1 = arith.constant 0 : i32
    return %c0_i32, %c0_i32_0 : i32, i32
  }
  func.func @transform_3(%arg0: i32) -> (i32, i32) {
    %c0_i32 = arith.constant 0 : i32
    %c0_i32_0 = arith.constant 0 : i32
    return %arg0, %c0_i32 : i32, i32
  }
}

module attributes {stable_mosaic.version = 11 : i64} {
  func.func @_bottleneck_tail_kernel(%arg0: i32, %arg1: memref<256x1152xbf16, #tpu.memory_space<vmem>>, %arg2: memref<1152x128xbf16, #tpu.memory_space<vmem>>, %arg3: memref<2x128xf32, #tpu.memory_space<vmem>>, %arg4: memref<128x128xbf16, #tpu.memory_space<vmem>>, %arg5: memref<2x128xf32, #tpu.memory_space<vmem>>, %arg6: memref<256x128xbf16, #tpu.memory_space<vmem>>, %arg7: memref<256x128xbf16, #tpu.memory_space<vmem>>) attributes {dimension_semantics = [#tpu.dimension_semantics<parallel>], iteration_bounds = array<i64: 2>, scalar_prefetch = 0 : i64, scratch_operands = 0 : i64, tpu.core_type = #tpu.core_type<tc>, window_params = [{transform_indices = @transform_0, window_bounds = array<i64: 256, 1152>}, {pipeline_mode = #tpu.pipeline_mode<synchronous>, transform_indices = @transform_1, window_bounds = array<i64: 1152, 128>}, {pipeline_mode = #tpu.pipeline_mode<synchronous>, transform_indices = @transform_2, window_bounds = array<i64: 2, 128>}, {pipeline_mode = #tpu.pipeline_mode<synchronous>, transform_indices = @transform_3, window_bounds = array<i64: 128, 128>}, {pipeline_mode = #tpu.pipeline_mode<synchronous>, transform_indices = @transform_4, window_bounds = array<i64: 2, 128>}, {transform_indices = @transform_5, window_bounds = array<i64: 256, 128>}, {transform_indices = @transform_6, window_bounds = array<i64: 256, 128>}]} {
    %c0 = arith.constant 0 : index
    %c0_0 = arith.constant 0 : index
    %0 = vector.load %arg1[%c0, %c0_0] : memref<256x1152xbf16, #tpu.memory_space<vmem>>, vector<256x1152xbf16>
    %c0_1 = arith.constant 0 : index
    %c0_2 = arith.constant 0 : index
    %1 = vector.load %arg2[%c0_1, %c0_2] : memref<1152x128xbf16, #tpu.memory_space<vmem>>, vector<1152x128xbf16>
    %cst = arith.constant dense<0.000000e+00> : vector<256x128xf32>
    %2 = tpu.matmul %0, %1, %cst {dimension_numbers = #tpu.dot_dimension_numbers<[1], [0], [0], [1], [0, 0, 1, 1], [], []>} : vector<256x1152xbf16>, vector<1152x128xbf16>, vector<256x128xf32> -> vector<256x128xf32>
    %c0_3 = arith.constant 0 : index
    %c0_4 = arith.constant 0 : index
    %3 = vector.load %arg3[%c0_3, %c0_4] : memref<2x128xf32, #tpu.memory_space<vmem>>, vector<1x128xf32>
    %4 = vector.broadcast %3 : vector<1x128xf32> to vector<256x128xf32>
    %5 = arith.mulf %2, %4 : vector<256x128xf32>
    %c1 = arith.constant 1 : index
    %c0_5 = arith.constant 0 : index
    %6 = vector.load %arg3[%c1, %c0_5] : memref<2x128xf32, #tpu.memory_space<vmem>>, vector<1x128xf32>
    %7 = vector.broadcast %6 : vector<1x128xf32> to vector<256x128xf32>
    %8 = arith.addf %5, %7 : vector<256x128xf32>
    %cst_6 = arith.constant 0.000000e+00 : f32
    %9 = vector.broadcast %cst_6 : f32 to vector<256x128xf32>
    %10 = arith.maximumf %8, %9 : vector<256x128xf32>
    %11 = arith.truncf %10 : vector<256x128xf32> to vector<256x128xbf16>
    %c0_7 = arith.constant 0 : index
    %c0_8 = arith.constant 0 : index
    %12 = vector.load %arg4[%c0_7, %c0_8] : memref<128x128xbf16, #tpu.memory_space<vmem>>, vector<128x128xbf16>
    %cst_9 = arith.constant dense<0.000000e+00> : vector<256x128xf32>
    %13 = tpu.matmul %11, %12, %cst_9 {dimension_numbers = #tpu.dot_dimension_numbers<[1], [0], [0], [1], [0, 0, 1, 1], [], []>} : vector<256x128xbf16>, vector<128x128xbf16>, vector<256x128xf32> -> vector<256x128xf32>
    %c0_10 = arith.constant 0 : index
    %c0_11 = arith.constant 0 : index
    %14 = vector.load %arg5[%c0_10, %c0_11] : memref<2x128xf32, #tpu.memory_space<vmem>>, vector<1x128xf32>
    %15 = vector.broadcast %14 : vector<1x128xf32> to vector<256x128xf32>
    %16 = arith.mulf %13, %15 : vector<256x128xf32>
    %c1_12 = arith.constant 1 : index
    %c0_13 = arith.constant 0 : index
    %17 = vector.load %arg5[%c1_12, %c0_13] : memref<2x128xf32, #tpu.memory_space<vmem>>, vector<1x128xf32>
    %18 = vector.broadcast %17 : vector<1x128xf32> to vector<256x128xf32>
    %19 = arith.addf %16, %18 : vector<256x128xf32>
    %c0_14 = arith.constant 0 : index
    %c0_15 = arith.constant 0 : index
    %20 = vector.load %arg6[%c0_14, %c0_15] : memref<256x128xbf16, #tpu.memory_space<vmem>>, vector<256x128xbf16>
    %21 = arith.extf %20 : vector<256x128xbf16> to vector<256x128xf32>
    %22 = arith.addf %19, %21 : vector<256x128xf32>
    %cst_16 = arith.constant 0.000000e+00 : f32
    %23 = vector.broadcast %cst_16 : f32 to vector<256x128xf32>
    %24 = arith.maximumf %22, %23 : vector<256x128xf32>
    %25 = arith.truncf %24 : vector<256x128xf32> to vector<256x128xbf16>
    %c0_17 = arith.constant 0 : index
    %c0_18 = arith.constant 0 : index
    %26 = vector.load %arg7[%c0_17, %c0_18] : memref<256x128xbf16, #tpu.memory_space<vmem>>, vector<256x128xbf16>
    tpu.vector_store %arg7[%c0_17, %c0_18], %25 {strides = array<i32>} : memref<256x128xbf16, #tpu.memory_space<vmem>>, vector<256x128xbf16>,
    return
  }
  func.func @transform_0(%arg0: i32) -> (i32, i32) {
    %c0_i32 = arith.constant 0 : i32
    %c0_i32_0 = arith.constant 0 : i32
    return %arg0, %c0_i32 : i32, i32
  }
  func.func @transform_1(%arg0: i32) -> (i32, i32) {
    %c0_i32 = arith.constant 0 : i32
    %c0_i32_0 = arith.constant 0 : i32
    %c0_i32_1 = arith.constant 0 : i32
    return %c0_i32, %c0_i32_0 : i32, i32
  }
  func.func @transform_2(%arg0: i32) -> (i32, i32) {
    %c0_i32 = arith.constant 0 : i32
    %c0_i32_0 = arith.constant 0 : i32
    %c0_i32_1 = arith.constant 0 : i32
    return %c0_i32, %c0_i32_0 : i32, i32
  }
  func.func @transform_3(%arg0: i32) -> (i32, i32) {
    %c0_i32 = arith.constant 0 : i32
    %c0_i32_0 = arith.constant 0 : i32
    %c0_i32_1 = arith.constant 0 : i32
    return %c0_i32, %c0_i32_0 : i32, i32
  }
  func.func @transform_4(%arg0: i32) -> (i32, i32) {
    %c0_i32 = arith.constant 0 : i32
    %c0_i32_0 = arith.constant 0 : i32
    %c0_i32_1 = arith.constant 0 : i32
    return %c0_i32, %c0_i32_0 : i32, i32
  }
  func.func @transform_5(%arg0: i32) -> (i32, i32) {
    %c0_i32 = arith.constant 0 : i32
    %c0_i32_0 = arith.constant 0 : i32
    return %arg0, %c0_i32 : i32, i32
  }
  func.func @transform_6(%arg0: i32) -> (i32, i32) {
    %c0_i32 = arith.constant 0 : i32
    %c0_i32_0 = arith.constant 0 : i32
    return %arg0, %c0_i32 : i32, i32
  }
}

module attributes {stable_mosaic.version = 11 : i64} {
  func.func @_bottleneck_tail_kernel(%arg0: i32, %arg1: memref<128x1152xbf16, #tpu.memory_space<vmem>>, %arg2: memref<1152x128xbf16, #tpu.memory_space<vmem>>, %arg3: memref<2x128xf32, #tpu.memory_space<vmem>>, %arg4: memref<128x128xbf16, #tpu.memory_space<vmem>>, %arg5: memref<2x128xf32, #tpu.memory_space<vmem>>, %arg6: memref<128x128xbf16, #tpu.memory_space<vmem>>, %arg7: memref<128x128xbf16, #tpu.memory_space<vmem>>) attributes {dimension_semantics = [#tpu.dimension_semantics<parallel>], iteration_bounds = array<i64: 1>, scalar_prefetch = 0 : i64, scratch_operands = 0 : i64, tpu.core_type = #tpu.core_type<tc>, window_params = [{transform_indices = @transform_0, window_bounds = array<i64: 128, 1152>}, {pipeline_mode = #tpu.pipeline_mode<synchronous>, transform_indices = @transform_1, window_bounds = array<i64: 1152, 128>}, {pipeline_mode = #tpu.pipeline_mode<synchronous>, transform_indices = @transform_2, window_bounds = array<i64: 2, 128>}, {pipeline_mode = #tpu.pipeline_mode<synchronous>, transform_indices = @transform_3, window_bounds = array<i64: 128, 128>}, {pipeline_mode = #tpu.pipeline_mode<synchronous>, transform_indices = @transform_4, window_bounds = array<i64: 2, 128>}, {transform_indices = @transform_5, window_bounds = array<i64: 128, 128>}, {transform_indices = @transform_6, window_bounds = array<i64: 128, 128>}]} {
    %c0 = arith.constant 0 : index
    %c0_0 = arith.constant 0 : index
    %0 = vector.load %arg1[%c0, %c0_0] : memref<128x1152xbf16, #tpu.memory_space<vmem>>, vector<128x1152xbf16>
    %c0_1 = arith.constant 0 : index
    %c0_2 = arith.constant 0 : index
    %1 = vector.load %arg2[%c0_1, %c0_2] : memref<1152x128xbf16, #tpu.memory_space<vmem>>, vector<1152x128xbf16>
    %cst = arith.constant dense<0.000000e+00> : vector<128x128xf32>
    %2 = tpu.matmul %0, %1, %cst {dimension_numbers = #tpu.dot_dimension_numbers<[1], [0], [0], [1], [0, 0, 1, 1], [], []>} : vector<128x1152xbf16>, vector<1152x128xbf16>, vector<128x128xf32> -> vector<128x128xf32>
    %c0_3 = arith.constant 0 : index
    %c0_4 = arith.constant 0 : index
    %3 = vector.load %arg3[%c0_3, %c0_4] : memref<2x128xf32, #tpu.memory_space<vmem>>, vector<1x128xf32>
    %4 = vector.broadcast %3 : vector<1x128xf32> to vector<128x128xf32>
    %5 = arith.mulf %2, %4 : vector<128x128xf32>
    %c1 = arith.constant 1 : index
    %c0_5 = arith.constant 0 : index
    %6 = vector.load %arg3[%c1, %c0_5] : memref<2x128xf32, #tpu.memory_space<vmem>>, vector<1x128xf32>
    %7 = vector.broadcast %6 : vector<1x128xf32> to vector<128x128xf32>
    %8 = arith.addf %5, %7 : vector<128x128xf32>
    %cst_6 = arith.constant 0.000000e+00 : f32
    %9 = vector.broadcast %cst_6 : f32 to vector<128x128xf32>
    %10 = arith.maximumf %8, %9 : vector<128x128xf32>
    %11 = arith.truncf %10 : vector<128x128xf32> to vector<128x128xbf16>
    %c0_7 = arith.constant 0 : index
    %c0_8 = arith.constant 0 : index
    %12 = vector.load %arg4[%c0_7, %c0_8] : memref<128x128xbf16, #tpu.memory_space<vmem>>, vector<128x128xbf16>
    %cst_9 = arith.constant dense<0.000000e+00> : vector<128x128xf32>
    %13 = tpu.matmul %11, %12, %cst_9 {dimension_numbers = #tpu.dot_dimension_numbers<[1], [0], [0], [1], [0, 0, 1, 1], [], []>} : vector<128x128xbf16>, vector<128x128xbf16>, vector<128x128xf32> -> vector<128x128xf32>
    %c0_10 = arith.constant 0 : index
    %c0_11 = arith.constant 0 : index
    %14 = vector.load %arg5[%c0_10, %c0_11] : memref<2x128xf32, #tpu.memory_space<vmem>>, vector<1x128xf32>
    %15 = vector.broadcast %14 : vector<1x128xf32> to vector<128x128xf32>
    %16 = arith.mulf %13, %15 : vector<128x128xf32>
    %c1_12 = arith.constant 1 : index
    %c0_13 = arith.constant 0 : index
    %17 = vector.load %arg5[%c1_12, %c0_13] : memref<2x128xf32, #tpu.memory_space<vmem>>, vector<1x128xf32>
    %18 = vector.broadcast %17 : vector<1x128xf32> to vector<128x128xf32>
    %19 = arith.addf %16, %18 : vector<128x128xf32>
    %c0_14 = arith.constant 0 : index
    %c0_15 = arith.constant 0 : index
    %20 = vector.load %arg6[%c0_14, %c0_15] : memref<128x128xbf16, #tpu.memory_space<vmem>>, vector<128x128xbf16>
    %21 = arith.extf %20 : vector<128x128xbf16> to vector<128x128xf32>
    %22 = arith.addf %19, %21 : vector<128x128xf32>
    %cst_16 = arith.constant 0.000000e+00 : f32
    %23 = vector.broadcast %cst_16 : f32 to vector<128x128xf32>
    %24 = arith.maximumf %22, %23 : vector<128x128xf32>
    %25 = arith.truncf %24 : vector<128x128xf32> to vector<128x128xbf16>
    %c0_17 = arith.constant 0 : index
    %c0_18 = arith.constant 0 : index
    %26 = vector.load %arg7[%c0_17, %c0_18] : memref<128x128xbf16, #tpu.memory_space<vmem>>, vector<128x128xbf16>
    tpu.vector_store %arg7[%c0_17, %c0_18], %25 {strides = array<i32>} : memref<128x128xbf16, #tpu.memory_space<vmem>>, vector<128x128xbf16>,
    return
  }
  func.func @transform_0(%arg0: i32) -> (i32, i32) {
    %c0_i32 = arith.constant 0 : i32
    %c0_i32_0 = arith.constant 0 : i32
    return %arg0, %c0_i32 : i32, i32
  }
  func.func @transform_1(%arg0: i32) -> (i32, i32) {
    %c0_i32 = arith.constant 0 : i32
    %c0_i32_0 = arith.constant 0 : i32
    %c0_i32_1 = arith.constant 0 : i32
    return %c0_i32, %c0_i32_0 : i32, i32
  }
  func.func @transform_2(%arg0: i32) -> (i32, i32) {
    %c0_i32 = arith.constant 0 : i32
    %c0_i32_0 = arith.constant 0 : i32
    %c0_i32_1 = arith.constant 0 : i32
    return %c0_i32, %c0_i32_0 : i32, i32
  }
  func.func @transform_3(%arg0: i32) -> (i32, i32) {
    %c0_i32 = arith.constant 0 : i32
    %c0_i32_0 = arith.constant 0 : i32
    %c0_i32_1 = arith.constant 0 : i32
    return %c0_i32, %c0_i32_0 : i32, i32
  }
  func.func @transform_4(%arg0: i32) -> (i32, i32) {
    %c0_i32 = arith.constant 0 : i32
    %c0_i32_0 = arith.constant 0 : i32
    %c0_i32_1 = arith.constant 0 : i32
    return %c0_i32, %c0_i32_0 : i32, i32
  }
  func.func @transform_5(%arg0: i32) -> (i32, i32) {
    %c0_i32 = arith.constant 0 : i32
    %c0_i32_0 = arith.constant 0 : i32
    return %arg0, %c0_i32 : i32, i32
  }
  func.func @transform_6(%arg0: i32) -> (i32, i32) {
    %c0_i32 = arith.constant 0 : i32
    %c0_i32_0 = arith.constant 0 : i32
    return %arg0, %c0_i32 : i32, i32
  }
}

module attributes {stable_mosaic.version = 11 : i64} {
  func.func @_matmul_bn_kernel(%arg0: i32, %arg1: memref<128x128xbf16, #tpu.memory_space<vmem>>, %arg2: memref<128x128xbf16, #tpu.memory_space<vmem>>, %arg3: memref<2x128xf32, #tpu.memory_space<vmem>>, %arg4: memref<128x128xbf16, #tpu.memory_space<vmem>>) attributes {dimension_semantics = [#tpu.dimension_semantics<parallel>], iteration_bounds = array<i64: 1>, scalar_prefetch = 0 : i64, scratch_operands = 0 : i64, tpu.core_type = #tpu.core_type<tc>, window_params = [{transform_indices = @transform_0, window_bounds = array<i64: 128, 128>}, {pipeline_mode = #tpu.pipeline_mode<synchronous>, transform_indices = @transform_1, window_bounds = array<i64: 128, 128>}, {pipeline_mode = #tpu.pipeline_mode<synchronous>, transform_indices = @transform_2, window_bounds = array<i64: 2, 128>}, {transform_indices = @transform_3, window_bounds = array<i64: 128, 128>}]} {
    %c0 = arith.constant 0 : index
    %c0_0 = arith.constant 0 : index
    %0 = vector.load %arg1[%c0, %c0_0] : memref<128x128xbf16, #tpu.memory_space<vmem>>, vector<128x128xbf16>
    %c0_1 = arith.constant 0 : index
    %c0_2 = arith.constant 0 : index
    %1 = vector.load %arg2[%c0_1, %c0_2] : memref<128x128xbf16, #tpu.memory_space<vmem>>, vector<128x128xbf16>
    %cst = arith.constant dense<0.000000e+00> : vector<128x128xf32>
    %2 = tpu.matmul %0, %1, %cst {dimension_numbers = #tpu.dot_dimension_numbers<[1], [0], [0], [1], [0, 0, 1, 1], [], []>} : vector<128x128xbf16>, vector<128x128xbf16>, vector<128x128xf32> -> vector<128x128xf32>
    %c0_3 = arith.constant 0 : index
    %c0_4 = arith.constant 0 : index
    %3 = vector.load %arg3[%c0_3, %c0_4] : memref<2x128xf32, #tpu.memory_space<vmem>>, vector<1x128xf32>
    %4 = vector.broadcast %3 : vector<1x128xf32> to vector<128x128xf32>
    %5 = arith.mulf %2, %4 : vector<128x128xf32>
    %c1 = arith.constant 1 : index
    %c0_5 = arith.constant 0 : index
    %6 = vector.load %arg3[%c1, %c0_5] : memref<2x128xf32, #tpu.memory_space<vmem>>, vector<1x128xf32>
    %7 = vector.broadcast %6 : vector<1x128xf32> to vector<128x128xf32>
    %8 = arith.addf %5, %7 : vector<128x128xf32>
    %9 = arith.truncf %8 : vector<128x128xf32> to vector<128x128xbf16>
    %c0_6 = arith.constant 0 : index
    %c0_7 = arith.constant 0 : index
    %10 = vector.load %arg4[%c0_6, %c0_7] : memref<128x128xbf16, #tpu.memory_space<vmem>>, vector<128x128xbf16>
    tpu.vector_store %arg4[%c0_6, %c0_7], %9 {strides = array<i32>} : memref<128x128xbf16, #tpu.memory_space<vmem>>, vector<128x128xbf16>,
    return
  }
  func.func @transform_0(%arg0: i32) -> (i32, i32) {
    %c0_i32 = arith.constant 0 : i32
    %c0_i32_0 = arith.constant 0 : i32
    return %arg0, %c0_i32 : i32, i32
  }
  func.func @transform_1(%arg0: i32) -> (i32, i32) {
    %c0_i32 = arith.constant 0 : i32
    %c0_i32_0 = arith.constant 0 : i32
    %c0_i32_1 = arith.constant 0 : i32
    return %c0_i32, %c0_i32_0 : i32, i32
  }
  func.func @transform_2(%arg0: i32) -> (i32, i32) {
    %c0_i32 = arith.constant 0 : i32
    %c0_i32_0 = arith.constant 0 : i32
    %c0_i32_1 = arith.constant 0 : i32
    return %c0_i32, %c0_i32_0 : i32, i32
  }
  func.func @transform_3(%arg0: i32) -> (i32, i32) {
    %c0_i32 = arith.constant 0 : i32
    %c0_i32_0 = arith.constant 0 : i32
    return %arg0, %c0_i32 : i32, i32
  }
}

module attributes {stable_mosaic.version = 11 : i64} {
  func.func @_matmul_bn_kernel(%arg0: i32, %arg1: memref<128x128xbf16, #tpu.memory_space<vmem>>, %arg2: memref<128x128xbf16, #tpu.memory_space<vmem>>, %arg3: memref<2x128xf32, #tpu.memory_space<vmem>>, %arg4: memref<128x128xbf16, #tpu.memory_space<vmem>>) attributes {dimension_semantics = [#tpu.dimension_semantics<parallel>], iteration_bounds = array<i64: 1>, scalar_prefetch = 0 : i64, scratch_operands = 0 : i64, tpu.core_type = #tpu.core_type<tc>, window_params = [{transform_indices = @transform_0, window_bounds = array<i64: 128, 128>}, {pipeline_mode = #tpu.pipeline_mode<synchronous>, transform_indices = @transform_1, window_bounds = array<i64: 128, 128>}, {pipeline_mode = #tpu.pipeline_mode<synchronous>, transform_indices = @transform_2, window_bounds = array<i64: 2, 128>}, {transform_indices = @transform_3, window_bounds = array<i64: 128, 128>}]} {
    %c0 = arith.constant 0 : index
    %c0_0 = arith.constant 0 : index
    %0 = vector.load %arg1[%c0, %c0_0] : memref<128x128xbf16, #tpu.memory_space<vmem>>, vector<128x128xbf16>
    %c0_1 = arith.constant 0 : index
    %c0_2 = arith.constant 0 : index
    %1 = vector.load %arg2[%c0_1, %c0_2] : memref<128x128xbf16, #tpu.memory_space<vmem>>, vector<128x128xbf16>
    %cst = arith.constant dense<0.000000e+00> : vector<128x128xf32>
    %2 = tpu.matmul %0, %1, %cst {dimension_numbers = #tpu.dot_dimension_numbers<[1], [0], [0], [1], [0, 0, 1, 1], [], []>} : vector<128x128xbf16>, vector<128x128xbf16>, vector<128x128xf32> -> vector<128x128xf32>
    %c0_3 = arith.constant 0 : index
    %c0_4 = arith.constant 0 : index
    %3 = vector.load %arg3[%c0_3, %c0_4] : memref<2x128xf32, #tpu.memory_space<vmem>>, vector<1x128xf32>
    %4 = vector.broadcast %3 : vector<1x128xf32> to vector<128x128xf32>
    %5 = arith.mulf %2, %4 : vector<128x128xf32>
    %c1 = arith.constant 1 : index
    %c0_5 = arith.constant 0 : index
    %6 = vector.load %arg3[%c1, %c0_5] : memref<2x128xf32, #tpu.memory_space<vmem>>, vector<1x128xf32>
    %7 = vector.broadcast %6 : vector<1x128xf32> to vector<128x128xf32>
    %8 = arith.addf %5, %7 : vector<128x128xf32>
    %cst_6 = arith.constant 0.000000e+00 : f32
    %9 = vector.broadcast %cst_6 : f32 to vector<128x128xf32>
    %10 = arith.maximumf %8, %9 : vector<128x128xf32>
    %11 = arith.truncf %10 : vector<128x128xf32> to vector<128x128xbf16>
    %c0_7 = arith.constant 0 : index
    %c0_8 = arith.constant 0 : index
    %12 = vector.load %arg4[%c0_7, %c0_8] : memref<128x128xbf16, #tpu.memory_space<vmem>>, vector<128x128xbf16>
    tpu.vector_store %arg4[%c0_7, %c0_8], %11 {strides = array<i32>} : memref<128x128xbf16, #tpu.memory_space<vmem>>, vector<128x128xbf16>,
    return
  }
  func.func @transform_0(%arg0: i32) -> (i32, i32) {
    %c0_i32 = arith.constant 0 : i32
    %c0_i32_0 = arith.constant 0 : i32
    return %arg0, %c0_i32 : i32, i32
  }
  func.func @transform_1(%arg0: i32) -> (i32, i32) {
    %c0_i32 = arith.constant 0 : i32
    %c0_i32_0 = arith.constant 0 : i32
    %c0_i32_1 = arith.constant 0 : i32
    return %c0_i32, %c0_i32_0 : i32, i32
  }
  func.func @transform_2(%arg0: i32) -> (i32, i32) {
    %c0_i32 = arith.constant 0 : i32
    %c0_i32_0 = arith.constant 0 : i32
    %c0_i32_1 = arith.constant 0 : i32
    return %c0_i32, %c0_i32_0 : i32, i32
  }
  func.func @transform_3(%arg0: i32) -> (i32, i32) {
    %c0_i32 = arith.constant 0 : i32
    %c0_i32_0 = arith.constant 0 : i32
    return %arg0, %c0_i32 : i32, i32
  }
}

module attributes {stable_mosaic.version = 11 : i64} {
  func.func @_matmul_bn_kernel(%arg0: i32, %arg1: memref<32x128xbf16, #tpu.memory_space<vmem>>, %arg2: memref<128x128xbf16, #tpu.memory_space<vmem>>, %arg3: memref<2x128xf32, #tpu.memory_space<vmem>>, %arg4: memref<32x128xbf16, #tpu.memory_space<vmem>>) attributes {dimension_semantics = [#tpu.dimension_semantics<parallel>], iteration_bounds = array<i64: 1>, scalar_prefetch = 0 : i64, scratch_operands = 0 : i64, tpu.core_type = #tpu.core_type<tc>, window_params = [{transform_indices = @transform_0, window_bounds = array<i64: 32, 128>}, {pipeline_mode = #tpu.pipeline_mode<synchronous>, transform_indices = @transform_1, window_bounds = array<i64: 128, 128>}, {pipeline_mode = #tpu.pipeline_mode<synchronous>, transform_indices = @transform_2, window_bounds = array<i64: 2, 128>}, {transform_indices = @transform_3, window_bounds = array<i64: 32, 128>}]} {
    %c0 = arith.constant 0 : index
    %c0_0 = arith.constant 0 : index
    %0 = vector.load %arg1[%c0, %c0_0] : memref<32x128xbf16, #tpu.memory_space<vmem>>, vector<32x128xbf16>
    %c0_1 = arith.constant 0 : index
    %c0_2 = arith.constant 0 : index
    %1 = vector.load %arg2[%c0_1, %c0_2] : memref<128x128xbf16, #tpu.memory_space<vmem>>, vector<128x128xbf16>
    %cst = arith.constant dense<0.000000e+00> : vector<32x128xf32>
    %2 = tpu.matmul %0, %1, %cst {dimension_numbers = #tpu.dot_dimension_numbers<[1], [0], [0], [1], [0, 0, 1, 1], [], []>} : vector<32x128xbf16>, vector<128x128xbf16>, vector<32x128xf32> -> vector<32x128xf32>
    %c0_3 = arith.constant 0 : index
    %c0_4 = arith.constant 0 : index
    %3 = vector.load %arg3[%c0_3, %c0_4] : memref<2x128xf32, #tpu.memory_space<vmem>>, vector<1x128xf32>
    %4 = vector.broadcast %3 : vector<1x128xf32> to vector<32x128xf32>
    %5 = arith.mulf %2, %4 : vector<32x128xf32>
    %c1 = arith.constant 1 : index
    %c0_5 = arith.constant 0 : index
    %6 = vector.load %arg3[%c1, %c0_5] : memref<2x128xf32, #tpu.memory_space<vmem>>, vector<1x128xf32>
    %7 = vector.broadcast %6 : vector<1x128xf32> to vector<32x128xf32>
    %8 = arith.addf %5, %7 : vector<32x128xf32>
    %9 = arith.truncf %8 : vector<32x128xf32> to vector<32x128xbf16>
    %c0_6 = arith.constant 0 : index
    %c0_7 = arith.constant 0 : index
    %10 = vector.load %arg4[%c0_6, %c0_7] : memref<32x128xbf16, #tpu.memory_space<vmem>>, vector<32x128xbf16>
    tpu.vector_store %arg4[%c0_6, %c0_7], %9 {strides = array<i32>} : memref<32x128xbf16, #tpu.memory_space<vmem>>, vector<32x128xbf16>,
    return
  }
  func.func @transform_0(%arg0: i32) -> (i32, i32) {
    %c0_i32 = arith.constant 0 : i32
    %c0_i32_0 = arith.constant 0 : i32
    return %arg0, %c0_i32 : i32, i32
  }
  func.func @transform_1(%arg0: i32) -> (i32, i32) {
    %c0_i32 = arith.constant 0 : i32
    %c0_i32_0 = arith.constant 0 : i32
    %c0_i32_1 = arith.constant 0 : i32
    return %c0_i32, %c0_i32_0 : i32, i32
  }
  func.func @transform_2(%arg0: i32) -> (i32, i32) {
    %c0_i32 = arith.constant 0 : i32
    %c0_i32_0 = arith.constant 0 : i32
    %c0_i32_1 = arith.constant 0 : i32
    return %c0_i32, %c0_i32_0 : i32, i32
  }
  func.func @transform_3(%arg0: i32) -> (i32, i32) {
    %c0_i32 = arith.constant 0 : i32
    %c0_i32_0 = arith.constant 0 : i32
    return %arg0, %c0_i32 : i32, i32
  }
}

module attributes {stable_mosaic.version = 11 : i64} {
  func.func @_matmul_bn_kernel(%arg0: i32, %arg1: memref<32x128xbf16, #tpu.memory_space<vmem>>, %arg2: memref<128x128xbf16, #tpu.memory_space<vmem>>, %arg3: memref<2x128xf32, #tpu.memory_space<vmem>>, %arg4: memref<32x128xbf16, #tpu.memory_space<vmem>>) attributes {dimension_semantics = [#tpu.dimension_semantics<parallel>], iteration_bounds = array<i64: 1>, scalar_prefetch = 0 : i64, scratch_operands = 0 : i64, tpu.core_type = #tpu.core_type<tc>, window_params = [{transform_indices = @transform_0, window_bounds = array<i64: 32, 128>}, {pipeline_mode = #tpu.pipeline_mode<synchronous>, transform_indices = @transform_1, window_bounds = array<i64: 128, 128>}, {pipeline_mode = #tpu.pipeline_mode<synchronous>, transform_indices = @transform_2, window_bounds = array<i64: 2, 128>}, {transform_indices = @transform_3, window_bounds = array<i64: 32, 128>}]} {
    %c0 = arith.constant 0 : index
    %c0_0 = arith.constant 0 : index
    %0 = vector.load %arg1[%c0, %c0_0] : memref<32x128xbf16, #tpu.memory_space<vmem>>, vector<32x128xbf16>
    %c0_1 = arith.constant 0 : index
    %c0_2 = arith.constant 0 : index
    %1 = vector.load %arg2[%c0_1, %c0_2] : memref<128x128xbf16, #tpu.memory_space<vmem>>, vector<128x128xbf16>
    %cst = arith.constant dense<0.000000e+00> : vector<32x128xf32>
    %2 = tpu.matmul %0, %1, %cst {dimension_numbers = #tpu.dot_dimension_numbers<[1], [0], [0], [1], [0, 0, 1, 1], [], []>} : vector<32x128xbf16>, vector<128x128xbf16>, vector<32x128xf32> -> vector<32x128xf32>
    %c0_3 = arith.constant 0 : index
    %c0_4 = arith.constant 0 : index
    %3 = vector.load %arg3[%c0_3, %c0_4] : memref<2x128xf32, #tpu.memory_space<vmem>>, vector<1x128xf32>
    %4 = vector.broadcast %3 : vector<1x128xf32> to vector<32x128xf32>
    %5 = arith.mulf %2, %4 : vector<32x128xf32>
    %c1 = arith.constant 1 : index
    %c0_5 = arith.constant 0 : index
    %6 = vector.load %arg3[%c1, %c0_5] : memref<2x128xf32, #tpu.memory_space<vmem>>, vector<1x128xf32>
    %7 = vector.broadcast %6 : vector<1x128xf32> to vector<32x128xf32>
    %8 = arith.addf %5, %7 : vector<32x128xf32>
    %cst_6 = arith.constant 0.000000e+00 : f32
    %9 = vector.broadcast %cst_6 : f32 to vector<32x128xf32>
    %10 = arith.maximumf %8, %9 : vector<32x128xf32>
    %11 = arith.truncf %10 : vector<32x128xf32> to vector<32x128xbf16>
    %c0_7 = arith.constant 0 : index
    %c0_8 = arith.constant 0 : index
    %12 = vector.load %arg4[%c0_7, %c0_8] : memref<32x128xbf16, #tpu.memory_space<vmem>>, vector<32x128xbf16>
    tpu.vector_store %arg4[%c0_7, %c0_8], %11 {strides = array<i32>} : memref<32x128xbf16, #tpu.memory_space<vmem>>, vector<32x128xbf16>,
    return
  }
  func.func @transform_0(%arg0: i32) -> (i32, i32) {
    %c0_i32 = arith.constant 0 : i32
    %c0_i32_0 = arith.constant 0 : i32
    return %arg0, %c0_i32 : i32, i32
  }
  func.func @transform_1(%arg0: i32) -> (i32, i32) {
    %c0_i32 = arith.constant 0 : i32
    %c0_i32_0 = arith.constant 0 : i32
    %c0_i32_1 = arith.constant 0 : i32
    return %c0_i32, %c0_i32_0 : i32, i32
  }
  func.func @transform_2(%arg0: i32) -> (i32, i32) {
    %c0_i32 = arith.constant 0 : i32
    %c0_i32_0 = arith.constant 0 : i32
    %c0_i32_1 = arith.constant 0 : i32
    return %c0_i32, %c0_i32_0 : i32, i32
  }
  func.func @transform_3(%arg0: i32) -> (i32, i32) {
    %c0_i32 = arith.constant 0 : i32
    %c0_i32_0 = arith.constant 0 : i32
    return %arg0, %c0_i32 : i32, i32
  }
}

module attributes {stable_mosaic.version = 11 : i64} {
  func.func @_bottleneck_tail_kernel(%arg0: i32, %arg1: memref<32x1152xbf16, #tpu.memory_space<vmem>>, %arg2: memref<1152x128xbf16, #tpu.memory_space<vmem>>, %arg3: memref<2x128xf32, #tpu.memory_space<vmem>>, %arg4: memref<128x128xbf16, #tpu.memory_space<vmem>>, %arg5: memref<2x128xf32, #tpu.memory_space<vmem>>, %arg6: memref<32x128xbf16, #tpu.memory_space<vmem>>, %arg7: memref<32x128xbf16, #tpu.memory_space<vmem>>) attributes {dimension_semantics = [#tpu.dimension_semantics<parallel>], iteration_bounds = array<i64: 1>, scalar_prefetch = 0 : i64, scratch_operands = 0 : i64, tpu.core_type = #tpu.core_type<tc>, window_params = [{transform_indices = @transform_0, window_bounds = array<i64: 32, 1152>}, {pipeline_mode = #tpu.pipeline_mode<synchronous>, transform_indices = @transform_1, window_bounds = array<i64: 1152, 128>}, {pipeline_mode = #tpu.pipeline_mode<synchronous>, transform_indices = @transform_2, window_bounds = array<i64: 2, 128>}, {pipeline_mode = #tpu.pipeline_mode<synchronous>, transform_indices = @transform_3, window_bounds = array<i64: 128, 128>}, {pipeline_mode = #tpu.pipeline_mode<synchronous>, transform_indices = @transform_4, window_bounds = array<i64: 2, 128>}, {transform_indices = @transform_5, window_bounds = array<i64: 32, 128>}, {transform_indices = @transform_6, window_bounds = array<i64: 32, 128>}]} {
    %c0 = arith.constant 0 : index
    %c0_0 = arith.constant 0 : index
    %0 = vector.load %arg1[%c0, %c0_0] : memref<32x1152xbf16, #tpu.memory_space<vmem>>, vector<32x1152xbf16>
    %c0_1 = arith.constant 0 : index
    %c0_2 = arith.constant 0 : index
    %1 = vector.load %arg2[%c0_1, %c0_2] : memref<1152x128xbf16, #tpu.memory_space<vmem>>, vector<1152x128xbf16>
    %cst = arith.constant dense<0.000000e+00> : vector<32x128xf32>
    %2 = tpu.matmul %0, %1, %cst {dimension_numbers = #tpu.dot_dimension_numbers<[1], [0], [0], [1], [0, 0, 1, 1], [], []>} : vector<32x1152xbf16>, vector<1152x128xbf16>, vector<32x128xf32> -> vector<32x128xf32>
    %c0_3 = arith.constant 0 : index
    %c0_4 = arith.constant 0 : index
    %3 = vector.load %arg3[%c0_3, %c0_4] : memref<2x128xf32, #tpu.memory_space<vmem>>, vector<1x128xf32>
    %4 = vector.broadcast %3 : vector<1x128xf32> to vector<32x128xf32>
    %5 = arith.mulf %2, %4 : vector<32x128xf32>
    %c1 = arith.constant 1 : index
    %c0_5 = arith.constant 0 : index
    %6 = vector.load %arg3[%c1, %c0_5] : memref<2x128xf32, #tpu.memory_space<vmem>>, vector<1x128xf32>
    %7 = vector.broadcast %6 : vector<1x128xf32> to vector<32x128xf32>
    %8 = arith.addf %5, %7 : vector<32x128xf32>
    %cst_6 = arith.constant 0.000000e+00 : f32
    %9 = vector.broadcast %cst_6 : f32 to vector<32x128xf32>
    %10 = arith.maximumf %8, %9 : vector<32x128xf32>
    %11 = arith.truncf %10 : vector<32x128xf32> to vector<32x128xbf16>
    %c0_7 = arith.constant 0 : index
    %c0_8 = arith.constant 0 : index
    %12 = vector.load %arg4[%c0_7, %c0_8] : memref<128x128xbf16, #tpu.memory_space<vmem>>, vector<128x128xbf16>
    %cst_9 = arith.constant dense<0.000000e+00> : vector<32x128xf32>
    %13 = tpu.matmul %11, %12, %cst_9 {dimension_numbers = #tpu.dot_dimension_numbers<[1], [0], [0], [1], [0, 0, 1, 1], [], []>} : vector<32x128xbf16>, vector<128x128xbf16>, vector<32x128xf32> -> vector<32x128xf32>
    %c0_10 = arith.constant 0 : index
    %c0_11 = arith.constant 0 : index
    %14 = vector.load %arg5[%c0_10, %c0_11] : memref<2x128xf32, #tpu.memory_space<vmem>>, vector<1x128xf32>
    %15 = vector.broadcast %14 : vector<1x128xf32> to vector<32x128xf32>
    %16 = arith.mulf %13, %15 : vector<32x128xf32>
    %c1_12 = arith.constant 1 : index
    %c0_13 = arith.constant 0 : index
    %17 = vector.load %arg5[%c1_12, %c0_13] : memref<2x128xf32, #tpu.memory_space<vmem>>, vector<1x128xf32>
    %18 = vector.broadcast %17 : vector<1x128xf32> to vector<32x128xf32>
    %19 = arith.addf %16, %18 : vector<32x128xf32>
    %c0_14 = arith.constant 0 : index
    %c0_15 = arith.constant 0 : index
    %20 = vector.load %arg6[%c0_14, %c0_15] : memref<32x128xbf16, #tpu.memory_space<vmem>>, vector<32x128xbf16>
    %21 = arith.extf %20 : vector<32x128xbf16> to vector<32x128xf32>
    %22 = arith.addf %19, %21 : vector<32x128xf32>
    %cst_16 = arith.constant 0.000000e+00 : f32
    %23 = vector.broadcast %cst_16 : f32 to vector<32x128xf32>
    %24 = arith.maximumf %22, %23 : vector<32x128xf32>
    %25 = arith.truncf %24 : vector<32x128xf32> to vector<32x128xbf16>
    %c0_17 = arith.constant 0 : index
    %c0_18 = arith.constant 0 : index
    %26 = vector.load %arg7[%c0_17, %c0_18] : memref<32x128xbf16, #tpu.memory_space<vmem>>, vector<32x128xbf16>
    tpu.vector_store %arg7[%c0_17, %c0_18], %25 {strides = array<i32>} : memref<32x128xbf16, #tpu.memory_space<vmem>>, vector<32x128xbf16>,
    return
  }
  func.func @transform_0(%arg0: i32) -> (i32, i32) {
    %c0_i32 = arith.constant 0 : i32
    %c0_i32_0 = arith.constant 0 : i32
    return %arg0, %c0_i32 : i32, i32
  }
  func.func @transform_1(%arg0: i32) -> (i32, i32) {
    %c0_i32 = arith.constant 0 : i32
    %c0_i32_0 = arith.constant 0 : i32
    %c0_i32_1 = arith.constant 0 : i32
    return %c0_i32, %c0_i32_0 : i32, i32
  }
  func.func @transform_2(%arg0: i32) -> (i32, i32) {
    %c0_i32 = arith.constant 0 : i32
    %c0_i32_0 = arith.constant 0 : i32
    %c0_i32_1 = arith.constant 0 : i32
    return %c0_i32, %c0_i32_0 : i32, i32
  }
  func.func @transform_3(%arg0: i32) -> (i32, i32) {
    %c0_i32 = arith.constant 0 : i32
    %c0_i32_0 = arith.constant 0 : i32
    %c0_i32_1 = arith.constant 0 : i32
    return %c0_i32, %c0_i32_0 : i32, i32
  }
  func.func @transform_4(%arg0: i32) -> (i32, i32) {
    %c0_i32 = arith.constant 0 : i32
    %c0_i32_0 = arith.constant 0 : i32
    %c0_i32_1 = arith.constant 0 : i32
    return %c0_i32, %c0_i32_0 : i32, i32
  }
  func.func @transform_5(%arg0: i32) -> (i32, i32) {
    %c0_i32 = arith.constant 0 : i32
    %c0_i32_0 = arith.constant 0 : i32
    return %arg0, %c0_i32 : i32, i32
  }
  func.func @transform_6(%arg0: i32) -> (i32, i32) {
    %c0_i32 = arith.constant 0 : i32
    %c0_i32_0 = arith.constant 0 : i32
    return %arg0, %c0_i32 : i32, i32
  }
}

module attributes {stable_mosaic.version = 11 : i64} {
  func.func @_matmul_bn_kernel(%arg0: i32, %arg1: memref<8x256xbf16, #tpu.memory_space<vmem>>, %arg2: memref<256x128xbf16, #tpu.memory_space<vmem>>, %arg3: memref<2x128xf32, #tpu.memory_space<vmem>>, %arg4: memref<8x128xbf16, #tpu.memory_space<vmem>>) attributes {dimension_semantics = [#tpu.dimension_semantics<parallel>], iteration_bounds = array<i64: 1>, scalar_prefetch = 0 : i64, scratch_operands = 0 : i64, tpu.core_type = #tpu.core_type<tc>, window_params = [{transform_indices = @transform_0, window_bounds = array<i64: 8, 256>}, {pipeline_mode = #tpu.pipeline_mode<synchronous>, transform_indices = @transform_1, window_bounds = array<i64: 256, 128>}, {pipeline_mode = #tpu.pipeline_mode<synchronous>, transform_indices = @transform_2, window_bounds = array<i64: 2, 128>}, {transform_indices = @transform_3, window_bounds = array<i64: 8, 128>}]} {
    %c0 = arith.constant 0 : index
    %c0_0 = arith.constant 0 : index
    %0 = vector.load %arg1[%c0, %c0_0] : memref<8x256xbf16, #tpu.memory_space<vmem>>, vector<8x256xbf16>
    %c0_1 = arith.constant 0 : index
    %c0_2 = arith.constant 0 : index
    %1 = vector.load %arg2[%c0_1, %c0_2] : memref<256x128xbf16, #tpu.memory_space<vmem>>, vector<256x128xbf16>
    %cst = arith.constant dense<0.000000e+00> : vector<8x128xf32>
    %2 = tpu.matmul %0, %1, %cst {dimension_numbers = #tpu.dot_dimension_numbers<[1], [0], [0], [1], [0, 0, 1, 1], [], []>} : vector<8x256xbf16>, vector<256x128xbf16>, vector<8x128xf32> -> vector<8x128xf32>
    %c0_3 = arith.constant 0 : index
    %c0_4 = arith.constant 0 : index
    %3 = vector.load %arg3[%c0_3, %c0_4] : memref<2x128xf32, #tpu.memory_space<vmem>>, vector<1x128xf32>
    %4 = vector.broadcast %3 : vector<1x128xf32> to vector<8x128xf32>
    %5 = arith.mulf %2, %4 : vector<8x128xf32>
    %c1 = arith.constant 1 : index
    %c0_5 = arith.constant 0 : index
    %6 = vector.load %arg3[%c1, %c0_5] : memref<2x128xf32, #tpu.memory_space<vmem>>, vector<1x128xf32>
    %7 = vector.broadcast %6 : vector<1x128xf32> to vector<8x128xf32>
    %8 = arith.addf %5, %7 : vector<8x128xf32>
    %cst_6 = arith.constant 0.000000e+00 : f32
    %9 = vector.broadcast %cst_6 : f32 to vector<8x128xf32>
    %10 = arith.maximumf %8, %9 : vector<8x128xf32>
    %11 = arith.truncf %10 : vector<8x128xf32> to vector<8x128xbf16>
    %c0_7 = arith.constant 0 : index
    %c0_8 = arith.constant 0 : index
    %12 = vector.load %arg4[%c0_7, %c0_8] : memref<8x128xbf16, #tpu.memory_space<vmem>>, vector<8x128xbf16>
    tpu.vector_store %arg4[%c0_7, %c0_8], %11 {strides = array<i32>} : memref<8x128xbf16, #tpu.memory_space<vmem>>, vector<8x128xbf16>,
    return
  }
  func.func @transform_0(%arg0: i32) -> (i32, i32) {
    %c0_i32 = arith.constant 0 : i32
    %c0_i32_0 = arith.constant 0 : i32
    return %arg0, %c0_i32 : i32, i32
  }
  func.func @transform_1(%arg0: i32) -> (i32, i32) {
    %c0_i32 = arith.constant 0 : i32
    %c0_i32_0 = arith.constant 0 : i32
    %c0_i32_1 = arith.constant 0 : i32
    return %c0_i32, %c0_i32_0 : i32, i32
  }
  func.func @transform_2(%arg0: i32) -> (i32, i32) {
    %c0_i32 = arith.constant 0 : i32
    %c0_i32_0 = arith.constant 0 : i32
    %c0_i32_1 = arith.constant 0 : i32
    return %c0_i32, %c0_i32_0 : i32, i32
  }
  func.func @transform_3(%arg0: i32) -> (i32, i32) {
    %c0_i32 = arith.constant 0 : i32
    %c0_i32_0 = arith.constant 0 : i32
    return %arg0, %c0_i32 : i32, i32
  }
}

module attributes {stable_mosaic.version = 11 : i64} {
  func.func @_matmul_bn_kernel(%arg0: i32, %arg1: memref<8x128xbf16, #tpu.memory_space<vmem>>, %arg2: memref<128x256xbf16, #tpu.memory_space<vmem>>, %arg3: memref<2x256xf32, #tpu.memory_space<vmem>>, %arg4: memref<8x256xbf16, #tpu.memory_space<vmem>>) attributes {dimension_semantics = [#tpu.dimension_semantics<parallel>], iteration_bounds = array<i64: 1>, scalar_prefetch = 0 : i64, scratch_operands = 0 : i64, tpu.core_type = #tpu.core_type<tc>, window_params = [{transform_indices = @transform_0, window_bounds = array<i64: 8, 128>}, {pipeline_mode = #tpu.pipeline_mode<synchronous>, transform_indices = @transform_1, window_bounds = array<i64: 128, 256>}, {pipeline_mode = #tpu.pipeline_mode<synchronous>, transform_indices = @transform_2, window_bounds = array<i64: 2, 256>}, {transform_indices = @transform_3, window_bounds = array<i64: 8, 256>}]} {
    %c0 = arith.constant 0 : index
    %c0_0 = arith.constant 0 : index
    %0 = vector.load %arg1[%c0, %c0_0] : memref<8x128xbf16, #tpu.memory_space<vmem>>, vector<8x128xbf16>
    %c0_1 = arith.constant 0 : index
    %c0_2 = arith.constant 0 : index
    %1 = vector.load %arg2[%c0_1, %c0_2] : memref<128x256xbf16, #tpu.memory_space<vmem>>, vector<128x256xbf16>
    %cst = arith.constant dense<0.000000e+00> : vector<8x256xf32>
    %2 = tpu.matmul %0, %1, %cst {dimension_numbers = #tpu.dot_dimension_numbers<[1], [0], [0], [1], [0, 0, 1, 1], [], []>} : vector<8x128xbf16>, vector<128x256xbf16>, vector<8x256xf32> -> vector<8x256xf32>
    %c0_3 = arith.constant 0 : index
    %c0_4 = arith.constant 0 : index
    %3 = vector.load %arg3[%c0_3, %c0_4] : memref<2x256xf32, #tpu.memory_space<vmem>>, vector<1x256xf32>
    %4 = vector.broadcast %3 : vector<1x256xf32> to vector<8x256xf32>
    %5 = arith.mulf %2, %4 : vector<8x256xf32>
    %c1 = arith.constant 1 : index
    %c0_5 = arith.constant 0 : index
    %6 = vector.load %arg3[%c1, %c0_5] : memref<2x256xf32, #tpu.memory_space<vmem>>, vector<1x256xf32>
    %7 = vector.broadcast %6 : vector<1x256xf32> to vector<8x256xf32>
    %8 = arith.addf %5, %7 : vector<8x256xf32>
    %9 = arith.truncf %8 : vector<8x256xf32> to vector<8x256xbf16>
    %c0_6 = arith.constant 0 : index
    %c0_7 = arith.constant 0 : index
    %10 = vector.load %arg4[%c0_6, %c0_7] : memref<8x256xbf16, #tpu.memory_space<vmem>>, vector<8x256xbf16>
    tpu.vector_store %arg4[%c0_6, %c0_7], %9 {strides = array<i32>} : memref<8x256xbf16, #tpu.memory_space<vmem>>, vector<8x256xbf16>,
    return
  }
  func.func @transform_0(%arg0: i32) -> (i32, i32) {
    %c0_i32 = arith.constant 0 : i32
    %c0_i32_0 = arith.constant 0 : i32
    return %arg0, %c0_i32 : i32, i32
  }
  func.func @transform_1(%arg0: i32) -> (i32, i32) {
    %c0_i32 = arith.constant 0 : i32
    %c0_i32_0 = arith.constant 0 : i32
    %c0_i32_1 = arith.constant 0 : i32
    return %c0_i32, %c0_i32_0 : i32, i32
  }
  func.func @transform_2(%arg0: i32) -> (i32, i32) {
    %c0_i32 = arith.constant 0 : i32
    %c0_i32_0 = arith.constant 0 : i32
    %c0_i32_1 = arith.constant 0 : i32
    return %c0_i32, %c0_i32_0 : i32, i32
  }
  func.func @transform_3(%arg0: i32) -> (i32, i32) {
    %c0_i32 = arith.constant 0 : i32
    %c0_i32_0 = arith.constant 0 : i32
    return %arg0, %c0_i32 : i32, i32
  }
}

module attributes {stable_mosaic.version = 11 : i64} {
  func.func @_bottleneck_tail_kernel(%arg0: i32, %arg1: memref<8x1152xbf16, #tpu.memory_space<vmem>>, %arg2: memref<1152x128xbf16, #tpu.memory_space<vmem>>, %arg3: memref<2x128xf32, #tpu.memory_space<vmem>>, %arg4: memref<128x256xbf16, #tpu.memory_space<vmem>>, %arg5: memref<2x256xf32, #tpu.memory_space<vmem>>, %arg6: memref<8x256xbf16, #tpu.memory_space<vmem>>, %arg7: memref<8x256xbf16, #tpu.memory_space<vmem>>) attributes {dimension_semantics = [#tpu.dimension_semantics<parallel>], iteration_bounds = array<i64: 1>, scalar_prefetch = 0 : i64, scratch_operands = 0 : i64, tpu.core_type = #tpu.core_type<tc>, window_params = [{transform_indices = @transform_0, window_bounds = array<i64: 8, 1152>}, {pipeline_mode = #tpu.pipeline_mode<synchronous>, transform_indices = @transform_1, window_bounds = array<i64: 1152, 128>}, {pipeline_mode = #tpu.pipeline_mode<synchronous>, transform_indices = @transform_2, window_bounds = array<i64: 2, 128>}, {pipeline_mode = #tpu.pipeline_mode<synchronous>, transform_indices = @transform_3, window_bounds = array<i64: 128, 256>}, {pipeline_mode = #tpu.pipeline_mode<synchronous>, transform_indices = @transform_4, window_bounds = array<i64: 2, 256>}, {transform_indices = @transform_5, window_bounds = array<i64: 8, 256>}, {transform_indices = @transform_6, window_bounds = array<i64: 8, 256>}]} {
    %c0 = arith.constant 0 : index
    %c0_0 = arith.constant 0 : index
    %0 = vector.load %arg1[%c0, %c0_0] : memref<8x1152xbf16, #tpu.memory_space<vmem>>, vector<8x1152xbf16>
    %c0_1 = arith.constant 0 : index
    %c0_2 = arith.constant 0 : index
    %1 = vector.load %arg2[%c0_1, %c0_2] : memref<1152x128xbf16, #tpu.memory_space<vmem>>, vector<1152x128xbf16>
    %cst = arith.constant dense<0.000000e+00> : vector<8x128xf32>
    %2 = tpu.matmul %0, %1, %cst {dimension_numbers = #tpu.dot_dimension_numbers<[1], [0], [0], [1], [0, 0, 1, 1], [], []>} : vector<8x1152xbf16>, vector<1152x128xbf16>, vector<8x128xf32> -> vector<8x128xf32>
    %c0_3 = arith.constant 0 : index
    %c0_4 = arith.constant 0 : index
    %3 = vector.load %arg3[%c0_3, %c0_4] : memref<2x128xf32, #tpu.memory_space<vmem>>, vector<1x128xf32>
    %4 = vector.broadcast %3 : vector<1x128xf32> to vector<8x128xf32>
    %5 = arith.mulf %2, %4 : vector<8x128xf32>
    %c1 = arith.constant 1 : index
    %c0_5 = arith.constant 0 : index
    %6 = vector.load %arg3[%c1, %c0_5] : memref<2x128xf32, #tpu.memory_space<vmem>>, vector<1x128xf32>
    %7 = vector.broadcast %6 : vector<1x128xf32> to vector<8x128xf32>
    %8 = arith.addf %5, %7 : vector<8x128xf32>
    %cst_6 = arith.constant 0.000000e+00 : f32
    %9 = vector.broadcast %cst_6 : f32 to vector<8x128xf32>
    %10 = arith.maximumf %8, %9 : vector<8x128xf32>
    %11 = arith.truncf %10 : vector<8x128xf32> to vector<8x128xbf16>
    %c0_7 = arith.constant 0 : index
    %c0_8 = arith.constant 0 : index
    %12 = vector.load %arg4[%c0_7, %c0_8] : memref<128x256xbf16, #tpu.memory_space<vmem>>, vector<128x256xbf16>
    %cst_9 = arith.constant dense<0.000000e+00> : vector<8x256xf32>
    %13 = tpu.matmul %11, %12, %cst_9 {dimension_numbers = #tpu.dot_dimension_numbers<[1], [0], [0], [1], [0, 0, 1, 1], [], []>} : vector<8x128xbf16>, vector<128x256xbf16>, vector<8x256xf32> -> vector<8x256xf32>
    %c0_10 = arith.constant 0 : index
    %c0_11 = arith.constant 0 : index
    %14 = vector.load %arg5[%c0_10, %c0_11] : memref<2x256xf32, #tpu.memory_space<vmem>>, vector<1x256xf32>
    %15 = vector.broadcast %14 : vector<1x256xf32> to vector<8x256xf32>
    %16 = arith.mulf %13, %15 : vector<8x256xf32>
    %c1_12 = arith.constant 1 : index
    %c0_13 = arith.constant 0 : index
    %17 = vector.load %arg5[%c1_12, %c0_13] : memref<2x256xf32, #tpu.memory_space<vmem>>, vector<1x256xf32>
    %18 = vector.broadcast %17 : vector<1x256xf32> to vector<8x256xf32>
    %19 = arith.addf %16, %18 : vector<8x256xf32>
    %c0_14 = arith.constant 0 : index
    %c0_15 = arith.constant 0 : index
    %20 = vector.load %arg6[%c0_14, %c0_15] : memref<8x256xbf16, #tpu.memory_space<vmem>>, vector<8x256xbf16>
    %21 = arith.extf %20 : vector<8x256xbf16> to vector<8x256xf32>
    %22 = arith.addf %19, %21 : vector<8x256xf32>
    %cst_16 = arith.constant 0.000000e+00 : f32
    %23 = vector.broadcast %cst_16 : f32 to vector<8x256xf32>
    %24 = arith.maximumf %22, %23 : vector<8x256xf32>
    %25 = arith.truncf %24 : vector<8x256xf32> to vector<8x256xbf16>
    %c0_17 = arith.constant 0 : index
    %c0_18 = arith.constant 0 : index
    %26 = vector.load %arg7[%c0_17, %c0_18] : memref<8x256xbf16, #tpu.memory_space<vmem>>, vector<8x256xbf16>
    tpu.vector_store %arg7[%c0_17, %c0_18], %25 {strides = array<i32>} : memref<8x256xbf16, #tpu.memory_space<vmem>>, vector<8x256xbf16>,
    return
  }
  func.func @transform_0(%arg0: i32) -> (i32, i32) {
    %c0_i32 = arith.constant 0 : i32
    %c0_i32_0 = arith.constant 0 : i32
    return %arg0, %c0_i32 : i32, i32
  }
  func.func @transform_1(%arg0: i32) -> (i32, i32) {
    %c0_i32 = arith.constant 0 : i32
    %c0_i32_0 = arith.constant 0 : i32
    %c0_i32_1 = arith.constant 0 : i32
    return %c0_i32, %c0_i32_0 : i32, i32
  }
  func.func @transform_2(%arg0: i32) -> (i32, i32) {
    %c0_i32 = arith.constant 0 : i32
    %c0_i32_0 = arith.constant 0 : i32
    %c0_i32_1 = arith.constant 0 : i32
    return %c0_i32, %c0_i32_0 : i32, i32
  }
  func.func @transform_3(%arg0: i32) -> (i32, i32) {
    %c0_i32 = arith.constant 0 : i32
    %c0_i32_0 = arith.constant 0 : i32
    %c0_i32_1 = arith.constant 0 : i32
    return %c0_i32, %c0_i32_0 : i32, i32
  }
  func.func @transform_4(%arg0: i32) -> (i32, i32) {
    %c0_i32 = arith.constant 0 : i32
    %c0_i32_0 = arith.constant 0 : i32
    %c0_i32_1 = arith.constant 0 : i32
    return %c0_i32, %c0_i32_0 : i32, i32
  }
  func.func @transform_5(%arg0: i32) -> (i32, i32) {
    %c0_i32 = arith.constant 0 : i32
    %c0_i32_0 = arith.constant 0 : i32
    return %arg0, %c0_i32 : i32, i32
  }
  func.func @transform_6(%arg0: i32) -> (i32, i32) {
    %c0_i32 = arith.constant 0 : i32
    %c0_i32_0 = arith.constant 0 : i32
    return %arg0, %c0_i32 : i32, i32
  }
}

module attributes {stable_mosaic.version = 11 : i64} {
  func.func @_matmul_bn_kernel(%arg0: i32, %arg1: memref<2x256xbf16, #tpu.memory_space<vmem>>, %arg2: memref<256x1024xbf16, #tpu.memory_space<vmem>>, %arg3: memref<2x1024xf32, #tpu.memory_space<vmem>>, %arg4: memref<2x1024xf32, #tpu.memory_space<vmem>>) attributes {dimension_semantics = [#tpu.dimension_semantics<parallel>], iteration_bounds = array<i64: 1>, scalar_prefetch = 0 : i64, scratch_operands = 0 : i64, tpu.core_type = #tpu.core_type<tc>, window_params = [{transform_indices = @transform_0, window_bounds = array<i64: 2, 256>}, {pipeline_mode = #tpu.pipeline_mode<synchronous>, transform_indices = @transform_1, window_bounds = array<i64: 256, 1024>}, {pipeline_mode = #tpu.pipeline_mode<synchronous>, transform_indices = @transform_2, window_bounds = array<i64: 2, 1024>}, {transform_indices = @transform_3, window_bounds = array<i64: 2, 1024>}]} {
    %c0 = arith.constant 0 : index
    %c0_0 = arith.constant 0 : index
    %0 = vector.load %arg1[%c0, %c0_0] : memref<2x256xbf16, #tpu.memory_space<vmem>>, vector<2x256xbf16>
    %c0_1 = arith.constant 0 : index
    %c0_2 = arith.constant 0 : index
    %1 = vector.load %arg2[%c0_1, %c0_2] : memref<256x1024xbf16, #tpu.memory_space<vmem>>, vector<256x1024xbf16>
    %cst = arith.constant dense<0.000000e+00> : vector<2x1024xf32>
    %2 = tpu.matmul %0, %1, %cst {dimension_numbers = #tpu.dot_dimension_numbers<[1], [0], [0], [1], [0, 0, 1, 1], [], []>} : vector<2x256xbf16>, vector<256x1024xbf16>, vector<2x1024xf32> -> vector<2x1024xf32>
    %c0_3 = arith.constant 0 : index
    %c0_4 = arith.constant 0 : index
    %3 = vector.load %arg3[%c0_3, %c0_4] : memref<2x1024xf32, #tpu.memory_space<vmem>>, vector<1x1024xf32>
    %4 = vector.broadcast %3 : vector<1x1024xf32> to vector<2x1024xf32>
    %5 = arith.mulf %2, %4 : vector<2x1024xf32>
    %c1 = arith.constant 1 : index
    %c0_5 = arith.constant 0 : index
    %6 = vector.load %arg3[%c1, %c0_5] : memref<2x1024xf32, #tpu.memory_space<vmem>>, vector<1x1024xf32>
    %7 = vector.broadcast %6 : vector<1x1024xf32> to vector<2x1024xf32>
    %8 = arith.addf %5, %7 : vector<2x1024xf32>
    %c0_6 = arith.constant 0 : index
    %c0_7 = arith.constant 0 : index
    %9 = vector.load %arg4[%c0_6, %c0_7] : memref<2x1024xf32, #tpu.memory_space<vmem>>, vector<2x1024xf32>
    tpu.vector_store %arg4[%c0_6, %c0_7], %8 {strides = array<i32>} : memref<2x1024xf32, #tpu.memory_space<vmem>>, vector<2x1024xf32>,
    return
  }
  func.func @transform_0(%arg0: i32) -> (i32, i32) {
    %c0_i32 = arith.constant 0 : i32
    %c0_i32_0 = arith.constant 0 : i32
    return %arg0, %c0_i32 : i32, i32
  }
  func.func @transform_1(%arg0: i32) -> (i32, i32) {
    %c0_i32 = arith.constant 0 : i32
    %c0_i32_0 = arith.constant 0 : i32
    %c0_i32_1 = arith.constant 0 : i32
    return %c0_i32, %c0_i32_0 : i32, i32
  }
  func.func @transform_2(%arg0: i32) -> (i32, i32) {
    %c0_i32 = arith.constant 0 : i32
    %c0_i32_0 = arith.constant 0 : i32
    %c0_i32_1 = arith.constant 0 : i32
    return %c0_i32, %c0_i32_0 : i32, i32
  }
  func.func @transform_3(%arg0: i32) -> (i32, i32) {
    %c0_i32 = arith.constant 0 : i32
    %c0_i32_0 = arith.constant 0 : i32
    return %arg0, %c0_i32 : i32, i32
  }
}

</mosaic_0001>

<llo_original>
// kernel: resnetfc_forward.38
$region0: #{resnetfc_forward.38}
  #allocation0 [shape = 'u32[]', space=smem, size = 0x4, offset = 0x4, fixed_abs, tag = 'smem constant byte address 0x4 - core index']
  #allocation1 [shape = 'u32[144,128]{1,0:T(1,128)}', space=vmem, size = 0x12000, scoped, tag = 'internal scratch']
  %s0 = inlined_call_operand.vmem [shape: bf16[2048,160], index: 0, kind: input, shape index: {}]
  %s1 = inlined_call_operand.vmem [shape: bf16[160,128], index: 1, kind: input, shape index: {}]
  %s2 = inlined_call_operand.vmem [shape: f32[2,128], index: 2, kind: input, shape index: {}]
  %s3 = inlined_call_operand.vmem [shape: bf16[2048,128], index: 3, kind: output, shape index: {}]
  %s4 = sld [smem:[#allocation0]]
  $region45: #{resnetfc_forward.38} parent=0
    _
  %s6 = ssub.s32 1, %s4
  %s7 = scalar_select 0, %s6, %s4
  loop: start=0, step=1, limit=10
  $region2: #{resnetfc_forward.38} parent=0 // loop_pre_header
    _
  $region3: #{resnetfc_forward.38} parent=0 // loop_header
    %s9 = sphi 0, %s13
    %p10 = scmp.ge.s32.totalorder %s9, 10
    %s19 = sphi 0, %s21
    %s22 = sphi 0, %s19
    %s23 = sphi 0, %s22
    %s39 = sphi 0, %s23
    %s43 = sphi 0, %s43
    %s45 = sphi 0, %s43
    %s46 = sphi 0, %s45
    %s60 = sphi 0, %s46
    %s64 = sphi 0, %s64
    %s66 = sphi 0, %s64
    %s67 = sphi 0, %s66
    %s81 = sphi 0, %s67
    %s87 = sphi 0, %s89
    %s90 = sphi 0, %s87
    %s91 = sphi 0, %s90
    %s107 = sphi 0, %s91
  $region4: #{resnetfc_forward.38} parent=0 // loop_header_branch
    %12 = sbr.rel (%p10) target = $region8
  $region5: #{resnetfc_forward.38} parent=0 // loop_body
    %s14 = ssub.s32 %s9, 1
    %s15 = ssub.s32 %s9, 2
    %s16 = sadd.s32 %s9, 1
    %s17 = ssub.s32 %s9, %s16
    %p18 = scmp.eq.s32.totalorder %s17, 0
    %s20 = sadd.s32 %s19, 1
    %s21 = scalar_select %p18, %s19, %s20
    %p24 = pneg %p18
    %p25 = scmp.eq.s32.totalorder %s9, 7
    %p26 = por %p24, %p25
    %p27 = scmp.ne.s32.totalorder %s19, %s22
    %p28 = scmp.eq.s32.totalorder %s9, 0
    %p29 = por %p27, %p28
    %p30 = scmp.ne.s32.totalorder %s19, %s22
    %p31 = scmp.eq.s32.totalorder %s14, 7
    %p32 = por %p30, %p31
    %p33 = scmp.ne.s32.totalorder %s22, %s23
    %p34 = scmp.eq.s32.totalorder %s14, 0
    %p35 = por %p33, %p34
    %p36 = scmp.ne.s32.totalorder %s22, %s23
    %p37 = scmp.eq.s32.totalorder %s15, 7
    %p38 = por %p36, %p37
    %p40 = scmp.ne.s32.totalorder %s23, %s39
    %p41 = scmp.eq.s32.totalorder %s15, 0
    %p42 = por %p40, %p41
    %s44 = sadd.s32 %s43, 1
    %p47 = scmp.eq.s32.totalorder %s9, 7
    %p48 = scmp.ne.s32.totalorder %s43, %s45
    %p49 = scmp.eq.s32.totalorder %s9, 0
    %p50 = por %p48, %p49
    %p51 = scmp.ne.s32.totalorder %s43, %s45
    %p52 = scmp.eq.s32.totalorder %s14, 7
    %p53 = por %p51, %p52
    %p54 = scmp.ne.s32.totalorder %s45, %s46
    %p55 = scmp.eq.s32.totalorder %s14, 0
    %p56 = por %p54, %p55
    %p57 = scmp.ne.s32.totalorder %s45, %s46
    %p58 = scmp.eq.s32.totalorder %s15, 7
    %p59 = por %p57, %p58
    %p61 = scmp.ne.s32.totalorder %s46, %s60
    %p62 = scmp.eq.s32.totalorder %s15, 0
    %p63 = por %p61, %p62
    %s65 = sadd.s32 %s64, 1
    %p68 = scmp.eq.s32.totalorder %s9, 7
    %p69 = scmp.ne.s32.totalorder %s64, %s66
    %p70 = scmp.eq.s32.totalorder %s9, 0
    %p71 = por %p69, %p70
    %p72 = scmp.ne.s32.totalorder %s64, %s66
    %p73 = scmp.eq.s32.totalorder %s14, 7
    %p74 = por %p72, %p73
    %p75 = scmp.ne.s32.totalorder %s66, %s67
    %p76 = scmp.eq.s32.totalorder %s14, 0
    %p77 = por %p75, %p76
    %p78 = scmp.ne.s32.totalorder %s66, %s67
    %p79 = scmp.eq.s32.totalorder %s15, 7
    %p80 = por %p78, %p79
    %p82 = scmp.ne.s32.totalorder %s67, %s81
    %p83 = scmp.eq.s32.totalorder %s15, 0
    %p84 = por %p82, %p83
    %s85 = ssub.s32 %s9, %s16
    %p86 = scmp.eq.s32.totalorder %s85, 0
    %s88 = sadd.s32 %s87, 1
    %s89 = scalar_select %p86, %s87, %s88
    %p92 = pneg %p86
    %p93 = scmp.eq.s32.totalorder %s9, 7
    %p94 = por %p92, %p93
    %p95 = scmp.ne.s32.totalorder %s87, %s90
    %p96 = scmp.eq.s32.totalorder %s9, 0
    %p97 = por %p95, %p96
    %p98 = scmp.ne.s32.totalorder %s87, %s90
    %p99 = scmp.eq.s32.totalorder %s14, 7
    %p100 = por %p98, %p99
    %p101 = scmp.ne.s32.totalorder %s90, %s91
    %p102 = scmp.eq.s32.totalorder %s14, 0
    %p103 = por %p101, %p102
    %p104 = scmp.ne.s32.totalorder %s90, %s91
    %p105 = scmp.eq.s32.totalorder %s15, 7
    %p106 = por %p104, %p105
    %p108 = scmp.ne.s32.totalorder %s91, %s107
    %p109 = scmp.eq.s32.totalorder %s15, 0
    %p110 = por %p108, %p109
    %p111 = scmp.le.s32.totalorder 1, %s9
    %p112 = scmp.lt.s32.totalorder %s9, 9
    %p113 = pnand %p111, %p112
    %p114 = pneg %p113
    // Predicated region
    $region9: #{resnetfc_forward.38} parent=5 // pred_check
      _
    $region10: #{resnetfc_forward.38} parent=5 // pred_check_branch
      %116 = sbr.rel (%p113) target = $region12
    $region11: #{resnetfc_forward.38} parent=5 // pred_region
      %s117 = ssub.s32 %s9, 1
      // Predicated region
      $region13: #{resnetfc_forward.38} parent=11 // pred_check
        %p118 = pneg %p56
      $region14: #{resnetfc_forward.38} parent=11 // pred_check_branch
        %120 = sbr.rel (%p118) target = $region16
      $region15: #{resnetfc_forward.38} parent=11 // pred_region
        _
      $region16: #{resnetfc_forward.38} parent=11 // pred_fallthru
        _
      // Predicated region
      $region17: #{resnetfc_forward.38} parent=11 // pred_check
        %p121 = pneg %p77
      $region18: #{resnetfc_forward.38} parent=11 // pred_check_branch
        %123 = sbr.rel (%p121) target = $region20
      $region19: #{resnetfc_forward.38} parent=11 // pred_region
        _
      $region20: #{resnetfc_forward.38} parent=11 // pred_fallthru
        _
    $region12: #{resnetfc_forward.38} parent=5 // pred_fallthru
      _
    %p124 = scmp.lt.s32.totalorder %s9, 8
    // Predicated region
    $region21: #{resnetfc_forward.38} parent=5 // pred_check
      %p125 = pneg %p124
    $region22: #{resnetfc_forward.38} parent=5 // pred_check_branch
      %127 = sbr.rel (%p125) target = $region24
    $region23: #{resnetfc_forward.38} parent=5 // pred_region
      // Predicated region
      $region25: #{resnetfc_forward.38} parent=23 // pred_check
        %p128 = pneg %p29
      $region26: #{resnetfc_forward.38} parent=23 // pred_check_branch
        %130 = sbr.rel (%p128) target = $region28
      $region27: #{resnetfc_forward.38} parent=23 // pred_region
        %s131 = smul.u32 32, %s9
        %p132 = scmp.lt.s32.totalorder %s131, 255
        %s133 = scalar_select %p132, %s131, 255
        %s134 = smul.addr %s133, 2
        %s135 = smul.addr %s134, 4
        %s136 = scalar_lea.vmem %s0, %s135
        %s137 = smul.u32 32, %s9
      $region28: #{resnetfc_forward.38} parent=23 // pred_fallthru
        _
    $region24: #{resnetfc_forward.38} parent=5 // pred_fallthru
      _
    %p138 = scmp.le.s32.totalorder 1, %s9
    %p139 = scmp.lt.s32.totalorder %s9, 9
    %p140 = pnand %p138, %p139
    %p141 = pneg %p140
    // Predicated region
    $region29: #{resnetfc_forward.38} parent=5 // pred_check
      _
    $region30: #{resnetfc_forward.38} parent=5 // pred_check_branch
      %143 = sbr.rel (%p140) target = $region32
    $region31: #{resnetfc_forward.38} parent=5 // pred_region
      %s144 = ssub.s32 %s9, 1
      %s145 = smul.u32 32, %s14
      %p146 = scmp.lt.s32.totalorder %s145, 255
      %s147 = scalar_select %p146, %s145, 255
      %s148 = smul.addr %s147, 2
      %s149 = smul.addr %s148, 4
      %s150 = scalar_lea.vmem %s0, %s149
      %p151 = pneg %p35
      %p152 = pneg %p32
      %p153 = pneg %p56
      %p154 = pneg %p53
      %p155 = pneg %p77
      %p156 = pneg %p74
      %p157 = pneg %p103
      %p158 = pneg %p100
      %s159 = smul.u32 32, %s14
      %p160 = scmp.lt.s32.totalorder %s159, 255
      %s161 = scalar_select %p160, %s159, 255
      %s162 = smul.addr %s161, 4
      %s163 = scalar_lea.vmem %s3, %s162
      %s164 = smul.u32 32, %s14
      %p165 = scmp.lt.s32.totalorder %s164, 255
      %s166 = scalar_select %p165, %s164, 255
      %s167 = smul.addr %s166, 2
      %s168 = smul.addr %s167, 4
      %s169 = scalar_lea.vmem %s0, %s168
      %s170 = smul.u32 32, %s14
      %s171 = smul.u32 32, %s14
      %p172 = scmp.lt.s32.totalorder %s171, 255
      %s173 = scalar_select %p172, %s171, 255
      %s174 = smul.addr %s173, 4
      %s175 = scalar_lea.vmem %s3, %s174
      %s176 = smul.u32 32, %s14
      %v178 = vld [vmem:[%s169] sm:$0xff]
      %v179 = vld [vmem:[%s169 + $0x8] sm:$0xff]
      %v180 = vld [vmem:[%s169 + $0x10] sm:$0xff]
      %v181 = vld [vmem:[%s169 + $0x18] sm:$0xff]
      %v182 = vld [vmem:[%s169 + $0x20] sm:$0xff]
      %v183 = vld [vmem:[%s169 + $0x28] sm:$0xff]
      %v184 = vld [vmem:[%s169 + $0x30] sm:$0xff]
      %v185 = vld [vmem:[%s169 + $0x38] sm:$0xff]
      %v186 = vld [vmem:[%s169 + $0x40] sm:$0xff]
      %v187 = vld [vmem:[%s169 + $0x48] sm:$0xff]
      %v188 = vld [vmem:[%s169 + $0x50] sm:$0xff]
      %v189 = vld [vmem:[%s169 + $0x58] sm:$0xff]
      %v190 = vld [vmem:[%s169 + $0x60] sm:$0xff]
      %v191 = vld [vmem:[%s169 + $0x68] sm:$0xff]
      %v192 = vld [vmem:[%s169 + $0x70] sm:$0xff]
      %v193 = vld [vmem:[%s169 + $0x78] sm:$0xff]
      %v194 = vld [vmem:[%s169 + $0x80] sm:$0xff]
      %v195 = vld [vmem:[%s169 + $0x88] sm:$0xff]
      %v196 = vld [vmem:[%s169 + $0x90] sm:$0xff]
      %v197 = vld [vmem:[%s169 + $0x98] sm:$0xff]
      %v198 = vld [vmem:[%s169 + $0xa0] sm:$0xff]
      %v199 = vld [vmem:[%s169 + $0xa8] sm:$0xff]
      %v200 = vld [vmem:[%s169 + $0xb0] sm:$0xff]
      %v201 = vld [vmem:[%s169 + $0xb8] sm:$0xff]
      %v202 = vld [vmem:[%s169 + $0xc0] sm:$0xff]
      %v203 = vld [vmem:[%s169 + $0xc8] sm:$0xff]
      %v204 = vld [vmem:[%s169 + $0xd0] sm:$0xff]
      %v205 = vld [vmem:[%s169 + $0xd8] sm:$0xff]
      %v206 = vld [vmem:[%s169 + $0xe0] sm:$0xff]
      %v207 = vld [vmem:[%s169 + $0xe8] sm:$0xff]
      %v208 = vld [vmem:[%s169 + $0xf0] sm:$0xff]
      %v209 = vld [vmem:[%s169 + $0xf8] sm:$0xff]
      %v210 = vld [vmem:[%s1] sm:$0xf]
      %v211 = vld [vmem:[%s1 + $0x4] sm:$0xf]
      %v212 = vld [vmem:[%s1 + $0x8] sm:$0xf]
      %v213 = vld [vmem:[%s1 + $0xc] sm:$0xf]
      %v214 = vld [vmem:[%s1 + $0x10] sm:$0xf]
      %v215 = vld [vmem:[%s1 + $0x14] sm:$0xf]
      %v216 = vld [vmem:[%s1 + $0x18] sm:$0xf]
      %v217 = vld [vmem:[%s1 + $0x1c] sm:$0xf]
      %v218 = vld [vmem:[%s1 + $0x20] sm:$0xf]
      %v219 = vld [vmem:[%s1 + $0x24] sm:$0xf]
      %v220 = vld [vmem:[%s1 + $0x28] sm:$0xf]
      %v221 = vld [vmem:[%s1 + $0x2c] sm:$0xf]
      %v222 = vld [vmem:[%s1 + $0x30] sm:$0xf]
      %v223 = vld [vmem:[%s1 + $0x34] sm:$0xf]
      %v224 = vld [vmem:[%s1 + $0x38] sm:$0xf]
      %v225 = vld [vmem:[%s1 + $0x3c] sm:$0xf]
      %v226 = vld [vmem:[%s1 + $0x40] sm:$0xf]
      %v227 = vld [vmem:[%s1 + $0x44] sm:$0xf]
      %v228 = vld [vmem:[%s1 + $0x48] sm:$0xf]
      %v229 = vld [vmem:[%s1 + $0x4c] sm:$0xf]
      %v262 = vunpack.c.l.b16 %v178
      %v263 = vunpack.c.h.b16 %v178
      %v264 = vunpack.c.l.b16 %v179
      %v265 = vunpack.c.h.b16 %v179
      %v266 = vunpack.c.l.b16 %v180
      %v267 = vunpack.c.h.b16 %v180
      %v268 = vunpack.c.l.b16 %v181
      %v269 = vunpack.c.h.b16 %v181
      %v270 = vunpack.c.l.b16 %v182
      %v271 = vunpack.c.h.b16 %v182
      %v272 = vunpack.c.l.b16 %v183
      %v273 = vunpack.c.h.b16 %v183
      %v274 = vunpack.c.l.b16 %v184
      %v275 = vunpack.c.h.b16 %v184
      %v276 = vunpack.c.l.b16 %v185
      %v277 = vunpack.c.h.b16 %v185
      %v278 = vunpack.c.l.b16 %v186
      %v279 = vunpack.c.h.b16 %v186
      %v280 = vunpack.c.l.b16 %v187
      %v281 = vunpack.c.h.b16 %v187
      %v282 = vunpack.c.l.b16 %v188
      %v283 = vunpack.c.h.b16 %v188
      %v284 = vunpack.c.l.b16 %v189
      %v285 = vunpack.c.h.b16 %v189
      %v286 = vunpack.c.l.b16 %v190
      %v287 = vunpack.c.h.b16 %v190
      %v288 = vunpack.c.l.b16 %v191
      %v289 = vunpack.c.h.b16 %v191
      %v290 = vunpack.c.l.b16 %v192
      %v291 = vunpack.c.h.b16 %v192
      %v292 = vunpack.c.l.b16 %v193
      %v293 = vunpack.c.h.b16 %v193
      %v294 = vunpack.c.l.b16 %v194
      %v295 = vunpack.c.h.b16 %v194
      %v296 = vunpack.c.l.b16 %v195
      %v297 = vunpack.c.h.b16 %v195
      %v298 = vunpack.c.l.b16 %v196
      %v299 = vunpack.c.h.b16 %v196
      %v300 = vunpack.c.l.b16 %v197
      %v301 = vunpack.c.h.b16 %v197
      %v302 = vunpack.c.l.b16 %v198
      %v303 = vunpack.c.h.b16 %v198
      %v304 = vunpack.c.l.b16 %v199
      %v305 = vunpack.c.h.b16 %v199
      %v306 = vunpack.c.l.b16 %v200
      %v307 = vunpack.c.h.b16 %v200
      %v308 = vunpack.c.l.b16 %v201
      %v309 = vunpack.c.h.b16 %v201
      %v310 = vunpack.c.l.b16 %v202
      %v311 = vunpack.c.h.b16 %v202
      %v312 = vunpack.c.l.b16 %v203
      %v313 = vunpack.c.h.b16 %v203
      %v314 = vunpack.c.l.b16 %v204
      %v315 = vunpack.c.h.b16 %v204
      %v316 = vunpack.c.l.b16 %v205
      %v317 = vunpack.c.h.b16 %v205
      %v318 = vunpack.c.l.b16 %v206
      %v319 = vunpack.c.h.b16 %v206
      %v320 = vunpack.c.l.b16 %v207
      %v321 = vunpack.c.h.b16 %v207
      %v322 = vunpack.c.l.b16 %v208
      %v323 = vunpack.c.h.b16 %v208
      %v324 = vunpack.c.l.b16 %v209
      %v325 = vunpack.c.h.b16 %v209
      %v326 = vpack.c.b16 %v264, %v262
      %v327 = vpack.c.b16 %v265, %v263
      %v328 = vpack.c.b16 %v268, %v266
      %v329 = vpack.c.b16 %v269, %v267
      %v330 = vpack.c.b16 %v272, %v270
      %v331 = vpack.c.b16 %v273, %v271
      %v332 = vpack.c.b16 %v276, %v274
      %v333 = vpack.c.b16 %v277, %v275
      %v334 = vpack.c.b16 %v280, %v278
      %v335 = vpack.c.b16 %v281, %v279
      %v336 = vpack.c.b16 %v284, %v282
      %v337 = vpack.c.b16 %v285, %v283
      %v338 = vpack.c.b16 %v288, %v286
      %v339 = vpack.c.b16 %v289, %v287
      %v340 = vpack.c.b16 %v292, %v290
      %v341 = vpack.c.b16 %v293, %v291
      %v342 = vpack.c.b16 %v296, %v294
      %v343 = vpack.c.b16 %v297, %v295
      %v344 = vpack.c.b16 %v300, %v298
      %v345 = vpack.c.b16 %v301, %v299
      %v346 = vpack.c.b16 %v304, %v302
      %v347 = vpack.c.b16 %v305, %v303
      %v348 = vpack.c.b16 %v308, %v306
      %v349 = vpack.c.b16 %v309, %v307
      %v350 = vpack.c.b16 %v312, %v310
      %v351 = vpack.c.b16 %v313, %v311
      %v352 = vpack.c.b16 %v316, %v314
      %v353 = vpack.c.b16 %v317, %v315
      %v354 = vpack.c.b16 %v320, %v318
      %v355 = vpack.c.b16 %v321, %v319
      %v356 = vpack.c.b16 %v324, %v322
      %v357 = vpack.c.b16 %v325, %v323
      %v394 = vunpack.c.l.b16 %v210
      %v395 = vunpack.c.l.b16 %v211
      %v396 = vunpack.c.l.b16 %v212
      %v397 = vunpack.c.l.b16 %v213
      %v398 = vunpack.c.l.b16 %v214
      %v399 = vunpack.c.l.b16 %v215
      %v400 = vunpack.c.l.b16 %v216
      %v401 = vunpack.c.l.b16 %v217
      %v402 = vunpack.c.l.b16 %v218
      %v403 = vunpack.c.l.b16 %v219
      %v404 = vunpack.c.l.b16 %v220
      %v405 = vunpack.c.l.b16 %v221
      %v406 = vunpack.c.l.b16 %v222
      %v407 = vunpack.c.l.b16 %v223
      %v408 = vunpack.c.l.b16 %v224
      %v409 = vunpack.c.l.b16 %v225
      %v410 = vunpack.c.l.b16 %v226
      %v411 = vunpack.c.l.b16 %v227
      %v412 = vunpack.c.l.b16 %v228
      %v413 = vunpack.c.l.b16 %v229
      %v414 = vpack.c.b16 %v395, %v394
      %v415 = vpack.c.b16 %v397, %v396
      %v416 = vpack.c.b16 %v399, %v398
      %v417 = vpack.c.b16 %v401, %v400
      %v418 = vpack.c.b16 %v403, %v402
      %v419 = vpack.c.b16 %v405, %v404
      %v420 = vpack.c.b16 %v407, %v406
      %v421 = vpack.c.b16 %v409, %v408
      %v422 = vpack.c.b16 %v411, %v410
      %v423 = vpack.c.b16 %v413, %v412
      %vm434 = vcmask 261120
      %v436 = vsel %vm434, %v327, 0
      %v439 = vsel %vm434, %v329, 0
      %v442 = vsel %vm434, %v331, 0
      %v445 = vsel %vm434, %v333, 0
      %v448 = vsel %vm434, %v335, 0
      %v451 = vsel %vm434, %v337, 0
      %v454 = vsel %vm434, %v339, 0
      %v457 = vsel %vm434, %v341, 0
      %v460 = vsel %vm434, %v343, 0
      %v463 = vsel %vm434, %v345, 0
      %v466 = vsel %vm434, %v347, 0
      %v469 = vsel %vm434, %v349, 0
      %v472 = vsel %vm434, %v351, 0
      %v475 = vsel %vm434, %v353, 0
      %v478 = vsel %vm434, %v355, 0
      %v481 = vsel %vm434, %v357, 0
      %483 = vmatprep.subr.bf16.mxu0 0
      %484 = vmatpush1.bf16.msra.mxu0 %v414
      %485 = vmatprep.subr.bf16.mxu0 0
      %486 = vmatpush1.bf16.msra.mxu0 %v415
      %487 = vmatprep.subr.bf16.mxu0 0
      %488 = vmatpush1.bf16.msra.mxu0 %v416
      %489 = vmatprep.subr.bf16.mxu0 0
      %490 = vmatpush1.bf16.msra.mxu0 %v417
      %491 = vmatprep.subr.bf16.mxu0 0
      %492 = vmatpush1.bf16.msra.mxu0 %v418
      %493 = vmatprep.subr.bf16.mxu0 0
      %494 = vmatpush1.bf16.msra.mxu0 %v419
      %495 = vmatprep.subr.bf16.mxu0 0
      %496 = vmatpush1.bf16.msra.mxu0 %v420
      %497 = vmatprep.subr.bf16.mxu0 0
      %498 = vmatpush1.bf16.msra.mxu0 %v421
      %499 = vmatprep.subr.bf16.mxu0 0
      %500 = vmatpush1.bf16.msra.mxu0 %v422
      %501 = vmatprep.subr.bf16.mxu0 0
      %502 = vmatpush1.bf16.msra.mxu0 %v423
      %503 = vmatprep.subr.bf16.mxu0 0
      %504 = vmatpush1.bf16.msra.mxu0 0
      %505 = vmatprep.subr.bf16.mxu0 0
      %506 = vmatpush1.bf16.msra.mxu0 0
      %507 = vmatprep.subr.bf16.mxu0 0
      %508 = vmatpush1.bf16.msra.mxu0 0
      %509 = vmatprep.subr.bf16.mxu0 0
      %510 = vmatpush1.bf16.msra.mxu0 0
      %511 = vmatprep.subr.bf16.mxu0 0
      %512 = vmatpush1.bf16.msra.mxu0 0
      %513 = vmatprep.subr.bf16.mxu0 0
      %514 = vmatpush1.bf16.msra.mxu0 0
      %515 = vmatprep.mubr.bf16.mxu0 %v436
      %516 = vmatmul.mubr.bf16.gmra.mrb[0].mxu0 %v326
      %v517 = vpop.f32.mrb[0].mxu0
      %v518 = vadd.f32 0.0, %v517
      %v519 = vpop.f32.mrb[0].mxu0
      %v520 = vpop.f32.mrb[0].mxu0
      %v521 = vadd.f32 0.0, %v520
      %v522 = vpop.f32.mrb[0].mxu0
      %523 = vmatprep.mubr.bf16.mxu0 %v439
      %524 = vmatmul.mubr.bf16.gmra.mrb[0].mxu0 %v328
      %v525 = vpop.f32.mrb[0].mxu0
      %v526 = vadd.f32 0.0, %v525
      %v527 = vpop.f32.mrb[0].mxu0
      %v528 = vpop.f32.mrb[0].mxu0
      %v529 = vadd.f32 0.0, %v528
      %v530 = vpop.f32.mrb[0].mxu0
      %531 = vmatprep.mubr.bf16.mxu0 %v442
      %532 = vmatmul.mubr.bf16.gmra.mrb[0].mxu0 %v330
      %v533 = vpop.f32.mrb[0].mxu0
      %v534 = vadd.f32 0.0, %v533
      %v535 = vpop.f32.mrb[0].mxu0
      %v536 = vpop.f32.mrb[0].mxu0
      %v537 = vadd.f32 0.0, %v536
      %v538 = vpop.f32.mrb[0].mxu0
      %539 = vmatprep.mubr.bf16.mxu0 %v445
      %540 = vmatmul.mubr.bf16.gmra.mrb[0].mxu0 %v332
      %v541 = vpop.f32.mrb[0].mxu0
      %v542 = vadd.f32 0.0, %v541
      %v543 = vpop.f32.mrb[0].mxu0
      %v544 = vpop.f32.mrb[0].mxu0
      %v545 = vadd.f32 0.0, %v544
      %v546 = vpop.f32.mrb[0].mxu0
      %547 = vmatprep.mubr.bf16.mxu0 %v448
      %548 = vmatmul.mubr.bf16.gmra.mrb[0].mxu0 %v334
      %v549 = vpop.f32.mrb[0].mxu0
      %v550 = vadd.f32 0.0, %v549
      %v551 = vpop.f32.mrb[0].mxu0
      %v552 = vpop.f32.mrb[0].mxu0
      %v553 = vadd.f32 0.0, %v552
      %v554 = vpop.f32.mrb[0].mxu0
      %555 = vmatprep.mubr.bf16.mxu0 %v451
      %556 = vmatmul.mubr.bf16.gmra.mrb[0].mxu0 %v336
      %v557 = vpop.f32.mrb[0].mxu0
      %v558 = vadd.f32 0.0, %v557
      %v559 = vpop.f32.mrb[0].mxu0
      %v560 = vpop.f32.mrb[0].mxu0
      %v561 = vadd.f32 0.0, %v560
      %v562 = vpop.f32.mrb[0].mxu0
      %563 = vmatprep.mubr.bf16.mxu0 %v454
      %564 = vmatmul.mubr.bf16.gmra.mrb[0].mxu0 %v338
      %v565 = vpop.f32.mrb[0].mxu0
      %v566 = vadd.f32 0.0, %v565
      %v567 = vpop.f32.mrb[0].mxu0
      %v568 = vpop.f32.mrb[0].mxu0
      %v569 = vadd.f32 0.0, %v568
      %v570 = vpop.f32.mrb[0].mxu0
      %571 = vmatprep.mubr.bf16.mxu0 %v457
      %572 = vmatmul.mubr.bf16.gmra.mrb[0].mxu0 %v340
      %v573 = vpop.f32.mrb[0].mxu0
      %v574 = vadd.f32 0.0, %v573
      %v575 = vpop.f32.mrb[0].mxu0
      %v576 = vpop.f32.mrb[0].mxu0
      %v577 = vadd.f32 0.0, %v576
      %v578 = vpop.f32.mrb[0].mxu0
      %579 = vmatprep.mubr.bf16.mxu0 %v460
      %580 = vmatmul.mubr.bf16.gmra.mrb[0].mxu0 %v342
      %v581 = vpop.f32.mrb[0].mxu0
      %v582 = vadd.f32 0.0, %v581
      %v583 = vpop.f32.mrb[0].mxu0
      %v584 = vpop.f32.mrb[0].mxu0
      %v585 = vadd.f32 0.0, %v584
      %v586 = vpop.f32.mrb[0].mxu0
      %587 = vmatprep.mubr.bf16.mxu0 %v463
      %588 = vmatmul.mubr.bf16.gmra.mrb[0].mxu0 %v344
      %v589 = vpop.f32.mrb[0].mxu0
      %v590 = vadd.f32 0.0, %v589
      %v591 = vpop.f32.mrb[0].mxu0
      %v592 = vpop.f32.mrb[0].mxu0
      %v593 = vadd.f32 0.0, %v592
      %v594 = vpop.f32.mrb[0].mxu0
      %595 = vmatprep.mubr.bf16.mxu0 %v466
      %596 = vmatmul.mubr.bf16.gmra.mrb[0].mxu0 %v346
      %v597 = vpop.f32.mrb[0].mxu0
      %v598 = vadd.f32 0.0, %v597
      %v599 = vpop.f32.mrb[0].mxu0
      %v600 = vpop.f32.mrb[0].mxu0
      %v601 = vadd.f32 0.0, %v600
      %v602 = vpop.f32.mrb[0].mxu0
      %603 = vmatprep.mubr.bf16.mxu0 %v469
      %604 = vmatmul.mubr.bf16.gmra.mrb[0].mxu0 %v348
      %v605 = vpop.f32.mrb[0].mxu0
      %v606 = vadd.f32 0.0, %v605
      %v607 = vpop.f32.mrb[0].mxu0
      %v608 = vpop.f32.mrb[0].mxu0
      %v609 = vadd.f32 0.0, %v608
      %v610 = vpop.f32.mrb[0].mxu0
      %611 = vmatprep.mubr.bf16.mxu0 %v472
      %612 = vmatmul.mubr.bf16.gmra.mrb[0].mxu0 %v350
      %v613 = vpop.f32.mrb[0].mxu0
      %v614 = vadd.f32 0.0, %v613
      %v615 = vpop.f32.mrb[0].mxu0
      %v616 = vpop.f32.mrb[0].mxu0
      %v617 = vadd.f32 0.0, %v616
      %v618 = vpop.f32.mrb[0].mxu0
      %619 = vmatprep.mubr.bf16.mxu0 %v475
      %620 = vmatmul.mubr.bf16.gmra.mrb[0].mxu0 %v352
      %v621 = vpop.f32.mrb[0].mxu0
      %v622 = vadd.f32 0.0, %v621
      %v623 = vpop.f32.mrb[0].mxu0
      %v624 = vpop.f32.mrb[0].mxu0
      %v625 = vadd.f32 0.0, %v624
      %v626 = vpop.f32.mrb[0].mxu0
      %627 = vmatprep.mubr.bf16.mxu0 %v478
      %628 = vmatmul.mubr.bf16.gmra.mrb[0].mxu0 %v354
      %v629 = vpop.f32.mrb[0].mxu0
      %v630 = vadd.f32 0.0, %v629
      %v631 = vpop.f32.mrb[0].mxu0
      %v632 = vpop.f32.mrb[0].mxu0
      %v633 = vadd.f32 0.0, %v632
      %v634 = vpop.f32.mrb[0].mxu0
      %635 = vmatprep.mubr.bf16.mxu0 %v481
      %636 = vmatmul.mubr.bf16.gmra.mrb[0].mxu0 %v356
      %v637 = vpop.f32.mrb[0].mxu0
      %v638 = vadd.f32 0.0, %v637
      %v639 = vpop.f32.mrb[0].mxu0
      %v640 = vpop.f32.mrb[0].mxu0
      %v641 = vadd.f32 0.0, %v640
      %v642 = vpop.f32.mrb[0].mxu0
      %643 = vdwg.mxu0
      %v644 = vld [vmem:[%s2] sm:$0x1]
      %v645 = vlaneseq
      %v646 = vshrl.u32 %v645, 7
      %v647 = vsub.s32 0, %v646
      %v648 = vrot.slane %v644, %v647
      %v649 = vmul.f32 %v518, %v648
      %v650 = vmul.f32 %v521, %v648
      %v651 = vmul.f32 %v526, %v648
      %v652 = vmul.f32 %v529, %v648
      %v653 = vmul.f32 %v534, %v648
      %v654 = vmul.f32 %v537, %v648
      %v655 = vmul.f32 %v542, %v648
      %v656 = vmul.f32 %v545, %v648
      %v657 = vmul.f32 %v550, %v648
      %v658 = vmul.f32 %v553, %v648
      %v659 = vmul.f32 %v558, %v648
      %v660 = vmul.f32 %v561, %v648
      %v661 = vmul.f32 %v566, %v648
      %v662 = vmul.f32 %v569, %v648
      %v663 = vmul.f32 %v574, %v648
      %v664 = vmul.f32 %v577, %v648
      %v665 = vmul.f32 %v582, %v648
      %v666 = vmul.f32 %v585, %v648
      %v667 = vmul.f32 %v590, %v648
      %v668 = vmul.f32 %v593, %v648
      %v669 = vmul.f32 %v598, %v648
      %v670 = vmul.f32 %v601, %v648
      %v671 = vmul.f32 %v606, %v648
      %v672 = vmul.f32 %v609, %v648
      %v673 = vmul.f32 %v614, %v648
      %v674 = vmul.f32 %v617, %v648
      %v675 = vmul.f32 %v622, %v648
      %v676 = vmul.f32 %v625, %v648
      %v677 = vmul.f32 %v630, %v648
      %v678 = vmul.f32 %v633, %v648
      %v679 = vmul.f32 %v638, %v648
      %v680 = vmul.f32 %v641, %v648
      %v681 = vld [vmem:[%s2 + $0x1] sm:$0x1]
      %v682 = vlaneseq
      %v683 = vshrl.u32 %v682, 7
      %v684 = vsub.s32 0, %v683
      %v685 = vrot.slane %v681, %v684
      %v686 = vadd.f32 %v649, %v685
      %v687 = vadd.f32 %v650, %v685
      %v688 = vadd.f32 %v651, %v685
      %v689 = vadd.f32 %v652, %v685
      %v690 = vadd.f32 %v653, %v685
      %v691 = vadd.f32 %v654, %v685
      %v692 = vadd.f32 %v655, %v685
      %v693 = vadd.f32 %v656, %v685
      %v694 = vadd.f32 %v657, %v685
      %v695 = vadd.f32 %v658, %v685
      %v696 = vadd.f32 %v659, %v685
      %v697 = vadd.f32 %v660, %v685
      %v698 = vadd.f32 %v661, %v685
      %v699 = vadd.f32 %v662, %v685
      %v700 = vadd.f32 %v663, %v685
      %v701 = vadd.f32 %v664, %v685
      %v702 = vadd.f32 %v665, %v685
      %v703 = vadd.f32 %v666, %v685
      %v704 = vadd.f32 %v667, %v685
      %v705 = vadd.f32 %v668, %v685
      %v706 = vadd.f32 %v669, %v685
      %v707 = vadd.f32 %v670, %v685
      %v708 = vadd.f32 %v671, %v685
      %v709 = vadd.f32 %v672, %v685
      %v710 = vadd.f32 %v673, %v685
      %v711 = vadd.f32 %v674, %v685
      %v712 = vadd.f32 %v675, %v685
      %v713 = vadd.f32 %v676, %v685
      %v714 = vadd.f32 %v677, %v685
      %v715 = vadd.f32 %v678, %v685
      %v716 = vadd.f32 %v679, %v685
      %v717 = vadd.f32 %v680, %v685
      %v718 = vmax.f32 %v686, 0.0
      %v719 = vmax.f32 %v687, 0.0
      %v720 = vmax.f32 %v688, 0.0
      %v721 = vmax.f32 %v689, 0.0
      %v722 = vmax.f32 %v690, 0.0
      %v723 = vmax.f32 %v691, 0.0
      %v724 = vmax.f32 %v692, 0.0
      %v725 = vmax.f32 %v693, 0.0
      %v726 = vmax.f32 %v694, 0.0
      %v727 = vmax.f32 %v695, 0.0
      %v728 = vmax.f32 %v696, 0.0
      %v729 = vmax.f32 %v697, 0.0
      %v730 = vmax.f32 %v698, 0.0
      %v731 = vmax.f32 %v699, 0.0
      %v732 = vmax.f32 %v700, 0.0
      %v733 = vmax.f32 %v701, 0.0
      %v734 = vmax.f32 %v702, 0.0
      %v735 = vmax.f32 %v703, 0.0
      %v736 = vmax.f32 %v704, 0.0
      %v737 = vmax.f32 %v705, 0.0
      %v738 = vmax.f32 %v706, 0.0
      %v739 = vmax.f32 %v707, 0.0
      %v740 = vmax.f32 %v708, 0.0
      %v741 = vmax.f32 %v709, 0.0
      %v742 = vmax.f32 %v710, 0.0
      %v743 = vmax.f32 %v711, 0.0
      %v744 = vmax.f32 %v712, 0.0
      %v745 = vmax.f32 %v713, 0.0
      %v746 = vmax.f32 %v714, 0.0
      %v747 = vmax.f32 %v715, 0.0
      %v748 = vmax.f32 %v716, 0.0
      %v749 = vmax.f32 %v717, 0.0
      %v750 = vpack.c.bf16 %v719, %v718
      %v751 = vpack.c.bf16 %v721, %v720
      %v752 = vpack.c.bf16 %v723, %v722
      %v753 = vpack.c.bf16 %v725, %v724
      %v754 = vpack.c.bf16 %v727, %v726
      %v755 = vpack.c.bf16 %v729, %v728
      %v756 = vpack.c.bf16 %v731, %v730
      %v757 = vpack.c.bf16 %v733, %v732
      %v758 = vpack.c.bf16 %v735, %v734
      %v759 = vpack.c.bf16 %v737, %v736
      %v760 = vpack.c.bf16 %v739, %v738
      %v761 = vpack.c.bf16 %v741, %v740
      %v762 = vpack.c.bf16 %v743, %v742
      %v763 = vpack.c.bf16 %v745, %v744
      %v764 = vpack.c.bf16 %v747, %v746
      %v765 = vpack.c.bf16 %v749, %v748
      %v782 = vunpack.c.l.b16 %v750
      %v783 = vunpack.c.h.b16 %v750
      %v784 = vunpack.c.l.b16 %v751
      %v785 = vunpack.c.h.b16 %v751
      %v786 = vunpack.c.l.b16 %v752
      %v787 = vunpack.c.h.b16 %v752
      %v788 = vunpack.c.l.b16 %v753
      %v789 = vunpack.c.h.b16 %v753
      %v790 = vunpack.c.l.b16 %v754
      %v791 = vunpack.c.h.b16 %v754
      %v792 = vunpack.c.l.b16 %v755
      %v793 = vunpack.c.h.b16 %v755
      %v794 = vunpack.c.l.b16 %v756
      %v795 = vunpack.c.h.b16 %v756
      %v796 = vunpack.c.l.b16 %v757
      %v797 = vunpack.c.h.b16 %v757
      %v798 = vunpack.c.l.b16 %v758
      %v799 = vunpack.c.h.b16 %v758
      %v800 = vunpack.c.l.b16 %v759
      %v801 = vunpack.c.h.b16 %v759
      %v802 = vunpack.c.l.b16 %v760
      %v803 = vunpack.c.h.b16 %v760
      %v804 = vunpack.c.l.b16 %v761
      %v805 = vunpack.c.h.b16 %v761
      %v806 = vunpack.c.l.b16 %v762
      %v807 = vunpack.c.h.b16 %v762
      %v808 = vunpack.c.l.b16 %v763
      %v809 = vunpack.c.h.b16 %v763
      %v810 = vunpack.c.l.b16 %v764
      %v811 = vunpack.c.h.b16 %v764
      %v812 = vunpack.c.l.b16 %v765
      %v813 = vunpack.c.h.b16 %v765
      %v814 = vpack.c.b16 %v782, %v782
      %v815 = vpack.c.b16 %v783, %v783
      %v816 = vpack.c.b16 %v784, %v784
      %v817 = vpack.c.b16 %v785, %v785
      %v818 = vpack.c.b16 %v786, %v786
      %v819 = vpack.c.b16 %v787, %v787
      %v820 = vpack.c.b16 %v788, %v788
      %v821 = vpack.c.b16 %v789, %v789
      %v822 = vpack.c.b16 %v790, %v790
      %v823 = vpack.c.b16 %v791, %v791
      %v824 = vpack.c.b16 %v792, %v792
      %v825 = vpack.c.b16 %v793, %v793
      %v826 = vpack.c.b16 %v794, %v794
      %v827 = vpack.c.b16 %v795, %v795
      %v828 = vpack.c.b16 %v796, %v796
      %v829 = vpack.c.b16 %v797, %v797
      %v830 = vpack.c.b16 %v798, %v798
      %v831 = vpack.c.b16 %v799, %v799
      %v832 = vpack.c.b16 %v800, %v800
      %v833 = vpack.c.b16 %v801, %v801
      %v834 = vpack.c.b16 %v802, %v802
      %v835 = vpack.c.b16 %v803, %v803
      %v836 = vpack.c.b16 %v804, %v804
      %v837 = vpack.c.b16 %v805, %v805
      %v838 = vpack.c.b16 %v806, %v806
      %v839 = vpack.c.b16 %v807, %v807
      %v840 = vpack.c.b16 %v808, %v808
      %v841 = vpack.c.b16 %v809, %v809
      %v842 = vpack.c.b16 %v810, %v810
      %v843 = vpack.c.b16 %v811, %v811
      %v844 = vpack.c.b16 %v812, %v812
      %v845 = vpack.c.b16 %v813, %v813
      %878 = vst [vmem:[%s175] sm:$0xf] %v814
      %879 = vst [vmem:[%s175 + $0x4] sm:$0xf] %v815
      %880 = vst [vmem:[%s175 + $0x8] sm:$0xf] %v816
      %881 = vst [vmem:[%s175 + $0xc] sm:$0xf] %v817
      %882 = vst [vmem:[%s175 + $0x10] sm:$0xf] %v818
      %883 = vst [vmem:[%s175 + $0x14] sm:$0xf] %v819
      %884 = vst [vmem:[%s175 + $0x18] sm:$0xf] %v820
      %885 = vst [vmem:[%s175 + $0x1c] sm:$0xf] %v821
      %886 = vst [vmem:[%s175 + $0x20] sm:$0xf] %v822
      %887 = vst [vmem:[%s175 + $0x24] sm:$0xf] %v823
      %888 = vst [vmem:[%s175 + $0x28] sm:$0xf] %v824
      %889 = vst [vmem:[%s175 + $0x2c] sm:$0xf] %v825
      %890 = vst [vmem:[%s175 + $0x30] sm:$0xf] %v826
      %891 = vst [vmem:[%s175 + $0x34] sm:$0xf] %v827
      %892 = vst [vmem:[%s175 + $0x38] sm:$0xf] %v828
      %893 = vst [vmem:[%s175 + $0x3c] sm:$0xf] %v829
      %894 = vst [vmem:[%s175 + $0x40] sm:$0xf] %v830
      %895 = vst [vmem:[%s175 + $0x44] sm:$0xf] %v831
      %896 = vst [vmem:[%s175 + $0x48] sm:$0xf] %v832
      %897 = vst [vmem:[%s175 + $0x4c] sm:$0xf] %v833
      %898 = vst [vmem:[%s175 + $0x50] sm:$0xf] %v834
      %899 = vst [vmem:[%s175 + $0x54] sm:$0xf] %v835
      %900 = vst [vmem:[%s175 + $0x58] sm:$0xf] %v836
      %901 = vst [vmem:[%s175 + $0x5c] sm:$0xf] %v837
      %902 = vst [vmem:[%s175 + $0x60] sm:$0xf] %v838
      %903 = vst [vmem:[%s175 + $0x64] sm:$0xf] %v839
      %904 = vst [vmem:[%s175 + $0x68] sm:$0xf] %v840
      %905 = vst [vmem:[%s175 + $0x6c] sm:$0xf] %v841
      %906 = vst [vmem:[%s175 + $0x70] sm:$0xf] %v842
      %907 = vst [vmem:[%s175 + $0x74] sm:$0xf] %v843
      %908 = vst [vmem:[%s175 + $0x78] sm:$0xf] %v844
      %909 = vst [vmem:[%s175 + $0x7c] sm:$0xf] %v845
      %s910 = smul.u32 32, %s14
      %p911 = scmp.lt.s32.totalorder %s910, 255
      %s912 = scalar_select %p911, %s910, 255
      %s913 = smul.addr %s912, 4
      %s914 = scalar_lea.vmem %s3, %s913
      // Predicated region
      $region33: #{resnetfc_forward.38} parent=31 // pred_check
        %p915 = pneg %p100
      $region34: #{resnetfc_forward.38} parent=31 // pred_check_branch
        %917 = sbr.rel (%p915) target = $region36
      $region35: #{resnetfc_forward.38} parent=31 // pred_region
        %s918 = smul.u32 32, %s14
      $region36: #{resnetfc_forward.38} parent=31 // pred_fallthru
        _
    $region32: #{resnetfc_forward.38} parent=5 // pred_fallthru
      _
    %p919 = scmp.le.s32.totalorder 2, %s9
    // Predicated region
    $region37: #{resnetfc_forward.38} parent=5 // pred_check
      %p920 = pneg %p919
    $region38: #{resnetfc_forward.38} parent=5 // pred_check_branch
      %922 = sbr.rel (%p920) target = $region40
    $region39: #{resnetfc_forward.38} parent=5 // pred_region
      %s923 = ssub.s32 %s9, 2
      // Predicated region
      $region41: #{resnetfc_forward.38} parent=39 // pred_check
        %p924 = pneg %p106
      $region42: #{resnetfc_forward.38} parent=39 // pred_check_branch
        %926 = sbr.rel (%p924) target = $region44
      $region43: #{resnetfc_forward.38} parent=39 // pred_region
        %s927 = smul.u32 32, %s15
        %p928 = scmp.lt.s32.totalorder %s927, 255
        %s929 = scalar_select %p928, %s927, 255
        %s930 = smul.addr %s929, 4
        %s931 = scalar_lea.vmem %s3, %s930
      $region44: #{resnetfc_forward.38} parent=39 // pred_fallthru
        _
    $region40: #{resnetfc_forward.38} parent=5 // pred_fallthru
      _
  $region6: #{resnetfc_forward.38} parent=0 // loop_footer
    %s13 = sadd.s32 1, %s9
  $region7: #{resnetfc_forward.38} parent=0 // loop_footer_branch
    %8 = sbr.rel target = $region3
  $region8: #{resnetfc_forward.38} parent=0 // loop_exit
    _

// kernel: resnetfc_forward.39
$region0: #{resnetfc_forward.39}
  #allocation0 [shape = 'u32[]', space=smem, size = 0x4, offset = 0x4, fixed_abs, tag = 'smem constant byte address 0x4 - core index']
  #allocation1 [shape = 'u32[144,128]{1,0:T(1,128)}', space=vmem, size = 0x12000, scoped, tag = 'internal scratch']
  %s0 = inlined_call_operand.vmem [shape: bf16[512,128], index: 0, kind: input, shape index: {}]
  %s1 = inlined_call_operand.vmem [shape: bf16[128,128], index: 1, kind: input, shape index: {}]
  %s2 = inlined_call_operand.vmem [shape: f32[2,128], index: 2, kind: input, shape index: {}]
  %s3 = inlined_call_operand.vmem [shape: bf16[512,128], index: 3, kind: output, shape index: {}]
  %s4 = sld [smem:[#allocation0]]
  $region45: #{resnetfc_forward.39} parent=0
    _
  %s6 = ssub.s32 1, %s4
  %s7 = scalar_select 0, %s6, %s4
  loop: start=0, step=1, limit=4
  $region2: #{resnetfc_forward.39} parent=0 // loop_pre_header
    _
  $region3: #{resnetfc_forward.39} parent=0 // loop_header
    %s9 = sphi 0, %s13
    %p10 = scmp.ge.s32.totalorder %s9, 4
    %s19 = sphi 0, %s21
    %s22 = sphi 0, %s19
    %s23 = sphi 0, %s22
    %s39 = sphi 0, %s23
    %s43 = sphi 0, %s43
    %s45 = sphi 0, %s43
    %s46 = sphi 0, %s45
    %s60 = sphi 0, %s46
    %s64 = sphi 0, %s64
    %s66 = sphi 0, %s64
    %s67 = sphi 0, %s66
    %s81 = sphi 0, %s67
    %s87 = sphi 0, %s89
    %s90 = sphi 0, %s87
    %s91 = sphi 0, %s90
    %s107 = sphi 0, %s91
  $region4: #{resnetfc_forward.39} parent=0 // loop_header_branch
    %12 = sbr.rel (%p10) target = $region8
  $region5: #{resnetfc_forward.39} parent=0 // loop_body
    %s14 = ssub.s32 %s9, 1
    %s15 = ssub.s32 %s9, 2
    %s16 = sadd.s32 %s9, 1
    %s17 = ssub.s32 %s9, %s16
    %p18 = scmp.eq.s32.totalorder %s17, 0
    %s20 = sadd.s32 %s19, 1
    %s21 = scalar_select %p18, %s19, %s20
    %p24 = pneg %p18
    %p25 = scmp.eq.s32.totalorder %s9, 1
    %p26 = por %p24, %p25
    %p27 = scmp.ne.s32.totalorder %s19, %s22
    %p28 = scmp.eq.s32.totalorder %s9, 0
    %p29 = por %p27, %p28
    %p30 = scmp.ne.s32.totalorder %s19, %s22
    %p31 = scmp.eq.s32.totalorder %s14, 1
    %p32 = por %p30, %p31
    %p33 = scmp.ne.s32.totalorder %s22, %s23
    %p34 = scmp.eq.s32.totalorder %s14, 0
    %p35 = por %p33, %p34
    %p36 = scmp.ne.s32.totalorder %s22, %s23
    %p37 = scmp.eq.s32.totalorder %s15, 1
    %p38 = por %p36, %p37
    %p40 = scmp.ne.s32.totalorder %s23, %s39
    %p41 = scmp.eq.s32.totalorder %s15, 0
    %p42 = por %p40, %p41
    %s44 = sadd.s32 %s43, 1
    %p47 = scmp.eq.s32.totalorder %s9, 1
    %p48 = scmp.ne.s32.totalorder %s43, %s45
    %p49 = scmp.eq.s32.totalorder %s9, 0
    %p50 = por %p48, %p49
    %p51 = scmp.ne.s32.totalorder %s43, %s45
    %p52 = scmp.eq.s32.totalorder %s14, 1
    %p53 = por %p51, %p52
    %p54 = scmp.ne.s32.totalorder %s45, %s46
    %p55 = scmp.eq.s32.totalorder %s14, 0
    %p56 = por %p54, %p55
    %p57 = scmp.ne.s32.totalorder %s45, %s46
    %p58 = scmp.eq.s32.totalorder %s15, 1
    %p59 = por %p57, %p58
    %p61 = scmp.ne.s32.totalorder %s46, %s60
    %p62 = scmp.eq.s32.totalorder %s15, 0
    %p63 = por %p61, %p62
    %s65 = sadd.s32 %s64, 1
    %p68 = scmp.eq.s32.totalorder %s9, 1
    %p69 = scmp.ne.s32.totalorder %s64, %s66
    %p70 = scmp.eq.s32.totalorder %s9, 0
    %p71 = por %p69, %p70
    %p72 = scmp.ne.s32.totalorder %s64, %s66
    %p73 = scmp.eq.s32.totalorder %s14, 1
    %p74 = por %p72, %p73
    %p75 = scmp.ne.s32.totalorder %s66, %s67
    %p76 = scmp.eq.s32.totalorder %s14, 0
    %p77 = por %p75, %p76
    %p78 = scmp.ne.s32.totalorder %s66, %s67
    %p79 = scmp.eq.s32.totalorder %s15, 1
    %p80 = por %p78, %p79
    %p82 = scmp.ne.s32.totalorder %s67, %s81
    %p83 = scmp.eq.s32.totalorder %s15, 0
    %p84 = por %p82, %p83
    %s85 = ssub.s32 %s9, %s16
    %p86 = scmp.eq.s32.totalorder %s85, 0
    %s88 = sadd.s32 %s87, 1
    %s89 = scalar_select %p86, %s87, %s88
    %p92 = pneg %p86
    %p93 = scmp.eq.s32.totalorder %s9, 1
    %p94 = por %p92, %p93
    %p95 = scmp.ne.s32.totalorder %s87, %s90
    %p96 = scmp.eq.s32.totalorder %s9, 0
    %p97 = por %p95, %p96
    %p98 = scmp.ne.s32.totalorder %s87, %s90
    %p99 = scmp.eq.s32.totalorder %s14, 1
    %p100 = por %p98, %p99
    %p101 = scmp.ne.s32.totalorder %s90, %s91
    %p102 = scmp.eq.s32.totalorder %s14, 0
    %p103 = por %p101, %p102
    %p104 = scmp.ne.s32.totalorder %s90, %s91
    %p105 = scmp.eq.s32.totalorder %s15, 1
    %p106 = por %p104, %p105
    %p108 = scmp.ne.s32.totalorder %s91, %s107
    %p109 = scmp.eq.s32.totalorder %s15, 0
    %p110 = por %p108, %p109
    %p111 = scmp.le.s32.totalorder 1, %s9
    %p112 = scmp.lt.s32.totalorder %s9, 3
    %p113 = pnand %p111, %p112
    %p114 = pneg %p113
    // Predicated region
    $region9: #{resnetfc_forward.39} parent=5 // pred_check
      _
    $region10: #{resnetfc_forward.39} parent=5 // pred_check_branch
      %116 = sbr.rel (%p113) target = $region12
    $region11: #{resnetfc_forward.39} parent=5 // pred_region
      %s117 = ssub.s32 %s9, 1
      // Predicated region
      $region13: #{resnetfc_forward.39} parent=11 // pred_check
        %p118 = pneg %p56
      $region14: #{resnetfc_forward.39} parent=11 // pred_check_branch
        %120 = sbr.rel (%p118) target = $region16
      $region15: #{resnetfc_forward.39} parent=11 // pred_region
        _
      $region16: #{resnetfc_forward.39} parent=11 // pred_fallthru
        _
      // Predicated region
      $region17: #{resnetfc_forward.39} parent=11 // pred_check
        %p121 = pneg %p77
      $region18: #{resnetfc_forward.39} parent=11 // pred_check_branch
        %123 = sbr.rel (%p121) target = $region20
      $region19: #{resnetfc_forward.39} parent=11 // pred_region
        _
      $region20: #{resnetfc_forward.39} parent=11 // pred_fallthru
        _
    $region12: #{resnetfc_forward.39} parent=5 // pred_fallthru
      _
    %p124 = scmp.lt.s32.totalorder %s9, 2
    // Predicated region
    $region21: #{resnetfc_forward.39} parent=5 // pred_check
      %p125 = pneg %p124
    $region22: #{resnetfc_forward.39} parent=5 // pred_check_branch
      %127 = sbr.rel (%p125) target = $region24
    $region23: #{resnetfc_forward.39} parent=5 // pred_region
      // Predicated region
      $region25: #{resnetfc_forward.39} parent=23 // pred_check
        %p128 = pneg %p29
      $region26: #{resnetfc_forward.39} parent=23 // pred_check_branch
        %130 = sbr.rel (%p128) target = $region28
      $region27: #{resnetfc_forward.39} parent=23 // pred_region
        %s131 = smul.u32 32, %s9
        %p132 = scmp.lt.s32.totalorder %s131, 63
        %s133 = scalar_select %p132, %s131, 63
        %s134 = smul.addr %s133, 4
        %s135 = scalar_lea.vmem %s0, %s134
        %s136 = smul.u32 32, %s9
      $region28: #{resnetfc_forward.39} parent=23 // pred_fallthru
        _
    $region24: #{resnetfc_forward.39} parent=5 // pred_fallthru
      _
    %p137 = scmp.le.s32.totalorder 1, %s9
    %p138 = scmp.lt.s32.totalorder %s9, 3
    %p139 = pnand %p137, %p138
    %p140 = pneg %p139
    // Predicated region
    $region29: #{resnetfc_forward.39} parent=5 // pred_check
      _
    $region30: #{resnetfc_forward.39} parent=5 // pred_check_branch
      %142 = sbr.rel (%p139) target = $region32
    $region31: #{resnetfc_forward.39} parent=5 // pred_region
      %s143 = ssub.s32 %s9, 1
      %s144 = smul.u32 32, %s14
      %p145 = scmp.lt.s32.totalorder %s144, 63
      %s146 = scalar_select %p145, %s144, 63
      %s147 = smul.addr %s146, 4
      %s148 = scalar_lea.vmem %s0, %s147
      %p149 = pneg %p35
      %p150 = pneg %p32
      %p151 = pneg %p56
      %p152 = pneg %p53
      %p153 = pneg %p77
      %p154 = pneg %p74
      %p155 = pneg %p103
      %p156 = pneg %p100
      %s157 = smul.u32 32, %s14
      %p158 = scmp.lt.s32.totalorder %s157, 63
      %s159 = scalar_select %p158, %s157, 63
      %s160 = smul.addr %s159, 4
      %s161 = scalar_lea.vmem %s3, %s160
      %s162 = smul.u32 32, %s14
      %p163 = scmp.lt.s32.totalorder %s162, 63
      %s164 = scalar_select %p163, %s162, 63
      %s165 = smul.addr %s164, 4
      %s166 = scalar_lea.vmem %s0, %s165
      %s167 = smul.u32 32, %s14
      %s168 = smul.u32 32, %s14
      %p169 = scmp.lt.s32.totalorder %s168, 63
      %s170 = scalar_select %p169, %s168, 63
      %s171 = smul.addr %s170, 4
      %s172 = scalar_lea.vmem %s3, %s171
      %s173 = smul.u32 32, %s14
      %v175 = vld [vmem:[%s166] sm:$0xf]
      %v176 = vld [vmem:[%s166 + $0x4] sm:$0xf]
      %v177 = vld [vmem:[%s166 + $0x8] sm:$0xf]
      %v178 = vld [vmem:[%s166 + $0xc] sm:$0xf]
      %v179 = vld [vmem:[%s166 + $0x10] sm:$0xf]
      %v180 = vld [vmem:[%s166 + $0x14] sm:$0xf]
      %v181 = vld [vmem:[%s166 + $0x18] sm:$0xf]
      %v182 = vld [vmem:[%s166 + $0x1c] sm:$0xf]
      %v183 = vld [vmem:[%s166 + $0x20] sm:$0xf]
      %v184 = vld [vmem:[%s166 + $0x24] sm:$0xf]
      %v185 = vld [vmem:[%s166 + $0x28] sm:$0xf]
      %v186 = vld [vmem:[%s166 + $0x2c] sm:$0xf]
      %v187 = vld [vmem:[%s166 + $0x30] sm:$0xf]
      %v188 = vld [vmem:[%s166 + $0x34] sm:$0xf]
      %v189 = vld [vmem:[%s166 + $0x38] sm:$0xf]
      %v190 = vld [vmem:[%s166 + $0x3c] sm:$0xf]
      %v191 = vld [vmem:[%s166 + $0x40] sm:$0xf]
      %v192 = vld [vmem:[%s166 + $0x44] sm:$0xf]
      %v193 = vld [vmem:[%s166 + $0x48] sm:$0xf]
      %v194 = vld [vmem:[%s166 + $0x4c] sm:$0xf]
      %v195 = vld [vmem:[%s166 + $0x50] sm:$0xf]
      %v196 = vld [vmem:[%s166 + $0x54] sm:$0xf]
      %v197 = vld [vmem:[%s166 + $0x58] sm:$0xf]
      %v198 = vld [vmem:[%s166 + $0x5c] sm:$0xf]
      %v199 = vld [vmem:[%s166 + $0x60] sm:$0xf]
      %v200 = vld [vmem:[%s166 + $0x64] sm:$0xf]
      %v201 = vld [vmem:[%s166 + $0x68] sm:$0xf]
      %v202 = vld [vmem:[%s166 + $0x6c] sm:$0xf]
      %v203 = vld [vmem:[%s166 + $0x70] sm:$0xf]
      %v204 = vld [vmem:[%s166 + $0x74] sm:$0xf]
      %v205 = vld [vmem:[%s166 + $0x78] sm:$0xf]
      %v206 = vld [vmem:[%s166 + $0x7c] sm:$0xf]
      %v207 = vld [vmem:[%s1] sm:$0xf]
      %v208 = vld [vmem:[%s1 + $0x4] sm:$0xf]
      %v209 = vld [vmem:[%s1 + $0x8] sm:$0xf]
      %v210 = vld [vmem:[%s1 + $0xc] sm:$0xf]
      %v211 = vld [vmem:[%s1 + $0x10] sm:$0xf]
      %v212 = vld [vmem:[%s1 + $0x14] sm:$0xf]
      %v213 = vld [vmem:[%s1 + $0x18] sm:$0xf]
      %v214 = vld [vmem:[%s1 + $0x1c] sm:$0xf]
      %v215 = vld [vmem:[%s1 + $0x20] sm:$0xf]
      %v216 = vld [vmem:[%s1 + $0x24] sm:$0xf]
      %v217 = vld [vmem:[%s1 + $0x28] sm:$0xf]
      %v218 = vld [vmem:[%s1 + $0x2c] sm:$0xf]
      %v219 = vld [vmem:[%s1 + $0x30] sm:$0xf]
      %v220 = vld [vmem:[%s1 + $0x34] sm:$0xf]
      %v221 = vld [vmem:[%s1 + $0x38] sm:$0xf]
      %v222 = vld [vmem:[%s1 + $0x3c] sm:$0xf]
      %v255 = vunpack.c.l.b16 %v175
      %v256 = vunpack.c.l.b16 %v176
      %v257 = vunpack.c.l.b16 %v177
      %v258 = vunpack.c.l.b16 %v178
      %v259 = vunpack.c.l.b16 %v179
      %v260 = vunpack.c.l.b16 %v180
      %v261 = vunpack.c.l.b16 %v181
      %v262 = vunpack.c.l.b16 %v182
      %v263 = vunpack.c.l.b16 %v183
      %v264 = vunpack.c.l.b16 %v184
      %v265 = vunpack.c.l.b16 %v185
      %v266 = vunpack.c.l.b16 %v186
      %v267 = vunpack.c.l.b16 %v187
      %v268 = vunpack.c.l.b16 %v188
      %v269 = vunpack.c.l.b16 %v189
      %v270 = vunpack.c.l.b16 %v190
      %v271 = vunpack.c.l.b16 %v191
      %v272 = vunpack.c.l.b16 %v192
      %v273 = vunpack.c.l.b16 %v193
      %v274 = vunpack.c.l.b16 %v194
      %v275 = vunpack.c.l.b16 %v195
      %v276 = vunpack.c.l.b16 %v196
      %v277 = vunpack.c.l.b16 %v197
      %v278 = vunpack.c.l.b16 %v198
      %v279 = vunpack.c.l.b16 %v199
      %v280 = vunpack.c.l.b16 %v200
      %v281 = vunpack.c.l.b16 %v201
      %v282 = vunpack.c.l.b16 %v202
      %v283 = vunpack.c.l.b16 %v203
      %v284 = vunpack.c.l.b16 %v204
      %v285 = vunpack.c.l.b16 %v205
      %v286 = vunpack.c.l.b16 %v206
      %v287 = vpack.c.b16 %v256, %v255
      %v288 = vpack.c.b16 %v258, %v257
      %v289 = vpack.c.b16 %v260, %v259
      %v290 = vpack.c.b16 %v262, %v261
      %v291 = vpack.c.b16 %v264, %v263
      %v292 = vpack.c.b16 %v266, %v265
      %v293 = vpack.c.b16 %v268, %v267
      %v294 = vpack.c.b16 %v270, %v269
      %v295 = vpack.c.b16 %v272, %v271
      %v296 = vpack.c.b16 %v274, %v273
      %v297 = vpack.c.b16 %v276, %v275
      %v298 = vpack.c.b16 %v278, %v277
      %v299 = vpack.c.b16 %v280, %v279
      %v300 = vpack.c.b16 %v282, %v281
      %v301 = vpack.c.b16 %v284, %v283
      %v302 = vpack.c.b16 %v286, %v285
      %v335 = vunpack.c.l.b16 %v207
      %v336 = vunpack.c.l.b16 %v208
      %v337 = vunpack.c.l.b16 %v209
      %v338 = vunpack.c.l.b16 %v210
      %v339 = vunpack.c.l.b16 %v211
      %v340 = vunpack.c.l.b16 %v212
      %v341 = vunpack.c.l.b16 %v213
      %v342 = vunpack.c.l.b16 %v214
      %v343 = vunpack.c.l.b16 %v215
      %v344 = vunpack.c.l.b16 %v216
      %v345 = vunpack.c.l.b16 %v217
      %v346 = vunpack.c.l.b16 %v218
      %v347 = vunpack.c.l.b16 %v219
      %v348 = vunpack.c.l.b16 %v220
      %v349 = vunpack.c.l.b16 %v221
      %v350 = vunpack.c.l.b16 %v222
      %v351 = vpack.c.b16 %v336, %v335
      %v352 = vpack.c.b16 %v338, %v337
      %v353 = vpack.c.b16 %v340, %v339
      %v354 = vpack.c.b16 %v342, %v341
      %v355 = vpack.c.b16 %v344, %v343
      %v356 = vpack.c.b16 %v346, %v345
      %v357 = vpack.c.b16 %v348, %v347
      %v358 = vpack.c.b16 %v350, %v349
      %367 = vmatprep.subr.bf16.mxu0 0
      %368 = vmatpush1.bf16.msra.mxu0 %v351
      %369 = vmatprep.subr.bf16.mxu0 0
      %370 = vmatpush1.bf16.msra.mxu0 %v352
      %371 = vmatprep.subr.bf16.mxu0 0
      %372 = vmatpush1.bf16.msra.mxu0 %v353
      %373 = vmatprep.subr.bf16.mxu0 0
      %374 = vmatpush1.bf16.msra.mxu0 %v354
      %375 = vmatprep.subr.bf16.mxu0 0
      %376 = vmatpush1.bf16.msra.mxu0 %v355
      %377 = vmatprep.subr.bf16.mxu0 0
      %378 = vmatpush1.bf16.msra.mxu0 %v356
      %379 = vmatprep.subr.bf16.mxu0 0
      %380 = vmatpush1.bf16.msra.mxu0 %v357
      %381 = vmatprep.subr.bf16.mxu0 0
      %382 = vmatpush1.bf16.msra.mxu0 %v358
      %383 = vmatprep.subr.bf16.mxu0 0
      %384 = vmatpush1.bf16.msra.mxu0 0
      %385 = vmatprep.subr.bf16.mxu0 0
      %386 = vmatpush1.bf16.msra.mxu0 0
      %387 = vmatprep.subr.bf16.mxu0 0
      %388 = vmatpush1.bf16.msra.mxu0 0
      %389 = vmatprep.subr.bf16.mxu0 0
      %390 = vmatpush1.bf16.msra.mxu0 0
      %391 = vmatprep.subr.bf16.mxu0 0
      %392 = vmatpush1.bf16.msra.mxu0 0
      %393 = vmatprep.subr.bf16.mxu0 0
      %394 = vmatpush1.bf16.msra.mxu0 0
      %395 = vmatprep.subr.bf16.mxu0 0
      %396 = vmatpush1.bf16.msra.mxu0 0
      %397 = vmatprep.subr.bf16.mxu0 0
      %398 = vmatpush1.bf16.msra.mxu0 0
      %399 = vmatprep.mubr.bf16.mxu0 0
      %400 = vmatmul.mubr.bf16.gmra.mrb[0].mxu0 %v287
      %v401 = vpop.f32.mrb[0].mxu0
      %v402 = vadd.f32 0.0, %v401
      %v403 = vpop.f32.mrb[0].mxu0
      %v404 = vpop.f32.mrb[0].mxu0
      %v405 = vadd.f32 0.0, %v404
      %v406 = vpop.f32.mrb[0].mxu0
      %407 = vmatprep.mubr.bf16.mxu0 0
      %408 = vmatmul.mubr.bf16.gmra.mrb[0].mxu0 %v288
      %v409 = vpop.f32.mrb[0].mxu0
      %v410 = vadd.f32 0.0, %v409
      %v411 = vpop.f32.mrb[0].mxu0
      %v412 = vpop.f32.mrb[0].mxu0
      %v413 = vadd.f32 0.0, %v412
      %v414 = vpop.f32.mrb[0].mxu0
      %415 = vmatprep.mubr.bf16.mxu0 0
      %416 = vmatmul.mubr.bf16.gmra.mrb[0].mxu0 %v289
      %v417 = vpop.f32.mrb[0].mxu0
      %v418 = vadd.f32 0.0, %v417
      %v419 = vpop.f32.mrb[0].mxu0
      %v420 = vpop.f32.mrb[0].mxu0
      %v421 = vadd.f32 0.0, %v420
      %v422 = vpop.f32.mrb[0].mxu0
      %423 = vmatprep.mubr.bf16.mxu0 0
      %424 = vmatmul.mubr.bf16.gmra.mrb[0].mxu0 %v290
      %v425 = vpop.f32.mrb[0].mxu0
      %v426 = vadd.f32 0.0, %v425
      %v427 = vpop.f32.mrb[0].mxu0
      %v428 = vpop.f32.mrb[0].mxu0
      %v429 = vadd.f32 0.0, %v428
      %v430 = vpop.f32.mrb[0].mxu0
      %431 = vmatprep.mubr.bf16.mxu0 0
      %432 = vmatmul.mubr.bf16.gmra.mrb[0].mxu0 %v291
      %v433 = vpop.f32.mrb[0].mxu0
      %v434 = vadd.f32 0.0, %v433
      %v435 = vpop.f32.mrb[0].mxu0
      %v436 = vpop.f32.mrb[0].mxu0
      %v437 = vadd.f32 0.0, %v436
      %v438 = vpop.f32.mrb[0].mxu0
      %439 = vmatprep.mubr.bf16.mxu0 0
      %440 = vmatmul.mubr.bf16.gmra.mrb[0].mxu0 %v292
      %v441 = vpop.f32.mrb[0].mxu0
      %v442 = vadd.f32 0.0, %v441
      %v443 = vpop.f32.mrb[0].mxu0
      %v444 = vpop.f32.mrb[0].mxu0
      %v445 = vadd.f32 0.0, %v444
      %v446 = vpop.f32.mrb[0].mxu0
      %447 = vmatprep.mubr.bf16.mxu0 0
      %448 = vmatmul.mubr.bf16.gmra.mrb[0].mxu0 %v293
      %v449 = vpop.f32.mrb[0].mxu0
      %v450 = vadd.f32 0.0, %v449
      %v451 = vpop.f32.mrb[0].mxu0
      %v452 = vpop.f32.mrb[0].mxu0
      %v453 = vadd.f32 0.0, %v452
      %v454 = vpop.f32.mrb[0].mxu0
      %455 = vmatprep.mubr.bf16.mxu0 0
      %456 = vmatmul.mubr.bf16.gmra.mrb[0].mxu0 %v294
      %v457 = vpop.f32.mrb[0].mxu0
      %v458 = vadd.f32 0.0, %v457
      %v459 = vpop.f32.mrb[0].mxu0
      %v460 = vpop.f32.mrb[0].mxu0
      %v461 = vadd.f32 0.0, %v460
      %v462 = vpop.f32.mrb[0].mxu0
      %463 = vmatprep.mubr.bf16.mxu0 0
      %464 = vmatmul.mubr.bf16.gmra.mrb[0].mxu0 %v295
      %v465 = vpop.f32.mrb[0].mxu0
      %v466 = vadd.f32 0.0, %v465
      %v467 = vpop.f32.mrb[0].mxu0
      %v468 = vpop.f32.mrb[0].mxu0
      %v469 = vadd.f32 0.0, %v468
      %v470 = vpop.f32.mrb[0].mxu0
      %471 = vmatprep.mubr.bf16.mxu0 0
      %472 = vmatmul.mubr.bf16.gmra.mrb[0].mxu0 %v296
      %v473 = vpop.f32.mrb[0].mxu0
      %v474 = vadd.f32 0.0, %v473
      %v475 = vpop.f32.mrb[0].mxu0
      %v476 = vpop.f32.mrb[0].mxu0
      %v477 = vadd.f32 0.0, %v476
      %v478 = vpop.f32.mrb[0].mxu0
      %479 = vmatprep.mubr.bf16.mxu0 0
      %480 = vmatmul.mubr.bf16.gmra.mrb[0].mxu0 %v297
      %v481 = vpop.f32.mrb[0].mxu0
      %v482 = vadd.f32 0.0, %v481
      %v483 = vpop.f32.mrb[0].mxu0
      %v484 = vpop.f32.mrb[0].mxu0
      %v485 = vadd.f32 0.0, %v484
      %v486 = vpop.f32.mrb[0].mxu0
      %487 = vmatprep.mubr.bf16.mxu0 0
      %488 = vmatmul.mubr.bf16.gmra.mrb[0].mxu0 %v298
      %v489 = vpop.f32.mrb[0].mxu0
      %v490 = vadd.f32 0.0, %v489
      %v491 = vpop.f32.mrb[0].mxu0
      %v492 = vpop.f32.mrb[0].mxu0
      %v493 = vadd.f32 0.0, %v492
      %v494 = vpop.f32.mrb[0].mxu0
      %495 = vmatprep.mubr.bf16.mxu0 0
      %496 = vmatmul.mubr.bf16.gmra.mrb[0].mxu0 %v299
      %v497 = vpop.f32.mrb[0].mxu0
      %v498 = vadd.f32 0.0, %v497
      %v499 = vpop.f32.mrb[0].mxu0
      %v500 = vpop.f32.mrb[0].mxu0
      %v501 = vadd.f32 0.0, %v500
      %v502 = vpop.f32.mrb[0].mxu0
      %503 = vmatprep.mubr.bf16.mxu0 0
      %504 = vmatmul.mubr.bf16.gmra.mrb[0].mxu0 %v300
      %v505 = vpop.f32.mrb[0].mxu0
      %v506 = vadd.f32 0.0, %v505
      %v507 = vpop.f32.mrb[0].mxu0
      %v508 = vpop.f32.mrb[0].mxu0
      %v509 = vadd.f32 0.0, %v508
      %v510 = vpop.f32.mrb[0].mxu0
      %511 = vmatprep.mubr.bf16.mxu0 0
      %512 = vmatmul.mubr.bf16.gmra.mrb[0].mxu0 %v301
      %v513 = vpop.f32.mrb[0].mxu0
      %v514 = vadd.f32 0.0, %v513
      %v515 = vpop.f32.mrb[0].mxu0
      %v516 = vpop.f32.mrb[0].mxu0
      %v517 = vadd.f32 0.0, %v516
      %v518 = vpop.f32.mrb[0].mxu0
      %519 = vmatprep.mubr.bf16.mxu0 0
      %520 = vmatmul.mubr.bf16.gmra.mrb[0].mxu0 %v302
      %v521 = vpop.f32.mrb[0].mxu0
      %v522 = vadd.f32 0.0, %v521
      %v523 = vpop.f32.mrb[0].mxu0
      %v524 = vpop.f32.mrb[0].mxu0
      %v525 = vadd.f32 0.0, %v524
      %v526 = vpop.f32.mrb[0].mxu0
      %527 = vdwg.mxu0
      %v528 = vld [vmem:[%s2] sm:$0x1]
      %v529 = vlaneseq
      %v530 = vshrl.u32 %v529, 7
      %v531 = vsub.s32 0, %v530
      %v532 = vrot.slane %v528, %v531
      %v533 = vmul.f32 %v402, %v532
      %v534 = vmul.f32 %v405, %v532
      %v535 = vmul.f32 %v410, %v532
      %v536 = vmul.f32 %v413, %v532
      %v537 = vmul.f32 %v418, %v532
      %v538 = vmul.f32 %v421, %v532
      %v539 = vmul.f32 %v426, %v532
      %v540 = vmul.f32 %v429, %v532
      %v541 = vmul.f32 %v434, %v532
      %v542 = vmul.f32 %v437, %v532
      %v543 = vmul.f32 %v442, %v532
      %v544 = vmul.f32 %v445, %v532
      %v545 = vmul.f32 %v450, %v532
      %v546 = vmul.f32 %v453, %v532
      %v547 = vmul.f32 %v458, %v532
      %v548 = vmul.f32 %v461, %v532
      %v549 = vmul.f32 %v466, %v532
      %v550 = vmul.f32 %v469, %v532
      %v551 = vmul.f32 %v474, %v532
      %v552 = vmul.f32 %v477, %v532
      %v553 = vmul.f32 %v482, %v532
      %v554 = vmul.f32 %v485, %v532
      %v555 = vmul.f32 %v490, %v532
      %v556 = vmul.f32 %v493, %v532
      %v557 = vmul.f32 %v498, %v532
      %v558 = vmul.f32 %v501, %v532
      %v559 = vmul.f32 %v506, %v532
      %v560 = vmul.f32 %v509, %v532
      %v561 = vmul.f32 %v514, %v532
      %v562 = vmul.f32 %v517, %v532
      %v563 = vmul.f32 %v522, %v532
      %v564 = vmul.f32 %v525, %v532
      %v565 = vld [vmem:[%s2 + $0x1] sm:$0x1]
      %v566 = vlaneseq
      %v567 = vshrl.u32 %v566, 7
      %v568 = vsub.s32 0, %v567
      %v569 = vrot.slane %v565, %v568
      %v570 = vadd.f32 %v533, %v569
      %v571 = vadd.f32 %v534, %v569
      %v572 = vadd.f32 %v535, %v569
      %v573 = vadd.f32 %v536, %v569
      %v574 = vadd.f32 %v537, %v569
      %v575 = vadd.f32 %v538, %v569
      %v576 = vadd.f32 %v539, %v569
      %v577 = vadd.f32 %v540, %v569
      %v578 = vadd.f32 %v541, %v569
      %v579 = vadd.f32 %v542, %v569
      %v580 = vadd.f32 %v543, %v569
      %v581 = vadd.f32 %v544, %v569
      %v582 = vadd.f32 %v545, %v569
      %v583 = vadd.f32 %v546, %v569
      %v584 = vadd.f32 %v547, %v569
      %v585 = vadd.f32 %v548, %v569
      %v586 = vadd.f32 %v549, %v569
      %v587 = vadd.f32 %v550, %v569
      %v588 = vadd.f32 %v551, %v569
      %v589 = vadd.f32 %v552, %v569
      %v590 = vadd.f32 %v553, %v569
      %v591 = vadd.f32 %v554, %v569
      %v592 = vadd.f32 %v555, %v569
      %v593 = vadd.f32 %v556, %v569
      %v594 = vadd.f32 %v557, %v569
      %v595 = vadd.f32 %v558, %v569
      %v596 = vadd.f32 %v559, %v569
      %v597 = vadd.f32 %v560, %v569
      %v598 = vadd.f32 %v561, %v569
      %v599 = vadd.f32 %v562, %v569
      %v600 = vadd.f32 %v563, %v569
      %v601 = vadd.f32 %v564, %v569
      %v602 = vmax.f32 %v570, 0.0
      %v603 = vmax.f32 %v571, 0.0
      %v604 = vmax.f32 %v572, 0.0
      %v605 = vmax.f32 %v573, 0.0
      %v606 = vmax.f32 %v574, 0.0
      %v607 = vmax.f32 %v575, 0.0
      %v608 = vmax.f32 %v576, 0.0
      %v609 = vmax.f32 %v577, 0.0
      %v610 = vmax.f32 %v578, 0.0
      %v611 = vmax.f32 %v579, 0.0
      %v612 = vmax.f32 %v580, 0.0
      %v613 = vmax.f32 %v581, 0.0
      %v614 = vmax.f32 %v582, 0.0
      %v615 = vmax.f32 %v583, 0.0
      %v616 = vmax.f32 %v584, 0.0
      %v617 = vmax.f32 %v585, 0.0
      %v618 = vmax.f32 %v586, 0.0
      %v619 = vmax.f32 %v587, 0.0
      %v620 = vmax.f32 %v588, 0.0
      %v621 = vmax.f32 %v589, 0.0
      %v622 = vmax.f32 %v590, 0.0
      %v623 = vmax.f32 %v591, 0.0
      %v624 = vmax.f32 %v592, 0.0
      %v625 = vmax.f32 %v593, 0.0
      %v626 = vmax.f32 %v594, 0.0
      %v627 = vmax.f32 %v595, 0.0
      %v628 = vmax.f32 %v596, 0.0
      %v629 = vmax.f32 %v597, 0.0
      %v630 = vmax.f32 %v598, 0.0
      %v631 = vmax.f32 %v599, 0.0
      %v632 = vmax.f32 %v600, 0.0
      %v633 = vmax.f32 %v601, 0.0
      %v634 = vpack.c.bf16 %v603, %v602
      %v635 = vpack.c.bf16 %v605, %v604
      %v636 = vpack.c.bf16 %v607, %v606
      %v637 = vpack.c.bf16 %v609, %v608
      %v638 = vpack.c.bf16 %v611, %v610
      %v639 = vpack.c.bf16 %v613, %v612
      %v640 = vpack.c.bf16 %v615, %v614
      %v641 = vpack.c.bf16 %v617, %v616
      %v642 = vpack.c.bf16 %v619, %v618
      %v643 = vpack.c.bf16 %v621, %v620
      %v644 = vpack.c.bf16 %v623, %v622
      %v645 = vpack.c.bf16 %v625, %v624
      %v646 = vpack.c.bf16 %v627, %v626
      %v647 = vpack.c.bf16 %v629, %v628
      %v648 = vpack.c.bf16 %v631, %v630
      %v649 = vpack.c.bf16 %v633, %v632
      %v666 = vunpack.c.l.b16 %v634
      %v667 = vunpack.c.h.b16 %v634
      %v668 = vunpack.c.l.b16 %v635
      %v669 = vunpack.c.h.b16 %v635
      %v670 = vunpack.c.l.b16 %v636
      %v671 = vunpack.c.h.b16 %v636
      %v672 = vunpack.c.l.b16 %v637
      %v673 = vunpack.c.h.b16 %v637
      %v674 = vunpack.c.l.b16 %v638
      %v675 = vunpack.c.h.b16 %v638
      %v676 = vunpack.c.l.b16 %v639
      %v677 = vunpack.c.h.b16 %v639
      %v678 = vunpack.c.l.b16 %v640
      %v679 = vunpack.c.h.b16 %v640
      %v680 = vunpack.c.l.b16 %v641
      %v681 = vunpack.c.h.b16 %v641
      %v682 = vunpack.c.l.b16 %v642
      %v683 = vunpack.c.h.b16 %v642
      %v684 = vunpack.c.l.b16 %v643
      %v685 = vunpack.c.h.b16 %v643
      %v686 = vunpack.c.l.b16 %v644
      %v687 = vunpack.c.h.b16 %v644
      %v688 = vunpack.c.l.b16 %v645
      %v689 = vunpack.c.h.b16 %v645
      %v690 = vunpack.c.l.b16 %v646
      %v691 = vunpack.c.h.b16 %v646
      %v692 = vunpack.c.l.b16 %v647
      %v693 = vunpack.c.h.b16 %v647
      %v694 = vunpack.c.l.b16 %v648
      %v695 = vunpack.c.h.b16 %v648
      %v696 = vunpack.c.l.b16 %v649
      %v697 = vunpack.c.h.b16 %v649
      %v698 = vpack.c.b16 %v666, %v666
      %v699 = vpack.c.b16 %v667, %v667
      %v700 = vpack.c.b16 %v668, %v668
      %v701 = vpack.c.b16 %v669, %v669
      %v702 = vpack.c.b16 %v670, %v670
      %v703 = vpack.c.b16 %v671, %v671
      %v704 = vpack.c.b16 %v672, %v672
      %v705 = vpack.c.b16 %v673, %v673
      %v706 = vpack.c.b16 %v674, %v674
      %v707 = vpack.c.b16 %v675, %v675
      %v708 = vpack.c.b16 %v676, %v676
      %v709 = vpack.c.b16 %v677, %v677
      %v710 = vpack.c.b16 %v678, %v678
      %v711 = vpack.c.b16 %v679, %v679
      %v712 = vpack.c.b16 %v680, %v680
      %v713 = vpack.c.b16 %v681, %v681
      %v714 = vpack.c.b16 %v682, %v682
      %v715 = vpack.c.b16 %v683, %v683
      %v716 = vpack.c.b16 %v684, %v684
      %v717 = vpack.c.b16 %v685, %v685
      %v718 = vpack.c.b16 %v686, %v686
      %v719 = vpack.c.b16 %v687, %v687
      %v720 = vpack.c.b16 %v688, %v688
      %v721 = vpack.c.b16 %v689, %v689
      %v722 = vpack.c.b16 %v690, %v690
      %v723 = vpack.c.b16 %v691, %v691
      %v724 = vpack.c.b16 %v692, %v692
      %v725 = vpack.c.b16 %v693, %v693
      %v726 = vpack.c.b16 %v694, %v694
      %v727 = vpack.c.b16 %v695, %v695
      %v728 = vpack.c.b16 %v696, %v696
      %v729 = vpack.c.b16 %v697, %v697
      %762 = vst [vmem:[%s172] sm:$0xf] %v698
      %763 = vst [vmem:[%s172 + $0x4] sm:$0xf] %v699
      %764 = vst [vmem:[%s172 + $0x8] sm:$0xf] %v700
      %765 = vst [vmem:[%s172 + $0xc] sm:$0xf] %v701
      %766 = vst [vmem:[%s172 + $0x10] sm:$0xf] %v702
      %767 = vst [vmem:[%s172 + $0x14] sm:$0xf] %v703
      %768 = vst [vmem:[%s172 + $0x18] sm:$0xf] %v704
      %769 = vst [vmem:[%s172 + $0x1c] sm:$0xf] %v705
      %770 = vst [vmem:[%s172 + $0x20] sm:$0xf] %v706
      %771 = vst [vmem:[%s172 + $0x24] sm:$0xf] %v707
      %772 = vst [vmem:[%s172 + $0x28] sm:$0xf] %v708
      %773 = vst [vmem:[%s172 + $0x2c] sm:$0xf] %v709
      %774 = vst [vmem:[%s172 + $0x30] sm:$0xf] %v710
      %775 = vst [vmem:[%s172 + $0x34] sm:$0xf] %v711
      %776 = vst [vmem:[%s172 + $0x38] sm:$0xf] %v712
      %777 = vst [vmem:[%s172 + $0x3c] sm:$0xf] %v713
      %778 = vst [vmem:[%s172 + $0x40] sm:$0xf] %v714
      %779 = vst [vmem:[%s172 + $0x44] sm:$0xf] %v715
      %780 = vst [vmem:[%s172 + $0x48] sm:$0xf] %v716
      %781 = vst [vmem:[%s172 + $0x4c] sm:$0xf] %v717
      %782 = vst [vmem:[%s172 + $0x50] sm:$0xf] %v718
      %783 = vst [vmem:[%s172 + $0x54] sm:$0xf] %v719
      %784 = vst [vmem:[%s172 + $0x58] sm:$0xf] %v720
      %785 = vst [vmem:[%s172 + $0x5c] sm:$0xf] %v721
      %786 = vst [vmem:[%s172 + $0x60] sm:$0xf] %v722
      %787 = vst [vmem:[%s172 + $0x64] sm:$0xf] %v723
      %788 = vst [vmem:[%s172 + $0x68] sm:$0xf] %v724
      %789 = vst [vmem:[%s172 + $0x6c] sm:$0xf] %v725
      %790 = vst [vmem:[%s172 + $0x70] sm:$0xf] %v726
      %791 = vst [vmem:[%s172 + $0x74] sm:$0xf] %v727
      %792 = vst [vmem:[%s172 + $0x78] sm:$0xf] %v728
      %793 = vst [vmem:[%s172 + $0x7c] sm:$0xf] %v729
      %s794 = smul.u32 32, %s14
      %p795 = scmp.lt.s32.totalorder %s794, 63
      %s796 = scalar_select %p795, %s794, 63
      %s797 = smul.addr %s796, 4
      %s798 = scalar_lea.vmem %s3, %s797
      // Predicated region
      $region33: #{resnetfc_forward.39} parent=31 // pred_check
        %p799 = pneg %p100
      $region34: #{resnetfc_forward.39} parent=31 // pred_check_branch
        %801 = sbr.rel (%p799) target = $region36
      $region35: #{resnetfc_forward.39} parent=31 // pred_region
        %s802 = smul.u32 32, %s14
      $region36: #{resnetfc_forward.39} parent=31 // pred_fallthru
        _
    $region32: #{resnetfc_forward.39} parent=5 // pred_fallthru
      _
    %p803 = scmp.le.s32.totalorder 2, %s9
    // Predicated region
    $region37: #{resnetfc_forward.39} parent=5 // pred_check
      %p804 = pneg %p803
    $region38: #{resnetfc_forward.39} parent=5 // pred_check_branch
      %806 = sbr.rel (%p804) target = $region40
    $region39: #{resnetfc_forward.39} parent=5 // pred_region
      %s807 = ssub.s32 %s9, 2
      // Predicated region
      $region41: #{resnetfc_forward.39} parent=39 // pred_check
        %p808 = pneg %p106
      $region42: #{resnetfc_forward.39} parent=39 // pred_check_branch
        %810 = sbr.rel (%p808) target = $region44
      $region43: #{resnetfc_forward.39} parent=39 // pred_region
        %s811 = smul.u32 32, %s15
        %p812 = scmp.lt.s32.totalorder %s811, 63
        %s813 = scalar_select %p812, %s811, 63
        %s814 = smul.addr %s813, 4
        %s815 = scalar_lea.vmem %s3, %s814
      $region44: #{resnetfc_forward.39} parent=39 // pred_fallthru
        _
    $region40: #{resnetfc_forward.39} parent=5 // pred_fallthru
      _
  $region6: #{resnetfc_forward.39} parent=0 // loop_footer
    %s13 = sadd.s32 1, %s9
  $region7: #{resnetfc_forward.39} parent=0 // loop_footer_branch
    %8 = sbr.rel target = $region3
  $region8: #{resnetfc_forward.39} parent=0 // loop_exit
    _

// kernel: resnetfc_forward.40
$region0: #{resnetfc_forward.40}
  #allocation0 [shape = 'u32[]', space=smem, size = 0x4, offset = 0x4, fixed_abs, tag = 'smem constant byte address 0x4 - core index']
  #allocation1 [shape = 'u32[144,128]{1,0:T(1,128)}', space=vmem, size = 0x12000, scoped, tag = 'internal scratch']
  %s0 = inlined_call_operand.vmem [shape: bf16[512,128], index: 0, kind: input, shape index: {}]
  %s1 = inlined_call_operand.vmem [shape: bf16[128,128], index: 1, kind: input, shape index: {}]
  %s2 = inlined_call_operand.vmem [shape: f32[2,128], index: 2, kind: input, shape index: {}]
  %s3 = inlined_call_operand.vmem [shape: bf16[512,128], index: 3, kind: output, shape index: {}]
  %s4 = sld [smem:[#allocation0]]
  $region45: #{resnetfc_forward.40} parent=0
    _
  %s6 = ssub.s32 1, %s4
  %s7 = scalar_select 0, %s6, %s4
  loop: start=0, step=1, limit=4
  $region2: #{resnetfc_forward.40} parent=0 // loop_pre_header
    _
  $region3: #{resnetfc_forward.40} parent=0 // loop_header
    %s9 = sphi 0, %s13
    %p10 = scmp.ge.s32.totalorder %s9, 4
    %s19 = sphi 0, %s21
    %s22 = sphi 0, %s19
    %s23 = sphi 0, %s22
    %s39 = sphi 0, %s23
    %s43 = sphi 0, %s43
    %s45 = sphi 0, %s43
    %s46 = sphi 0, %s45
    %s60 = sphi 0, %s46
    %s64 = sphi 0, %s64
    %s66 = sphi 0, %s64
    %s67 = sphi 0, %s66
    %s81 = sphi 0, %s67
    %s87 = sphi 0, %s89
    %s90 = sphi 0, %s87
    %s91 = sphi 0, %s90
    %s107 = sphi 0, %s91
  $region4: #{resnetfc_forward.40} parent=0 // loop_header_branch
    %12 = sbr.rel (%p10) target = $region8
  $region5: #{resnetfc_forward.40} parent=0 // loop_body
    %s14 = ssub.s32 %s9, 1
    %s15 = ssub.s32 %s9, 2
    %s16 = sadd.s32 %s9, 1
    %s17 = ssub.s32 %s9, %s16
    %p18 = scmp.eq.s32.totalorder %s17, 0
    %s20 = sadd.s32 %s19, 1
    %s21 = scalar_select %p18, %s19, %s20
    %p24 = pneg %p18
    %p25 = scmp.eq.s32.totalorder %s9, 1
    %p26 = por %p24, %p25
    %p27 = scmp.ne.s32.totalorder %s19, %s22
    %p28 = scmp.eq.s32.totalorder %s9, 0
    %p29 = por %p27, %p28
    %p30 = scmp.ne.s32.totalorder %s19, %s22
    %p31 = scmp.eq.s32.totalorder %s14, 1
    %p32 = por %p30, %p31
    %p33 = scmp.ne.s32.totalorder %s22, %s23
    %p34 = scmp.eq.s32.totalorder %s14, 0
    %p35 = por %p33, %p34
    %p36 = scmp.ne.s32.totalorder %s22, %s23
    %p37 = scmp.eq.s32.totalorder %s15, 1
    %p38 = por %p36, %p37
    %p40 = scmp.ne.s32.totalorder %s23, %s39
    %p41 = scmp.eq.s32.totalorder %s15, 0
    %p42 = por %p40, %p41
    %s44 = sadd.s32 %s43, 1
    %p47 = scmp.eq.s32.totalorder %s9, 1
    %p48 = scmp.ne.s32.totalorder %s43, %s45
    %p49 = scmp.eq.s32.totalorder %s9, 0
    %p50 = por %p48, %p49
    %p51 = scmp.ne.s32.totalorder %s43, %s45
    %p52 = scmp.eq.s32.totalorder %s14, 1
    %p53 = por %p51, %p52
    %p54 = scmp.ne.s32.totalorder %s45, %s46
    %p55 = scmp.eq.s32.totalorder %s14, 0
    %p56 = por %p54, %p55
    %p57 = scmp.ne.s32.totalorder %s45, %s46
    %p58 = scmp.eq.s32.totalorder %s15, 1
    %p59 = por %p57, %p58
    %p61 = scmp.ne.s32.totalorder %s46, %s60
    %p62 = scmp.eq.s32.totalorder %s15, 0
    %p63 = por %p61, %p62
    %s65 = sadd.s32 %s64, 1
    %p68 = scmp.eq.s32.totalorder %s9, 1
    %p69 = scmp.ne.s32.totalorder %s64, %s66
    %p70 = scmp.eq.s32.totalorder %s9, 0
    %p71 = por %p69, %p70
    %p72 = scmp.ne.s32.totalorder %s64, %s66
    %p73 = scmp.eq.s32.totalorder %s14, 1
    %p74 = por %p72, %p73
    %p75 = scmp.ne.s32.totalorder %s66, %s67
    %p76 = scmp.eq.s32.totalorder %s14, 0
    %p77 = por %p75, %p76
    %p78 = scmp.ne.s32.totalorder %s66, %s67
    %p79 = scmp.eq.s32.totalorder %s15, 1
    %p80 = por %p78, %p79
    %p82 = scmp.ne.s32.totalorder %s67, %s81
    %p83 = scmp.eq.s32.totalorder %s15, 0
    %p84 = por %p82, %p83
    %s85 = ssub.s32 %s9, %s16
    %p86 = scmp.eq.s32.totalorder %s85, 0
    %s88 = sadd.s32 %s87, 1
    %s89 = scalar_select %p86, %s87, %s88
    %p92 = pneg %p86
    %p93 = scmp.eq.s32.totalorder %s9, 1
    %p94 = por %p92, %p93
    %p95 = scmp.ne.s32.totalorder %s87, %s90
    %p96 = scmp.eq.s32.totalorder %s9, 0
    %p97 = por %p95, %p96
    %p98 = scmp.ne.s32.totalorder %s87, %s90
    %p99 = scmp.eq.s32.totalorder %s14, 1
    %p100 = por %p98, %p99
    %p101 = scmp.ne.s32.totalorder %s90, %s91
    %p102 = scmp.eq.s32.totalorder %s14, 0
    %p103 = por %p101, %p102
    %p104 = scmp.ne.s32.totalorder %s90, %s91
    %p105 = scmp.eq.s32.totalorder %s15, 1
    %p106 = por %p104, %p105
    %p108 = scmp.ne.s32.totalorder %s91, %s107
    %p109 = scmp.eq.s32.totalorder %s15, 0
    %p110 = por %p108, %p109
    %p111 = scmp.le.s32.totalorder 1, %s9
    %p112 = scmp.lt.s32.totalorder %s9, 3
    %p113 = pnand %p111, %p112
    %p114 = pneg %p113
    // Predicated region
    $region9: #{resnetfc_forward.40} parent=5 // pred_check
      _
    $region10: #{resnetfc_forward.40} parent=5 // pred_check_branch
      %116 = sbr.rel (%p113) target = $region12
    $region11: #{resnetfc_forward.40} parent=5 // pred_region
      %s117 = ssub.s32 %s9, 1
      // Predicated region
      $region13: #{resnetfc_forward.40} parent=11 // pred_check
        %p118 = pneg %p56
      $region14: #{resnetfc_forward.40} parent=11 // pred_check_branch
        %120 = sbr.rel (%p118) target = $region16
      $region15: #{resnetfc_forward.40} parent=11 // pred_region
        _
      $region16: #{resnetfc_forward.40} parent=11 // pred_fallthru
        _
      // Predicated region
      $region17: #{resnetfc_forward.40} parent=11 // pred_check
        %p121 = pneg %p77
      $region18: #{resnetfc_forward.40} parent=11 // pred_check_branch
        %123 = sbr.rel (%p121) target = $region20
      $region19: #{resnetfc_forward.40} parent=11 // pred_region
        _
      $region20: #{resnetfc_forward.40} parent=11 // pred_fallthru
        _
    $region12: #{resnetfc_forward.40} parent=5 // pred_fallthru
      _
    %p124 = scmp.lt.s32.totalorder %s9, 2
    // Predicated region
    $region21: #{resnetfc_forward.40} parent=5 // pred_check
      %p125 = pneg %p124
    $region22: #{resnetfc_forward.40} parent=5 // pred_check_branch
      %127 = sbr.rel (%p125) target = $region24
    $region23: #{resnetfc_forward.40} parent=5 // pred_region
      // Predicated region
      $region25: #{resnetfc_forward.40} parent=23 // pred_check
        %p128 = pneg %p29
      $region26: #{resnetfc_forward.40} parent=23 // pred_check_branch
        %130 = sbr.rel (%p128) target = $region28
      $region27: #{resnetfc_forward.40} parent=23 // pred_region
        %s131 = smul.u32 32, %s9
        %p132 = scmp.lt.s32.totalorder %s131, 63
        %s133 = scalar_select %p132, %s131, 63
        %s134 = smul.addr %s133, 4
        %s135 = scalar_lea.vmem %s0, %s134
        %s136 = smul.u32 32, %s9
      $region28: #{resnetfc_forward.40} parent=23 // pred_fallthru
        _
    $region24: #{resnetfc_forward.40} parent=5 // pred_fallthru
      _
    %p137 = scmp.le.s32.totalorder 1, %s9
    %p138 = scmp.lt.s32.totalorder %s9, 3
    %p139 = pnand %p137, %p138
    %p140 = pneg %p139
    // Predicated region
    $region29: #{resnetfc_forward.40} parent=5 // pred_check
      _
    $region30: #{resnetfc_forward.40} parent=5 // pred_check_branch
      %142 = sbr.rel (%p139) target = $region32
    $region31: #{resnetfc_forward.40} parent=5 // pred_region
      %s143 = ssub.s32 %s9, 1
      %s144 = smul.u32 32, %s14
      %p145 = scmp.lt.s32.totalorder %s144, 63
      %s146 = scalar_select %p145, %s144, 63
      %s147 = smul.addr %s146, 4
      %s148 = scalar_lea.vmem %s0, %s147
      %p149 = pneg %p35
      %p150 = pneg %p32
      %p151 = pneg %p56
      %p152 = pneg %p53
      %p153 = pneg %p77
      %p154 = pneg %p74
      %p155 = pneg %p103
      %p156 = pneg %p100
      %s157 = smul.u32 32, %s14
      %p158 = scmp.lt.s32.totalorder %s157, 63
      %s159 = scalar_select %p158, %s157, 63
      %s160 = smul.addr %s159, 4
      %s161 = scalar_lea.vmem %s3, %s160
      %s162 = smul.u32 32, %s14
      %p163 = scmp.lt.s32.totalorder %s162, 63
      %s164 = scalar_select %p163, %s162, 63
      %s165 = smul.addr %s164, 4
      %s166 = scalar_lea.vmem %s0, %s165
      %s167 = smul.u32 32, %s14
      %s168 = smul.u32 32, %s14
      %p169 = scmp.lt.s32.totalorder %s168, 63
      %s170 = scalar_select %p169, %s168, 63
      %s171 = smul.addr %s170, 4
      %s172 = scalar_lea.vmem %s3, %s171
      %s173 = smul.u32 32, %s14
      %v175 = vld [vmem:[%s166] sm:$0xf]
      %v176 = vld [vmem:[%s166 + $0x4] sm:$0xf]
      %v177 = vld [vmem:[%s166 + $0x8] sm:$0xf]
      %v178 = vld [vmem:[%s166 + $0xc] sm:$0xf]
      %v179 = vld [vmem:[%s166 + $0x10] sm:$0xf]
      %v180 = vld [vmem:[%s166 + $0x14] sm:$0xf]
      %v181 = vld [vmem:[%s166 + $0x18] sm:$0xf]
      %v182 = vld [vmem:[%s166 + $0x1c] sm:$0xf]
      %v183 = vld [vmem:[%s166 + $0x20] sm:$0xf]
      %v184 = vld [vmem:[%s166 + $0x24] sm:$0xf]
      %v185 = vld [vmem:[%s166 + $0x28] sm:$0xf]
      %v186 = vld [vmem:[%s166 + $0x2c] sm:$0xf]
      %v187 = vld [vmem:[%s166 + $0x30] sm:$0xf]
      %v188 = vld [vmem:[%s166 + $0x34] sm:$0xf]
      %v189 = vld [vmem:[%s166 + $0x38] sm:$0xf]
      %v190 = vld [vmem:[%s166 + $0x3c] sm:$0xf]
      %v191 = vld [vmem:[%s166 + $0x40] sm:$0xf]
      %v192 = vld [vmem:[%s166 + $0x44] sm:$0xf]
      %v193 = vld [vmem:[%s166 + $0x48] sm:$0xf]
      %v194 = vld [vmem:[%s166 + $0x4c] sm:$0xf]
      %v195 = vld [vmem:[%s166 + $0x50] sm:$0xf]
      %v196 = vld [vmem:[%s166 + $0x54] sm:$0xf]
      %v197 = vld [vmem:[%s166 + $0x58] sm:$0xf]
      %v198 = vld [vmem:[%s166 + $0x5c] sm:$0xf]
      %v199 = vld [vmem:[%s166 + $0x60] sm:$0xf]
      %v200 = vld [vmem:[%s166 + $0x64] sm:$0xf]
      %v201 = vld [vmem:[%s166 + $0x68] sm:$0xf]
      %v202 = vld [vmem:[%s166 + $0x6c] sm:$0xf]
      %v203 = vld [vmem:[%s166 + $0x70] sm:$0xf]
      %v204 = vld [vmem:[%s166 + $0x74] sm:$0xf]
      %v205 = vld [vmem:[%s166 + $0x78] sm:$0xf]
      %v206 = vld [vmem:[%s166 + $0x7c] sm:$0xf]
      %v207 = vld [vmem:[%s1] sm:$0xf]
      %v208 = vld [vmem:[%s1 + $0x4] sm:$0xf]
      %v209 = vld [vmem:[%s1 + $0x8] sm:$0xf]
      %v210 = vld [vmem:[%s1 + $0xc] sm:$0xf]
      %v211 = vld [vmem:[%s1 + $0x10] sm:$0xf]
      %v212 = vld [vmem:[%s1 + $0x14] sm:$0xf]
      %v213 = vld [vmem:[%s1 + $0x18] sm:$0xf]
      %v214 = vld [vmem:[%s1 + $0x1c] sm:$0xf]
      %v215 = vld [vmem:[%s1 + $0x20] sm:$0xf]
      %v216 = vld [vmem:[%s1 + $0x24] sm:$0xf]
      %v217 = vld [vmem:[%s1 + $0x28] sm:$0xf]
      %v218 = vld [vmem:[%s1 + $0x2c] sm:$0xf]
      %v219 = vld [vmem:[%s1 + $0x30] sm:$0xf]
      %v220 = vld [vmem:[%s1 + $0x34] sm:$0xf]
      %v221 = vld [vmem:[%s1 + $0x38] sm:$0xf]
      %v222 = vld [vmem:[%s1 + $0x3c] sm:$0xf]
      %v255 = vunpack.c.l.b16 %v175
      %v256 = vunpack.c.l.b16 %v176
      %v257 = vunpack.c.l.b16 %v177
      %v258 = vunpack.c.l.b16 %v178
      %v259 = vunpack.c.l.b16 %v179
      %v260 = vunpack.c.l.b16 %v180
      %v261 = vunpack.c.l.b16 %v181
      %v262 = vunpack.c.l.b16 %v182
      %v263 = vunpack.c.l.b16 %v183
      %v264 = vunpack.c.l.b16 %v184
      %v265 = vunpack.c.l.b16 %v185
      %v266 = vunpack.c.l.b16 %v186
      %v267 = vunpack.c.l.b16 %v187
      %v268 = vunpack.c.l.b16 %v188
      %v269 = vunpack.c.l.b16 %v189
      %v270 = vunpack.c.l.b16 %v190
      %v271 = vunpack.c.l.b16 %v191
      %v272 = vunpack.c.l.b16 %v192
      %v273 = vunpack.c.l.b16 %v193
      %v274 = vunpack.c.l.b16 %v194
      %v275 = vunpack.c.l.b16 %v195
      %v276 = vunpack.c.l.b16 %v196
      %v277 = vunpack.c.l.b16 %v197
      %v278 = vunpack.c.l.b16 %v198
      %v279 = vunpack.c.l.b16 %v199
      %v280 = vunpack.c.l.b16 %v200
      %v281 = vunpack.c.l.b16 %v201
      %v282 = vunpack.c.l.b16 %v202
      %v283 = vunpack.c.l.b16 %v203
      %v284 = vunpack.c.l.b16 %v204
      %v285 = vunpack.c.l.b16 %v205
      %v286 = vunpack.c.l.b16 %v206
      %v287 = vpack.c.b16 %v256, %v255
      %v288 = vpack.c.b16 %v258, %v257
      %v289 = vpack.c.b16 %v260, %v259
      %v290 = vpack.c.b16 %v262, %v261
      %v291 = vpack.c.b16 %v264, %v263
      %v292 = vpack.c.b16 %v266, %v265
      %v293 = vpack.c.b16 %v268, %v267
      %v294 = vpack.c.b16 %v270, %v269
      %v295 = vpack.c.b16 %v272, %v271
      %v296 = vpack.c.b16 %v274, %v273
      %v297 = vpack.c.b16 %v276, %v275
      %v298 = vpack.c.b16 %v278, %v277
      %v299 = vpack.c.b16 %v280, %v279
      %v300 = vpack.c.b16 %v282, %v281
      %v301 = vpack.c.b16 %v284, %v283
      %v302 = vpack.c.b16 %v286, %v285
      %v335 = vunpack.c.l.b16 %v207
      %v336 = vunpack.c.l.b16 %v208
      %v337 = vunpack.c.l.b16 %v209
      %v338 = vunpack.c.l.b16 %v210
      %v339 = vunpack.c.l.b16 %v211
      %v340 = vunpack.c.l.b16 %v212
      %v341 = vunpack.c.l.b16 %v213
      %v342 = vunpack.c.l.b16 %v214
      %v343 = vunpack.c.l.b16 %v215
      %v344 = vunpack.c.l.b16 %v216
      %v345 = vunpack.c.l.b16 %v217
      %v346 = vunpack.c.l.b16 %v218
      %v347 = vunpack.c.l.b16 %v219
      %v348 = vunpack.c.l.b16 %v220
      %v349 = vunpack.c.l.b16 %v221
      %v350 = vunpack.c.l.b16 %v222
      %v351 = vpack.c.b16 %v336, %v335
      %v352 = vpack.c.b16 %v338, %v337
      %v353 = vpack.c.b16 %v340, %v339
      %v354 = vpack.c.b16 %v342, %v341
      %v355 = vpack.c.b16 %v344, %v343
      %v356 = vpack.c.b16 %v346, %v345
      %v357 = vpack.c.b16 %v348, %v347
      %v358 = vpack.c.b16 %v350, %v349
      %367 = vmatprep.subr.bf16.mxu0 0
      %368 = vmatpush1.bf16.msra.mxu0 %v351
      %369 = vmatprep.subr.bf16.mxu0 0
      %370 = vmatpush1.bf16.msra.mxu0 %v352
      %371 = vmatprep.subr.bf16.mxu0 0
      %372 = vmatpush1.bf16.msra.mxu0 %v353
      %373 = vmatprep.subr.bf16.mxu0 0
      %374 = vmatpush1.bf16.msra.mxu0 %v354
      %375 = vmatprep.subr.bf16.mxu0 0
      %376 = vmatpush1.bf16.msra.mxu0 %v355
      %377 = vmatprep.subr.bf16.mxu0 0
      %378 = vmatpush1.bf16.msra.mxu0 %v356
      %379 = vmatprep.subr.bf16.mxu0 0
      %380 = vmatpush1.bf16.msra.mxu0 %v357
      %381 = vmatprep.subr.bf16.mxu0 0
      %382 = vmatpush1.bf16.msra.mxu0 %v358
      %383 = vmatprep.subr.bf16.mxu0 0
      %384 = vmatpush1.bf16.msra.mxu0 0
      %385 = vmatprep.subr.bf16.mxu0 0
      %386 = vmatpush1.bf16.msra.mxu0 0
      %387 = vmatprep.subr.bf16.mxu0 0
      %388 = vmatpush1.bf16.msra.mxu0 0
      %389 = vmatprep.subr.bf16.mxu0 0
      %390 = vmatpush1.bf16.msra.mxu0 0
      %391 = vmatprep.subr.bf16.mxu0 0
      %392 = vmatpush1.bf16.msra.mxu0 0
      %393 = vmatprep.subr.bf16.mxu0 0
      %394 = vmatpush1.bf16.msra.mxu0 0
      %395 = vmatprep.subr.bf16.mxu0 0
      %396 = vmatpush1.bf16.msra.mxu0 0
      %397 = vmatprep.subr.bf16.mxu0 0
      %398 = vmatpush1.bf16.msra.mxu0 0
      %399 = vmatprep.mubr.bf16.mxu0 0
      %400 = vmatmul.mubr.bf16.gmra.mrb[0].mxu0 %v287
      %v401 = vpop.f32.mrb[0].mxu0
      %v402 = vadd.f32 0.0, %v401
      %v403 = vpop.f32.mrb[0].mxu0
      %v404 = vpop.f32.mrb[0].mxu0
      %v405 = vadd.f32 0.0, %v404
      %v406 = vpop.f32.mrb[0].mxu0
      %407 = vmatprep.mubr.bf16.mxu0 0
      %408 = vmatmul.mubr.bf16.gmra.mrb[0].mxu0 %v288
      %v409 = vpop.f32.mrb[0].mxu0
      %v410 = vadd.f32 0.0, %v409
      %v411 = vpop.f32.mrb[0].mxu0
      %v412 = vpop.f32.mrb[0].mxu0
      %v413 = vadd.f32 0.0, %v412
      %v414 = vpop.f32.mrb[0].mxu0
      %415 = vmatprep.mubr.bf16.mxu0 0
      %416 = vmatmul.mubr.bf16.gmra.mrb[0].mxu0 %v289
      %v417 = vpop.f32.mrb[0].mxu0
      %v418 = vadd.f32 0.0, %v417
      %v419 = vpop.f32.mrb[0].mxu0
      %v420 = vpop.f32.mrb[0].mxu0
      %v421 = vadd.f32 0.0, %v420
      %v422 = vpop.f32.mrb[0].mxu0
      %423 = vmatprep.mubr.bf16.mxu0 0
      %424 = vmatmul.mubr.bf16.gmra.mrb[0].mxu0 %v290
      %v425 = vpop.f32.mrb[0].mxu0
      %v426 = vadd.f32 0.0, %v425
      %v427 = vpop.f32.mrb[0].mxu0
      %v428 = vpop.f32.mrb[0].mxu0
      %v429 = vadd.f32 0.0, %v428
      %v430 = vpop.f32.mrb[0].mxu0
      %431 = vmatprep.mubr.bf16.mxu0 0
      %432 = vmatmul.mubr.bf16.gmra.mrb[0].mxu0 %v291
      %v433 = vpop.f32.mrb[0].mxu0
      %v434 = vadd.f32 0.0, %v433
      %v435 = vpop.f32.mrb[0].mxu0
      %v436 = vpop.f32.mrb[0].mxu0
      %v437 = vadd.f32 0.0, %v436
      %v438 = vpop.f32.mrb[0].mxu0
      %439 = vmatprep.mubr.bf16.mxu0 0
      %440 = vmatmul.mubr.bf16.gmra.mrb[0].mxu0 %v292
      %v441 = vpop.f32.mrb[0].mxu0
      %v442 = vadd.f32 0.0, %v441
      %v443 = vpop.f32.mrb[0].mxu0
      %v444 = vpop.f32.mrb[0].mxu0
      %v445 = vadd.f32 0.0, %v444
      %v446 = vpop.f32.mrb[0].mxu0
      %447 = vmatprep.mubr.bf16.mxu0 0
      %448 = vmatmul.mubr.bf16.gmra.mrb[0].mxu0 %v293
      %v449 = vpop.f32.mrb[0].mxu0
      %v450 = vadd.f32 0.0, %v449
      %v451 = vpop.f32.mrb[0].mxu0
      %v452 = vpop.f32.mrb[0].mxu0
      %v453 = vadd.f32 0.0, %v452
      %v454 = vpop.f32.mrb[0].mxu0
      %455 = vmatprep.mubr.bf16.mxu0 0
      %456 = vmatmul.mubr.bf16.gmra.mrb[0].mxu0 %v294
      %v457 = vpop.f32.mrb[0].mxu0
      %v458 = vadd.f32 0.0, %v457
      %v459 = vpop.f32.mrb[0].mxu0
      %v460 = vpop.f32.mrb[0].mxu0
      %v461 = vadd.f32 0.0, %v460
      %v462 = vpop.f32.mrb[0].mxu0
      %463 = vmatprep.mubr.bf16.mxu0 0
      %464 = vmatmul.mubr.bf16.gmra.mrb[0].mxu0 %v295
      %v465 = vpop.f32.mrb[0].mxu0
      %v466 = vadd.f32 0.0, %v465
      %v467 = vpop.f32.mrb[0].mxu0
      %v468 = vpop.f32.mrb[0].mxu0
      %v469 = vadd.f32 0.0, %v468
      %v470 = vpop.f32.mrb[0].mxu0
      %471 = vmatprep.mubr.bf16.mxu0 0
      %472 = vmatmul.mubr.bf16.gmra.mrb[0].mxu0 %v296
      %v473 = vpop.f32.mrb[0].mxu0
      %v474 = vadd.f32 0.0, %v473
      %v475 = vpop.f32.mrb[0].mxu0
      %v476 = vpop.f32.mrb[0].mxu0
      %v477 = vadd.f32 0.0, %v476
      %v478 = vpop.f32.mrb[0].mxu0
      %479 = vmatprep.mubr.bf16.mxu0 0
      %480 = vmatmul.mubr.bf16.gmra.mrb[0].mxu0 %v297
      %v481 = vpop.f32.mrb[0].mxu0
      %v482 = vadd.f32 0.0, %v481
      %v483 = vpop.f32.mrb[0].mxu0
      %v484 = vpop.f32.mrb[0].mxu0
      %v485 = vadd.f32 0.0, %v484
      %v486 = vpop.f32.mrb[0].mxu0
      %487 = vmatprep.mubr.bf16.mxu0 0
      %488 = vmatmul.mubr.bf16.gmra.mrb[0].mxu0 %v298
      %v489 = vpop.f32.mrb[0].mxu0
      %v490 = vadd.f32 0.0, %v489
      %v491 = vpop.f32.mrb[0].mxu0
      %v492 = vpop.f32.mrb[0].mxu0
      %v493 = vadd.f32 0.0, %v492
      %v494 = vpop.f32.mrb[0].mxu0
      %495 = vmatprep.mubr.bf16.mxu0 0
      %496 = vmatmul.mubr.bf16.gmra.mrb[0].mxu0 %v299
      %v497 = vpop.f32.mrb[0].mxu0
      %v498 = vadd.f32 0.0, %v497
      %v499 = vpop.f32.mrb[0].mxu0
      %v500 = vpop.f32.mrb[0].mxu0
      %v501 = vadd.f32 0.0, %v500
      %v502 = vpop.f32.mrb[0].mxu0
      %503 = vmatprep.mubr.bf16.mxu0 0
      %504 = vmatmul.mubr.bf16.gmra.mrb[0].mxu0 %v300
      %v505 = vpop.f32.mrb[0].mxu0
      %v506 = vadd.f32 0.0, %v505
      %v507 = vpop.f32.mrb[0].mxu0
      %v508 = vpop.f32.mrb[0].mxu0
      %v509 = vadd.f32 0.0, %v508
      %v510 = vpop.f32.mrb[0].mxu0
      %511 = vmatprep.mubr.bf16.mxu0 0
      %512 = vmatmul.mubr.bf16.gmra.mrb[0].mxu0 %v301
      %v513 = vpop.f32.mrb[0].mxu0
      %v514 = vadd.f32 0.0, %v513
      %v515 = vpop.f32.mrb[0].mxu0
      %v516 = vpop.f32.mrb[0].mxu0
      %v517 = vadd.f32 0.0, %v516
      %v518 = vpop.f32.mrb[0].mxu0
      %519 = vmatprep.mubr.bf16.mxu0 0
      %520 = vmatmul.mubr.bf16.gmra.mrb[0].mxu0 %v302
      %v521 = vpop.f32.mrb[0].mxu0
      %v522 = vadd.f32 0.0, %v521
      %v523 = vpop.f32.mrb[0].mxu0
      %v524 = vpop.f32.mrb[0].mxu0
      %v525 = vadd.f32 0.0, %v524
      %v526 = vpop.f32.mrb[0].mxu0
      %527 = vdwg.mxu0
      %v528 = vld [vmem:[%s2] sm:$0x1]
      %v529 = vlaneseq
      %v530 = vshrl.u32 %v529, 7
      %v531 = vsub.s32 0, %v530
      %v532 = vrot.slane %v528, %v531
      %v533 = vmul.f32 %v402, %v532
      %v534 = vmul.f32 %v405, %v532
      %v535 = vmul.f32 %v410, %v532
      %v536 = vmul.f32 %v413, %v532
      %v537 = vmul.f32 %v418, %v532
      %v538 = vmul.f32 %v421, %v532
      %v539 = vmul.f32 %v426, %v532
      %v540 = vmul.f32 %v429, %v532
      %v541 = vmul.f32 %v434, %v532
      %v542 = vmul.f32 %v437, %v532
      %v543 = vmul.f32 %v442, %v532
      %v544 = vmul.f32 %v445, %v532
      %v545 = vmul.f32 %v450, %v532
      %v546 = vmul.f32 %v453, %v532
      %v547 = vmul.f32 %v458, %v532
      %v548 = vmul.f32 %v461, %v532
      %v549 = vmul.f32 %v466, %v532
      %v550 = vmul.f32 %v469, %v532
      %v551 = vmul.f32 %v474, %v532
      %v552 = vmul.f32 %v477, %v532
      %v553 = vmul.f32 %v482, %v532
      %v554 = vmul.f32 %v485, %v532
      %v555 = vmul.f32 %v490, %v532
      %v556 = vmul.f32 %v493, %v532
      %v557 = vmul.f32 %v498, %v532
      %v558 = vmul.f32 %v501, %v532
      %v559 = vmul.f32 %v506, %v532
      %v560 = vmul.f32 %v509, %v532
      %v561 = vmul.f32 %v514, %v532
      %v562 = vmul.f32 %v517, %v532
      %v563 = vmul.f32 %v522, %v532
      %v564 = vmul.f32 %v525, %v532
      %v565 = vld [vmem:[%s2 + $0x1] sm:$0x1]
      %v566 = vlaneseq
      %v567 = vshrl.u32 %v566, 7
      %v568 = vsub.s32 0, %v567
      %v569 = vrot.slane %v565, %v568
      %v570 = vadd.f32 %v533, %v569
      %v571 = vadd.f32 %v534, %v569
      %v572 = vadd.f32 %v535, %v569
      %v573 = vadd.f32 %v536, %v569
      %v574 = vadd.f32 %v537, %v569
      %v575 = vadd.f32 %v538, %v569
      %v576 = vadd.f32 %v539, %v569
      %v577 = vadd.f32 %v540, %v569
      %v578 = vadd.f32 %v541, %v569
      %v579 = vadd.f32 %v542, %v569
      %v580 = vadd.f32 %v543, %v569
      %v581 = vadd.f32 %v544, %v569
      %v582 = vadd.f32 %v545, %v569
      %v583 = vadd.f32 %v546, %v569
      %v584 = vadd.f32 %v547, %v569
      %v585 = vadd.f32 %v548, %v569
      %v586 = vadd.f32 %v549, %v569
      %v587 = vadd.f32 %v550, %v569
      %v588 = vadd.f32 %v551, %v569
      %v589 = vadd.f32 %v552, %v569
      %v590 = vadd.f32 %v553, %v569
      %v591 = vadd.f32 %v554, %v569
      %v592 = vadd.f32 %v555, %v569
      %v593 = vadd.f32 %v556, %v569
      %v594 = vadd.f32 %v557, %v569
      %v595 = vadd.f32 %v558, %v569
      %v596 = vadd.f32 %v559, %v569
      %v597 = vadd.f32 %v560, %v569
      %v598 = vadd.f32 %v561, %v569
      %v599 = vadd.f32 %v562, %v569
      %v600 = vadd.f32 %v563, %v569
      %v601 = vadd.f32 %v564, %v569
      %v602 = vpack.c.bf16 %v571, %v570
      %v603 = vpack.c.bf16 %v573, %v572
      %v604 = vpack.c.bf16 %v575, %v574
      %v605 = vpack.c.bf16 %v577, %v576
      %v606 = vpack.c.bf16 %v579, %v578
      %v607 = vpack.c.bf16 %v581, %v580
      %v608 = vpack.c.bf16 %v583, %v582
      %v609 = vpack.c.bf16 %v585, %v584
      %v610 = vpack.c.bf16 %v587, %v586
      %v611 = vpack.c.bf16 %v589, %v588
      %v612 = vpack.c.bf16 %v591, %v590
      %v613 = vpack.c.bf16 %v593, %v592
      %v614 = vpack.c.bf16 %v595, %v594
      %v615 = vpack.c.bf16 %v597, %v596
      %v616 = vpack.c.bf16 %v599, %v598
      %v617 = vpack.c.bf16 %v601, %v600
      %v634 = vunpack.c.l.b16 %v602
      %v635 = vunpack.c.h.b16 %v602
      %v636 = vunpack.c.l.b16 %v603
      %v637 = vunpack.c.h.b16 %v603
      %v638 = vunpack.c.l.b16 %v604
      %v639 = vunpack.c.h.b16 %v604
      %v640 = vunpack.c.l.b16 %v605
      %v641 = vunpack.c.h.b16 %v605
      %v642 = vunpack.c.l.b16 %v606
      %v643 = vunpack.c.h.b16 %v606
      %v644 = vunpack.c.l.b16 %v607
      %v645 = vunpack.c.h.b16 %v607
      %v646 = vunpack.c.l.b16 %v608
      %v647 = vunpack.c.h.b16 %v608
      %v648 = vunpack.c.l.b16 %v609
      %v649 = vunpack.c.h.b16 %v609
      %v650 = vunpack.c.l.b16 %v610
      %v651 = vunpack.c.h.b16 %v610
      %v652 = vunpack.c.l.b16 %v611
      %v653 = vunpack.c.h.b16 %v611
      %v654 = vunpack.c.l.b16 %v612
      %v655 = vunpack.c.h.b16 %v612
      %v656 = vunpack.c.l.b16 %v613
      %v657 = vunpack.c.h.b16 %v613
      %v658 = vunpack.c.l.b16 %v614
      %v659 = vunpack.c.h.b16 %v614
      %v660 = vunpack.c.l.b16 %v615
      %v661 = vunpack.c.h.b16 %v615
      %v662 = vunpack.c.l.b16 %v616
      %v663 = vunpack.c.h.b16 %v616
      %v664 = vunpack.c.l.b16 %v617
      %v665 = vunpack.c.h.b16 %v617
      %v666 = vpack.c.b16 %v634, %v634
      %v667 = vpack.c.b16 %v635, %v635
      %v668 = vpack.c.b16 %v636, %v636
      %v669 = vpack.c.b16 %v637, %v637
      %v670 = vpack.c.b16 %v638, %v638
      %v671 = vpack.c.b16 %v639, %v639
      %v672 = vpack.c.b16 %v640, %v640
      %v673 = vpack.c.b16 %v641, %v641
      %v674 = vpack.c.b16 %v642, %v642
      %v675 = vpack.c.b16 %v643, %v643
      %v676 = vpack.c.b16 %v644, %v644
      %v677 = vpack.c.b16 %v645, %v645
      %v678 = vpack.c.b16 %v646, %v646
      %v679 = vpack.c.b16 %v647, %v647
      %v680 = vpack.c.b16 %v648, %v648
      %v681 = vpack.c.b16 %v649, %v649
      %v682 = vpack.c.b16 %v650, %v650
      %v683 = vpack.c.b16 %v651, %v651
      %v684 = vpack.c.b16 %v652, %v652
      %v685 = vpack.c.b16 %v653, %v653
      %v686 = vpack.c.b16 %v654, %v654
      %v687 = vpack.c.b16 %v655, %v655
      %v688 = vpack.c.b16 %v656, %v656
      %v689 = vpack.c.b16 %v657, %v657
      %v690 = vpack.c.b16 %v658, %v658
      %v691 = vpack.c.b16 %v659, %v659
      %v692 = vpack.c.b16 %v660, %v660
      %v693 = vpack.c.b16 %v661, %v661
      %v694 = vpack.c.b16 %v662, %v662
      %v695 = vpack.c.b16 %v663, %v663
      %v696 = vpack.c.b16 %v664, %v664
      %v697 = vpack.c.b16 %v665, %v665
      %730 = vst [vmem:[%s172] sm:$0xf] %v666
      %731 = vst [vmem:[%s172 + $0x4] sm:$0xf] %v667
      %732 = vst [vmem:[%s172 + $0x8] sm:$0xf] %v668
      %733 = vst [vmem:[%s172 + $0xc] sm:$0xf] %v669
      %734 = vst [vmem:[%s172 + $0x10] sm:$0xf] %v670
      %735 = vst [vmem:[%s172 + $0x14] sm:$0xf] %v671
      %736 = vst [vmem:[%s172 + $0x18] sm:$0xf] %v672
      %737 = vst [vmem:[%s172 + $0x1c] sm:$0xf] %v673
      %738 = vst [vmem:[%s172 + $0x20] sm:$0xf] %v674
      %739 = vst [vmem:[%s172 + $0x24] sm:$0xf] %v675
      %740 = vst [vmem:[%s172 + $0x28] sm:$0xf] %v676
      %741 = vst [vmem:[%s172 + $0x2c] sm:$0xf] %v677
      %742 = vst [vmem:[%s172 + $0x30] sm:$0xf] %v678
      %743 = vst [vmem:[%s172 + $0x34] sm:$0xf] %v679
      %744 = vst [vmem:[%s172 + $0x38] sm:$0xf] %v680
      %745 = vst [vmem:[%s172 + $0x3c] sm:$0xf] %v681
      %746 = vst [vmem:[%s172 + $0x40] sm:$0xf] %v682
      %747 = vst [vmem:[%s172 + $0x44] sm:$0xf] %v683
      %748 = vst [vmem:[%s172 + $0x48] sm:$0xf] %v684
      %749 = vst [vmem:[%s172 + $0x4c] sm:$0xf] %v685
      %750 = vst [vmem:[%s172 + $0x50] sm:$0xf] %v686
      %751 = vst [vmem:[%s172 + $0x54] sm:$0xf] %v687
      %752 = vst [vmem:[%s172 + $0x58] sm:$0xf] %v688
      %753 = vst [vmem:[%s172 + $0x5c] sm:$0xf] %v689
      %754 = vst [vmem:[%s172 + $0x60] sm:$0xf] %v690
      %755 = vst [vmem:[%s172 + $0x64] sm:$0xf] %v691
      %756 = vst [vmem:[%s172 + $0x68] sm:$0xf] %v692
      %757 = vst [vmem:[%s172 + $0x6c] sm:$0xf] %v693
      %758 = vst [vmem:[%s172 + $0x70] sm:$0xf] %v694
      %759 = vst [vmem:[%s172 + $0x74] sm:$0xf] %v695
      %760 = vst [vmem:[%s172 + $0x78] sm:$0xf] %v696
      %761 = vst [vmem:[%s172 + $0x7c] sm:$0xf] %v697
      %s762 = smul.u32 32, %s14
      %p763 = scmp.lt.s32.totalorder %s762, 63
      %s764 = scalar_select %p763, %s762, 63
      %s765 = smul.addr %s764, 4
      %s766 = scalar_lea.vmem %s3, %s765
      // Predicated region
      $region33: #{resnetfc_forward.40} parent=31 // pred_check
        %p767 = pneg %p100
      $region34: #{resnetfc_forward.40} parent=31 // pred_check_branch
        %769 = sbr.rel (%p767) target = $region36
      $region35: #{resnetfc_forward.40} parent=31 // pred_region
        %s770 = smul.u32 32, %s14
      $region36: #{resnetfc_forward.40} parent=31 // pred_fallthru
        _
    $region32: #{resnetfc_forward.40} parent=5 // pred_fallthru
      _
    %p771 = scmp.le.s32.totalorder 2, %s9
    // Predicated region
    $region37: #{resnetfc_forward.40} parent=5 // pred_check
      %p772 = pneg %p771
    $region38: #{resnetfc_forward.40} parent=5 // pred_check_branch
      %774 = sbr.rel (%p772) target = $region40
    $region39: #{resnetfc_forward.40} parent=5 // pred_region
      %s775 = ssub.s32 %s9, 2
      // Predicated region
      $region41: #{resnetfc_forward.40} parent=39 // pred_check
        %p776 = pneg %p106
      $region42: #{resnetfc_forward.40} parent=39 // pred_check_branch
        %778 = sbr.rel (%p776) target = $region44
      $region43: #{resnetfc_forward.40} parent=39 // pred_region
        %s779 = smul.u32 32, %s15
        %p780 = scmp.lt.s32.totalorder %s779, 63
        %s781 = scalar_select %p780, %s779, 63
        %s782 = smul.addr %s781, 4
        %s783 = scalar_lea.vmem %s3, %s782
      $region44: #{resnetfc_forward.40} parent=39 // pred_fallthru
        _
    $region40: #{resnetfc_forward.40} parent=5 // pred_fallthru
      _
  $region6: #{resnetfc_forward.40} parent=0 // loop_footer
    %s13 = sadd.s32 1, %s9
  $region7: #{resnetfc_forward.40} parent=0 // loop_footer_branch
    %8 = sbr.rel target = $region3
  $region8: #{resnetfc_forward.40} parent=0 // loop_exit
    _

// kernel: resnetfc_forward.41
$region0: #{resnetfc_forward.41}
  #allocation0 [shape = 'u32[]', space=smem, size = 0x4, offset = 0x4, fixed_abs, tag = 'smem constant byte address 0x4 - core index']
  #allocation1 [shape = 'u32[144,128]{1,0:T(1,128)}', space=vmem, size = 0x12000, scoped, tag = 'internal scratch']
  %s0 = inlined_call_operand.vmem [shape: bf16[512,1152], index: 0, kind: input, shape index: {}]
  %s1 = inlined_call_operand.vmem [shape: bf16[1152,128], index: 1, kind: input, shape index: {}]
  %s2 = inlined_call_operand.vmem [shape: f32[2,128], index: 2, kind: input, shape index: {}]
  %s3 = inlined_call_operand.vmem [shape: bf16[128,128], index: 3, kind: input, shape index: {}]
  %s4 = inlined_call_operand.vmem [shape: f32[2,128], index: 4, kind: input, shape index: {}]
  %s5 = inlined_call_operand.vmem [shape: bf16[512,128], index: 5, kind: input, shape index: {}]
  %s6 = inlined_call_operand.vmem [shape: bf16[512,128], index: 6, kind: output, shape index: {}]
  %s7 = sld [smem:[#allocation0]]
  $region57: #{resnetfc_forward.41} parent=0
    _
  %s9 = ssub.s32 1, %s7
  %s10 = scalar_select 0, %s9, %s7
  loop: start=0, step=1, limit=4
  $region2: #{resnetfc_forward.41} parent=0 // loop_pre_header
    _
  $region3: #{resnetfc_forward.41} parent=0 // loop_header
    %s12 = sphi 0, %s16
    %p13 = scmp.ge.s32.totalorder %s12, 4
    %s22 = sphi 0, %s24
    %s25 = sphi 0, %s22
    %s26 = sphi 0, %s25
    %s42 = sphi 0, %s26
    %s46 = sphi 0, %s46
    %s48 = sphi 0, %s46
    %s49 = sphi 0, %s48
    %s63 = sphi 0, %s49
    %s67 = sphi 0, %s67
    %s69 = sphi 0, %s67
    %s70 = sphi 0, %s69
    %s84 = sphi 0, %s70
    %s88 = sphi 0, %s88
    %s90 = sphi 0, %s88
    %s91 = sphi 0, %s90
    %s105 = sphi 0, %s91
    %s109 = sphi 0, %s109
    %s111 = sphi 0, %s109
    %s112 = sphi 0, %s111
    %s126 = sphi 0, %s112
    %s132 = sphi 0, %s134
    %s135 = sphi 0, %s132
    %s136 = sphi 0, %s135
    %s152 = sphi 0, %s136
    %s158 = sphi 0, %s160
    %s161 = sphi 0, %s158
    %s162 = sphi 0, %s161
    %s178 = sphi 0, %s162
  $region4: #{resnetfc_forward.41} parent=0 // loop_header_branch
    %15 = sbr.rel (%p13) target = $region8
  $region5: #{resnetfc_forward.41} parent=0 // loop_body
    %s17 = ssub.s32 %s12, 1
    %s18 = ssub.s32 %s12, 2
    %s19 = sadd.s32 %s12, 1
    %s20 = ssub.s32 %s12, %s19
    %p21 = scmp.eq.s32.totalorder %s20, 0
    %s23 = sadd.s32 %s22, 1
    %s24 = scalar_select %p21, %s22, %s23
    %p27 = pneg %p21
    %p28 = scmp.eq.s32.totalorder %s12, 1
    %p29 = por %p27, %p28
    %p30 = scmp.ne.s32.totalorder %s22, %s25
    %p31 = scmp.eq.s32.totalorder %s12, 0
    %p32 = por %p30, %p31
    %p33 = scmp.ne.s32.totalorder %s22, %s25
    %p34 = scmp.eq.s32.totalorder %s17, 1
    %p35 = por %p33, %p34
    %p36 = scmp.ne.s32.totalorder %s25, %s26
    %p37 = scmp.eq.s32.totalorder %s17, 0
    %p38 = por %p36, %p37
    %p39 = scmp.ne.s32.totalorder %s25, %s26
    %p40 = scmp.eq.s32.totalorder %s18, 1
    %p41 = por %p39, %p40
    %p43 = scmp.ne.s32.totalorder %s26, %s42
    %p44 = scmp.eq.s32.totalorder %s18, 0
    %p45 = por %p43, %p44
    %s47 = sadd.s32 %s46, 1
    %p50 = scmp.eq.s32.totalorder %s12, 1
    %p51 = scmp.ne.s32.totalorder %s46, %s48
    %p52 = scmp.eq.s32.totalorder %s12, 0
    %p53 = por %p51, %p52
    %p54 = scmp.ne.s32.totalorder %s46, %s48
    %p55 = scmp.eq.s32.totalorder %s17, 1
    %p56 = por %p54, %p55
    %p57 = scmp.ne.s32.totalorder %s48, %s49
    %p58 = scmp.eq.s32.totalorder %s17, 0
    %p59 = por %p57, %p58
    %p60 = scmp.ne.s32.totalorder %s48, %s49
    %p61 = scmp.eq.s32.totalorder %s18, 1
    %p62 = por %p60, %p61
    %p64 = scmp.ne.s32.totalorder %s49, %s63
    %p65 = scmp.eq.s32.totalorder %s18, 0
    %p66 = por %p64, %p65
    %s68 = sadd.s32 %s67, 1
    %p71 = scmp.eq.s32.totalorder %s12, 1
    %p72 = scmp.ne.s32.totalorder %s67, %s69
    %p73 = scmp.eq.s32.totalorder %s12, 0
    %p74 = por %p72, %p73
    %p75 = scmp.ne.s32.totalorder %s67, %s69
    %p76 = scmp.eq.s32.totalorder %s17, 1
    %p77 = por %p75, %p76
    %p78 = scmp.ne.s32.totalorder %s69, %s70
    %p79 = scmp.eq.s32.totalorder %s17, 0
    %p80 = por %p78, %p79
    %p81 = scmp.ne.s32.totalorder %s69, %s70
    %p82 = scmp.eq.s32.totalorder %s18, 1
    %p83 = por %p81, %p82
    %p85 = scmp.ne.s32.totalorder %s70, %s84
    %p86 = scmp.eq.s32.totalorder %s18, 0
    %p87 = por %p85, %p86
    %s89 = sadd.s32 %s88, 1
    %p92 = scmp.eq.s32.totalorder %s12, 1
    %p93 = scmp.ne.s32.totalorder %s88, %s90
    %p94 = scmp.eq.s32.totalorder %s12, 0
    %p95 = por %p93, %p94
    %p96 = scmp.ne.s32.totalorder %s88, %s90
    %p97 = scmp.eq.s32.totalorder %s17, 1
    %p98 = por %p96, %p97
    %p99 = scmp.ne.s32.totalorder %s90, %s91
    %p100 = scmp.eq.s32.totalorder %s17, 0
    %p101 = por %p99, %p100
    %p102 = scmp.ne.s32.totalorder %s90, %s91
    %p103 = scmp.eq.s32.totalorder %s18, 1
    %p104 = por %p102, %p103
    %p106 = scmp.ne.s32.totalorder %s91, %s105
    %p107 = scmp.eq.s32.totalorder %s18, 0
    %p108 = por %p106, %p107
    %s110 = sadd.s32 %s109, 1
    %p113 = scmp.eq.s32.totalorder %s12, 1
    %p114 = scmp.ne.s32.totalorder %s109, %s111
    %p115 = scmp.eq.s32.totalorder %s12, 0
    %p116 = por %p114, %p115
    %p117 = scmp.ne.s32.totalorder %s109, %s111
    %p118 = scmp.eq.s32.totalorder %s17, 1
    %p119 = por %p117, %p118
    %p120 = scmp.ne.s32.totalorder %s111, %s112
    %p121 = scmp.eq.s32.totalorder %s17, 0
    %p122 = por %p120, %p121
    %p123 = scmp.ne.s32.totalorder %s111, %s112
    %p124 = scmp.eq.s32.totalorder %s18, 1
    %p125 = por %p123, %p124
    %p127 = scmp.ne.s32.totalorder %s112, %s126
    %p128 = scmp.eq.s32.totalorder %s18, 0
    %p129 = por %p127, %p128
    %s130 = ssub.s32 %s12, %s19
    %p131 = scmp.eq.s32.totalorder %s130, 0
    %s133 = sadd.s32 %s132, 1
    %s134 = scalar_select %p131, %s132, %s133
    %p137 = pneg %p131
    %p138 = scmp.eq.s32.totalorder %s12, 1
    %p139 = por %p137, %p138
    %p140 = scmp.ne.s32.totalorder %s132, %s135
    %p141 = scmp.eq.s32.totalorder %s12, 0
    %p142 = por %p140, %p141
    %p143 = scmp.ne.s32.totalorder %s132, %s135
    %p144 = scmp.eq.s32.totalorder %s17, 1
    %p145 = por %p143, %p144
    %p146 = scmp.ne.s32.totalorder %s135, %s136
    %p147 = scmp.eq.s32.totalorder %s17, 0
    %p148 = por %p146, %p147
    %p149 = scmp.ne.s32.totalorder %s135, %s136
    %p150 = scmp.eq.s32.totalorder %s18, 1
    %p151 = por %p149, %p150
    %p153 = scmp.ne.s32.totalorder %s136, %s152
    %p154 = scmp.eq.s32.totalorder %s18, 0
    %p155 = por %p153, %p154
    %s156 = ssub.s32 %s12, %s19
    %p157 = scmp.eq.s32.totalorder %s156, 0
    %s159 = sadd.s32 %s158, 1
    %s160 = scalar_select %p157, %s158, %s159
    %p163 = pneg %p157
    %p164 = scmp.eq.s32.totalorder %s12, 1
    %p165 = por %p163, %p164
    %p166 = scmp.ne.s32.totalorder %s158, %s161
    %p167 = scmp.eq.s32.totalorder %s12, 0
    %p168 = por %p166, %p167
    %p169 = scmp.ne.s32.totalorder %s158, %s161
    %p170 = scmp.eq.s32.totalorder %s17, 1
    %p171 = por %p169, %p170
    %p172 = scmp.ne.s32.totalorder %s161, %s162
    %p173 = scmp.eq.s32.totalorder %s17, 0
    %p174 = por %p172, %p173
    %p175 = scmp.ne.s32.totalorder %s161, %s162
    %p176 = scmp.eq.s32.totalorder %s18, 1
    %p177 = por %p175, %p176
    %p179 = scmp.ne.s32.totalorder %s162, %s178
    %p180 = scmp.eq.s32.totalorder %s18, 0
    %p181 = por %p179, %p180
    %p182 = scmp.le.s32.totalorder 1, %s12
    %p183 = scmp.lt.s32.totalorder %s12, 3
    %p184 = pnand %p182, %p183
    %p185 = pneg %p184
    // Predicated region
    $region9: #{resnetfc_forward.41} parent=5 // pred_check
      _
    $region10: #{resnetfc_forward.41} parent=5 // pred_check_branch
      %187 = sbr.rel (%p184) target = $region12
    $region11: #{resnetfc_forward.41} parent=5 // pred_region
      %s188 = ssub.s32 %s12, 1
      // Predicated region
      $region13: #{resnetfc_forward.41} parent=11 // pred_check
        %p189 = pneg %p59
      $region14: #{resnetfc_forward.41} parent=11 // pred_check_branch
        %191 = sbr.rel (%p189) target = $region16
      $region15: #{resnetfc_forward.41} parent=11 // pred_region
        _
      $region16: #{resnetfc_forward.41} parent=11 // pred_fallthru
        _
      // Predicated region
      $region17: #{resnetfc_forward.41} parent=11 // pred_check
        %p192 = pneg %p80
      $region18: #{resnetfc_forward.41} parent=11 // pred_check_branch
        %194 = sbr.rel (%p192) target = $region20
      $region19: #{resnetfc_forward.41} parent=11 // pred_region
        _
      $region20: #{resnetfc_forward.41} parent=11 // pred_fallthru
        _
      // Predicated region
      $region21: #{resnetfc_forward.41} parent=11 // pred_check
        %p195 = pneg %p101
      $region22: #{resnetfc_forward.41} parent=11 // pred_check_branch
        %197 = sbr.rel (%p195) target = $region24
      $region23: #{resnetfc_forward.41} parent=11 // pred_region
        _
      $region24: #{resnetfc_forward.41} parent=11 // pred_fallthru
        _
      // Predicated region
      $region25: #{resnetfc_forward.41} parent=11 // pred_check
        %p198 = pneg %p122
      $region26: #{resnetfc_forward.41} parent=11 // pred_check_branch
        %200 = sbr.rel (%p198) target = $region28
      $region27: #{resnetfc_forward.41} parent=11 // pred_region
        _
      $region28: #{resnetfc_forward.41} parent=11 // pred_fallthru
        _
    $region12: #{resnetfc_forward.41} parent=5 // pred_fallthru
      _
    %p201 = scmp.lt.s32.totalorder %s12, 2
    // Predicated region
    $region29: #{resnetfc_forward.41} parent=5 // pred_check
      %p202 = pneg %p201
    $region30: #{resnetfc_forward.41} parent=5 // pred_check_branch
      %204 = sbr.rel (%p202) target = $region32
    $region31: #{resnetfc_forward.41} parent=5 // pred_region
      // Predicated region
      $region33: #{resnetfc_forward.41} parent=31 // pred_check
        %p205 = pneg %p32
      $region34: #{resnetfc_forward.41} parent=31 // pred_check_branch
        %207 = sbr.rel (%p205) target = $region36
      $region35: #{resnetfc_forward.41} parent=31 // pred_region
        %s208 = smul.u32 32, %s12
        %p209 = scmp.lt.s32.totalorder %s208, 63
        %s210 = scalar_select %p209, %s208, 63
        %s211 = smul.addr %s210, 9
        %s212 = smul.addr %s211, 4
        %s213 = scalar_lea.vmem %s0, %s212
        %s214 = smul.u32 32, %s12
      $region36: #{resnetfc_forward.41} parent=31 // pred_fallthru
        _
      // Predicated region
      $region37: #{resnetfc_forward.41} parent=31 // pred_check
        %p215 = pneg %p142
      $region38: #{resnetfc_forward.41} parent=31 // pred_check_branch
        %217 = sbr.rel (%p215) target = $region40
      $region39: #{resnetfc_forward.41} parent=31 // pred_region
        %s218 = smul.u32 32, %s12
        %p219 = scmp.lt.s32.totalorder %s218, 63
        %s220 = scalar_select %p219, %s218, 63
        %s221 = smul.addr %s220, 4
        %s222 = scalar_lea.vmem %s5, %s221
        %s223 = smul.u32 32, %s12
      $region40: #{resnetfc_forward.41} parent=31 // pred_fallthru
        _
    $region32: #{resnetfc_forward.41} parent=5 // pred_fallthru
      _
    %p224 = scmp.le.s32.totalorder 1, %s12
    %p225 = scmp.lt.s32.totalorder %s12, 3
    %p226 = pnand %p224, %p225
    %p227 = pneg %p226
    // Predicated region
    $region41: #{resnetfc_forward.41} parent=5 // pred_check
      _
    $region42: #{resnetfc_forward.41} parent=5 // pred_check_branch
      %229 = sbr.rel (%p226) target = $region44
    $region43: #{resnetfc_forward.41} parent=5 // pred_region
      %s230 = ssub.s32 %s12, 1
      %s231 = smul.u32 32, %s17
      %p232 = scmp.lt.s32.totalorder %s231, 63
      %s233 = scalar_select %p232, %s231, 63
      %s234 = smul.addr %s233, 9
      %s235 = smul.addr %s234, 4
      %s236 = scalar_lea.vmem %s0, %s235
      %p237 = pneg %p38
      %p238 = pneg %p35
      %p239 = pneg %p59
      %p240 = pneg %p56
      %p241 = pneg %p80
      %p242 = pneg %p77
      %p243 = pneg %p101
      %p244 = pneg %p98
      %p245 = pneg %p122
      %p246 = pneg %p119
      %s247 = smul.u32 32, %s17
      %p248 = scmp.lt.s32.totalorder %s247, 63
      %s249 = scalar_select %p248, %s247, 63
      %s250 = smul.addr %s249, 4
      %s251 = scalar_lea.vmem %s5, %s250
      %p252 = pneg %p148
      %p253 = pneg %p145
      %p254 = pneg %p174
      %p255 = pneg %p171
      %s256 = smul.u32 32, %s17
      %p257 = scmp.lt.s32.totalorder %s256, 63
      %s258 = scalar_select %p257, %s256, 63
      %s259 = smul.addr %s258, 4
      %s260 = scalar_lea.vmem %s6, %s259
      %s261 = smul.u32 32, %s17
      %p262 = scmp.lt.s32.totalorder %s261, 63
      %s263 = scalar_select %p262, %s261, 63
      %s264 = smul.addr %s263, 9
      %s265 = smul.addr %s264, 4
      %s266 = scalar_lea.vmem %s0, %s265
      %s267 = smul.u32 32, %s17
      %s268 = smul.u32 32, %s17
      %p269 = scmp.lt.s32.totalorder %s268, 63
      %s270 = scalar_select %p269, %s268, 63
      %s271 = smul.addr %s270, 4
      %s272 = scalar_lea.vmem %s5, %s271
      %s273 = smul.u32 32, %s17
      %s274 = smul.u32 32, %s17
      %p275 = scmp.lt.s32.totalorder %s274, 63
      %s276 = scalar_select %p275, %s274, 63
      %s277 = smul.addr %s276, 4
      %s278 = scalar_lea.vmem %s6, %s277
      %s279 = smul.u32 32, %s17
      %v281 = vld [vmem:[%s266] sm:$0xff]
      %v282 = vld [vmem:[%s266 + $0x8] sm:$0xff]
      %v283 = vld [vmem:[%s266 + $0x10] sm:$0xff]
      %v284 = vld [vmem:[%s266 + $0x18] sm:$0xff]
      %v285 = vld [vmem:[%s266 + $0x20] sm:$0xf]
      %v286 = vld [vmem:[%s266 + $0x24] sm:$0xff]
      %v287 = vld [vmem:[%s266 + $0x2c] sm:$0xff]
      %v288 = vld [vmem:[%s266 + $0x34] sm:$0xff]
      %v289 = vld [vmem:[%s266 + $0x3c] sm:$0xff]
      %v290 = vld [vmem:[%s266 + $0x44] sm:$0xf]
      %v291 = vld [vmem:[%s266 + $0x48] sm:$0xff]
      %v292 = vld [vmem:[%s266 + $0x50] sm:$0xff]
      %v293 = vld [vmem:[%s266 + $0x58] sm:$0xff]
      %v294 = vld [vmem:[%s266 + $0x60] sm:$0xff]
      %v295 = vld [vmem:[%s266 + $0x68] sm:$0xf]
      %v296 = vld [vmem:[%s266 + $0x6c] sm:$0xff]
      %v297 = vld [vmem:[%s266 + $0x74] sm:$0xff]
      %v298 = vld [vmem:[%s266 + $0x7c] sm:$0xff]
      %v299 = vld [vmem:[%s266 + $0x84] sm:$0xff]
      %v300 = vld [vmem:[%s266 + $0x8c] sm:$0xf]
      %v301 = vld [vmem:[%s266 + $0x90] sm:$0xff]
      %v302 = vld [vmem:[%s266 + $0x98] sm:$0xff]
      %v303 = vld [vmem:[%s266 + $0xa0] sm:$0xff]
      %v304 = vld [vmem:[%s266 + $0xa8] sm:$0xff]
      %v305 = vld [vmem:[%s266 + $0xb0] sm:$0xf]
      %v306 = vld [vmem:[%s266 + $0xb4] sm:$0xff]
      %v307 = vld [vmem:[%s266 + $0xbc] sm:$0xff]
      %v308 = vld [vmem:[%s266 + $0xc4] sm:$0xff]
      %v309 = vld [vmem:[%s266 + $0xcc] sm:$0xff]
      %v310 = vld [vmem:[%s266 + $0xd4] sm:$0xf]
      %v311 = vld [vmem:[%s266 + $0xd8] sm:$0xff]
      %v312 = vld [vmem:[%s266 + $0xe0] sm:$0xff]
      %v313 = vld [vmem:[%s266 + $0xe8] sm:$0xff]
      %v314 = vld [vmem:[%s266 + $0xf0] sm:$0xff]
      %v315 = vld [vmem:[%s266 + $0xf8] sm:$0xf]
      %v316 = vld [vmem:[%s266 + $0xfc] sm:$0xff]
      %v317 = vld [vmem:[%s266 + $0x104] sm:$0xff]
      %v318 = vld [vmem:[%s266 + $0x10c] sm:$0xff]
      %v319 = vld [vmem:[%s266 + $0x114] sm:$0xff]
      %v320 = vld [vmem:[%s266 + $0x11c] sm:$0xf]
      %v321 = vld [vmem:[%s266 + $0x120] sm:$0xff]
      %v322 = vld [vmem:[%s266 + $0x128] sm:$0xff]
      %v323 = vld [vmem:[%s266 + $0x130] sm:$0xff]
      %v324 = vld [vmem:[%s266 + $0x138] sm:$0xff]
      %v325 = vld [vmem:[%s266 + $0x140] sm:$0xf]
      %v326 = vld [vmem:[%s266 + $0x144] sm:$0xff]
      %v327 = vld [vmem:[%s266 + $0x14c] sm:$0xff]
      %v328 = vld [vmem:[%s266 + $0x154] sm:$0xff]
      %v329 = vld [vmem:[%s266 + $0x15c] sm:$0xff]
      %v330 = vld [vmem:[%s266 + $0x164] sm:$0xf]
      %v331 = vld [vmem:[%s266 + $0x168] sm:$0xff]
      %v332 = vld [vmem:[%s266 + $0x170] sm:$0xff]
      %v333 = vld [vmem:[%s266 + $0x178] sm:$0xff]
      %v334 = vld [vmem:[%s266 + $0x180] sm:$0xff]
      %v335 = vld [vmem:[%s266 + $0x188] sm:$0xf]
      %v336 = vld [vmem:[%s266 + $0x18c] sm:$0xff]
      %v337 = vld [vmem:[%s266 + $0x194] sm:$0xff]
      %v338 = vld [vmem:[%s266 + $0x19c] sm:$0xff]
      %v339 = vld [vmem:[%s266 + $0x1a4] sm:$0xff]
      %v340 = vld [vmem:[%s266 + $0x1ac] sm:$0xf]
      %v341 = vld [vmem:[%s266 + $0x1b0] sm:$0xff]
      %v342 = vld [vmem:[%s266 + $0x1b8] sm:$0xff]
      %v343 = vld [vmem:[%s266 + $0x1c0] sm:$0xff]
      %v344 = vld [vmem:[%s266 + $0x1c8] sm:$0xff]
      %v345 = vld [vmem:[%s266 + $0x1d0] sm:$0xf]
      %v346 = vld [vmem:[%s266 + $0x1d4] sm:$0xff]
      %v347 = vld [vmem:[%s266 + $0x1dc] sm:$0xff]
      %v348 = vld [vmem:[%s266 + $0x1e4] sm:$0xff]
      %v349 = vld [vmem:[%s266 + $0x1ec] sm:$0xff]
      %v350 = vld [vmem:[%s266 + $0x1f4] sm:$0xf]
      %v351 = vld [vmem:[%s266 + $0x1f8] sm:$0xff]
      %v352 = vld [vmem:[%s266 + $0x200] sm:$0xff]
      %v353 = vld [vmem:[%s266 + $0x208] sm:$0xff]
      %v354 = vld [vmem:[%s266 + $0x210] sm:$0xff]
      %v355 = vld [vmem:[%s266 + $0x218] sm:$0xf]
      %v356 = vld [vmem:[%s266 + $0x21c] sm:$0xff]
      %v357 = vld [vmem:[%s266 + $0x224] sm:$0xff]
      %v358 = vld [vmem:[%s266 + $0x22c] sm:$0xff]
      %v359 = vld [vmem:[%s266 + $0x234] sm:$0xff]
      %v360 = vld [vmem:[%s266 + $0x23c] sm:$0xf]
      %v361 = vld [vmem:[%s266 + $0x240] sm:$0xff]
      %v362 = vld [vmem:[%s266 + $0x248] sm:$0xff]
      %v363 = vld [vmem:[%s266 + $0x250] sm:$0xff]
      %v364 = vld [vmem:[%s266 + $0x258] sm:$0xff]
      %v365 = vld [vmem:[%s266 + $0x260] sm:$0xf]
      %v366 = vld [vmem:[%s266 + $0x264] sm:$0xff]
      %v367 = vld [vmem:[%s266 + $0x26c] sm:$0xff]
      %v368 = vld [vmem:[%s266 + $0x274] sm:$0xff]
      %v369 = vld [vmem:[%s266 + $0x27c] sm:$0xff]
      %v370 = vld [vmem:[%s266 + $0x284] sm:$0xf]
      %v371 = vld [vmem:[%s266 + $0x288] sm:$0xff]
      %v372 = vld [vmem:[%s266 + $0x290] sm:$0xff]
      %v373 = vld [vmem:[%s266 + $0x298] sm:$0xff]
      %v374 = vld [vmem:[%s266 + $0x2a0] sm:$0xff]
      %v375 = vld [vmem:[%s266 + $0x2a8] sm:$0xf]
      %v376 = vld [vmem:[%s266 + $0x2ac] sm:$0xff]
      %v377 = vld [vmem:[%s266 + $0x2b4] sm:$0xff]
      %v378 = vld [vmem:[%s266 + $0x2bc] sm:$0xff]
      %v379 = vld [vmem:[%s266 + $0x2c4] sm:$0xff]
      %v380 = vld [vmem:[%s266 + $0x2cc] sm:$0xf]
      %v381 = vld [vmem:[%s266 + $0x2d0] sm:$0xff]
      %v382 = vld [vmem:[%s266 + $0x2d8] sm:$0xff]
      %v383 = vld [vmem:[%s266 + $0x2e0] sm:$0xff]
      %v384 = vld [vmem:[%s266 + $0x2e8] sm:$0xff]
      %v385 = vld [vmem:[%s266 + $0x2f0] sm:$0xf]
      %v386 = vld [vmem:[%s266 + $0x2f4] sm:$0xff]
      %v387 = vld [vmem:[%s266 + $0x2fc] sm:$0xff]
      %v388 = vld [vmem:[%s266 + $0x304] sm:$0xff]
      %v389 = vld [vmem:[%s266 + $0x30c] sm:$0xff]
      %v390 = vld [vmem:[%s266 + $0x314] sm:$0xf]
      %v391 = vld [vmem:[%s266 + $0x318] sm:$0xff]
      %v392 = vld [vmem:[%s266 + $0x320] sm:$0xff]
      %v393 = vld [vmem:[%s266 + $0x328] sm:$0xff]
      %v394 = vld [vmem:[%s266 + $0x330] sm:$0xff]
      %v395 = vld [vmem:[%s266 + $0x338] sm:$0xf]
      %v396 = vld [vmem:[%s266 + $0x33c] sm:$0xff]
      %v397 = vld [vmem:[%s266 + $0x344] sm:$0xff]
      %v398 = vld [vmem:[%s266 + $0x34c] sm:$0xff]
      %v399 = vld [vmem:[%s266 + $0x354] sm:$0xff]
      %v400 = vld [vmem:[%s266 + $0x35c] sm:$0xf]
      %v401 = vld [vmem:[%s266 + $0x360] sm:$0xff]
      %v402 = vld [vmem:[%s266 + $0x368] sm:$0xff]
      %v403 = vld [vmem:[%s266 + $0x370] sm:$0xff]
      %v404 = vld [vmem:[%s266 + $0x378] sm:$0xff]
      %v405 = vld [vmem:[%s266 + $0x380] sm:$0xf]
      %v406 = vld [vmem:[%s266 + $0x384] sm:$0xff]
      %v407 = vld [vmem:[%s266 + $0x38c] sm:$0xff]
      %v408 = vld [vmem:[%s266 + $0x394] sm:$0xff]
      %v409 = vld [vmem:[%s266 + $0x39c] sm:$0xff]
      %v410 = vld [vmem:[%s266 + $0x3a4] sm:$0xf]
      %v411 = vld [vmem:[%s266 + $0x3a8] sm:$0xff]
      %v412 = vld [vmem:[%s266 + $0x3b0] sm:$0xff]
      %v413 = vld [vmem:[%s266 + $0x3b8] sm:$0xff]
      %v414 = vld [vmem:[%s266 + $0x3c0] sm:$0xff]
      %v415 = vld [vmem:[%s266 + $0x3c8] sm:$0xf]
      %v416 = vld [vmem:[%s266 + $0x3cc] sm:$0xff]
      %v417 = vld [vmem:[%s266 + $0x3d4] sm:$0xff]
      %v418 = vld [vmem:[%s266 + $0x3dc] sm:$0xff]
      %v419 = vld [vmem:[%s266 + $0x3e4] sm:$0xff]
      %v420 = vld [vmem:[%s266 + $0x3ec] sm:$0xf]
      %v421 = vld [vmem:[%s266 + $0x3f0] sm:$0xff]
      %v422 = vld [vmem:[%s266 + $0x3f8] sm:$0xff]
      %v423 = vld [vmem:[%s266 + $0x400] sm:$0xff]
      %v424 = vld [vmem:[%s266 + $0x408] sm:$0xff]
      %v425 = vld [vmem:[%s266 + $0x410] sm:$0xf]
      %v426 = vld [vmem:[%s266 + $0x414] sm:$0xff]
      %v427 = vld [vmem:[%s266 + $0x41c] sm:$0xff]
      %v428 = vld [vmem:[%s266 + $0x424] sm:$0xff]
      %v429 = vld [vmem:[%s266 + $0x42c] sm:$0xff]
      %v430 = vld [vmem:[%s266 + $0x434] sm:$0xf]
      %v431 = vld [vmem:[%s266 + $0x438] sm:$0xff]
      %v432 = vld [vmem:[%s266 + $0x440] sm:$0xff]
      %v433 = vld [vmem:[%s266 + $0x448] sm:$0xff]
      %v434 = vld [vmem:[%s266 + $0x450] sm:$0xff]
      %v435 = vld [vmem:[%s266 + $0x458] sm:$0xf]
      %v436 = vld [vmem:[%s266 + $0x45c] sm:$0xff]
      %v437 = vld [vmem:[%s266 + $0x464] sm:$0xff]
      %v438 = vld [vmem:[%s266 + $0x46c] sm:$0xff]
      %v439 = vld [vmem:[%s266 + $0x474] sm:$0xff]
      %v440 = vld [vmem:[%s266 + $0x47c] sm:$0xf]
      %v441 = vld [vmem:[%s1] sm:$0xf]
      %v442 = vld [vmem:[%s1 + $0x4] sm:$0xf]
      %v443 = vld [vmem:[%s1 + $0x8] sm:$0xf]
      %v444 = vld [vmem:[%s1 + $0xc] sm:$0xf]
      %v445 = vld [vmem:[%s1 + $0x10] sm:$0xf]
      %v446 = vld [vmem:[%s1 + $0x14] sm:$0xf]
      %v447 = vld [vmem:[%s1 + $0x18] sm:$0xf]
      %v448 = vld [vmem:[%s1 + $0x1c] sm:$0xf]
      %v449 = vld [vmem:[%s1 + $0x20] sm:$0xf]
      %v450 = vld [vmem:[%s1 + $0x24] sm:$0xf]
      %v451 = vld [vmem:[%s1 + $0x28] sm:$0xf]
      %v452 = vld [vmem:[%s1 + $0x2c] sm:$0xf]
      %v453 = vld [vmem:[%s1 + $0x30] sm:$0xf]
      %v454 = vld [vmem:[%s1 + $0x34] sm:$0xf]
      %v455 = vld [vmem:[%s1 + $0x38] sm:$0xf]
      %v456 = vld [vmem:[%s1 + $0x3c] sm:$0xf]
      %v457 = vld [vmem:[%s1 + $0x40] sm:$0xf]
      %v458 = vld [vmem:[%s1 + $0x44] sm:$0xf]
      %v459 = vld [vmem:[%s1 + $0x48] sm:$0xf]
      %v460 = vld [vmem:[%s1 + $0x4c] sm:$0xf]
      %v461 = vld [vmem:[%s1 + $0x50] sm:$0xf]
      %v462 = vld [vmem:[%s1 + $0x54] sm:$0xf]
      %v463 = vld [vmem:[%s1 + $0x58] sm:$0xf]
      %v464 = vld [vmem:[%s1 + $0x5c] sm:$0xf]
      %v465 = vld [vmem:[%s1 + $0x60] sm:$0xf]
      %v466 = vld [vmem:[%s1 + $0x64] sm:$0xf]
      %v467 = vld [vmem:[%s1 + $0x68] sm:$0xf]
      %v468 = vld [vmem:[%s1 + $0x6c] sm:$0xf]
      %v469 = vld [vmem:[%s1 + $0x70] sm:$0xf]
      %v470 = vld [vmem:[%s1 + $0x74] sm:$0xf]
      %v471 = vld [vmem:[%s1 + $0x78] sm:$0xf]
      %v472 = vld [vmem:[%s1 + $0x7c] sm:$0xf]
      %v473 = vld [vmem:[%s1 + $0x80] sm:$0xf]
      %v474 = vld [vmem:[%s1 + $0x84] sm:$0xf]
      %v475 = vld [vmem:[%s1 + $0x88] sm:$0xf]
      %v476 = vld [vmem:[%s1 + $0x8c] sm:$0xf]
      %v477 = vld [vmem:[%s1 + $0x90] sm:$0xf]
      %v478 = vld [vmem:[%s1 + $0x94] sm:$0xf]
      %v479 = vld [vmem:[%s1 + $0x98] sm:$0xf]
      %v480 = vld [vmem:[%s1 + $0x9c] sm:$0xf]
      %v481 = vld [vmem:[%s1 + $0xa0] sm:$0xf]
      %v482 = vld [vmem:[%s1 + $0xa4] sm:$0xf]
      %v483 = vld [vmem:[%s1 + $0xa8] sm:$0xf]
      %v484 = vld [vmem:[%s1 + $0xac] sm:$0xf]
      %v485 = vld [vmem:[%s1 + $0xb0] sm:$0xf]
      %v486 = vld [vmem:[%s1 + $0xb4] sm:$0xf]
      %v487 = vld [vmem:[%s1 + $0xb8] sm:$0xf]
      %v488 = vld [vmem:[%s1 + $0xbc] sm:$0xf]
      %v489 = vld [vmem:[%s1 + $0xc0] sm:$0xf]
      %v490 = vld [vmem:[%s1 + $0xc4] sm:$0xf]
      %v491 = vld [vmem:[%s1 + $0xc8] sm:$0xf]
      %v492 = vld [vmem:[%s1 + $0xcc] sm:$0xf]
      %v493 = vld [vmem:[%s1 + $0xd0] sm:$0xf]
      %v494 = vld [vmem:[%s1 + $0xd4] sm:$0xf]
      %v495 = vld [vmem:[%s1 + $0xd8] sm:$0xf]
      %v496 = vld [vmem:[%s1 + $0xdc] sm:$0xf]
      %v497 = vld [vmem:[%s1 + $0xe0] sm:$0xf]
      %v498 = vld [vmem:[%s1 + $0xe4] sm:$0xf]
      %v499 = vld [vmem:[%s1 + $0xe8] sm:$0xf]
      %v500 = vld [vmem:[%s1 + $0xec] sm:$0xf]
      %v501 = vld [vmem:[%s1 + $0xf0] sm:$0xf]
      %v502 = vld [vmem:[%s1 + $0xf4] sm:$0xf]
      %v503 = vld [vmem:[%s1 + $0xf8] sm:$0xf]
      %v504 = vld [vmem:[%s1 + $0xfc] sm:$0xf]
      %v505 = vld [vmem:[%s1 + $0x100] sm:$0xf]
      %v506 = vld [vmem:[%s1 + $0x104] sm:$0xf]
      %v507 = vld [vmem:[%s1 + $0x108] sm:$0xf]
      %v508 = vld [vmem:[%s1 + $0x10c] sm:$0xf]
      %v509 = vld [vmem:[%s1 + $0x110] sm:$0xf]
      %v510 = vld [vmem:[%s1 + $0x114] sm:$0xf]
      %v511 = vld [vmem:[%s1 + $0x118] sm:$0xf]
      %v512 = vld [vmem:[%s1 + $0x11c] sm:$0xf]
      %v513 = vld [vmem:[%s1 + $0x120] sm:$0xf]
      %v514 = vld [vmem:[%s1 + $0x124] sm:$0xf]
      %v515 = vld [vmem:[%s1 + $0x128] sm:$0xf]
      %v516 = vld [vmem:[%s1 + $0x12c] sm:$0xf]
      %v517 = vld [vmem:[%s1 + $0x130] sm:$0xf]
      %v518 = vld [vmem:[%s1 + $0x134] sm:$0xf]
      %v519 = vld [vmem:[%s1 + $0x138] sm:$0xf]
      %v520 = vld [vmem:[%s1 + $0x13c] sm:$0xf]
      %v521 = vld [vmem:[%s1 + $0x140] sm:$0xf]
      %v522 = vld [vmem:[%s1 + $0x144] sm:$0xf]
      %v523 = vld [vmem:[%s1 + $0x148] sm:$0xf]
      %v524 = vld [vmem:[%s1 + $0x14c] sm:$0xf]
      %v525 = vld [vmem:[%s1 + $0x150] sm:$0xf]
      %v526 = vld [vmem:[%s1 + $0x154] sm:$0xf]
      %v527 = vld [vmem:[%s1 + $0x158] sm:$0xf]
      %v528 = vld [vmem:[%s1 + $0x15c] sm:$0xf]
      %v529 = vld [vmem:[%s1 + $0x160] sm:$0xf]
      %v530 = vld [vmem:[%s1 + $0x164] sm:$0xf]
      %v531 = vld [vmem:[%s1 + $0x168] sm:$0xf]
      %v532 = vld [vmem:[%s1 + $0x16c] sm:$0xf]
      %v533 = vld [vmem:[%s1 + $0x170] sm:$0xf]
      %v534 = vld [vmem:[%s1 + $0x174] sm:$0xf]
      %v535 = vld [vmem:[%s1 + $0x178] sm:$0xf]
      %v536 = vld [vmem:[%s1 + $0x17c] sm:$0xf]
      %v537 = vld [vmem:[%s1 + $0x180] sm:$0xf]
      %v538 = vld [vmem:[%s1 + $0x184] sm:$0xf]
      %v539 = vld [vmem:[%s1 + $0x188] sm:$0xf]
      %v540 = vld [vmem:[%s1 + $0x18c] sm:$0xf]
      %v541 = vld [vmem:[%s1 + $0x190] sm:$0xf]
      %v542 = vld [vmem:[%s1 + $0x194] sm:$0xf]
      %v543 = vld [vmem:[%s1 + $0x198] sm:$0xf]
      %v544 = vld [vmem:[%s1 + $0x19c] sm:$0xf]
      %v545 = vld [vmem:[%s1 + $0x1a0] sm:$0xf]
      %v546 = vld [vmem:[%s1 + $0x1a4] sm:$0xf]
      %v547 = vld [vmem:[%s1 + $0x1a8] sm:$0xf]
      %v548 = vld [vmem:[%s1 + $0x1ac] sm:$0xf]
      %v549 = vld [vmem:[%s1 + $0x1b0] sm:$0xf]
      %v550 = vld [vmem:[%s1 + $0x1b4] sm:$0xf]
      %v551 = vld [vmem:[%s1 + $0x1b8] sm:$0xf]
      %v552 = vld [vmem:[%s1 + $0x1bc] sm:$0xf]
      %v553 = vld [vmem:[%s1 + $0x1c0] sm:$0xf]
      %v554 = vld [vmem:[%s1 + $0x1c4] sm:$0xf]
      %v555 = vld [vmem:[%s1 + $0x1c8] sm:$0xf]
      %v556 = vld [vmem:[%s1 + $0x1cc] sm:$0xf]
      %v557 = vld [vmem:[%s1 + $0x1d0] sm:$0xf]
      %v558 = vld [vmem:[%s1 + $0x1d4] sm:$0xf]
      %v559 = vld [vmem:[%s1 + $0x1d8] sm:$0xf]
      %v560 = vld [vmem:[%s1 + $0x1dc] sm:$0xf]
      %v561 = vld [vmem:[%s1 + $0x1e0] sm:$0xf]
      %v562 = vld [vmem:[%s1 + $0x1e4] sm:$0xf]
      %v563 = vld [vmem:[%s1 + $0x1e8] sm:$0xf]
      %v564 = vld [vmem:[%s1 + $0x1ec] sm:$0xf]
      %v565 = vld [vmem:[%s1 + $0x1f0] sm:$0xf]
      %v566 = vld [vmem:[%s1 + $0x1f4] sm:$0xf]
      %v567 = vld [vmem:[%s1 + $0x1f8] sm:$0xf]
      %v568 = vld [vmem:[%s1 + $0x1fc] sm:$0xf]
      %v569 = vld [vmem:[%s1 + $0x200] sm:$0xf]
      %v570 = vld [vmem:[%s1 + $0x204] sm:$0xf]
      %v571 = vld [vmem:[%s1 + $0x208] sm:$0xf]
      %v572 = vld [vmem:[%s1 + $0x20c] sm:$0xf]
      %v573 = vld [vmem:[%s1 + $0x210] sm:$0xf]
      %v574 = vld [vmem:[%s1 + $0x214] sm:$0xf]
      %v575 = vld [vmem:[%s1 + $0x218] sm:$0xf]
      %v576 = vld [vmem:[%s1 + $0x21c] sm:$0xf]
      %v577 = vld [vmem:[%s1 + $0x220] sm:$0xf]
      %v578 = vld [vmem:[%s1 + $0x224] sm:$0xf]
      %v579 = vld [vmem:[%s1 + $0x228] sm:$0xf]
      %v580 = vld [vmem:[%s1 + $0x22c] sm:$0xf]
      %v581 = vld [vmem:[%s1 + $0x230] sm:$0xf]
      %v582 = vld [vmem:[%s1 + $0x234] sm:$0xf]
      %v583 = vld [vmem:[%s1 + $0x238] sm:$0xf]
      %v584 = vld [vmem:[%s1 + $0x23c] sm:$0xf]
      %v745 = vunpack.c.l.b16 %v281
      %v746 = vunpack.c.h.b16 %v281
      %v747 = vunpack.c.l.b16 %v282
      %v748 = vunpack.c.h.b16 %v282
      %v749 = vunpack.c.l.b16 %v283
      %v750 = vunpack.c.h.b16 %v283
      %v751 = vunpack.c.l.b16 %v284
      %v752 = vunpack.c.h.b16 %v284
      %v753 = vunpack.c.l.b16 %v285
      %v754 = vunpack.c.l.b16 %v286
      %v755 = vunpack.c.h.b16 %v286
      %v756 = vunpack.c.l.b16 %v287
      %v757 = vunpack.c.h.b16 %v287
      %v758 = vunpack.c.l.b16 %v288
      %v759 = vunpack.c.h.b16 %v288
      %v760 = vunpack.c.l.b16 %v289
      %v761 = vunpack.c.h.b16 %v289
      %v762 = vunpack.c.l.b16 %v290
      %v763 = vunpack.c.l.b16 %v291
      %v764 = vunpack.c.h.b16 %v291
      %v765 = vunpack.c.l.b16 %v292
      %v766 = vunpack.c.h.b16 %v292
      %v767 = vunpack.c.l.b16 %v293
      %v768 = vunpack.c.h.b16 %v293
      %v769 = vunpack.c.l.b16 %v294
      %v770 = vunpack.c.h.b16 %v294
      %v771 = vunpack.c.l.b16 %v295
      %v772 = vunpack.c.l.b16 %v296
      %v773 = vunpack.c.h.b16 %v296
      %v774 = vunpack.c.l.b16 %v297
      %v775 = vunpack.c.h.b16 %v297
      %v776 = vunpack.c.l.b16 %v298
      %v777 = vunpack.c.h.b16 %v298
      %v778 = vunpack.c.l.b16 %v299
      %v779 = vunpack.c.h.b16 %v299
      %v780 = vunpack.c.l.b16 %v300
      %v781 = vunpack.c.l.b16 %v301
      %v782 = vunpack.c.h.b16 %v301
      %v783 = vunpack.c.l.b16 %v302
      %v784 = vunpack.c.h.b16 %v302
      %v785 = vunpack.c.l.b16 %v303
      %v786 = vunpack.c.h.b16 %v303
      %v787 = vunpack.c.l.b16 %v304
      %v788 = vunpack.c.h.b16 %v304
      %v789 = vunpack.c.l.b16 %v305
      %v790 = vunpack.c.l.b16 %v306
      %v791 = vunpack.c.h.b16 %v306
      %v792 = vunpack.c.l.b16 %v307
      %v793 = vunpack.c.h.b16 %v307
      %v794 = vunpack.c.l.b16 %v308
      %v795 = vunpack.c.h.b16 %v308
      %v796 = vunpack.c.l.b16 %v309
      %v797 = vunpack.c.h.b16 %v309
      %v798 = vunpack.c.l.b16 %v310
      %v799 = vunpack.c.l.b16 %v311
      %v800 = vunpack.c.h.b16 %v311
      %v801 = vunpack.c.l.b16 %v312
      %v802 = vunpack.c.h.b16 %v312
      %v803 = vunpack.c.l.b16 %v313
      %v804 = vunpack.c.h.b16 %v313
      %v805 = vunpack.c.l.b16 %v314
      %v806 = vunpack.c.h.b16 %v314
      %v807 = vunpack.c.l.b16 %v315
      %v808 = vunpack.c.l.b16 %v316
      %v809 = vunpack.c.h.b16 %v316
      %v810 = vunpack.c.l.b16 %v317
      %v811 = vunpack.c.h.b16 %v317
      %v812 = vunpack.c.l.b16 %v318
      %v813 = vunpack.c.h.b16 %v318
      %v814 = vunpack.c.l.b16 %v319
      %v815 = vunpack.c.h.b16 %v319
      %v816 = vunpack.c.l.b16 %v320
      %v817 = vunpack.c.l.b16 %v321
      %v818 = vunpack.c.h.b16 %v321
      %v819 = vunpack.c.l.b16 %v322
      %v820 = vunpack.c.h.b16 %v322
      %v821 = vunpack.c.l.b16 %v323
      %v822 = vunpack.c.h.b16 %v323
      %v823 = vunpack.c.l.b16 %v324
      %v824 = vunpack.c.h.b16 %v324
      %v825 = vunpack.c.l.b16 %v325
      %v826 = vunpack.c.l.b16 %v326
      %v827 = vunpack.c.h.b16 %v326
      %v828 = vunpack.c.l.b16 %v327
      %v829 = vunpack.c.h.b16 %v327
      %v830 = vunpack.c.l.b16 %v328
      %v831 = vunpack.c.h.b16 %v328
      %v832 = vunpack.c.l.b16 %v329
      %v833 = vunpack.c.h.b16 %v329
      %v834 = vunpack.c.l.b16 %v330
      %v835 = vunpack.c.l.b16 %v331
      %v836 = vunpack.c.h.b16 %v331
      %v837 = vunpack.c.l.b16 %v332
      %v838 = vunpack.c.h.b16 %v332
      %v839 = vunpack.c.l.b16 %v333
      %v840 = vunpack.c.h.b16 %v333
      %v841 = vunpack.c.l.b16 %v334
      %v842 = vunpack.c.h.b16 %v334
      %v843 = vunpack.c.l.b16 %v335
      %v844 = vunpack.c.l.b16 %v336
      %v845 = vunpack.c.h.b16 %v336
      %v846 = vunpack.c.l.b16 %v337
      %v847 = vunpack.c.h.b16 %v337
      %v848 = vunpack.c.l.b16 %v338
      %v849 = vunpack.c.h.b16 %v338
      %v850 = vunpack.c.l.b16 %v339
      %v851 = vunpack.c.h.b16 %v339
      %v852 = vunpack.c.l.b16 %v340
      %v853 = vunpack.c.l.b16 %v341
      %v854 = vunpack.c.h.b16 %v341
      %v855 = vunpack.c.l.b16 %v342
      %v856 = vunpack.c.h.b16 %v342
      %v857 = vunpack.c.l.b16 %v343
      %v858 = vunpack.c.h.b16 %v343
      %v859 = vunpack.c.l.b16 %v344
      %v860 = vunpack.c.h.b16 %v344
      %v861 = vunpack.c.l.b16 %v345
      %v862 = vunpack.c.l.b16 %v346
      %v863 = vunpack.c.h.b16 %v346
      %v864 = vunpack.c.l.b16 %v347
      %v865 = vunpack.c.h.b16 %v347
      %v866 = vunpack.c.l.b16 %v348
      %v867 = vunpack.c.h.b16 %v348
      %v868 = vunpack.c.l.b16 %v349
      %v869 = vunpack.c.h.b16 %v349
      %v870 = vunpack.c.l.b16 %v350
      %v871 = vunpack.c.l.b16 %v351
      %v872 = vunpack.c.h.b16 %v351
      %v873 = vunpack.c.l.b16 %v352
      %v874 = vunpack.c.h.b16 %v352
      %v875 = vunpack.c.l.b16 %v353
      %v876 = vunpack.c.h.b16 %v353
      %v877 = vunpack.c.l.b16 %v354
      %v878 = vunpack.c.h.b16 %v354
      %v879 = vunpack.c.l.b16 %v355
      %v880 = vunpack.c.l.b16 %v356
      %v881 = vunpack.c.h.b16 %v356
      %v882 = vunpack.c.l.b16 %v357
      %v883 = vunpack.c.h.b16 %v357
      %v884 = vunpack.c.l.b16 %v358
      %v885 = vunpack.c.h.b16 %v358
      %v886 = vunpack.c.l.b16 %v359
      %v887 = vunpack.c.h.b16 %v359
      %v888 = vunpack.c.l.b16 %v360
      %v889 = vunpack.c.l.b16 %v361
      %v890 = vunpack.c.h.b16 %v361
      %v891 = vunpack.c.l.b16 %v362
      %v892 = vunpack.c.h.b16 %v362
      %v893 = vunpack.c.l.b16 %v363
      %v894 = vunpack.c.h.b16 %v363
      %v895 = vunpack.c.l.b16 %v364
      %v896 = vunpack.c.h.b16 %v364
      %v897 = vunpack.c.l.b16 %v365
      %v898 = vunpack.c.l.b16 %v366
      %v899 = vunpack.c.h.b16 %v366
      %v900 = vunpack.c.l.b16 %v367
      %v901 = vunpack.c.h.b16 %v367
      %v902 = vunpack.c.l.b16 %v368
      %v903 = vunpack.c.h.b16 %v368
      %v904 = vunpack.c.l.b16 %v369
      %v905 = vunpack.c.h.b16 %v369
      %v906 = vunpack.c.l.b16 %v370
      %v907 = vunpack.c.l.b16 %v371
      %v908 = vunpack.c.h.b16 %v371
      %v909 = vunpack.c.l.b16 %v372
      %v910 = vunpack.c.h.b16 %v372
      %v911 = vunpack.c.l.b16 %v373
      %v912 = vunpack.c.h.b16 %v373
      %v913 = vunpack.c.l.b16 %v374
      %v914 = vunpack.c.h.b16 %v374
      %v915 = vunpack.c.l.b16 %v375
      %v916 = vunpack.c.l.b16 %v376
      %v917 = vunpack.c.h.b16 %v376
      %v918 = vunpack.c.l.b16 %v377
      %v919 = vunpack.c.h.b16 %v377
      %v920 = vunpack.c.l.b16 %v378
      %v921 = vunpack.c.h.b16 %v378
      %v922 = vunpack.c.l.b16 %v379
      %v923 = vunpack.c.h.b16 %v379
      %v924 = vunpack.c.l.b16 %v380
      %v925 = vunpack.c.l.b16 %v381
      %v926 = vunpack.c.h.b16 %v381
      %v927 = vunpack.c.l.b16 %v382
      %v928 = vunpack.c.h.b16 %v382
      %v929 = vunpack.c.l.b16 %v383
      %v930 = vunpack.c.h.b16 %v383
      %v931 = vunpack.c.l.b16 %v384
      %v932 = vunpack.c.h.b16 %v384
      %v933 = vunpack.c.l.b16 %v385
      %v934 = vunpack.c.l.b16 %v386
      %v935 = vunpack.c.h.b16 %v386
      %v936 = vunpack.c.l.b16 %v387
      %v937 = vunpack.c.h.b16 %v387
      %v938 = vunpack.c.l.b16 %v388
      %v939 = vunpack.c.h.b16 %v388
      %v940 = vunpack.c.l.b16 %v389
      %v941 = vunpack.c.h.b16 %v389
      %v942 = vunpack.c.l.b16 %v390
      %v943 = vunpack.c.l.b16 %v391
      %v944 = vunpack.c.h.b16 %v391
      %v945 = vunpack.c.l.b16 %v392
      %v946 = vunpack.c.h.b16 %v392
      %v947 = vunpack.c.l.b16 %v393
      %v948 = vunpack.c.h.b16 %v393
      %v949 = vunpack.c.l.b16 %v394
      %v950 = vunpack.c.h.b16 %v394
      %v951 = vunpack.c.l.b16 %v395
      %v952 = vunpack.c.l.b16 %v396
      %v953 = vunpack.c.h.b16 %v396
      %v954 = vunpack.c.l.b16 %v397
      %v955 = vunpack.c.h.b16 %v397
      %v956 = vunpack.c.l.b16 %v398
      %v957 = vunpack.c.h.b16 %v398
      %v958 = vunpack.c.l.b16 %v399
      %v959 = vunpack.c.h.b16 %v399
      %v960 = vunpack.c.l.b16 %v400
      %v961 = vunpack.c.l.b16 %v401
      %v962 = vunpack.c.h.b16 %v401
      %v963 = vunpack.c.l.b16 %v402
      %v964 = vunpack.c.h.b16 %v402
      %v965 = vunpack.c.l.b16 %v403
      %v966 = vunpack.c.h.b16 %v403
      %v967 = vunpack.c.l.b16 %v404
      %v968 = vunpack.c.h.b16 %v404
      %v969 = vunpack.c.l.b16 %v405
      %v970 = vunpack.c.l.b16 %v406
      %v971 = vunpack.c.h.b16 %v406
      %v972 = vunpack.c.l.b16 %v407
      %v973 = vunpack.c.h.b16 %v407
      %v974 = vunpack.c.l.b16 %v408
      %v975 = vunpack.c.h.b16 %v408
      %v976 = vunpack.c.l.b16 %v409
      %v977 = vunpack.c.h.b16 %v409
      %v978 = vunpack.c.l.b16 %v410
      %v979 = vunpack.c.l.b16 %v411
      %v980 = vunpack.c.h.b16 %v411
      %v981 = vunpack.c.l.b16 %v412
      %v982 = vunpack.c.h.b16 %v412
      %v983 = vunpack.c.l.b16 %v413
      %v984 = vunpack.c.h.b16 %v413
      %v985 = vunpack.c.l.b16 %v414
      %v986 = vunpack.c.h.b16 %v414
      %v987 = vunpack.c.l.b16 %v415
      %v988 = vunpack.c.l.b16 %v416
      %v989 = vunpack.c.h.b16 %v416
      %v990 = vunpack.c.l.b16 %v417
      %v991 = vunpack.c.h.b16 %v417
      %v992 = vunpack.c.l.b16 %v418
      %v993 = vunpack.c.h.b16 %v418
      %v994 = vunpack.c.l.b16 %v419
      %v995 = vunpack.c.h.b16 %v419
      %v996 = vunpack.c.l.b16 %v420
      %v997 = vunpack.c.l.b16 %v421
      %v998 = vunpack.c.h.b16 %v421
      %v999 = vunpack.c.l.b16 %v422
      %v1000 = vunpack.c.h.b16 %v422
      %v1001 = vunpack.c.l.b16 %v423
      %v1002 = vunpack.c.h.b16 %v423
      %v1003 = vunpack.c.l.b16 %v424
      %v1004 = vunpack.c.h.b16 %v424
      %v1005 = vunpack.c.l.b16 %v425
      %v1006 = vunpack.c.l.b16 %v426
      %v1007 = vunpack.c.h.b16 %v426
      %v1008 = vunpack.c.l.b16 %v427
      %v1009 = vunpack.c.h.b16 %v427
      %v1010 = vunpack.c.l.b16 %v428
      %v1011 = vunpack.c.h.b16 %v428
      %v1012 = vunpack.c.l.b16 %v429
      %v1013 = vunpack.c.h.b16 %v429
      %v1014 = vunpack.c.l.b16 %v430
      %v1015 = vunpack.c.l.b16 %v431
      %v1016 = vunpack.c.h.b16 %v431
      %v1017 = vunpack.c.l.b16 %v432
      %v1018 = vunpack.c.h.b16 %v432
      %v1019 = vunpack.c.l.b16 %v433
      %v1020 = vunpack.c.h.b16 %v433
      %v1021 = vunpack.c.l.b16 %v434
      %v1022 = vunpack.c.h.b16 %v434
      %v1023 = vunpack.c.l.b16 %v435
      %v1024 = vunpack.c.l.b16 %v436
      %v1025 = vunpack.c.h.b16 %v436
      %v1026 = vunpack.c.l.b16 %v437
      %v1027 = vunpack.c.h.b16 %v437
      %v1028 = vunpack.c.l.b16 %v438
      %v1029 = vunpack.c.h.b16 %v438
      %v1030 = vunpack.c.l.b16 %v439
      %v1031 = vunpack.c.h.b16 %v439
      %v1032 = vunpack.c.l.b16 %v440
      %v1033 = vpack.c.b16 %v754, %v745
      %v1034 = vpack.c.b16 %v755, %v746
      %v1035 = vpack.c.b16 %v756, %v747
      %v1036 = vpack.c.b16 %v757, %v748
      %v1037 = vpack.c.b16 %v758, %v749
      %v1038 = vpack.c.b16 %v759, %v750
      %v1039 = vpack.c.b16 %v760, %v751
      %v1040 = vpack.c.b16 %v761, %v752
      %v1041 = vpack.c.b16 %v762, %v753
      %v1042 = vpack.c.b16 %v772, %v763
      %v1043 = vpack.c.b16 %v773, %v764
      %v1044 = vpack.c.b16 %v774, %v765
      %v1045 = vpack.c.b16 %v775, %v766
      %v1046 = vpack.c.b16 %v776, %v767
      %v1047 = vpack.c.b16 %v777, %v768
      %v1048 = vpack.c.b16 %v778, %v769
      %v1049 = vpack.c.b16 %v779, %v770
      %v1050 = vpack.c.b16 %v780, %v771
      %v1051 = vpack.c.b16 %v790, %v781
      %v1052 = vpack.c.b16 %v791, %v782
      %v1053 = vpack.c.b16 %v792, %v783
      %v1054 = vpack.c.b16 %v793, %v784
      %v1055 = vpack.c.b16 %v794, %v785
      %v1056 = vpack.c.b16 %v795, %v786
      %v1057 = vpack.c.b16 %v796, %v787
      %v1058 = vpack.c.b16 %v797, %v788
      %v1059 = vpack.c.b16 %v798, %v789
      %v1060 = vpack.c.b16 %v808, %v799
      %v1061 = vpack.c.b16 %v809, %v800
      %v1062 = vpack.c.b16 %v810, %v801
      %v1063 = vpack.c.b16 %v811, %v802
      %v1064 = vpack.c.b16 %v812, %v803
      %v1065 = vpack.c.b16 %v813, %v804
      %v1066 = vpack.c.b16 %v814, %v805
      %v1067 = vpack.c.b16 %v815, %v806
      %v1068 = vpack.c.b16 %v816, %v807
      %v1069 = vpack.c.b16 %v826, %v817
      %v1070 = vpack.c.b16 %v827, %v818
      %v1071 = vpack.c.b16 %v828, %v819
      %v1072 = vpack.c.b16 %v829, %v820
      %v1073 = vpack.c.b16 %v830, %v821
      %v1074 = vpack.c.b16 %v831, %v822
      %v1075 = vpack.c.b16 %v832, %v823
      %v1076 = vpack.c.b16 %v833, %v824
      %v1077 = vpack.c.b16 %v834, %v825
      %v1078 = vpack.c.b16 %v844, %v835
      %v1079 = vpack.c.b16 %v845, %v836
      %v1080 = vpack.c.b16 %v846, %v837
      %v1081 = vpack.c.b16 %v847, %v838
      %v1082 = vpack.c.b16 %v848, %v839
      %v1083 = vpack.c.b16 %v849, %v840
      %v1084 = vpack.c.b16 %v850, %v841
      %v1085 = vpack.c.b16 %v851, %v842
      %v1086 = vpack.c.b16 %v852, %v843
      %v1087 = vpack.c.b16 %v862, %v853
      %v1088 = vpack.c.b16 %v863, %v854
      %v1089 = vpack.c.b16 %v864, %v855
      %v1090 = vpack.c.b16 %v865, %v856
      %v1091 = vpack.c.b16 %v866, %v857
      %v1092 = vpack.c.b16 %v867, %v858
      %v1093 = vpack.c.b16 %v868, %v859
      %v1094 = vpack.c.b16 %v869, %v860
      %v1095 = vpack.c.b16 %v870, %v861
      %v1096 = vpack.c.b16 %v880, %v871
      %v1097 = vpack.c.b16 %v881, %v872
      %v1098 = vpack.c.b16 %v882, %v873
      %v1099 = vpack.c.b16 %v883, %v874
      %v1100 = vpack.c.b16 %v884, %v875
      %v1101 = vpack.c.b16 %v885, %v876
      %v1102 = vpack.c.b16 %v886, %v877
      %v1103 = vpack.c.b16 %v887, %v878
      %v1104 = vpack.c.b16 %v888, %v879
      %v1105 = vpack.c.b16 %v898, %v889
      %v1106 = vpack.c.b16 %v899, %v890
      %v1107 = vpack.c.b16 %v900, %v891
      %v1108 = vpack.c.b16 %v901, %v892
      %v1109 = vpack.c.b16 %v902, %v893
      %v1110 = vpack.c.b16 %v903, %v894
      %v1111 = vpack.c.b16 %v904, %v895
      %v1112 = vpack.c.b16 %v905, %v896
      %v1113 = vpack.c.b16 %v906, %v897
      %v1114 = vpack.c.b16 %v916, %v907
      %v1115 = vpack.c.b16 %v917, %v908
      %v1116 = vpack.c.b16 %v918, %v909
      %v1117 = vpack.c.b16 %v919, %v910
      %v1118 = vpack.c.b16 %v920, %v911
      %v1119 = vpack.c.b16 %v921, %v912
      %v1120 = vpack.c.b16 %v922, %v913
      %v1121 = vpack.c.b16 %v923, %v914
      %v1122 = vpack.c.b16 %v924, %v915
      %v1123 = vpack.c.b16 %v934, %v925
      %v1124 = vpack.c.b16 %v935, %v926
      %v1125 = vpack.c.b16 %v936, %v927
      %v1126 = vpack.c.b16 %v937, %v928
      %v1127 = vpack.c.b16 %v938, %v929
      %v1128 = vpack.c.b16 %v939, %v930
      %v1129 = vpack.c.b16 %v940, %v931
      %v1130 = vpack.c.b16 %v941, %v932
      %v1131 = vpack.c.b16 %v942, %v933
      %v1132 = vpack.c.b16 %v952, %v943
      %v1133 = vpack.c.b16 %v953, %v944
      %v1134 = vpack.c.b16 %v954, %v945
      %v1135 = vpack.c.b16 %v955, %v946
      %v1136 = vpack.c.b16 %v956, %v947
      %v1137 = vpack.c.b16 %v957, %v948
      %v1138 = vpack.c.b16 %v958, %v949
      %v1139 = vpack.c.b16 %v959, %v950
      %v1140 = vpack.c.b16 %v960, %v951
      %v1141 = vpack.c.b16 %v970, %v961
      %v1142 = vpack.c.b16 %v971, %v962
      %v1143 = vpack.c.b16 %v972, %v963
      %v1144 = vpack.c.b16 %v973, %v964
      %v1145 = vpack.c.b16 %v974, %v965
      %v1146 = vpack.c.b16 %v975, %v966
      %v1147 = vpack.c.b16 %v976, %v967
      %v1148 = vpack.c.b16 %v977, %v968
      %v1149 = vpack.c.b16 %v978, %v969
      %v1150 = vpack.c.b16 %v988, %v979
      %v1151 = vpack.c.b16 %v989, %v980
      %v1152 = vpack.c.b16 %v990, %v981
      %v1153 = vpack.c.b16 %v991, %v982
      %v1154 = vpack.c.b16 %v992, %v983
      %v1155 = vpack.c.b16 %v993, %v984
      %v1156 = vpack.c.b16 %v994, %v985
      %v1157 = vpack.c.b16 %v995, %v986
      %v1158 = vpack.c.b16 %v996, %v987
      %v1159 = vpack.c.b16 %v1006, %v997
      %v1160 = vpack.c.b16 %v1007, %v998
      %v1161 = vpack.c.b16 %v1008, %v999
      %v1162 = vpack.c.b16 %v1009, %v1000
      %v1163 = vpack.c.b16 %v1010, %v1001
      %v1164 = vpack.c.b16 %v1011, %v1002
      %v1165 = vpack.c.b16 %v1012, %v1003
      %v1166 = vpack.c.b16 %v1013, %v1004
      %v1167 = vpack.c.b16 %v1014, %v1005
      %v1168 = vpack.c.b16 %v1024, %v1015
      %v1169 = vpack.c.b16 %v1025, %v1016
      %v1170 = vpack.c.b16 %v1026, %v1017
      %v1171 = vpack.c.b16 %v1027, %v1018
      %v1172 = vpack.c.b16 %v1028, %v1019
      %v1173 = vpack.c.b16 %v1029, %v1020
      %v1174 = vpack.c.b16 %v1030, %v1021
      %v1175 = vpack.c.b16 %v1031, %v1022
      %v1176 = vpack.c.b16 %v1032, %v1023
      %v1465 = vunpack.c.l.b16 %v441
      %v1466 = vunpack.c.l.b16 %v442
      %v1467 = vunpack.c.l.b16 %v443
      %v1468 = vunpack.c.l.b16 %v444
      %v1469 = vunpack.c.l.b16 %v445
      %v1470 = vunpack.c.l.b16 %v446
      %v1471 = vunpack.c.l.b16 %v447
      %v1472 = vunpack.c.l.b16 %v448
      %v1473 = vunpack.c.l.b16 %v449
      %v1474 = vunpack.c.l.b16 %v450
      %v1475 = vunpack.c.l.b16 %v451
      %v1476 = vunpack.c.l.b16 %v452
      %v1477 = vunpack.c.l.b16 %v453
      %v1478 = vunpack.c.l.b16 %v454
      %v1479 = vunpack.c.l.b16 %v455
      %v1480 = vunpack.c.l.b16 %v456
      %v1481 = vunpack.c.l.b16 %v457
      %v1482 = vunpack.c.l.b16 %v458
      %v1483 = vunpack.c.l.b16 %v459
      %v1484 = vunpack.c.l.b16 %v460
      %v1485 = vunpack.c.l.b16 %v461
      %v1486 = vunpack.c.l.b16 %v462
      %v1487 = vunpack.c.l.b16 %v463
      %v1488 = vunpack.c.l.b16 %v464
      %v1489 = vunpack.c.l.b16 %v465
      %v1490 = vunpack.c.l.b16 %v466
      %v1491 = vunpack.c.l.b16 %v467
      %v1492 = vunpack.c.l.b16 %v468
      %v1493 = vunpack.c.l.b16 %v469
      %v1494 = vunpack.c.l.b16 %v470
      %v1495 = vunpack.c.l.b16 %v471
      %v1496 = vunpack.c.l.b16 %v472
      %v1497 = vunpack.c.l.b16 %v473
      %v1498 = vunpack.c.l.b16 %v474
      %v1499 = vunpack.c.l.b16 %v475
      %v1500 = vunpack.c.l.b16 %v476
      %v1501 = vunpack.c.l.b16 %v477
      %v1502 = vunpack.c.l.b16 %v478
      %v1503 = vunpack.c.l.b16 %v479
      %v1504 = vunpack.c.l.b16 %v480
      %v1505 = vunpack.c.l.b16 %v481
      %v1506 = vunpack.c.l.b16 %v482
      %v1507 = vunpack.c.l.b16 %v483
      %v1508 = vunpack.c.l.b16 %v484
      %v1509 = vunpack.c.l.b16 %v485
      %v1510 = vunpack.c.l.b16 %v486
      %v1511 = vunpack.c.l.b16 %v487
      %v1512 = vunpack.c.l.b16 %v488
      %v1513 = vunpack.c.l.b16 %v489
      %v1514 = vunpack.c.l.b16 %v490
      %v1515 = vunpack.c.l.b16 %v491
      %v1516 = vunpack.c.l.b16 %v492
      %v1517 = vunpack.c.l.b16 %v493
      %v1518 = vunpack.c.l.b16 %v494
      %v1519 = vunpack.c.l.b16 %v495
      %v1520 = vunpack.c.l.b16 %v496
      %v1521 = vunpack.c.l.b16 %v497
      %v1522 = vunpack.c.l.b16 %v498
      %v1523 = vunpack.c.l.b16 %v499
      %v1524 = vunpack.c.l.b16 %v500
      %v1525 = vunpack.c.l.b16 %v501
      %v1526 = vunpack.c.l.b16 %v502
      %v1527 = vunpack.c.l.b16 %v503
      %v1528 = vunpack.c.l.b16 %v504
      %v1529 = vunpack.c.l.b16 %v505
      %v1530 = vunpack.c.l.b16 %v506
      %v1531 = vunpack.c.l.b16 %v507
      %v1532 = vunpack.c.l.b16 %v508
      %v1533 = vunpack.c.l.b16 %v509
      %v1534 = vunpack.c.l.b16 %v510
      %v1535 = vunpack.c.l.b16 %v511
      %v1536 = vunpack.c.l.b16 %v512
      %v1537 = vunpack.c.l.b16 %v513
      %v1538 = vunpack.c.l.b16 %v514
      %v1539 = vunpack.c.l.b16 %v515
      %v1540 = vunpack.c.l.b16 %v516
      %v1541 = vunpack.c.l.b16 %v517
      %v1542 = vunpack.c.l.b16 %v518
      %v1543 = vunpack.c.l.b16 %v519
      %v1544 = vunpack.c.l.b16 %v520
      %v1545 = vunpack.c.l.b16 %v521
      %v1546 = vunpack.c.l.b16 %v522
      %v1547 = vunpack.c.l.b16 %v523
      %v1548 = vunpack.c.l.b16 %v524
      %v1549 = vunpack.c.l.b16 %v525
      %v1550 = vunpack.c.l.b16 %v526
      %v1551 = vunpack.c.l.b16 %v527
      %v1552 = vunpack.c.l.b16 %v528
      %v1553 = vunpack.c.l.b16 %v529
      %v1554 = vunpack.c.l.b16 %v530
      %v1555 = vunpack.c.l.b16 %v531
      %v1556 = vunpack.c.l.b16 %v532
      %v1557 = vunpack.c.l.b16 %v533
      %v1558 = vunpack.c.l.b16 %v534
      %v1559 = vunpack.c.l.b16 %v535
      %v1560 = vunpack.c.l.b16 %v536
      %v1561 = vunpack.c.l.b16 %v537
      %v1562 = vunpack.c.l.b16 %v538
      %v1563 = vunpack.c.l.b16 %v539
      %v1564 = vunpack.c.l.b16 %v540
      %v1565 = vunpack.c.l.b16 %v541
      %v1566 = vunpack.c.l.b16 %v542
      %v1567 = vunpack.c.l.b16 %v543
      %v1568 = vunpack.c.l.b16 %v544
      %v1569 = vunpack.c.l.b16 %v545
      %v1570 = vunpack.c.l.b16 %v546
      %v1571 = vunpack.c.l.b16 %v547
      %v1572 = vunpack.c.l.b16 %v548
      %v1573 = vunpack.c.l.b16 %v549
      %v1574 = vunpack.c.l.b16 %v550
      %v1575 = vunpack.c.l.b16 %v551
      %v1576 = vunpack.c.l.b16 %v552
      %v1577 = vunpack.c.l.b16 %v553
      %v1578 = vunpack.c.l.b16 %v554
      %v1579 = vunpack.c.l.b16 %v555
      %v1580 = vunpack.c.l.b16 %v556
      %v1581 = vunpack.c.l.b16 %v557
      %v1582 = vunpack.c.l.b16 %v558
      %v1583 = vunpack.c.l.b16 %v559
      %v1584 = vunpack.c.l.b16 %v560
      %v1585 = vunpack.c.l.b16 %v561
      %v1586 = vunpack.c.l.b16 %v562
      %v1587 = vunpack.c.l.b16 %v563
      %v1588 = vunpack.c.l.b16 %v564
      %v1589 = vunpack.c.l.b16 %v565
      %v1590 = vunpack.c.l.b16 %v566
      %v1591 = vunpack.c.l.b16 %v567
      %v1592 = vunpack.c.l.b16 %v568
      %v1593 = vunpack.c.l.b16 %v569
      %v1594 = vunpack.c.l.b16 %v570
      %v1595 = vunpack.c.l.b16 %v571
      %v1596 = vunpack.c.l.b16 %v572
      %v1597 = vunpack.c.l.b16 %v573
      %v1598 = vunpack.c.l.b16 %v574
      %v1599 = vunpack.c.l.b16 %v575
      %v1600 = vunpack.c.l.b16 %v576
      %v1601 = vunpack.c.l.b16 %v577
      %v1602 = vunpack.c.l.b16 %v578
      %v1603 = vunpack.c.l.b16 %v579
      %v1604 = vunpack.c.l.b16 %v580
      %v1605 = vunpack.c.l.b16 %v581
      %v1606 = vunpack.c.l.b16 %v582
      %v1607 = vunpack.c.l.b16 %v583
      %v1608 = vunpack.c.l.b16 %v584
      %v1609 = vpack.c.b16 %v1466, %v1465
      %v1610 = vpack.c.b16 %v1468, %v1467
      %v1611 = vpack.c.b16 %v1470, %v1469
      %v1612 = vpack.c.b16 %v1472, %v1471
      %v1613 = vpack.c.b16 %v1474, %v1473
      %v1614 = vpack.c.b16 %v1476, %v1475
      %v1615 = vpack.c.b16 %v1478, %v1477
      %v1616 = vpack.c.b16 %v1480, %v1479
      %v1617 = vpack.c.b16 %v1482, %v1481
      %v1618 = vpack.c.b16 %v1484, %v1483
      %v1619 = vpack.c.b16 %v1486, %v1485
      %v1620 = vpack.c.b16 %v1488, %v1487
      %v1621 = vpack.c.b16 %v1490, %v1489
      %v1622 = vpack.c.b16 %v1492, %v1491
      %v1623 = vpack.c.b16 %v1494, %v1493
      %v1624 = vpack.c.b16 %v1496, %v1495
      %v1625 = vpack.c.b16 %v1498, %v1497
      %v1626 = vpack.c.b16 %v1500, %v1499
      %v1627 = vpack.c.b16 %v1502, %v1501
      %v1628 = vpack.c.b16 %v1504, %v1503
      %v1629 = vpack.c.b16 %v1506, %v1505
      %v1630 = vpack.c.b16 %v1508, %v1507
      %v1631 = vpack.c.b16 %v1510, %v1509
      %v1632 = vpack.c.b16 %v1512, %v1511
      %v1633 = vpack.c.b16 %v1514, %v1513
      %v1634 = vpack.c.b16 %v1516, %v1515
      %v1635 = vpack.c.b16 %v1518, %v1517
      %v1636 = vpack.c.b16 %v1520, %v1519
      %v1637 = vpack.c.b16 %v1522, %v1521
      %v1638 = vpack.c.b16 %v1524, %v1523
      %v1639 = vpack.c.b16 %v1526, %v1525
      %v1640 = vpack.c.b16 %v1528, %v1527
      %v1641 = vpack.c.b16 %v1530, %v1529
      %v1642 = vpack.c.b16 %v1532, %v1531
      %v1643 = vpack.c.b16 %v1534, %v1533
      %v1644 = vpack.c.b16 %v1536, %v1535
      %v1645 = vpack.c.b16 %v1538, %v1537
      %v1646 = vpack.c.b16 %v1540, %v1539
      %v1647 = vpack.c.b16 %v1542, %v1541
      %v1648 = vpack.c.b16 %v1544, %v1543
      %v1649 = vpack.c.b16 %v1546, %v1545
      %v1650 = vpack.c.b16 %v1548, %v1547
      %v1651 = vpack.c.b16 %v1550, %v1549
      %v1652 = vpack.c.b16 %v1552, %v1551
      %v1653 = vpack.c.b16 %v1554, %v1553
      %v1654 = vpack.c.b16 %v1556, %v1555
      %v1655 = vpack.c.b16 %v1558, %v1557
      %v1656 = vpack.c.b16 %v1560, %v1559
      %v1657 = vpack.c.b16 %v1562, %v1561
      %v1658 = vpack.c.b16 %v1564, %v1563
      %v1659 = vpack.c.b16 %v1566, %v1565
      %v1660 = vpack.c.b16 %v1568, %v1567
      %v1661 = vpack.c.b16 %v1570, %v1569
      %v1662 = vpack.c.b16 %v1572, %v1571
      %v1663 = vpack.c.b16 %v1574, %v1573
      %v1664 = vpack.c.b16 %v1576, %v1575
      %v1665 = vpack.c.b16 %v1578, %v1577
      %v1666 = vpack.c.b16 %v1580, %v1579
      %v1667 = vpack.c.b16 %v1582, %v1581
      %v1668 = vpack.c.b16 %v1584, %v1583
      %v1669 = vpack.c.b16 %v1586, %v1585
      %v1670 = vpack.c.b16 %v1588, %v1587
      %v1671 = vpack.c.b16 %v1590, %v1589
      %v1672 = vpack.c.b16 %v1592, %v1591
      %v1673 = vpack.c.b16 %v1594, %v1593
      %v1674 = vpack.c.b16 %v1596, %v1595
      %v1675 = vpack.c.b16 %v1598, %v1597
      %v1676 = vpack.c.b16 %v1600, %v1599
      %v1677 = vpack.c.b16 %v1602, %v1601
      %v1678 = vpack.c.b16 %v1604, %v1603
      %v1679 = vpack.c.b16 %v1606, %v1605
      %v1680 = vpack.c.b16 %v1608, %v1607
      %1753 = vmatprep.subr.bf16.mxu0 0
      %1754 = vmatpush1.bf16.msra.mxu0 %v1609
      %1755 = vmatprep.subr.bf16.mxu0 0
      %1756 = vmatpush1.bf16.msra.mxu0 %v1610
      %1757 = vmatprep.subr.bf16.mxu0 0
      %1758 = vmatpush1.bf16.msra.mxu0 %v1611
      %1759 = vmatprep.subr.bf16.mxu0 0
      %1760 = vmatpush1.bf16.msra.mxu0 %v1612
      %1761 = vmatprep.subr.bf16.mxu0 0
      %1762 = vmatpush1.bf16.msra.mxu0 %v1613
      %1763 = vmatprep.subr.bf16.mxu0 0
      %1764 = vmatpush1.bf16.msra.mxu0 %v1614
      %1765 = vmatprep.subr.bf16.mxu0 0
      %1766 = vmatpush1.bf16.msra.mxu0 %v1615
      %1767 = vmatprep.subr.bf16.mxu0 0
      %1768 = vmatpush1.bf16.msra.mxu0 %v1616
      %1769 = vmatprep.subr.bf16.mxu0 0
      %1770 = vmatpush1.bf16.msra.mxu0 %v1617
      %1771 = vmatprep.subr.bf16.mxu0 0
      %1772 = vmatpush1.bf16.msra.mxu0 %v1618
      %1773 = vmatprep.subr.bf16.mxu0 0
      %1774 = vmatpush1.bf16.msra.mxu0 %v1619
      %1775 = vmatprep.subr.bf16.mxu0 0
      %1776 = vmatpush1.bf16.msra.mxu0 %v1620
      %1777 = vmatprep.subr.bf16.mxu0 0
      %1778 = vmatpush1.bf16.msra.mxu0 %v1621
      %1779 = vmatprep.subr.bf16.mxu0 0
      %1780 = vmatpush1.bf16.msra.mxu0 %v1622
      %1781 = vmatprep.subr.bf16.mxu0 0
      %1782 = vmatpush1.bf16.msra.mxu0 %v1623
      %1783 = vmatprep.subr.bf16.mxu0 0
      %1784 = vmatpush1.bf16.msra.mxu0 %v1624
      %1785 = vmatprep.mubr.bf16.mxu0 %v1034
      %1786 = vmatmul.mubr.bf16.gmra.mrb[0].mxu0 %v1033
      %v1787 = vpop.f32.mrb[0].mxu0
      %v1788 = vadd.f32 0.0, %v1787
      %v1789 = vpop.f32.mrb[0].mxu0
      %v1790 = vpop.f32.mrb[0].mxu0
      %v1791 = vadd.f32 0.0, %v1790
      %v1792 = vpop.f32.mrb[0].mxu0
      %1793 = vmatprep.mubr.bf16.mxu0 %v1043
      %1794 = vmatmul.mubr.bf16.gmra.mrb[0].mxu0 %v1042
      %v1795 = vpop.f32.mrb[0].mxu0
      %v1796 = vadd.f32 0.0, %v1795
      %v1797 = vpop.f32.mrb[0].mxu0
      %v1798 = vpop.f32.mrb[0].mxu0
      %v1799 = vadd.f32 0.0, %v1798
      %v1800 = vpop.f32.mrb[0].mxu0
      %1801 = vmatprep.mubr.bf16.mxu0 %v1052
      %1802 = vmatmul.mubr.bf16.gmra.mrb[0].mxu0 %v1051
      %v1803 = vpop.f32.mrb[0].mxu0
      %v1804 = vadd.f32 0.0, %v1803
      %v1805 = vpop.f32.mrb[0].mxu0
      %v1806 = vpop.f32.mrb[0].mxu0
      %v1807 = vadd.f32 0.0, %v1806
      %v1808 = vpop.f32.mrb[0].mxu0
      %1809 = vmatprep.mubr.bf16.mxu0 %v1061
      %1810 = vmatmul.mubr.bf16.gmra.mrb[0].mxu0 %v1060
      %v1811 = vpop.f32.mrb[0].mxu0
      %v1812 = vadd.f32 0.0, %v1811
      %v1813 = vpop.f32.mrb[0].mxu0
      %v1814 = vpop.f32.mrb[0].mxu0
      %v1815 = vadd.f32 0.0, %v1814
      %v1816 = vpop.f32.mrb[0].mxu0
      %1817 = vmatprep.mubr.bf16.mxu0 %v1070
      %1818 = vmatmul.mubr.bf16.gmra.mrb[0].mxu0 %v1069
      %v1819 = vpop.f32.mrb[0].mxu0
      %v1820 = vadd.f32 0.0, %v1819
      %v1821 = vpop.f32.mrb[0].mxu0
      %v1822 = vpop.f32.mrb[0].mxu0
      %v1823 = vadd.f32 0.0, %v1822
      %v1824 = vpop.f32.mrb[0].mxu0
      %1825 = vmatprep.mubr.bf16.mxu0 %v1079
      %1826 = vmatmul.mubr.bf16.gmra.mrb[0].mxu0 %v1078
      %v1827 = vpop.f32.mrb[0].mxu0
      %v1828 = vadd.f32 0.0, %v1827
      %v1829 = vpop.f32.mrb[0].mxu0
      %v1830 = vpop.f32.mrb[0].mxu0
      %v1831 = vadd.f32 0.0, %v1830
      %v1832 = vpop.f32.mrb[0].mxu0
      %1833 = vmatprep.mubr.bf16.mxu0 %v1088
      %1834 = vmatmul.mubr.bf16.gmra.mrb[0].mxu0 %v1087
      %v1835 = vpop.f32.mrb[0].mxu0
      %v1836 = vadd.f32 0.0, %v1835
      %v1837 = vpop.f32.mrb[0].mxu0
      %v1838 = vpop.f32.mrb[0].mxu0
      %v1839 = vadd.f32 0.0, %v1838
      %v1840 = vpop.f32.mrb[0].mxu0
      %1841 = vmatprep.mubr.bf16.mxu0 %v1097
      %1842 = vmatmul.mubr.bf16.gmra.mrb[0].mxu0 %v1096
      %v1843 = vpop.f32.mrb[0].mxu0
      %v1844 = vadd.f32 0.0, %v1843
      %v1845 = vpop.f32.mrb[0].mxu0
      %v1846 = vpop.f32.mrb[0].mxu0
      %v1847 = vadd.f32 0.0, %v1846
      %v1848 = vpop.f32.mrb[0].mxu0
      %1849 = vmatprep.mubr.bf16.mxu0 %v1106
      %1850 = vmatmul.mubr.bf16.gmra.mrb[0].mxu0 %v1105
      %v1851 = vpop.f32.mrb[0].mxu0
      %v1852 = vadd.f32 0.0, %v1851
      %v1853 = vpop.f32.mrb[0].mxu0
      %v1854 = vpop.f32.mrb[0].mxu0
      %v1855 = vadd.f32 0.0, %v1854
      %v1856 = vpop.f32.mrb[0].mxu0
      %1857 = vmatprep.mubr.bf16.mxu0 %v1115
      %1858 = vmatmul.mubr.bf16.gmra.mrb[0].mxu0 %v1114
      %v1859 = vpop.f32.mrb[0].mxu0
      %v1860 = vadd.f32 0.0, %v1859
      %v1861 = vpop.f32.mrb[0].mxu0
      %v1862 = vpop.f32.mrb[0].mxu0
      %v1863 = vadd.f32 0.0, %v1862
      %v1864 = vpop.f32.mrb[0].mxu0
      %1865 = vmatprep.mubr.bf16.mxu0 %v1124
      %1866 = vmatmul.mubr.bf16.gmra.mrb[0].mxu0 %v1123
      %v1867 = vpop.f32.mrb[0].mxu0
      %v1868 = vadd.f32 0.0, %v1867
      %v1869 = vpop.f32.mrb[0].mxu0
      %v1870 = vpop.f32.mrb[0].mxu0
      %v1871 = vadd.f32 0.0, %v1870
      %v1872 = vpop.f32.mrb[0].mxu0
      %1873 = vmatprep.mubr.bf16.mxu0 %v1133
      %1874 = vmatmul.mubr.bf16.gmra.mrb[0].mxu0 %v1132
      %v1875 = vpop.f32.mrb[0].mxu0
      %v1876 = vadd.f32 0.0, %v1875
      %v1877 = vpop.f32.mrb[0].mxu0
      %v1878 = vpop.f32.mrb[0].mxu0
      %v1879 = vadd.f32 0.0, %v1878
      %v1880 = vpop.f32.mrb[0].mxu0
      %1881 = vmatprep.mubr.bf16.mxu0 %v1142
      %1882 = vmatmul.mubr.bf16.gmra.mrb[0].mxu0 %v1141
      %v1883 = vpop.f32.mrb[0].mxu0
      %v1884 = vadd.f32 0.0, %v1883
      %v1885 = vpop.f32.mrb[0].mxu0
      %v1886 = vpop.f32.mrb[0].mxu0
      %v1887 = vadd.f32 0.0, %v1886
      %v1888 = vpop.f32.mrb[0].mxu0
      %1889 = vmatprep.mubr.bf16.mxu0 %v1151
      %1890 = vmatmul.mubr.bf16.gmra.mrb[0].mxu0 %v1150
      %v1891 = vpop.f32.mrb[0].mxu0
      %v1892 = vadd.f32 0.0, %v1891
      %v1893 = vpop.f32.mrb[0].mxu0
      %v1894 = vpop.f32.mrb[0].mxu0
      %v1895 = vadd.f32 0.0, %v1894
      %v1896 = vpop.f32.mrb[0].mxu0
      %1897 = vmatprep.mubr.bf16.mxu0 %v1160
      %1898 = vmatmul.mubr.bf16.gmra.mrb[0].mxu0 %v1159
      %v1899 = vpop.f32.mrb[0].mxu0
      %v1900 = vadd.f32 0.0, %v1899
      %v1901 = vpop.f32.mrb[0].mxu0
      %v1902 = vpop.f32.mrb[0].mxu0
      %v1903 = vadd.f32 0.0, %v1902
      %v1904 = vpop.f32.mrb[0].mxu0
      %1905 = vmatprep.mubr.bf16.mxu0 %v1169
      %1906 = vmatmul.mubr.bf16.gmra.mrb[0].mxu0 %v1168
      %v1907 = vpop.f32.mrb[0].mxu0
      %v1908 = vadd.f32 0.0, %v1907
      %v1909 = vpop.f32.mrb[0].mxu0
      %v1910 = vpop.f32.mrb[0].mxu0
      %v1911 = vadd.f32 0.0, %v1910
      %v1912 = vpop.f32.mrb[0].mxu0
      %1913 = vdwg.mxu0
      %1914 = vmatprep.subr.bf16.mxu0 0
      %1915 = vmatpush1.bf16.msra.mxu0 %v1625
      %1916 = vmatprep.subr.bf16.mxu0 0
      %1917 = vmatpush1.bf16.msra.mxu0 %v1626
      %1918 = vmatprep.subr.bf16.mxu0 0
      %1919 = vmatpush1.bf16.msra.mxu0 %v1627
      %1920 = vmatprep.subr.bf16.mxu0 0
      %1921 = vmatpush1.bf16.msra.mxu0 %v1628
      %1922 = vmatprep.subr.bf16.mxu0 0
      %1923 = vmatpush1.bf16.msra.mxu0 %v1629
      %1924 = vmatprep.subr.bf16.mxu0 0
      %1925 = vmatpush1.bf16.msra.mxu0 %v1630
      %1926 = vmatprep.subr.bf16.mxu0 0
      %1927 = vmatpush1.bf16.msra.mxu0 %v1631
      %1928 = vmatprep.subr.bf16.mxu0 0
      %1929 = vmatpush1.bf16.msra.mxu0 %v1632
      %1930 = vmatprep.subr.bf16.mxu0 0
      %1931 = vmatpush1.bf16.msra.mxu0 %v1633
      %1932 = vmatprep.subr.bf16.mxu0 0
      %1933 = vmatpush1.bf16.msra.mxu0 %v1634
      %1934 = vmatprep.subr.bf16.mxu0 0
      %1935 = vmatpush1.bf16.msra.mxu0 %v1635
      %1936 = vmatprep.subr.bf16.mxu0 0
      %1937 = vmatpush1.bf16.msra.mxu0 %v1636
      %1938 = vmatprep.subr.bf16.mxu0 0
      %1939 = vmatpush1.bf16.msra.mxu0 %v1637
      %1940 = vmatprep.subr.bf16.mxu0 0
      %1941 = vmatpush1.bf16.msra.mxu0 %v1638
      %1942 = vmatprep.subr.bf16.mxu0 0
      %1943 = vmatpush1.bf16.msra.mxu0 %v1639
      %1944 = vmatprep.subr.bf16.mxu0 0
      %1945 = vmatpush1.bf16.msra.mxu0 %v1640
      %1946 = vmatprep.mubr.bf16.mxu0 %v1036
      %1947 = vmatmul.mubr.bf16.gmra.mrb[0].mxu0 %v1035
      %v1948 = vpop.f32.mrb[0].mxu0
      %v1949 = vadd.f32 %v1788, %v1948
      %v1950 = vpop.f32.mrb[0].mxu0
      %v1951 = vpop.f32.mrb[0].mxu0
      %v1952 = vadd.f32 %v1791, %v1951
      %v1953 = vpop.f32.mrb[0].mxu0
      %1954 = vmatprep.mubr.bf16.mxu0 %v1045
      %1955 = vmatmul.mubr.bf16.gmra.mrb[0].mxu0 %v1044
      %v1956 = vpop.f32.mrb[0].mxu0
      %v1957 = vadd.f32 %v1796, %v1956
      %v1958 = vpop.f32.mrb[0].mxu0
      %v1959 = vpop.f32.mrb[0].mxu0
      %v1960 = vadd.f32 %v1799, %v1959
      %v1961 = vpop.f32.mrb[0].mxu0
      %1962 = vmatprep.mubr.bf16.mxu0 %v1054
      %1963 = vmatmul.mubr.bf16.gmra.mrb[0].mxu0 %v1053
      %v1964 = vpop.f32.mrb[0].mxu0
      %v1965 = vadd.f32 %v1804, %v1964
      %v1966 = vpop.f32.mrb[0].mxu0
      %v1967 = vpop.f32.mrb[0].mxu0
      %v1968 = vadd.f32 %v1807, %v1967
      %v1969 = vpop.f32.mrb[0].mxu0
      %1970 = vmatprep.mubr.bf16.mxu0 %v1063
      %1971 = vmatmul.mubr.bf16.gmra.mrb[0].mxu0 %v1062
      %v1972 = vpop.f32.mrb[0].mxu0
      %v1973 = vadd.f32 %v1812, %v1972
      %v1974 = vpop.f32.mrb[0].mxu0
      %v1975 = vpop.f32.mrb[0].mxu0
      %v1976 = vadd.f32 %v1815, %v1975
      %v1977 = vpop.f32.mrb[0].mxu0
      %1978 = vmatprep.mubr.bf16.mxu0 %v1072
      %1979 = vmatmul.mubr.bf16.gmra.mrb[0].mxu0 %v1071
      %v1980 = vpop.f32.mrb[0].mxu0
      %v1981 = vadd.f32 %v1820, %v1980
      %v1982 = vpop.f32.mrb[0].mxu0
      %v1983 = vpop.f32.mrb[0].mxu0
      %v1984 = vadd.f32 %v1823, %v1983
      %v1985 = vpop.f32.mrb[0].mxu0
      %1986 = vmatprep.mubr.bf16.mxu0 %v1081
      %1987 = vmatmul.mubr.bf16.gmra.mrb[0].mxu0 %v1080
      %v1988 = vpop.f32.mrb[0].mxu0
      %v1989 = vadd.f32 %v1828, %v1988
      %v1990 = vpop.f32.mrb[0].mxu0
      %v1991 = vpop.f32.mrb[0].mxu0
      %v1992 = vadd.f32 %v1831, %v1991
      %v1993 = vpop.f32.mrb[0].mxu0
      %1994 = vmatprep.mubr.bf16.mxu0 %v1090
      %1995 = vmatmul.mubr.bf16.gmra.mrb[0].mxu0 %v1089
      %v1996 = vpop.f32.mrb[0].mxu0
      %v1997 = vadd.f32 %v1836, %v1996
      %v1998 = vpop.f32.mrb[0].mxu0
      %v1999 = vpop.f32.mrb[0].mxu0
      %v2000 = vadd.f32 %v1839, %v1999
      %v2001 = vpop.f32.mrb[0].mxu0
      %2002 = vmatprep.mubr.bf16.mxu0 %v1099
      %2003 = vmatmul.mubr.bf16.gmra.mrb[0].mxu0 %v1098
      %v2004 = vpop.f32.mrb[0].mxu0
      %v2005 = vadd.f32 %v1844, %v2004
      %v2006 = vpop.f32.mrb[0].mxu0
      %v2007 = vpop.f32.mrb[0].mxu0
      %v2008 = vadd.f32 %v1847, %v2007
      %v2009 = vpop.f32.mrb[0].mxu0
      %2010 = vmatprep.mubr.bf16.mxu0 %v1108
      %2011 = vmatmul.mubr.bf16.gmra.mrb[0].mxu0 %v1107
      %v2012 = vpop.f32.mrb[0].mxu0
      %v2013 = vadd.f32 %v1852, %v2012
      %v2014 = vpop.f32.mrb[0].mxu0
      %v2015 = vpop.f32.mrb[0].mxu0
      %v2016 = vadd.f32 %v1855, %v2015
      %v2017 = vpop.f32.mrb[0].mxu0
      %2018 = vmatprep.mubr.bf16.mxu0 %v1117
      %2019 = vmatmul.mubr.bf16.gmra.mrb[0].mxu0 %v1116
      %v2020 = vpop.f32.mrb[0].mxu0
      %v2021 = vadd.f32 %v1860, %v2020
      %v2022 = vpop.f32.mrb[0].mxu0
      %v2023 = vpop.f32.mrb[0].mxu0
      %v2024 = vadd.f32 %v1863, %v2023
      %v2025 = vpop.f32.mrb[0].mxu0
      %2026 = vmatprep.mubr.bf16.mxu0 %v1126
      %2027 = vmatmul.mubr.bf16.gmra.mrb[0].mxu0 %v1125
      %v2028 = vpop.f32.mrb[0].mxu0
      %v2029 = vadd.f32 %v1868, %v2028
      %v2030 = vpop.f32.mrb[0].mxu0
      %v2031 = vpop.f32.mrb[0].mxu0
      %v2032 = vadd.f32 %v1871, %v2031
      %v2033 = vpop.f32.mrb[0].mxu0
      %2034 = vmatprep.mubr.bf16.mxu0 %v1135
      %2035 = vmatmul.mubr.bf16.gmra.mrb[0].mxu0 %v1134
      %v2036 = vpop.f32.mrb[0].mxu0
      %v2037 = vadd.f32 %v1876, %v2036
      %v2038 = vpop.f32.mrb[0].mxu0
      %v2039 = vpop.f32.mrb[0].mxu0
      %v2040 = vadd.f32 %v1879, %v2039
      %v2041 = vpop.f32.mrb[0].mxu0
      %2042 = vmatprep.mubr.bf16.mxu0 %v1144
      %2043 = vmatmul.mubr.bf16.gmra.mrb[0].mxu0 %v1143
      %v2044 = vpop.f32.mrb[0].mxu0
      %v2045 = vadd.f32 %v1884, %v2044
      %v2046 = vpop.f32.mrb[0].mxu0
      %v2047 = vpop.f32.mrb[0].mxu0
      %v2048 = vadd.f32 %v1887, %v2047
      %v2049 = vpop.f32.mrb[0].mxu0
      %2050 = vmatprep.mubr.bf16.mxu0 %v1153
      %2051 = vmatmul.mubr.bf16.gmra.mrb[0].mxu0 %v1152
      %v2052 = vpop.f32.mrb[0].mxu0
      %v2053 = vadd.f32 %v1892, %v2052
      %v2054 = vpop.f32.mrb[0].mxu0
      %v2055 = vpop.f32.mrb[0].mxu0
      %v2056 = vadd.f32 %v1895, %v2055
      %v2057 = vpop.f32.mrb[0].mxu0
      %2058 = vmatprep.mubr.bf16.mxu0 %v1162
      %2059 = vmatmul.mubr.bf16.gmra.mrb[0].mxu0 %v1161
      %v2060 = vpop.f32.mrb[0].mxu0
      %v2061 = vadd.f32 %v1900, %v2060
      %v2062 = vpop.f32.mrb[0].mxu0
      %v2063 = vpop.f32.mrb[0].mxu0
      %v2064 = vadd.f32 %v1903, %v2063
      %v2065 = vpop.f32.mrb[0].mxu0
      %2066 = vmatprep.mubr.bf16.mxu0 %v1171
      %2067 = vmatmul.mubr.bf16.gmra.mrb[0].mxu0 %v1170
      %v2068 = vpop.f32.mrb[0].mxu0
      %v2069 = vadd.f32 %v1908, %v2068
      %v2070 = vpop.f32.mrb[0].mxu0
      %v2071 = vpop.f32.mrb[0].mxu0
      %v2072 = vadd.f32 %v1911, %v2071
      %v2073 = vpop.f32.mrb[0].mxu0
      %2074 = vdwg.mxu0
      %2075 = vmatprep.subr.bf16.mxu0 0
      %2076 = vmatpush1.bf16.msra.mxu0 %v1641
      %2077 = vmatprep.subr.bf16.mxu0 0
      %2078 = vmatpush1.bf16.msra.mxu0 %v1642
      %2079 = vmatprep.subr.bf16.mxu0 0
      %2080 = vmatpush1.bf16.msra.mxu0 %v1643
      %2081 = vmatprep.subr.bf16.mxu0 0
      %2082 = vmatpush1.bf16.msra.mxu0 %v1644
      %2083 = vmatprep.subr.bf16.mxu0 0
      %2084 = vmatpush1.bf16.msra.mxu0 %v1645
      %2085 = vmatprep.subr.bf16.mxu0 0
      %2086 = vmatpush1.bf16.msra.mxu0 %v1646
      %2087 = vmatprep.subr.bf16.mxu0 0
      %2088 = vmatpush1.bf16.msra.mxu0 %v1647
      %2089 = vmatprep.subr.bf16.mxu0 0
      %2090 = vmatpush1.bf16.msra.mxu0 %v1648
      %2091 = vmatprep.subr.bf16.mxu0 0
      %2092 = vmatpush1.bf16.msra.mxu0 %v1649
      %2093 = vmatprep.subr.bf16.mxu0 0
      %2094 = vmatpush1.bf16.msra.mxu0 %v1650
      %2095 = vmatprep.subr.bf16.mxu0 0
      %2096 = vmatpush1.bf16.msra.mxu0 %v1651
      %2097 = vmatprep.subr.bf16.mxu0 0
      %2098 = vmatpush1.bf16.msra.mxu0 %v1652
      %2099 = vmatprep.subr.bf16.mxu0 0
      %2100 = vmatpush1.bf16.msra.mxu0 %v1653
      %2101 = vmatprep.subr.bf16.mxu0 0
      %2102 = vmatpush1.bf16.msra.mxu0 %v1654
      %2103 = vmatprep.subr.bf16.mxu0 0
      %2104 = vmatpush1.bf16.msra.mxu0 %v1655
      %2105 = vmatprep.subr.bf16.mxu0 0
      %2106 = vmatpush1.bf16.msra.mxu0 %v1656
      %2107 = vmatprep.mubr.bf16.mxu0 %v1038
      %2108 = vmatmul.mubr.bf16.gmra.mrb[0].mxu0 %v1037
      %v2109 = vpop.f32.mrb[0].mxu0
      %v2110 = vadd.f32 %v1949, %v2109
      %v2111 = vpop.f32.mrb[0].mxu0
      %v2112 = vpop.f32.mrb[0].mxu0
      %v2113 = vadd.f32 %v1952, %v2112
      %v2114 = vpop.f32.mrb[0].mxu0
      %2115 = vmatprep.mubr.bf16.mxu0 %v1047
      %2116 = vmatmul.mubr.bf16.gmra.mrb[0].mxu0 %v1046
      %v2117 = vpop.f32.mrb[0].mxu0
      %v2118 = vadd.f32 %v1957, %v2117
      %v2119 = vpop.f32.mrb[0].mxu0
      %v2120 = vpop.f32.mrb[0].mxu0
      %v2121 = vadd.f32 %v1960, %v2120
      %v2122 = vpop.f32.mrb[0].mxu0
      %2123 = vmatprep.mubr.bf16.mxu0 %v1056
      %2124 = vmatmul.mubr.bf16.gmra.mrb[0].mxu0 %v1055
      %v2125 = vpop.f32.mrb[0].mxu0
      %v2126 = vadd.f32 %v1965, %v2125
      %v2127 = vpop.f32.mrb[0].mxu0
      %v2128 = vpop.f32.mrb[0].mxu0
      %v2129 = vadd.f32 %v1968, %v2128
      %v2130 = vpop.f32.mrb[0].mxu0
      %2131 = vmatprep.mubr.bf16.mxu0 %v1065
      %2132 = vmatmul.mubr.bf16.gmra.mrb[0].mxu0 %v1064
      %v2133 = vpop.f32.mrb[0].mxu0
      %v2134 = vadd.f32 %v1973, %v2133
      %v2135 = vpop.f32.mrb[0].mxu0
      %v2136 = vpop.f32.mrb[0].mxu0
      %v2137 = vadd.f32 %v1976, %v2136
      %v2138 = vpop.f32.mrb[0].mxu0
      %2139 = vmatprep.mubr.bf16.mxu0 %v1074
      %2140 = vmatmul.mubr.bf16.gmra.mrb[0].mxu0 %v1073
      %v2141 = vpop.f32.mrb[0].mxu0
      %v2142 = vadd.f32 %v1981, %v2141
      %v2143 = vpop.f32.mrb[0].mxu0
      %v2144 = vpop.f32.mrb[0].mxu0
      %v2145 = vadd.f32 %v1984, %v2144
      %v2146 = vpop.f32.mrb[0].mxu0
      %2147 = vmatprep.mubr.bf16.mxu0 %v1083
      %2148 = vmatmul.mubr.bf16.gmra.mrb[0].mxu0 %v1082
      %v2149 = vpop.f32.mrb[0].mxu0
      %v2150 = vadd.f32 %v1989, %v2149
      %v2151 = vpop.f32.mrb[0].mxu0
      %v2152 = vpop.f32.mrb[0].mxu0
      %v2153 = vadd.f32 %v1992, %v2152
      %v2154 = vpop.f32.mrb[0].mxu0
      %2155 = vmatprep.mubr.bf16.mxu0 %v1092
      %2156 = vmatmul.mubr.bf16.gmra.mrb[0].mxu0 %v1091
      %v2157 = vpop.f32.mrb[0].mxu0
      %v2158 = vadd.f32 %v1997, %v2157
      %v2159 = vpop.f32.mrb[0].mxu0
      %v2160 = vpop.f32.mrb[0].mxu0
      %v2161 = vadd.f32 %v2000, %v2160
      %v2162 = vpop.f32.mrb[0].mxu0
      %2163 = vmatprep.mubr.bf16.mxu0 %v1101
      %2164 = vmatmul.mubr.bf16.gmra.mrb[0].mxu0 %v1100
      %v2165 = vpop.f32.mrb[0].mxu0
      %v2166 = vadd.f32 %v2005, %v2165
      %v2167 = vpop.f32.mrb[0].mxu0
      %v2168 = vpop.f32.mrb[0].mxu0
      %v2169 = vadd.f32 %v2008, %v2168
      %v2170 = vpop.f32.mrb[0].mxu0
      %2171 = vmatprep.mubr.bf16.mxu0 %v1110
      %2172 = vmatmul.mubr.bf16.gmra.mrb[0].mxu0 %v1109
      %v2173 = vpop.f32.mrb[0].mxu0
      %v2174 = vadd.f32 %v2013, %v2173
      %v2175 = vpop.f32.mrb[0].mxu0
      %v2176 = vpop.f32.mrb[0].mxu0
      %v2177 = vadd.f32 %v2016, %v2176
      %v2178 = vpop.f32.mrb[0].mxu0
      %2179 = vmatprep.mubr.bf16.mxu0 %v1119
      %2180 = vmatmul.mubr.bf16.gmra.mrb[0].mxu0 %v1118
      %v2181 = vpop.f32.mrb[0].mxu0
      %v2182 = vadd.f32 %v2021, %v2181
      %v2183 = vpop.f32.mrb[0].mxu0
      %v2184 = vpop.f32.mrb[0].mxu0
      %v2185 = vadd.f32 %v2024, %v2184
      %v2186 = vpop.f32.mrb[0].mxu0
      %2187 = vmatprep.mubr.bf16.mxu0 %v1128
      %2188 = vmatmul.mubr.bf16.gmra.mrb[0].mxu0 %v1127
      %v2189 = vpop.f32.mrb[0].mxu0
      %v2190 = vadd.f32 %v2029, %v2189
      %v2191 = vpop.f32.mrb[0].mxu0
      %v2192 = vpop.f32.mrb[0].mxu0
      %v2193 = vadd.f32 %v2032, %v2192
      %v2194 = vpop.f32.mrb[0].mxu0
      %2195 = vmatprep.mubr.bf16.mxu0 %v1137
      %2196 = vmatmul.mubr.bf16.gmra.mrb[0].mxu0 %v1136
      %v2197 = vpop.f32.mrb[0].mxu0
      %v2198 = vadd.f32 %v2037, %v2197
      %v2199 = vpop.f32.mrb[0].mxu0
      %v2200 = vpop.f32.mrb[0].mxu0
      %v2201 = vadd.f32 %v2040, %v2200
      %v2202 = vpop.f32.mrb[0].mxu0
      %2203 = vmatprep.mubr.bf16.mxu0 %v1146
      %2204 = vmatmul.mubr.bf16.gmra.mrb[0].mxu0 %v1145
      %v2205 = vpop.f32.mrb[0].mxu0
      %v2206 = vadd.f32 %v2045, %v2205
      %v2207 = vpop.f32.mrb[0].mxu0
      %v2208 = vpop.f32.mrb[0].mxu0
      %v2209 = vadd.f32 %v2048, %v2208
      %v2210 = vpop.f32.mrb[0].mxu0
      %2211 = vmatprep.mubr.bf16.mxu0 %v1155
      %2212 = vmatmul.mubr.bf16.gmra.mrb[0].mxu0 %v1154
      %v2213 = vpop.f32.mrb[0].mxu0
      %v2214 = vadd.f32 %v2053, %v2213
      %v2215 = vpop.f32.mrb[0].mxu0
      %v2216 = vpop.f32.mrb[0].mxu0
      %v2217 = vadd.f32 %v2056, %v2216
      %v2218 = vpop.f32.mrb[0].mxu0
      %2219 = vmatprep.mubr.bf16.mxu0 %v1164
      %2220 = vmatmul.mubr.bf16.gmra.mrb[0].mxu0 %v1163
      %v2221 = vpop.f32.mrb[0].mxu0
      %v2222 = vadd.f32 %v2061, %v2221
      %v2223 = vpop.f32.mrb[0].mxu0
      %v2224 = vpop.f32.mrb[0].mxu0
      %v2225 = vadd.f32 %v2064, %v2224
      %v2226 = vpop.f32.mrb[0].mxu0
      %2227 = vmatprep.mubr.bf16.mxu0 %v1173
      %2228 = vmatmul.mubr.bf16.gmra.mrb[0].mxu0 %v1172
      %v2229 = vpop.f32.mrb[0].mxu0
      %v2230 = vadd.f32 %v2069, %v2229
      %v2231 = vpop.f32.mrb[0].mxu0
      %v2232 = vpop.f32.mrb[0].mxu0
      %v2233 = vadd.f32 %v2072, %v2232
      %v2234 = vpop.f32.mrb[0].mxu0
      %2235 = vdwg.mxu0
      %2236 = vmatprep.subr.bf16.mxu0 0
      %2237 = vmatpush1.bf16.msra.mxu0 %v1657
      %2238 = vmatprep.subr.bf16.mxu0 0
      %2239 = vmatpush1.bf16.msra.mxu0 %v1658
      %2240 = vmatprep.subr.bf16.mxu0 0
      %2241 = vmatpush1.bf16.msra.mxu0 %v1659
      %2242 = vmatprep.subr.bf16.mxu0 0
      %2243 = vmatpush1.bf16.msra.mxu0 %v1660
      %2244 = vmatprep.subr.bf16.mxu0 0
      %2245 = vmatpush1.bf16.msra.mxu0 %v1661
      %2246 = vmatprep.subr.bf16.mxu0 0
      %2247 = vmatpush1.bf16.msra.mxu0 %v1662
      %2248 = vmatprep.subr.bf16.mxu0 0
      %2249 = vmatpush1.bf16.msra.mxu0 %v1663
      %2250 = vmatprep.subr.bf16.mxu0 0
      %2251 = vmatpush1.bf16.msra.mxu0 %v1664
      %2252 = vmatprep.subr.bf16.mxu0 0
      %2253 = vmatpush1.bf16.msra.mxu0 %v1665
      %2254 = vmatprep.subr.bf16.mxu0 0
      %2255 = vmatpush1.bf16.msra.mxu0 %v1666
      %2256 = vmatprep.subr.bf16.mxu0 0
      %2257 = vmatpush1.bf16.msra.mxu0 %v1667
      %2258 = vmatprep.subr.bf16.mxu0 0
      %2259 = vmatpush1.bf16.msra.mxu0 %v1668
      %2260 = vmatprep.subr.bf16.mxu0 0
      %2261 = vmatpush1.bf16.msra.mxu0 %v1669
      %2262 = vmatprep.subr.bf16.mxu0 0
      %2263 = vmatpush1.bf16.msra.mxu0 %v1670
      %2264 = vmatprep.subr.bf16.mxu0 0
      %2265 = vmatpush1.bf16.msra.mxu0 %v1671
      %2266 = vmatprep.subr.bf16.mxu0 0
      %2267 = vmatpush1.bf16.msra.mxu0 %v1672
      %2268 = vmatprep.mubr.bf16.mxu0 %v1040
      %2269 = vmatmul.mubr.bf16.gmra.mrb[0].mxu0 %v1039
      %v2270 = vpop.f32.mrb[0].mxu0
      %v2271 = vadd.f32 %v2110, %v2270
      %v2272 = vpop.f32.mrb[0].mxu0
      %v2273 = vpop.f32.mrb[0].mxu0
      %v2274 = vadd.f32 %v2113, %v2273
      %v2275 = vpop.f32.mrb[0].mxu0
      %2276 = vmatprep.mubr.bf16.mxu0 %v1049
      %2277 = vmatmul.mubr.bf16.gmra.mrb[0].mxu0 %v1048
      %v2278 = vpop.f32.mrb[0].mxu0
      %v2279 = vadd.f32 %v2118, %v2278
      %v2280 = vpop.f32.mrb[0].mxu0
      %v2281 = vpop.f32.mrb[0].mxu0
      %v2282 = vadd.f32 %v2121, %v2281
      %v2283 = vpop.f32.mrb[0].mxu0
      %2284 = vmatprep.mubr.bf16.mxu0 %v1058
      %2285 = vmatmul.mubr.bf16.gmra.mrb[0].mxu0 %v1057
      %v2286 = vpop.f32.mrb[0].mxu0
      %v2287 = vadd.f32 %v2126, %v2286
      %v2288 = vpop.f32.mrb[0].mxu0
      %v2289 = vpop.f32.mrb[0].mxu0
      %v2290 = vadd.f32 %v2129, %v2289
      %v2291 = vpop.f32.mrb[0].mxu0
      %2292 = vmatprep.mubr.bf16.mxu0 %v1067
      %2293 = vmatmul.mubr.bf16.gmra.mrb[0].mxu0 %v1066
      %v2294 = vpop.f32.mrb[0].mxu0
      %v2295 = vadd.f32 %v2134, %v2294
      %v2296 = vpop.f32.mrb[0].mxu0
      %v2297 = vpop.f32.mrb[0].mxu0
      %v2298 = vadd.f32 %v2137, %v2297
      %v2299 = vpop.f32.mrb[0].mxu0
      %2300 = vmatprep.mubr.bf16.mxu0 %v1076
      %2301 = vmatmul.mubr.bf16.gmra.mrb[0].mxu0 %v1075
      %v2302 = vpop.f32.mrb[0].mxu0
      %v2303 = vadd.f32 %v2142, %v2302
      %v2304 = vpop.f32.mrb[0].mxu0
      %v2305 = vpop.f32.mrb[0].mxu0
      %v2306 = vadd.f32 %v2145, %v2305
      %v2307 = vpop.f32.mrb[0].mxu0
      %2308 = vmatprep.mubr.bf16.mxu0 %v1085
      %2309 = vmatmul.mubr.bf16.gmra.mrb[0].mxu0 %v1084
      %v2310 = vpop.f32.mrb[0].mxu0
      %v2311 = vadd.f32 %v2150, %v2310
      %v2312 = vpop.f32.mrb[0].mxu0
      %v2313 = vpop.f32.mrb[0].mxu0
      %v2314 = vadd.f32 %v2153, %v2313
      %v2315 = vpop.f32.mrb[0].mxu0
      %2316 = vmatprep.mubr.bf16.mxu0 %v1094
      %2317 = vmatmul.mubr.bf16.gmra.mrb[0].mxu0 %v1093
      %v2318 = vpop.f32.mrb[0].mxu0
      %v2319 = vadd.f32 %v2158, %v2318
      %v2320 = vpop.f32.mrb[0].mxu0
      %v2321 = vpop.f32.mrb[0].mxu0
      %v2322 = vadd.f32 %v2161, %v2321
      %v2323 = vpop.f32.mrb[0].mxu0
      %2324 = vmatprep.mubr.bf16.mxu0 %v1103
      %2325 = vmatmul.mubr.bf16.gmra.mrb[0].mxu0 %v1102
      %v2326 = vpop.f32.mrb[0].mxu0
      %v2327 = vadd.f32 %v2166, %v2326
      %v2328 = vpop.f32.mrb[0].mxu0
      %v2329 = vpop.f32.mrb[0].mxu0
      %v2330 = vadd.f32 %v2169, %v2329
      %v2331 = vpop.f32.mrb[0].mxu0
      %2332 = vmatprep.mubr.bf16.mxu0 %v1112
      %2333 = vmatmul.mubr.bf16.gmra.mrb[0].mxu0 %v1111
      %v2334 = vpop.f32.mrb[0].mxu0
      %v2335 = vadd.f32 %v2174, %v2334
      %v2336 = vpop.f32.mrb[0].mxu0
      %v2337 = vpop.f32.mrb[0].mxu0
      %v2338 = vadd.f32 %v2177, %v2337
      %v2339 = vpop.f32.mrb[0].mxu0
      %2340 = vmatprep.mubr.bf16.mxu0 %v1121
      %2341 = vmatmul.mubr.bf16.gmra.mrb[0].mxu0 %v1120
      %v2342 = vpop.f32.mrb[0].mxu0
      %v2343 = vadd.f32 %v2182, %v2342
      %v2344 = vpop.f32.mrb[0].mxu0
      %v2345 = vpop.f32.mrb[0].mxu0
      %v2346 = vadd.f32 %v2185, %v2345
      %v2347 = vpop.f32.mrb[0].mxu0
      %2348 = vmatprep.mubr.bf16.mxu0 %v1130
      %2349 = vmatmul.mubr.bf16.gmra.mrb[0].mxu0 %v1129
      %v2350 = vpop.f32.mrb[0].mxu0
      %v2351 = vadd.f32 %v2190, %v2350
      %v2352 = vpop.f32.mrb[0].mxu0
      %v2353 = vpop.f32.mrb[0].mxu0
      %v2354 = vadd.f32 %v2193, %v2353
      %v2355 = vpop.f32.mrb[0].mxu0
      %2356 = vmatprep.mubr.bf16.mxu0 %v1139
      %2357 = vmatmul.mubr.bf16.gmra.mrb[0].mxu0 %v1138
      %v2358 = vpop.f32.mrb[0].mxu0
      %v2359 = vadd.f32 %v2198, %v2358
      %v2360 = vpop.f32.mrb[0].mxu0
      %v2361 = vpop.f32.mrb[0].mxu0
      %v2362 = vadd.f32 %v2201, %v2361
      %v2363 = vpop.f32.mrb[0].mxu0
      %2364 = vmatprep.mubr.bf16.mxu0 %v1148
      %2365 = vmatmul.mubr.bf16.gmra.mrb[0].mxu0 %v1147
      %v2366 = vpop.f32.mrb[0].mxu0
      %v2367 = vadd.f32 %v2206, %v2366
      %v2368 = vpop.f32.mrb[0].mxu0
      %v2369 = vpop.f32.mrb[0].mxu0
      %v2370 = vadd.f32 %v2209, %v2369
      %v2371 = vpop.f32.mrb[0].mxu0
      %2372 = vmatprep.mubr.bf16.mxu0 %v1157
      %2373 = vmatmul.mubr.bf16.gmra.mrb[0].mxu0 %v1156
      %v2374 = vpop.f32.mrb[0].mxu0
      %v2375 = vadd.f32 %v2214, %v2374
      %v2376 = vpop.f32.mrb[0].mxu0
      %v2377 = vpop.f32.mrb[0].mxu0
      %v2378 = vadd.f32 %v2217, %v2377
      %v2379 = vpop.f32.mrb[0].mxu0
      %2380 = vmatprep.mubr.bf16.mxu0 %v1166
      %2381 = vmatmul.mubr.bf16.gmra.mrb[0].mxu0 %v1165
      %v2382 = vpop.f32.mrb[0].mxu0
      %v2383 = vadd.f32 %v2222, %v2382
      %v2384 = vpop.f32.mrb[0].mxu0
      %v2385 = vpop.f32.mrb[0].mxu0
      %v2386 = vadd.f32 %v2225, %v2385
      %v2387 = vpop.f32.mrb[0].mxu0
      %2388 = vmatprep.mubr.bf16.mxu0 %v1175
      %2389 = vmatmul.mubr.bf16.gmra.mrb[0].mxu0 %v1174
      %v2390 = vpop.f32.mrb[0].mxu0
      %v2391 = vadd.f32 %v2230, %v2390
      %v2392 = vpop.f32.mrb[0].mxu0
      %v2393 = vpop.f32.mrb[0].mxu0
      %v2394 = vadd.f32 %v2233, %v2393
      %v2395 = vpop.f32.mrb[0].mxu0
      %2396 = vdwg.mxu0
      %2397 = vmatprep.subr.bf16.mxu0 0
      %2398 = vmatpush1.bf16.msra.mxu0 %v1673
      %2399 = vmatprep.subr.bf16.mxu0 0
      %2400 = vmatpush1.bf16.msra.mxu0 %v1674
      %2401 = vmatprep.subr.bf16.mxu0 0
      %2402 = vmatpush1.bf16.msra.mxu0 %v1675
      %2403 = vmatprep.subr.bf16.mxu0 0
      %2404 = vmatpush1.bf16.msra.mxu0 %v1676
      %2405 = vmatprep.subr.bf16.mxu0 0
      %2406 = vmatpush1.bf16.msra.mxu0 %v1677
      %2407 = vmatprep.subr.bf16.mxu0 0
      %2408 = vmatpush1.bf16.msra.mxu0 %v1678
      %2409 = vmatprep.subr.bf16.mxu0 0
      %2410 = vmatpush1.bf16.msra.mxu0 %v1679
      %2411 = vmatprep.subr.bf16.mxu0 0
      %2412 = vmatpush1.bf16.msra.mxu0 %v1680
      %2413 = vmatprep.subr.bf16.mxu0 0
      %2414 = vmatpush1.bf16.msra.mxu0 0
      %2415 = vmatprep.subr.bf16.mxu0 0
      %2416 = vmatpush1.bf16.msra.mxu0 0
      %2417 = vmatprep.subr.bf16.mxu0 0
      %2418 = vmatpush1.bf16.msra.mxu0 0
      %2419 = vmatprep.subr.bf16.mxu0 0
      %2420 = vmatpush1.bf16.msra.mxu0 0
      %2421 = vmatprep.subr.bf16.mxu0 0
      %2422 = vmatpush1.bf16.msra.mxu0 0
      %2423 = vmatprep.subr.bf16.mxu0 0
      %2424 = vmatpush1.bf16.msra.mxu0 0
      %2425 = vmatprep.subr.bf16.mxu0 0
      %2426 = vmatpush1.bf16.msra.mxu0 0
      %2427 = vmatprep.subr.bf16.mxu0 0
      %2428 = vmatpush1.bf16.msra.mxu0 0
      %2429 = vmatprep.mubr.bf16.mxu0 0
      %2430 = vmatmul.mubr.bf16.gmra.mrb[0].mxu0 %v1041
      %v2431 = vpop.f32.mrb[0].mxu0
      %v2432 = vadd.f32 %v2271, %v2431
      %v2433 = vpop.f32.mrb[0].mxu0
      %v2434 = vpop.f32.mrb[0].mxu0
      %v2435 = vadd.f32 %v2274, %v2434
      %v2436 = vpop.f32.mrb[0].mxu0
      %2437 = vmatprep.mubr.bf16.mxu0 0
      %2438 = vmatmul.mubr.bf16.gmra.mrb[0].mxu0 %v1050
      %v2439 = vpop.f32.mrb[0].mxu0
      %v2440 = vadd.f32 %v2279, %v2439
      %v2441 = vpop.f32.mrb[0].mxu0
      %v2442 = vpop.f32.mrb[0].mxu0
      %v2443 = vadd.f32 %v2282, %v2442
      %v2444 = vpop.f32.mrb[0].mxu0
      %2445 = vmatprep.mubr.bf16.mxu0 0
      %2446 = vmatmul.mubr.bf16.gmra.mrb[0].mxu0 %v1059
      %v2447 = vpop.f32.mrb[0].mxu0
      %v2448 = vadd.f32 %v2287, %v2447
      %v2449 = vpop.f32.mrb[0].mxu0
      %v2450 = vpop.f32.mrb[0].mxu0
      %v2451 = vadd.f32 %v2290, %v2450
      %v2452 = vpop.f32.mrb[0].mxu0
      %2453 = vmatprep.mubr.bf16.mxu0 0
      %2454 = vmatmul.mubr.bf16.gmra.mrb[0].mxu0 %v1068
      %v2455 = vpop.f32.mrb[0].mxu0
      %v2456 = vadd.f32 %v2295, %v2455
      %v2457 = vpop.f32.mrb[0].mxu0
      %v2458 = vpop.f32.mrb[0].mxu0
      %v2459 = vadd.f32 %v2298, %v2458
      %v2460 = vpop.f32.mrb[0].mxu0
      %2461 = vmatprep.mubr.bf16.mxu0 0
      %2462 = vmatmul.mubr.bf16.gmra.mrb[0].mxu0 %v1077
      %v2463 = vpop.f32.mrb[0].mxu0
      %v2464 = vadd.f32 %v2303, %v2463
      %v2465 = vpop.f32.mrb[0].mxu0
      %v2466 = vpop.f32.mrb[0].mxu0
      %v2467 = vadd.f32 %v2306, %v2466
      %v2468 = vpop.f32.mrb[0].mxu0
      %2469 = vmatprep.mubr.bf16.mxu0 0
      %2470 = vmatmul.mubr.bf16.gmra.mrb[0].mxu0 %v1086
      %v2471 = vpop.f32.mrb[0].mxu0
      %v2472 = vadd.f32 %v2311, %v2471
      %v2473 = vpop.f32.mrb[0].mxu0
      %v2474 = vpop.f32.mrb[0].mxu0
      %v2475 = vadd.f32 %v2314, %v2474
      %v2476 = vpop.f32.mrb[0].mxu0
      %2477 = vmatprep.mubr.bf16.mxu0 0
      %2478 = vmatmul.mubr.bf16.gmra.mrb[0].mxu0 %v1095
      %v2479 = vpop.f32.mrb[0].mxu0
      %v2480 = vadd.f32 %v2319, %v2479
      %v2481 = vpop.f32.mrb[0].mxu0
      %v2482 = vpop.f32.mrb[0].mxu0
      %v2483 = vadd.f32 %v2322, %v2482
      %v2484 = vpop.f32.mrb[0].mxu0
      %2485 = vmatprep.mubr.bf16.mxu0 0
      %2486 = vmatmul.mubr.bf16.gmra.mrb[0].mxu0 %v1104
      %v2487 = vpop.f32.mrb[0].mxu0
      %v2488 = vadd.f32 %v2327, %v2487
      %v2489 = vpop.f32.mrb[0].mxu0
      %v2490 = vpop.f32.mrb[0].mxu0
      %v2491 = vadd.f32 %v2330, %v2490
      %v2492 = vpop.f32.mrb[0].mxu0
      %2493 = vmatprep.mubr.bf16.mxu0 0
      %2494 = vmatmul.mubr.bf16.gmra.mrb[0].mxu0 %v1113
      %v2495 = vpop.f32.mrb[0].mxu0
      %v2496 = vadd.f32 %v2335, %v2495
      %v2497 = vpop.f32.mrb[0].mxu0
      %v2498 = vpop.f32.mrb[0].mxu0
      %v2499 = vadd.f32 %v2338, %v2498
      %v2500 = vpop.f32.mrb[0].mxu0
      %2501 = vmatprep.mubr.bf16.mxu0 0
      %2502 = vmatmul.mubr.bf16.gmra.mrb[0].mxu0 %v1122
      %v2503 = vpop.f32.mrb[0].mxu0
      %v2504 = vadd.f32 %v2343, %v2503
      %v2505 = vpop.f32.mrb[0].mxu0
      %v2506 = vpop.f32.mrb[0].mxu0
      %v2507 = vadd.f32 %v2346, %v2506
      %v2508 = vpop.f32.mrb[0].mxu0
      %2509 = vmatprep.mubr.bf16.mxu0 0
      %2510 = vmatmul.mubr.bf16.gmra.mrb[0].mxu0 %v1131
      %v2511 = vpop.f32.mrb[0].mxu0
      %v2512 = vadd.f32 %v2351, %v2511
      %v2513 = vpop.f32.mrb[0].mxu0
      %v2514 = vpop.f32.mrb[0].mxu0
      %v2515 = vadd.f32 %v2354, %v2514
      %v2516 = vpop.f32.mrb[0].mxu0
      %2517 = vmatprep.mubr.bf16.mxu0 0
      %2518 = vmatmul.mubr.bf16.gmra.mrb[0].mxu0 %v1140
      %v2519 = vpop.f32.mrb[0].mxu0
      %v2520 = vadd.f32 %v2359, %v2519
      %v2521 = vpop.f32.mrb[0].mxu0
      %v2522 = vpop.f32.mrb[0].mxu0
      %v2523 = vadd.f32 %v2362, %v2522
      %v2524 = vpop.f32.mrb[0].mxu0
      %2525 = vmatprep.mubr.bf16.mxu0 0
      %2526 = vmatmul.mubr.bf16.gmra.mrb[0].mxu0 %v1149
      %v2527 = vpop.f32.mrb[0].mxu0
      %v2528 = vadd.f32 %v2367, %v2527
      %v2529 = vpop.f32.mrb[0].mxu0
      %v2530 = vpop.f32.mrb[0].mxu0
      %v2531 = vadd.f32 %v2370, %v2530
      %v2532 = vpop.f32.mrb[0].mxu0
      %2533 = vmatprep.mubr.bf16.mxu0 0
      %2534 = vmatmul.mubr.bf16.gmra.mrb[0].mxu0 %v1158
      %v2535 = vpop.f32.mrb[0].mxu0
      %v2536 = vadd.f32 %v2375, %v2535
      %v2537 = vpop.f32.mrb[0].mxu0
      %v2538 = vpop.f32.mrb[0].mxu0
      %v2539 = vadd.f32 %v2378, %v2538
      %v2540 = vpop.f32.mrb[0].mxu0
      %2541 = vmatprep.mubr.bf16.mxu0 0
      %2542 = vmatmul.mubr.bf16.gmra.mrb[0].mxu0 %v1167
      %v2543 = vpop.f32.mrb[0].mxu0
      %v2544 = vadd.f32 %v2383, %v2543
      %v2545 = vpop.f32.mrb[0].mxu0
      %v2546 = vpop.f32.mrb[0].mxu0
      %v2547 = vadd.f32 %v2386, %v2546
      %v2548 = vpop.f32.mrb[0].mxu0
      %2549 = vmatprep.mubr.bf16.mxu0 0
      %2550 = vmatmul.mubr.bf16.gmra.mrb[0].mxu0 %v1176
      %v2551 = vpop.f32.mrb[0].mxu0
      %v2552 = vadd.f32 %v2391, %v2551
      %v2553 = vpop.f32.mrb[0].mxu0
      %v2554 = vpop.f32.mrb[0].mxu0
      %v2555 = vadd.f32 %v2394, %v2554
      %v2556 = vpop.f32.mrb[0].mxu0
      %2557 = vdwg.mxu0
      %v2558 = vld [vmem:[%s2] sm:$0x1]
      %v2559 = vlaneseq
      %v2560 = vshrl.u32 %v2559, 7
      %v2561 = vsub.s32 0, %v2560
      %v2562 = vrot.slane %v2558, %v2561
      %v2563 = vmul.f32 %v2432, %v2562
      %v2564 = vmul.f32 %v2435, %v2562
      %v2565 = vmul.f32 %v2440, %v2562
      %v2566 = vmul.f32 %v2443, %v2562
      %v2567 = vmul.f32 %v2448, %v2562
      %v2568 = vmul.f32 %v2451, %v2562
      %v2569 = vmul.f32 %v2456, %v2562
      %v2570 = vmul.f32 %v2459, %v2562
      %v2571 = vmul.f32 %v2464, %v2562
      %v2572 = vmul.f32 %v2467, %v2562
      %v2573 = vmul.f32 %v2472, %v2562
      %v2574 = vmul.f32 %v2475, %v2562
      %v2575 = vmul.f32 %v2480, %v2562
      %v2576 = vmul.f32 %v2483, %v2562
      %v2577 = vmul.f32 %v2488, %v2562
      %v2578 = vmul.f32 %v2491, %v2562
      %v2579 = vmul.f32 %v2496, %v2562
      %v2580 = vmul.f32 %v2499, %v2562
      %v2581 = vmul.f32 %v2504, %v2562
      %v2582 = vmul.f32 %v2507, %v2562
      %v2583 = vmul.f32 %v2512, %v2562
      %v2584 = vmul.f32 %v2515, %v2562
      %v2585 = vmul.f32 %v2520, %v2562
      %v2586 = vmul.f32 %v2523, %v2562
      %v2587 = vmul.f32 %v2528, %v2562
      %v2588 = vmul.f32 %v2531, %v2562
      %v2589 = vmul.f32 %v2536, %v2562
      %v2590 = vmul.f32 %v2539, %v2562
      %v2591 = vmul.f32 %v2544, %v2562
      %v2592 = vmul.f32 %v2547, %v2562
      %v2593 = vmul.f32 %v2552, %v2562
      %v2594 = vmul.f32 %v2555, %v2562
      %v2595 = vld [vmem:[%s2 + $0x1] sm:$0x1]
      %v2596 = vlaneseq
      %v2597 = vshrl.u32 %v2596, 7
      %v2598 = vsub.s32 0, %v2597
      %v2599 = vrot.slane %v2595, %v2598
      %v2600 = vadd.f32 %v2563, %v2599
      %v2601 = vadd.f32 %v2564, %v2599
      %v2602 = vadd.f32 %v2565, %v2599
      %v2603 = vadd.f32 %v2566, %v2599
      %v2604 = vadd.f32 %v2567, %v2599
      %v2605 = vadd.f32 %v2568, %v2599
      %v2606 = vadd.f32 %v2569, %v2599
      %v2607 = vadd.f32 %v2570, %v2599
      %v2608 = vadd.f32 %v2571, %v2599
      %v2609 = vadd.f32 %v2572, %v2599
      %v2610 = vadd.f32 %v2573, %v2599
      %v2611 = vadd.f32 %v2574, %v2599
      %v2612 = vadd.f32 %v2575, %v2599
      %v2613 = vadd.f32 %v2576, %v2599
      %v2614 = vadd.f32 %v2577, %v2599
      %v2615 = vadd.f32 %v2578, %v2599
      %v2616 = vadd.f32 %v2579, %v2599
      %v2617 = vadd.f32 %v2580, %v2599
      %v2618 = vadd.f32 %v2581, %v2599
      %v2619 = vadd.f32 %v2582, %v2599
      %v2620 = vadd.f32 %v2583, %v2599
      %v2621 = vadd.f32 %v2584, %v2599
      %v2622 = vadd.f32 %v2585, %v2599
      %v2623 = vadd.f32 %v2586, %v2599
      %v2624 = vadd.f32 %v2587, %v2599
      %v2625 = vadd.f32 %v2588, %v2599
      %v2626 = vadd.f32 %v2589, %v2599
      %v2627 = vadd.f32 %v2590, %v2599
      %v2628 = vadd.f32 %v2591, %v2599
      %v2629 = vadd.f32 %v2592, %v2599
      %v2630 = vadd.f32 %v2593, %v2599
      %v2631 = vadd.f32 %v2594, %v2599
      %v2632 = vmax.f32 %v2600, 0.0
      %v2633 = vmax.f32 %v2601, 0.0
      %v2634 = vmax.f32 %v2602, 0.0
      %v2635 = vmax.f32 %v2603, 0.0
      %v2636 = vmax.f32 %v2604, 0.0
      %v2637 = vmax.f32 %v2605, 0.0
      %v2638 = vmax.f32 %v2606, 0.0
      %v2639 = vmax.f32 %v2607, 0.0
      %v2640 = vmax.f32 %v2608, 0.0
      %v2641 = vmax.f32 %v2609, 0.0
      %v2642 = vmax.f32 %v2610, 0.0
      %v2643 = vmax.f32 %v2611, 0.0
      %v2644 = vmax.f32 %v2612, 0.0
      %v2645 = vmax.f32 %v2613, 0.0
      %v2646 = vmax.f32 %v2614, 0.0
      %v2647 = vmax.f32 %v2615, 0.0
      %v2648 = vmax.f32 %v2616, 0.0
      %v2649 = vmax.f32 %v2617, 0.0
      %v2650 = vmax.f32 %v2618, 0.0
      %v2651 = vmax.f32 %v2619, 0.0
      %v2652 = vmax.f32 %v2620, 0.0
      %v2653 = vmax.f32 %v2621, 0.0
      %v2654 = vmax.f32 %v2622, 0.0
      %v2655 = vmax.f32 %v2623, 0.0
      %v2656 = vmax.f32 %v2624, 0.0
      %v2657 = vmax.f32 %v2625, 0.0
      %v2658 = vmax.f32 %v2626, 0.0
      %v2659 = vmax.f32 %v2627, 0.0
      %v2660 = vmax.f32 %v2628, 0.0
      %v2661 = vmax.f32 %v2629, 0.0
      %v2662 = vmax.f32 %v2630, 0.0
      %v2663 = vmax.f32 %v2631, 0.0
      %v2664 = vpack.c.bf16 %v2633, %v2632
      %v2665 = vpack.c.bf16 %v2635, %v2634
      %v2666 = vpack.c.bf16 %v2637, %v2636
      %v2667 = vpack.c.bf16 %v2639, %v2638
      %v2668 = vpack.c.bf16 %v2641, %v2640
      %v2669 = vpack.c.bf16 %v2643, %v2642
      %v2670 = vpack.c.bf16 %v2645, %v2644
      %v2671 = vpack.c.bf16 %v2647, %v2646
      %v2672 = vpack.c.bf16 %v2649, %v2648
      %v2673 = vpack.c.bf16 %v2651, %v2650
      %v2674 = vpack.c.bf16 %v2653, %v2652
      %v2675 = vpack.c.bf16 %v2655, %v2654
      %v2676 = vpack.c.bf16 %v2657, %v2656
      %v2677 = vpack.c.bf16 %v2659, %v2658
      %v2678 = vpack.c.bf16 %v2661, %v2660
      %v2679 = vpack.c.bf16 %v2663, %v2662
      %v2680 = vld [vmem:[%s3] sm:$0xf]
      %v2681 = vld [vmem:[%s3 + $0x4] sm:$0xf]
      %v2682 = vld [vmem:[%s3 + $0x8] sm:$0xf]
      %v2683 = vld [vmem:[%s3 + $0xc] sm:$0xf]
      %v2684 = vld [vmem:[%s3 + $0x10] sm:$0xf]
      %v2685 = vld [vmem:[%s3 + $0x14] sm:$0xf]
      %v2686 = vld [vmem:[%s3 + $0x18] sm:$0xf]
      %v2687 = vld [vmem:[%s3 + $0x1c] sm:$0xf]
      %v2688 = vld [vmem:[%s3 + $0x20] sm:$0xf]
      %v2689 = vld [vmem:[%s3 + $0x24] sm:$0xf]
      %v2690 = vld [vmem:[%s3 + $0x28] sm:$0xf]
      %v2691 = vld [vmem:[%s3 + $0x2c] sm:$0xf]
      %v2692 = vld [vmem:[%s3 + $0x30] sm:$0xf]
      %v2693 = vld [vmem:[%s3 + $0x34] sm:$0xf]
      %v2694 = vld [vmem:[%s3 + $0x38] sm:$0xf]
      %v2695 = vld [vmem:[%s3 + $0x3c] sm:$0xf]
      %v2712 = vunpack.c.l.b16 %v2680
      %v2713 = vunpack.c.l.b16 %v2681
      %v2714 = vunpack.c.l.b16 %v2682
      %v2715 = vunpack.c.l.b16 %v2683
      %v2716 = vunpack.c.l.b16 %v2684
      %v2717 = vunpack.c.l.b16 %v2685
      %v2718 = vunpack.c.l.b16 %v2686
      %v2719 = vunpack.c.l.b16 %v2687
      %v2720 = vunpack.c.l.b16 %v2688
      %v2721 = vunpack.c.l.b16 %v2689
      %v2722 = vunpack.c.l.b16 %v2690
      %v2723 = vunpack.c.l.b16 %v2691
      %v2724 = vunpack.c.l.b16 %v2692
      %v2725 = vunpack.c.l.b16 %v2693
      %v2726 = vunpack.c.l.b16 %v2694
      %v2727 = vunpack.c.l.b16 %v2695
      %v2728 = vpack.c.b16 %v2713, %v2712
      %v2729 = vpack.c.b16 %v2715, %v2714
      %v2730 = vpack.c.b16 %v2717, %v2716
      %v2731 = vpack.c.b16 %v2719, %v2718
      %v2732 = vpack.c.b16 %v2721, %v2720
      %v2733 = vpack.c.b16 %v2723, %v2722
      %v2734 = vpack.c.b16 %v2725, %v2724
      %v2735 = vpack.c.b16 %v2727, %v2726
      %2744 = vmatprep.subr.bf16.mxu0 0
      %2745 = vmatpush1.bf16.msra.mxu0 %v2728
      %2746 = vmatprep.subr.bf16.mxu0 0
      %2747 = vmatpush1.bf16.msra.mxu0 %v2729
      %2748 = vmatprep.subr.bf16.mxu0 0
      %2749 = vmatpush1.bf16.msra.mxu0 %v2730
      %2750 = vmatprep.subr.bf16.mxu0 0
      %2751 = vmatpush1.bf16.msra.mxu0 %v2731
      %2752 = vmatprep.subr.bf16.mxu0 0
      %2753 = vmatpush1.bf16.msra.mxu0 %v2732
      %2754 = vmatprep.subr.bf16.mxu0 0
      %2755 = vmatpush1.bf16.msra.mxu0 %v2733
      %2756 = vmatprep.subr.bf16.mxu0 0
      %2757 = vmatpush1.bf16.msra.mxu0 %v2734
      %2758 = vmatprep.subr.bf16.mxu0 0
      %2759 = vmatpush1.bf16.msra.mxu0 %v2735
      %2760 = vmatprep.subr.bf16.mxu0 0
      %2761 = vmatpush1.bf16.msra.mxu0 0
      %2762 = vmatprep.subr.bf16.mxu0 0
      %2763 = vmatpush1.bf16.msra.mxu0 0
      %2764 = vmatprep.subr.bf16.mxu0 0
      %2765 = vmatpush1.bf16.msra.mxu0 0
      %2766 = vmatprep.subr.bf16.mxu0 0
      %2767 = vmatpush1.bf16.msra.mxu0 0
      %2768 = vmatprep.subr.bf16.mxu0 0
      %2769 = vmatpush1.bf16.msra.mxu0 0
      %2770 = vmatprep.subr.bf16.mxu0 0
      %2771 = vmatpush1.bf16.msra.mxu0 0
      %2772 = vmatprep.subr.bf16.mxu0 0
      %2773 = vmatpush1.bf16.msra.mxu0 0
      %2774 = vmatprep.subr.bf16.mxu0 0
      %2775 = vmatpush1.bf16.msra.mxu0 0
      %2776 = vmatprep.mubr.bf16.mxu0 0
      %2777 = vmatmul.mubr.bf16.gmra.mrb[0].mxu0 %v2664
      %v2778 = vpop.f32.mrb[0].mxu0
      %v2779 = vadd.f32 0.0, %v2778
      %v2780 = vpop.f32.mrb[0].mxu0
      %v2781 = vpop.f32.mrb[0].mxu0
      %v2782 = vadd.f32 0.0, %v2781
      %v2783 = vpop.f32.mrb[0].mxu0
      %2784 = vmatprep.mubr.bf16.mxu0 0
      %2785 = vmatmul.mubr.bf16.gmra.mrb[0].mxu0 %v2665
      %v2786 = vpop.f32.mrb[0].mxu0
      %v2787 = vadd.f32 0.0, %v2786
      %v2788 = vpop.f32.mrb[0].mxu0
      %v2789 = vpop.f32.mrb[0].mxu0
      %v2790 = vadd.f32 0.0, %v2789
      %v2791 = vpop.f32.mrb[0].mxu0
      %2792 = vmatprep.mubr.bf16.mxu0 0
      %2793 = vmatmul.mubr.bf16.gmra.mrb[0].mxu0 %v2666
      %v2794 = vpop.f32.mrb[0].mxu0
      %v2795 = vadd.f32 0.0, %v2794
      %v2796 = vpop.f32.mrb[0].mxu0
      %v2797 = vpop.f32.mrb[0].mxu0
      %v2798 = vadd.f32 0.0, %v2797
      %v2799 = vpop.f32.mrb[0].mxu0
      %2800 = vmatprep.mubr.bf16.mxu0 0
      %2801 = vmatmul.mubr.bf16.gmra.mrb[0].mxu0 %v2667
      %v2802 = vpop.f32.mrb[0].mxu0
      %v2803 = vadd.f32 0.0, %v2802
      %v2804 = vpop.f32.mrb[0].mxu0
      %v2805 = vpop.f32.mrb[0].mxu0
      %v2806 = vadd.f32 0.0, %v2805
      %v2807 = vpop.f32.mrb[0].mxu0
      %2808 = vmatprep.mubr.bf16.mxu0 0
      %2809 = vmatmul.mubr.bf16.gmra.mrb[0].mxu0 %v2668
      %v2810 = vpop.f32.mrb[0].mxu0
      %v2811 = vadd.f32 0.0, %v2810
      %v2812 = vpop.f32.mrb[0].mxu0
      %v2813 = vpop.f32.mrb[0].mxu0
      %v2814 = vadd.f32 0.0, %v2813
      %v2815 = vpop.f32.mrb[0].mxu0
      %2816 = vmatprep.mubr.bf16.mxu0 0
      %2817 = vmatmul.mubr.bf16.gmra.mrb[0].mxu0 %v2669
      %v2818 = vpop.f32.mrb[0].mxu0
      %v2819 = vadd.f32 0.0, %v2818
      %v2820 = vpop.f32.mrb[0].mxu0
      %v2821 = vpop.f32.mrb[0].mxu0
      %v2822 = vadd.f32 0.0, %v2821
      %v2823 = vpop.f32.mrb[0].mxu0
      %2824 = vmatprep.mubr.bf16.mxu0 0
      %2825 = vmatmul.mubr.bf16.gmra.mrb[0].mxu0 %v2670
      %v2826 = vpop.f32.mrb[0].mxu0
      %v2827 = vadd.f32 0.0, %v2826
      %v2828 = vpop.f32.mrb[0].mxu0
      %v2829 = vpop.f32.mrb[0].mxu0
      %v2830 = vadd.f32 0.0, %v2829
      %v2831 = vpop.f32.mrb[0].mxu0
      %2832 = vmatprep.mubr.bf16.mxu0 0
      %2833 = vmatmul.mubr.bf16.gmra.mrb[0].mxu0 %v2671
      %v2834 = vpop.f32.mrb[0].mxu0
      %v2835 = vadd.f32 0.0, %v2834
      %v2836 = vpop.f32.mrb[0].mxu0
      %v2837 = vpop.f32.mrb[0].mxu0
      %v2838 = vadd.f32 0.0, %v2837
      %v2839 = vpop.f32.mrb[0].mxu0
      %2840 = vmatprep.mubr.bf16.mxu0 0
      %2841 = vmatmul.mubr.bf16.gmra.mrb[0].mxu0 %v2672
      %v2842 = vpop.f32.mrb[0].mxu0
      %v2843 = vadd.f32 0.0, %v2842
      %v2844 = vpop.f32.mrb[0].mxu0
      %v2845 = vpop.f32.mrb[0].mxu0
      %v2846 = vadd.f32 0.0, %v2845
      %v2847 = vpop.f32.mrb[0].mxu0
      %2848 = vmatprep.mubr.bf16.mxu0 0
      %2849 = vmatmul.mubr.bf16.gmra.mrb[0].mxu0 %v2673
      %v2850 = vpop.f32.mrb[0].mxu0
      %v2851 = vadd.f32 0.0, %v2850
      %v2852 = vpop.f32.mrb[0].mxu0
      %v2853 = vpop.f32.mrb[0].mxu0
      %v2854 = vadd.f32 0.0, %v2853
      %v2855 = vpop.f32.mrb[0].mxu0
      %2856 = vmatprep.mubr.bf16.mxu0 0
      %2857 = vmatmul.mubr.bf16.gmra.mrb[0].mxu0 %v2674
      %v2858 = vpop.f32.mrb[0].mxu0
      %v2859 = vadd.f32 0.0, %v2858
      %v2860 = vpop.f32.mrb[0].mxu0
      %v2861 = vpop.f32.mrb[0].mxu0
      %v2862 = vadd.f32 0.0, %v2861
      %v2863 = vpop.f32.mrb[0].mxu0
      %2864 = vmatprep.mubr.bf16.mxu0 0
      %2865 = vmatmul.mubr.bf16.gmra.mrb[0].mxu0 %v2675
      %v2866 = vpop.f32.mrb[0].mxu0
      %v2867 = vadd.f32 0.0, %v2866
      %v2868 = vpop.f32.mrb[0].mxu0
      %v2869 = vpop.f32.mrb[0].mxu0
      %v2870 = vadd.f32 0.0, %v2869
      %v2871 = vpop.f32.mrb[0].mxu0
      %2872 = vmatprep.mubr.bf16.mxu0 0
      %2873 = vmatmul.mubr.bf16.gmra.mrb[0].mxu0 %v2676
      %v2874 = vpop.f32.mrb[0].mxu0
      %v2875 = vadd.f32 0.0, %v2874
      %v2876 = vpop.f32.mrb[0].mxu0
      %v2877 = vpop.f32.mrb[0].mxu0
      %v2878 = vadd.f32 0.0, %v2877
      %v2879 = vpop.f32.mrb[0].mxu0
      %2880 = vmatprep.mubr.bf16.mxu0 0
      %2881 = vmatmul.mubr.bf16.gmra.mrb[0].mxu0 %v2677
      %v2882 = vpop.f32.mrb[0].mxu0
      %v2883 = vadd.f32 0.0, %v2882
      %v2884 = vpop.f32.mrb[0].mxu0
      %v2885 = vpop.f32.mrb[0].mxu0
      %v2886 = vadd.f32 0.0, %v2885
      %v2887 = vpop.f32.mrb[0].mxu0
      %2888 = vmatprep.mubr.bf16.mxu0 0
      %2889 = vmatmul.mubr.bf16.gmra.mrb[0].mxu0 %v2678
      %v2890 = vpop.f32.mrb[0].mxu0
      %v2891 = vadd.f32 0.0, %v2890
      %v2892 = vpop.f32.mrb[0].mxu0
      %v2893 = vpop.f32.mrb[0].mxu0
      %v2894 = vadd.f32 0.0, %v2893
      %v2895 = vpop.f32.mrb[0].mxu0
      %2896 = vmatprep.mubr.bf16.mxu0 0
      %2897 = vmatmul.mubr.bf16.gmra.mrb[0].mxu0 %v2679
      %v2898 = vpop.f32.mrb[0].mxu0
      %v2899 = vadd.f32 0.0, %v2898
      %v2900 = vpop.f32.mrb[0].mxu0
      %v2901 = vpop.f32.mrb[0].mxu0
      %v2902 = vadd.f32 0.0, %v2901
      %v2903 = vpop.f32.mrb[0].mxu0
      %2904 = vdwg.mxu0
      %v2905 = vld [vmem:[%s4] sm:$0x1]
      %v2906 = vlaneseq
      %v2907 = vshrl.u32 %v2906, 7
      %v2908 = vsub.s32 0, %v2907
      %v2909 = vrot.slane %v2905, %v2908
      %v2910 = vmul.f32 %v2779, %v2909
      %v2911 = vmul.f32 %v2782, %v2909
      %v2912 = vmul.f32 %v2787, %v2909
      %v2913 = vmul.f32 %v2790, %v2909
      %v2914 = vmul.f32 %v2795, %v2909
      %v2915 = vmul.f32 %v2798, %v2909
      %v2916 = vmul.f32 %v2803, %v2909
      %v2917 = vmul.f32 %v2806, %v2909
      %v2918 = vmul.f32 %v2811, %v2909
      %v2919 = vmul.f32 %v2814, %v2909
      %v2920 = vmul.f32 %v2819, %v2909
      %v2921 = vmul.f32 %v2822, %v2909
      %v2922 = vmul.f32 %v2827, %v2909
      %v2923 = vmul.f32 %v2830, %v2909
      %v2924 = vmul.f32 %v2835, %v2909
      %v2925 = vmul.f32 %v2838, %v2909
      %v2926 = vmul.f32 %v2843, %v2909
      %v2927 = vmul.f32 %v2846, %v2909
      %v2928 = vmul.f32 %v2851, %v2909
      %v2929 = vmul.f32 %v2854, %v2909
      %v2930 = vmul.f32 %v2859, %v2909
      %v2931 = vmul.f32 %v2862, %v2909
      %v2932 = vmul.f32 %v2867, %v2909
      %v2933 = vmul.f32 %v2870, %v2909
      %v2934 = vmul.f32 %v2875, %v2909
      %v2935 = vmul.f32 %v2878, %v2909
      %v2936 = vmul.f32 %v2883, %v2909
      %v2937 = vmul.f32 %v2886, %v2909
      %v2938 = vmul.f32 %v2891, %v2909
      %v2939 = vmul.f32 %v2894, %v2909
      %v2940 = vmul.f32 %v2899, %v2909
      %v2941 = vmul.f32 %v2902, %v2909
      %v2942 = vld [vmem:[%s4 + $0x1] sm:$0x1]
      %v2943 = vlaneseq
      %v2944 = vshrl.u32 %v2943, 7
      %v2945 = vsub.s32 0, %v2944
      %v2946 = vrot.slane %v2942, %v2945
      %v2947 = vadd.f32 %v2910, %v2946
      %v2948 = vadd.f32 %v2911, %v2946
      %v2949 = vadd.f32 %v2912, %v2946
      %v2950 = vadd.f32 %v2913, %v2946
      %v2951 = vadd.f32 %v2914, %v2946
      %v2952 = vadd.f32 %v2915, %v2946
      %v2953 = vadd.f32 %v2916, %v2946
      %v2954 = vadd.f32 %v2917, %v2946
      %v2955 = vadd.f32 %v2918, %v2946
      %v2956 = vadd.f32 %v2919, %v2946
      %v2957 = vadd.f32 %v2920, %v2946
      %v2958 = vadd.f32 %v2921, %v2946
      %v2959 = vadd.f32 %v2922, %v2946
      %v2960 = vadd.f32 %v2923, %v2946
      %v2961 = vadd.f32 %v2924, %v2946
      %v2962 = vadd.f32 %v2925, %v2946
      %v2963 = vadd.f32 %v2926, %v2946
      %v2964 = vadd.f32 %v2927, %v2946
      %v2965 = vadd.f32 %v2928, %v2946
      %v2966 = vadd.f32 %v2929, %v2946
      %v2967 = vadd.f32 %v2930, %v2946
      %v2968 = vadd.f32 %v2931, %v2946
      %v2969 = vadd.f32 %v2932, %v2946
      %v2970 = vadd.f32 %v2933, %v2946
      %v2971 = vadd.f32 %v2934, %v2946
      %v2972 = vadd.f32 %v2935, %v2946
      %v2973 = vadd.f32 %v2936, %v2946
      %v2974 = vadd.f32 %v2937, %v2946
      %v2975 = vadd.f32 %v2938, %v2946
      %v2976 = vadd.f32 %v2939, %v2946
      %v2977 = vadd.f32 %v2940, %v2946
      %v2978 = vadd.f32 %v2941, %v2946
      %v2979 = vld [vmem:[%s272] sm:$0xf]
      %v2980 = vld [vmem:[%s272 + $0x4] sm:$0xf]
      %v2981 = vld [vmem:[%s272 + $0x8] sm:$0xf]
      %v2982 = vld [vmem:[%s272 + $0xc] sm:$0xf]
      %v2983 = vld [vmem:[%s272 + $0x10] sm:$0xf]
      %v2984 = vld [vmem:[%s272 + $0x14] sm:$0xf]
      %v2985 = vld [vmem:[%s272 + $0x18] sm:$0xf]
      %v2986 = vld [vmem:[%s272 + $0x1c] sm:$0xf]
      %v2987 = vld [vmem:[%s272 + $0x20] sm:$0xf]
      %v2988 = vld [vmem:[%s272 + $0x24] sm:$0xf]
      %v2989 = vld [vmem:[%s272 + $0x28] sm:$0xf]
      %v2990 = vld [vmem:[%s272 + $0x2c] sm:$0xf]
      %v2991 = vld [vmem:[%s272 + $0x30] sm:$0xf]
      %v2992 = vld [vmem:[%s272 + $0x34] sm:$0xf]
      %v2993 = vld [vmem:[%s272 + $0x38] sm:$0xf]
      %v2994 = vld [vmem:[%s272 + $0x3c] sm:$0xf]
      %v2995 = vld [vmem:[%s272 + $0x40] sm:$0xf]
      %v2996 = vld [vmem:[%s272 + $0x44] sm:$0xf]
      %v2997 = vld [vmem:[%s272 + $0x48] sm:$0xf]
      %v2998 = vld [vmem:[%s272 + $0x4c] sm:$0xf]
      %v2999 = vld [vmem:[%s272 + $0x50] sm:$0xf]
      %v3000 = vld [vmem:[%s272 + $0x54] sm:$0xf]
      %v3001 = vld [vmem:[%s272 + $0x58] sm:$0xf]
      %v3002 = vld [vmem:[%s272 + $0x5c] sm:$0xf]
      %v3003 = vld [vmem:[%s272 + $0x60] sm:$0xf]
      %v3004 = vld [vmem:[%s272 + $0x64] sm:$0xf]
      %v3005 = vld [vmem:[%s272 + $0x68] sm:$0xf]
      %v3006 = vld [vmem:[%s272 + $0x6c] sm:$0xf]
      %v3007 = vld [vmem:[%s272 + $0x70] sm:$0xf]
      %v3008 = vld [vmem:[%s272 + $0x74] sm:$0xf]
      %v3009 = vld [vmem:[%s272 + $0x78] sm:$0xf]
      %v3010 = vld [vmem:[%s272 + $0x7c] sm:$0xf]
      %v3011 = vunpack.c.l.bf16 %v2979
      %v3012 = vunpack.c.l.bf16 %v2980
      %v3013 = vunpack.c.l.bf16 %v2981
      %v3014 = vunpack.c.l.bf16 %v2982
      %v3015 = vunpack.c.l.bf16 %v2983
      %v3016 = vunpack.c.l.bf16 %v2984
      %v3017 = vunpack.c.l.bf16 %v2985
      %v3018 = vunpack.c.l.bf16 %v2986
      %v3019 = vunpack.c.l.bf16 %v2987
      %v3020 = vunpack.c.l.bf16 %v2988
      %v3021 = vunpack.c.l.bf16 %v2989
      %v3022 = vunpack.c.l.bf16 %v2990
      %v3023 = vunpack.c.l.bf16 %v2991
      %v3024 = vunpack.c.l.bf16 %v2992
      %v3025 = vunpack.c.l.bf16 %v2993
      %v3026 = vunpack.c.l.bf16 %v2994
      %v3027 = vunpack.c.l.bf16 %v2995
      %v3028 = vunpack.c.l.bf16 %v2996
      %v3029 = vunpack.c.l.bf16 %v2997
      %v3030 = vunpack.c.l.bf16 %v2998
      %v3031 = vunpack.c.l.bf16 %v2999
      %v3032 = vunpack.c.l.bf16 %v3000
      %v3033 = vunpack.c.l.bf16 %v3001
      %v3034 = vunpack.c.l.bf16 %v3002
      %v3035 = vunpack.c.l.bf16 %v3003
      %v3036 = vunpack.c.l.bf16 %v3004
      %v3037 = vunpack.c.l.bf16 %v3005
      %v3038 = vunpack.c.l.bf16 %v3006
      %v3039 = vunpack.c.l.bf16 %v3007
      %v3040 = vunpack.c.l.bf16 %v3008
      %v3041 = vunpack.c.l.bf16 %v3009
      %v3042 = vunpack.c.l.bf16 %v3010
      %v3043 = vadd.f32 %v2947, %v3011
      %v3044 = vadd.f32 %v2948, %v3012
      %v3045 = vadd.f32 %v2949, %v3013
      %v3046 = vadd.f32 %v2950, %v3014
      %v3047 = vadd.f32 %v2951, %v3015
      %v3048 = vadd.f32 %v2952, %v3016
      %v3049 = vadd.f32 %v2953, %v3017
      %v3050 = vadd.f32 %v2954, %v3018
      %v3051 = vadd.f32 %v2955, %v3019
      %v3052 = vadd.f32 %v2956, %v3020
      %v3053 = vadd.f32 %v2957, %v3021
      %v3054 = vadd.f32 %v2958, %v3022
      %v3055 = vadd.f32 %v2959, %v3023
      %v3056 = vadd.f32 %v2960, %v3024
      %v3057 = vadd.f32 %v2961, %v3025
      %v3058 = vadd.f32 %v2962, %v3026
      %v3059 = vadd.f32 %v2963, %v3027
      %v3060 = vadd.f32 %v2964, %v3028
      %v3061 = vadd.f32 %v2965, %v3029
      %v3062 = vadd.f32 %v2966, %v3030
      %v3063 = vadd.f32 %v2967, %v3031
      %v3064 = vadd.f32 %v2968, %v3032
      %v3065 = vadd.f32 %v2969, %v3033
      %v3066 = vadd.f32 %v2970, %v3034
      %v3067 = vadd.f32 %v2971, %v3035
      %v3068 = vadd.f32 %v2972, %v3036
      %v3069 = vadd.f32 %v2973, %v3037
      %v3070 = vadd.f32 %v2974, %v3038
      %v3071 = vadd.f32 %v2975, %v3039
      %v3072 = vadd.f32 %v2976, %v3040
      %v3073 = vadd.f32 %v2977, %v3041
      %v3074 = vadd.f32 %v2978, %v3042
      %v3075 = vmax.f32 %v3043, 0.0
      %v3076 = vmax.f32 %v3044, 0.0
      %v3077 = vmax.f32 %v3045, 0.0
      %v3078 = vmax.f32 %v3046, 0.0
      %v3079 = vmax.f32 %v3047, 0.0
      %v3080 = vmax.f32 %v3048, 0.0
      %v3081 = vmax.f32 %v3049, 0.0
      %v3082 = vmax.f32 %v3050, 0.0
      %v3083 = vmax.f32 %v3051, 0.0
      %v3084 = vmax.f32 %v3052, 0.0
      %v3085 = vmax.f32 %v3053, 0.0
      %v3086 = vmax.f32 %v3054, 0.0
      %v3087 = vmax.f32 %v3055, 0.0
      %v3088 = vmax.f32 %v3056, 0.0
      %v3089 = vmax.f32 %v3057, 0.0
      %v3090 = vmax.f32 %v3058, 0.0
      %v3091 = vmax.f32 %v3059, 0.0
      %v3092 = vmax.f32 %v3060, 0.0
      %v3093 = vmax.f32 %v3061, 0.0
      %v3094 = vmax.f32 %v3062, 0.0
      %v3095 = vmax.f32 %v3063, 0.0
      %v3096 = vmax.f32 %v3064, 0.0
      %v3097 = vmax.f32 %v3065, 0.0
      %v3098 = vmax.f32 %v3066, 0.0
      %v3099 = vmax.f32 %v3067, 0.0
      %v3100 = vmax.f32 %v3068, 0.0
      %v3101 = vmax.f32 %v3069, 0.0
      %v3102 = vmax.f32 %v3070, 0.0
      %v3103 = vmax.f32 %v3071, 0.0
      %v3104 = vmax.f32 %v3072, 0.0
      %v3105 = vmax.f32 %v3073, 0.0
      %v3106 = vmax.f32 %v3074, 0.0
      %v3107 = vpack.c.bf16 %v3076, %v3075
      %v3108 = vpack.c.bf16 %v3078, %v3077
      %v3109 = vpack.c.bf16 %v3080, %v3079
      %v3110 = vpack.c.bf16 %v3082, %v3081
      %v3111 = vpack.c.bf16 %v3084, %v3083
      %v3112 = vpack.c.bf16 %v3086, %v3085
      %v3113 = vpack.c.bf16 %v3088, %v3087
      %v3114 = vpack.c.bf16 %v3090, %v3089
      %v3115 = vpack.c.bf16 %v3092, %v3091
      %v3116 = vpack.c.bf16 %v3094, %v3093
      %v3117 = vpack.c.bf16 %v3096, %v3095
      %v3118 = vpack.c.bf16 %v3098, %v3097
      %v3119 = vpack.c.bf16 %v3100, %v3099
      %v3120 = vpack.c.bf16 %v3102, %v3101
      %v3121 = vpack.c.bf16 %v3104, %v3103
      %v3122 = vpack.c.bf16 %v3106, %v3105
      %v3139 = vunpack.c.l.b16 %v3107
      %v3140 = vunpack.c.h.b16 %v3107
      %v3141 = vunpack.c.l.b16 %v3108
      %v3142 = vunpack.c.h.b16 %v3108
      %v3143 = vunpack.c.l.b16 %v3109
      %v3144 = vunpack.c.h.b16 %v3109
      %v3145 = vunpack.c.l.b16 %v3110
      %v3146 = vunpack.c.h.b16 %v3110
      %v3147 = vunpack.c.l.b16 %v3111
      %v3148 = vunpack.c.h.b16 %v3111
      %v3149 = vunpack.c.l.b16 %v3112
      %v3150 = vunpack.c.h.b16 %v3112
      %v3151 = vunpack.c.l.b16 %v3113
      %v3152 = vunpack.c.h.b16 %v3113
      %v3153 = vunpack.c.l.b16 %v3114
      %v3154 = vunpack.c.h.b16 %v3114
      %v3155 = vunpack.c.l.b16 %v3115
      %v3156 = vunpack.c.h.b16 %v3115
      %v3157 = vunpack.c.l.b16 %v3116
      %v3158 = vunpack.c.h.b16 %v3116
      %v3159 = vunpack.c.l.b16 %v3117
      %v3160 = vunpack.c.h.b16 %v3117
      %v3161 = vunpack.c.l.b16 %v3118
      %v3162 = vunpack.c.h.b16 %v3118
      %v3163 = vunpack.c.l.b16 %v3119
      %v3164 = vunpack.c.h.b16 %v3119
      %v3165 = vunpack.c.l.b16 %v3120
      %v3166 = vunpack.c.h.b16 %v3120
      %v3167 = vunpack.c.l.b16 %v3121
      %v3168 = vunpack.c.h.b16 %v3121
      %v3169 = vunpack.c.l.b16 %v3122
      %v3170 = vunpack.c.h.b16 %v3122
      %v3171 = vpack.c.b16 %v3139, %v3139
      %v3172 = vpack.c.b16 %v3140, %v3140
      %v3173 = vpack.c.b16 %v3141, %v3141
      %v3174 = vpack.c.b16 %v3142, %v3142
      %v3175 = vpack.c.b16 %v3143, %v3143
      %v3176 = vpack.c.b16 %v3144, %v3144
      %v3177 = vpack.c.b16 %v3145, %v3145
      %v3178 = vpack.c.b16 %v3146, %v3146
      %v3179 = vpack.c.b16 %v3147, %v3147
      %v3180 = vpack.c.b16 %v3148, %v3148
      %v3181 = vpack.c.b16 %v3149, %v3149
      %v3182 = vpack.c.b16 %v3150, %v3150
      %v3183 = vpack.c.b16 %v3151, %v3151
      %v3184 = vpack.c.b16 %v3152, %v3152
      %v3185 = vpack.c.b16 %v3153, %v3153
      %v3186 = vpack.c.b16 %v3154, %v3154
      %v3187 = vpack.c.b16 %v3155, %v3155
      %v3188 = vpack.c.b16 %v3156, %v3156
      %v3189 = vpack.c.b16 %v3157, %v3157
      %v3190 = vpack.c.b16 %v3158, %v3158
      %v3191 = vpack.c.b16 %v3159, %v3159
      %v3192 = vpack.c.b16 %v3160, %v3160
      %v3193 = vpack.c.b16 %v3161, %v3161
      %v3194 = vpack.c.b16 %v3162, %v3162
      %v3195 = vpack.c.b16 %v3163, %v3163
      %v3196 = vpack.c.b16 %v3164, %v3164
      %v3197 = vpack.c.b16 %v3165, %v3165
      %v3198 = vpack.c.b16 %v3166, %v3166
      %v3199 = vpack.c.b16 %v3167, %v3167
      %v3200 = vpack.c.b16 %v3168, %v3168
      %v3201 = vpack.c.b16 %v3169, %v3169
      %v3202 = vpack.c.b16 %v3170, %v3170
      %3235 = vst [vmem:[%s278] sm:$0xf] %v3171
      %3236 = vst [vmem:[%s278 + $0x4] sm:$0xf] %v3172
      %3237 = vst [vmem:[%s278 + $0x8] sm:$0xf] %v3173
      %3238 = vst [vmem:[%s278 + $0xc] sm:$0xf] %v3174
      %3239 = vst [vmem:[%s278 + $0x10] sm:$0xf] %v3175
      %3240 = vst [vmem:[%s278 + $0x14] sm:$0xf] %v3176
      %3241 = vst [vmem:[%s278 + $0x18] sm:$0xf] %v3177
      %3242 = vst [vmem:[%s278 + $0x1c] sm:$0xf] %v3178
      %3243 = vst [vmem:[%s278 + $0x20] sm:$0xf] %v3179
      %3244 = vst [vmem:[%s278 + $0x24] sm:$0xf] %v3180
      %3245 = vst [vmem:[%s278 + $0x28] sm:$0xf] %v3181
      %3246 = vst [vmem:[%s278 + $0x2c] sm:$0xf] %v3182
      %3247 = vst [vmem:[%s278 + $0x30] sm:$0xf] %v3183
      %3248 = vst [vmem:[%s278 + $0x34] sm:$0xf] %v3184
      %3249 = vst [vmem:[%s278 + $0x38] sm:$0xf] %v3185
      %3250 = vst [vmem:[%s278 + $0x3c] sm:$0xf] %v3186
      %3251 = vst [vmem:[%s278 + $0x40] sm:$0xf] %v3187
      %3252 = vst [vmem:[%s278 + $0x44] sm:$0xf] %v3188
      %3253 = vst [vmem:[%s278 + $0x48] sm:$0xf] %v3189
      %3254 = vst [vmem:[%s278 + $0x4c] sm:$0xf] %v3190
      %3255 = vst [vmem:[%s278 + $0x50] sm:$0xf] %v3191
      %3256 = vst [vmem:[%s278 + $0x54] sm:$0xf] %v3192
      %3257 = vst [vmem:[%s278 + $0x58] sm:$0xf] %v3193
      %3258 = vst [vmem:[%s278 + $0x5c] sm:$0xf] %v3194
      %3259 = vst [vmem:[%s278 + $0x60] sm:$0xf] %v3195
      %3260 = vst [vmem:[%s278 + $0x64] sm:$0xf] %v3196
      %3261 = vst [vmem:[%s278 + $0x68] sm:$0xf] %v3197
      %3262 = vst [vmem:[%s278 + $0x6c] sm:$0xf] %v3198
      %3263 = vst [vmem:[%s278 + $0x70] sm:$0xf] %v3199
      %3264 = vst [vmem:[%s278 + $0x74] sm:$0xf] %v3200
      %3265 = vst [vmem:[%s278 + $0x78] sm:$0xf] %v3201
      %3266 = vst [vmem:[%s278 + $0x7c] sm:$0xf] %v3202
      %s3267 = smul.u32 32, %s17
      %p3268 = scmp.lt.s32.totalorder %s3267, 63
      %s3269 = scalar_select %p3268, %s3267, 63
      %s3270 = smul.addr %s3269, 4
      %s3271 = scalar_lea.vmem %s6, %s3270
      // Predicated region
      $region45: #{resnetfc_forward.41} parent=43 // pred_check
        %p3272 = pneg %p171
      $region46: #{resnetfc_forward.41} parent=43 // pred_check_branch
        %3274 = sbr.rel (%p3272) target = $region48
      $region47: #{resnetfc_forward.41} parent=43 // pred_region
        %s3275 = smul.u32 32, %s17
      $region48: #{resnetfc_forward.41} parent=43 // pred_fallthru
        _
    $region44: #{resnetfc_forward.41} parent=5 // pred_fallthru
      _
    %p3276 = scmp.le.s32.totalorder 2, %s12
    // Predicated region
    $region49: #{resnetfc_forward.41} parent=5 // pred_check
      %p3277 = pneg %p3276
    $region50: #{resnetfc_forward.41} parent=5 // pred_check_branch
      %3279 = sbr.rel (%p3277) target = $region52
    $region51: #{resnetfc_forward.41} parent=5 // pred_region
      %s3280 = ssub.s32 %s12, 2
      // Predicated region
      $region53: #{resnetfc_forward.41} parent=51 // pred_check
        %p3281 = pneg %p177
      $region54: #{resnetfc_forward.41} parent=51 // pred_check_branch
        %3283 = sbr.rel (%p3281) target = $region56
      $region55: #{resnetfc_forward.41} parent=51 // pred_region
        %s3284 = smul.u32 32, %s18
        %p3285 = scmp.lt.s32.totalorder %s3284, 63
        %s3286 = scalar_select %p3285, %s3284, 63
        %s3287 = smul.addr %s3286, 4
        %s3288 = scalar_lea.vmem %s6, %s3287
      $region56: #{resnetfc_forward.41} parent=51 // pred_fallthru
        _
    $region52: #{resnetfc_forward.41} parent=5 // pred_fallthru
      _
  $region6: #{resnetfc_forward.41} parent=0 // loop_footer
    %s16 = sadd.s32 1, %s12
  $region7: #{resnetfc_forward.41} parent=0 // loop_footer_branch
    %11 = sbr.rel target = $region3
  $region8: #{resnetfc_forward.41} parent=0 // loop_exit
    _

// kernel: resnetfc_forward.47
$region0: #{resnetfc_forward.47}
  #allocation0 [shape = 'u32[]', space=smem, size = 0x4, offset = 0x4, fixed_abs, tag = 'smem constant byte address 0x4 - core index']
  #allocation1 [shape = 'u32[144,128]{1,0:T(1,128)}', space=vmem, size = 0x12000, scoped, tag = 'internal scratch']
  %s0 = inlined_call_operand.vmem [shape: bf16[128,128], index: 0, kind: input, shape index: {}]
  %s1 = inlined_call_operand.vmem [shape: bf16[128,128], index: 1, kind: input, shape index: {}]
  %s2 = inlined_call_operand.vmem [shape: f32[2,128], index: 2, kind: input, shape index: {}]
  %s3 = inlined_call_operand.vmem [shape: bf16[128,128], index: 3, kind: output, shape index: {}]
  %s4 = sld [smem:[#allocation0]]
  $region22: #{resnetfc_forward.47} parent=0
    _
  %s6 = ssub.s32 1, %s4
  %s7 = scalar_select 0, %s6, %s4
  // Predicated region
  $region2: #{resnetfc_forward.47} parent=0 // pred_check
    _
  $region3: #{resnetfc_forward.47} parent=0 // pred_check_branch
    %9 = sbr.rel (0) target = $region5
  $region4: #{resnetfc_forward.47} parent=0 // pred_region
    _
  $region5: #{resnetfc_forward.47} parent=0 // pred_fallthru
    _
  // Predicated region
  $region6: #{resnetfc_forward.47} parent=0 // pred_check
    _
  $region7: #{resnetfc_forward.47} parent=0 // pred_check_branch
    %11 = sbr.rel (0) target = $region9
  $region8: #{resnetfc_forward.47} parent=0 // pred_region
    _
  $region9: #{resnetfc_forward.47} parent=0 // pred_fallthru
    _
  // Predicated region
  $region10: #{resnetfc_forward.47} parent=0 // pred_check
    _
  $region11: #{resnetfc_forward.47} parent=0 // pred_check_branch
    %13 = sbr.rel (0) target = $region13
  $region12: #{resnetfc_forward.47} parent=0 // pred_region
    _
  $region13: #{resnetfc_forward.47} parent=0 // pred_fallthru
    _
  %v15 = vld [vmem:[%s0] sm:$0xf]
  %v16 = vld [vmem:[%s0 + $0x4] sm:$0xf]
  %v17 = vld [vmem:[%s0 + $0x8] sm:$0xf]
  %v18 = vld [vmem:[%s0 + $0xc] sm:$0xf]
  %v19 = vld [vmem:[%s0 + $0x10] sm:$0xf]
  %v20 = vld [vmem:[%s0 + $0x14] sm:$0xf]
  %v21 = vld [vmem:[%s0 + $0x18] sm:$0xf]
  %v22 = vld [vmem:[%s0 + $0x1c] sm:$0xf]
  %v23 = vld [vmem:[%s0 + $0x20] sm:$0xf]
  %v24 = vld [vmem:[%s0 + $0x24] sm:$0xf]
  %v25 = vld [vmem:[%s0 + $0x28] sm:$0xf]
  %v26 = vld [vmem:[%s0 + $0x2c] sm:$0xf]
  %v27 = vld [vmem:[%s0 + $0x30] sm:$0xf]
  %v28 = vld [vmem:[%s0 + $0x34] sm:$0xf]
  %v29 = vld [vmem:[%s0 + $0x38] sm:$0xf]
  %v30 = vld [vmem:[%s0 + $0x3c] sm:$0xf]
  %v31 = vld [vmem:[%s1] sm:$0xf]
  %v32 = vld [vmem:[%s1 + $0x4] sm:$0xf]
  %v33 = vld [vmem:[%s1 + $0x8] sm:$0xf]
  %v34 = vld [vmem:[%s1 + $0xc] sm:$0xf]
  %v35 = vld [vmem:[%s1 + $0x10] sm:$0xf]
  %v36 = vld [vmem:[%s1 + $0x14] sm:$0xf]
  %v37 = vld [vmem:[%s1 + $0x18] sm:$0xf]
  %v38 = vld [vmem:[%s1 + $0x1c] sm:$0xf]
  %v39 = vld [vmem:[%s1 + $0x20] sm:$0xf]
  %v40 = vld [vmem:[%s1 + $0x24] sm:$0xf]
  %v41 = vld [vmem:[%s1 + $0x28] sm:$0xf]
  %v42 = vld [vmem:[%s1 + $0x2c] sm:$0xf]
  %v43 = vld [vmem:[%s1 + $0x30] sm:$0xf]
  %v44 = vld [vmem:[%s1 + $0x34] sm:$0xf]
  %v45 = vld [vmem:[%s1 + $0x38] sm:$0xf]
  %v46 = vld [vmem:[%s1 + $0x3c] sm:$0xf]
  %v63 = vunpack.c.l.b16 %v15
  %v64 = vunpack.c.l.b16 %v16
  %v65 = vunpack.c.l.b16 %v17
  %v66 = vunpack.c.l.b16 %v18
  %v67 = vunpack.c.l.b16 %v19
  %v68 = vunpack.c.l.b16 %v20
  %v69 = vunpack.c.l.b16 %v21
  %v70 = vunpack.c.l.b16 %v22
  %v71 = vunpack.c.l.b16 %v23
  %v72 = vunpack.c.l.b16 %v24
  %v73 = vunpack.c.l.b16 %v25
  %v74 = vunpack.c.l.b16 %v26
  %v75 = vunpack.c.l.b16 %v27
  %v76 = vunpack.c.l.b16 %v28
  %v77 = vunpack.c.l.b16 %v29
  %v78 = vunpack.c.l.b16 %v30
  %v79 = vpack.c.b16 %v64, %v63
  %v80 = vpack.c.b16 %v66, %v65
  %v81 = vpack.c.b16 %v68, %v67
  %v82 = vpack.c.b16 %v70, %v69
  %v83 = vpack.c.b16 %v72, %v71
  %v84 = vpack.c.b16 %v74, %v73
  %v85 = vpack.c.b16 %v76, %v75
  %v86 = vpack.c.b16 %v78, %v77
  %v111 = vunpack.c.l.b16 %v31
  %v112 = vunpack.c.l.b16 %v32
  %v113 = vunpack.c.l.b16 %v33
  %v114 = vunpack.c.l.b16 %v34
  %v115 = vunpack.c.l.b16 %v35
  %v116 = vunpack.c.l.b16 %v36
  %v117 = vunpack.c.l.b16 %v37
  %v118 = vunpack.c.l.b16 %v38
  %v119 = vunpack.c.l.b16 %v39
  %v120 = vunpack.c.l.b16 %v40
  %v121 = vunpack.c.l.b16 %v41
  %v122 = vunpack.c.l.b16 %v42
  %v123 = vunpack.c.l.b16 %v43
  %v124 = vunpack.c.l.b16 %v44
  %v125 = vunpack.c.l.b16 %v45
  %v126 = vunpack.c.l.b16 %v46
  %v127 = vpack.c.b16 %v112, %v111
  %v128 = vpack.c.b16 %v114, %v113
  %v129 = vpack.c.b16 %v116, %v115
  %v130 = vpack.c.b16 %v118, %v117
  %v131 = vpack.c.b16 %v120, %v119
  %v132 = vpack.c.b16 %v122, %v121
  %v133 = vpack.c.b16 %v124, %v123
  %v134 = vpack.c.b16 %v126, %v125
  %143 = vmatprep.subr.bf16.mxu0 0
  %144 = vmatpush1.bf16.msra.mxu0 %v127
  %145 = vmatprep.subr.bf16.mxu0 0
  %146 = vmatpush1.bf16.msra.mxu0 %v128
  %147 = vmatprep.subr.bf16.mxu0 0
  %148 = vmatpush1.bf16.msra.mxu0 %v129
  %149 = vmatprep.subr.bf16.mxu0 0
  %150 = vmatpush1.bf16.msra.mxu0 %v130
  %151 = vmatprep.subr.bf16.mxu0 0
  %152 = vmatpush1.bf16.msra.mxu0 %v131
  %153 = vmatprep.subr.bf16.mxu0 0
  %154 = vmatpush1.bf16.msra.mxu0 %v132
  %155 = vmatprep.subr.bf16.mxu0 0
  %156 = vmatpush1.bf16.msra.mxu0 %v133
  %157 = vmatprep.subr.bf16.mxu0 0
  %158 = vmatpush1.bf16.msra.mxu0 %v134
  %159 = vmatprep.subr.bf16.mxu0 0
  %160 = vmatpush1.bf16.msra.mxu0 0
  %161 = vmatprep.subr.bf16.mxu0 0
  %162 = vmatpush1.bf16.msra.mxu0 0
  %163 = vmatprep.subr.bf16.mxu0 0
  %164 = vmatpush1.bf16.msra.mxu0 0
  %165 = vmatprep.subr.bf16.mxu0 0
  %166 = vmatpush1.bf16.msra.mxu0 0
  %167 = vmatprep.subr.bf16.mxu0 0
  %168 = vmatpush1.bf16.msra.mxu0 0
  %169 = vmatprep.subr.bf16.mxu0 0
  %170 = vmatpush1.bf16.msra.mxu0 0
  %171 = vmatprep.subr.bf16.mxu0 0
  %172 = vmatpush1.bf16.msra.mxu0 0
  %173 = vmatprep.subr.bf16.mxu0 0
  %174 = vmatpush1.bf16.msra.mxu0 0
  %175 = vmatprep.mubr.bf16.mxu0 0
  %176 = vmatmul.mubr.bf16.gmra.mrb[0].mxu0 %v79
  %v177 = vpop.f32.mrb[0].mxu0
  %v178 = vadd.f32 0.0, %v177
  %v179 = vpop.f32.mrb[0].mxu0
  %v180 = vpop.f32.mrb[0].mxu0
  %v181 = vadd.f32 0.0, %v180
  %v182 = vpop.f32.mrb[0].mxu0
  %183 = vmatprep.mubr.bf16.mxu0 0
  %184 = vmatmul.mubr.bf16.gmra.mrb[0].mxu0 %v80
  %v185 = vpop.f32.mrb[0].mxu0
  %v186 = vadd.f32 0.0, %v185
  %v187 = vpop.f32.mrb[0].mxu0
  %v188 = vpop.f32.mrb[0].mxu0
  %v189 = vadd.f32 0.0, %v188
  %v190 = vpop.f32.mrb[0].mxu0
  %191 = vmatprep.mubr.bf16.mxu0 0
  %192 = vmatmul.mubr.bf16.gmra.mrb[0].mxu0 %v81
  %v193 = vpop.f32.mrb[0].mxu0
  %v194 = vadd.f32 0.0, %v193
  %v195 = vpop.f32.mrb[0].mxu0
  %v196 = vpop.f32.mrb[0].mxu0
  %v197 = vadd.f32 0.0, %v196
  %v198 = vpop.f32.mrb[0].mxu0
  %199 = vmatprep.mubr.bf16.mxu0 0
  %200 = vmatmul.mubr.bf16.gmra.mrb[0].mxu0 %v82
  %v201 = vpop.f32.mrb[0].mxu0
  %v202 = vadd.f32 0.0, %v201
  %v203 = vpop.f32.mrb[0].mxu0
  %v204 = vpop.f32.mrb[0].mxu0
  %v205 = vadd.f32 0.0, %v204
  %v206 = vpop.f32.mrb[0].mxu0
  %207 = vmatprep.mubr.bf16.mxu0 0
  %208 = vmatmul.mubr.bf16.gmra.mrb[0].mxu0 %v83
  %v209 = vpop.f32.mrb[0].mxu0
  %v210 = vadd.f32 0.0, %v209
  %v211 = vpop.f32.mrb[0].mxu0
  %v212 = vpop.f32.mrb[0].mxu0
  %v213 = vadd.f32 0.0, %v212
  %v214 = vpop.f32.mrb[0].mxu0
  %215 = vmatprep.mubr.bf16.mxu0 0
  %216 = vmatmul.mubr.bf16.gmra.mrb[0].mxu0 %v84
  %v217 = vpop.f32.mrb[0].mxu0
  %v218 = vadd.f32 0.0, %v217
  %v219 = vpop.f32.mrb[0].mxu0
  %v220 = vpop.f32.mrb[0].mxu0
  %v221 = vadd.f32 0.0, %v220
  %v222 = vpop.f32.mrb[0].mxu0
  %223 = vmatprep.mubr.bf16.mxu0 0
  %224 = vmatmul.mubr.bf16.gmra.mrb[0].mxu0 %v85
  %v225 = vpop.f32.mrb[0].mxu0
  %v226 = vadd.f32 0.0, %v225
  %v227 = vpop.f32.mrb[0].mxu0
  %v228 = vpop.f32.mrb[0].mxu0
  %v229 = vadd.f32 0.0, %v228
  %v230 = vpop.f32.mrb[0].mxu0
  %231 = vmatprep.mubr.bf16.mxu0 0
  %232 = vmatmul.mubr.bf16.gmra.mrb[0].mxu0 %v86
  %v233 = vpop.f32.mrb[0].mxu0
  %v234 = vadd.f32 0.0, %v233
  %v235 = vpop.f32.mrb[0].mxu0
  %v236 = vpop.f32.mrb[0].mxu0
  %v237 = vadd.f32 0.0, %v236
  %v238 = vpop.f32.mrb[0].mxu0
  %239 = vdwg.mxu0
  %v240 = vld [vmem:[%s2] sm:$0x1]
  %v241 = vlaneseq
  %v242 = vshrl.u32 %v241, 7
  %v243 = vsub.s32 0, %v242
  %v244 = vrot.slane %v240, %v243
  %v245 = vmul.f32 %v178, %v244
  %v246 = vmul.f32 %v181, %v244
  %v247 = vmul.f32 %v186, %v244
  %v248 = vmul.f32 %v189, %v244
  %v249 = vmul.f32 %v194, %v244
  %v250 = vmul.f32 %v197, %v244
  %v251 = vmul.f32 %v202, %v244
  %v252 = vmul.f32 %v205, %v244
  %v253 = vmul.f32 %v210, %v244
  %v254 = vmul.f32 %v213, %v244
  %v255 = vmul.f32 %v218, %v244
  %v256 = vmul.f32 %v221, %v244
  %v257 = vmul.f32 %v226, %v244
  %v258 = vmul.f32 %v229, %v244
  %v259 = vmul.f32 %v234, %v244
  %v260 = vmul.f32 %v237, %v244
  %v261 = vld [vmem:[%s2 + $0x1] sm:$0x1]
  %v262 = vlaneseq
  %v263 = vshrl.u32 %v262, 7
  %v264 = vsub.s32 0, %v263
  %v265 = vrot.slane %v261, %v264
  %v266 = vadd.f32 %v245, %v265
  %v267 = vadd.f32 %v246, %v265
  %v268 = vadd.f32 %v247, %v265
  %v269 = vadd.f32 %v248, %v265
  %v270 = vadd.f32 %v249, %v265
  %v271 = vadd.f32 %v250, %v265
  %v272 = vadd.f32 %v251, %v265
  %v273 = vadd.f32 %v252, %v265
  %v274 = vadd.f32 %v253, %v265
  %v275 = vadd.f32 %v254, %v265
  %v276 = vadd.f32 %v255, %v265
  %v277 = vadd.f32 %v256, %v265
  %v278 = vadd.f32 %v257, %v265
  %v279 = vadd.f32 %v258, %v265
  %v280 = vadd.f32 %v259, %v265
  %v281 = vadd.f32 %v260, %v265
  %v282 = vpack.c.bf16 %v267, %v266
  %v283 = vpack.c.bf16 %v269, %v268
  %v284 = vpack.c.bf16 %v271, %v270
  %v285 = vpack.c.bf16 %v273, %v272
  %v286 = vpack.c.bf16 %v275, %v274
  %v287 = vpack.c.bf16 %v277, %v276
  %v288 = vpack.c.bf16 %v279, %v278
  %v289 = vpack.c.bf16 %v281, %v280
  %v298 = vunpack.c.l.b16 %v282
  %v299 = vunpack.c.h.b16 %v282
  %v300 = vunpack.c.l.b16 %v283
  %v301 = vunpack.c.h.b16 %v283
  %v302 = vunpack.c.l.b16 %v284
  %v303 = vunpack.c.h.b16 %v284
  %v304 = vunpack.c.l.b16 %v285
  %v305 = vunpack.c.h.b16 %v285
  %v306 = vunpack.c.l.b16 %v286
  %v307 = vunpack.c.h.b16 %v286
  %v308 = vunpack.c.l.b16 %v287
  %v309 = vunpack.c.h.b16 %v287
  %v310 = vunpack.c.l.b16 %v288
  %v311 = vunpack.c.h.b16 %v288
  %v312 = vunpack.c.l.b16 %v289
  %v313 = vunpack.c.h.b16 %v289
  %v314 = vpack.c.b16 %v298, %v298
  %v315 = vpack.c.b16 %v299, %v299
  %v316 = vpack.c.b16 %v300, %v300
  %v317 = vpack.c.b16 %v301, %v301
  %v318 = vpack.c.b16 %v302, %v302
  %v319 = vpack.c.b16 %v303, %v303
  %v320 = vpack.c.b16 %v304, %v304
  %v321 = vpack.c.b16 %v305, %v305
  %v322 = vpack.c.b16 %v306, %v306
  %v323 = vpack.c.b16 %v307, %v307
  %v324 = vpack.c.b16 %v308, %v308
  %v325 = vpack.c.b16 %v309, %v309
  %v326 = vpack.c.b16 %v310, %v310
  %v327 = vpack.c.b16 %v311, %v311
  %v328 = vpack.c.b16 %v312, %v312
  %v329 = vpack.c.b16 %v313, %v313
  %346 = vst [vmem:[%s3] sm:$0xf] %v314
  %347 = vst [vmem:[%s3 + $0x4] sm:$0xf] %v315
  %348 = vst [vmem:[%s3 + $0x8] sm:$0xf] %v316
  %349 = vst [vmem:[%s3 + $0xc] sm:$0xf] %v317
  %350 = vst [vmem:[%s3 + $0x10] sm:$0xf] %v318
  %351 = vst [vmem:[%s3 + $0x14] sm:$0xf] %v319
  %352 = vst [vmem:[%s3 + $0x18] sm:$0xf] %v320
  %353 = vst [vmem:[%s3 + $0x1c] sm:$0xf] %v321
  %354 = vst [vmem:[%s3 + $0x20] sm:$0xf] %v322
  %355 = vst [vmem:[%s3 + $0x24] sm:$0xf] %v323
  %356 = vst [vmem:[%s3 + $0x28] sm:$0xf] %v324
  %357 = vst [vmem:[%s3 + $0x2c] sm:$0xf] %v325
  %358 = vst [vmem:[%s3 + $0x30] sm:$0xf] %v326
  %359 = vst [vmem:[%s3 + $0x34] sm:$0xf] %v327
  %360 = vst [vmem:[%s3 + $0x38] sm:$0xf] %v328
  %361 = vst [vmem:[%s3 + $0x3c] sm:$0xf] %v329
  // Predicated region
  $region14: #{resnetfc_forward.47} parent=0 // pred_check
    _
  $region15: #{resnetfc_forward.47} parent=0 // pred_check_branch
    %363 = sbr.rel (0) target = $region17
  $region16: #{resnetfc_forward.47} parent=0 // pred_region
    _
  $region17: #{resnetfc_forward.47} parent=0 // pred_fallthru
    _
  // Predicated region
  $region18: #{resnetfc_forward.47} parent=0 // pred_check
    _
  $region19: #{resnetfc_forward.47} parent=0 // pred_check_branch
    %365 = sbr.rel (0) target = $region21
  $region20: #{resnetfc_forward.47} parent=0 // pred_region
    _
  $region21: #{resnetfc_forward.47} parent=0 // pred_fallthru
    _

// kernel: resnetfc_forward.49
$region0: #{resnetfc_forward.49}
  #allocation0 [shape = 'u32[]', space=smem, size = 0x4, offset = 0x4, fixed_abs, tag = 'smem constant byte address 0x4 - core index']
  #allocation1 [shape = 'u32[144,128]{1,0:T(1,128)}', space=vmem, size = 0x12000, scoped, tag = 'internal scratch']
  %s0 = inlined_call_operand.vmem [shape: bf16[128,128], index: 0, kind: input, shape index: {}]
  %s1 = inlined_call_operand.vmem [shape: bf16[128,128], index: 1, kind: input, shape index: {}]
  %s2 = inlined_call_operand.vmem [shape: f32[2,128], index: 2, kind: input, shape index: {}]
  %s3 = inlined_call_operand.vmem [shape: bf16[128,128], index: 3, kind: output, shape index: {}]
  %s4 = sld [smem:[#allocation0]]
  $region22: #{resnetfc_forward.49} parent=0
    _
  %s6 = ssub.s32 1, %s4
  %s7 = scalar_select 0, %s6, %s4
  // Predicated region
  $region2: #{resnetfc_forward.49} parent=0 // pred_check
    _
  $region3: #{resnetfc_forward.49} parent=0 // pred_check_branch
    %9 = sbr.rel (0) target = $region5
  $region4: #{resnetfc_forward.49} parent=0 // pred_region
    _
  $region5: #{resnetfc_forward.49} parent=0 // pred_fallthru
    _
  // Predicated region
  $region6: #{resnetfc_forward.49} parent=0 // pred_check
    _
  $region7: #{resnetfc_forward.49} parent=0 // pred_check_branch
    %11 = sbr.rel (0) target = $region9
  $region8: #{resnetfc_forward.49} parent=0 // pred_region
    _
  $region9: #{resnetfc_forward.49} parent=0 // pred_fallthru
    _
  // Predicated region
  $region10: #{resnetfc_forward.49} parent=0 // pred_check
    _
  $region11: #{resnetfc_forward.49} parent=0 // pred_check_branch
    %13 = sbr.rel (0) target = $region13
  $region12: #{resnetfc_forward.49} parent=0 // pred_region
    _
  $region13: #{resnetfc_forward.49} parent=0 // pred_fallthru
    _
  %v15 = vld [vmem:[%s0] sm:$0xf]
  %v16 = vld [vmem:[%s0 + $0x4] sm:$0xf]
  %v17 = vld [vmem:[%s0 + $0x8] sm:$0xf]
  %v18 = vld [vmem:[%s0 + $0xc] sm:$0xf]
  %v19 = vld [vmem:[%s0 + $0x10] sm:$0xf]
  %v20 = vld [vmem:[%s0 + $0x14] sm:$0xf]
  %v21 = vld [vmem:[%s0 + $0x18] sm:$0xf]
  %v22 = vld [vmem:[%s0 + $0x1c] sm:$0xf]
  %v23 = vld [vmem:[%s0 + $0x20] sm:$0xf]
  %v24 = vld [vmem:[%s0 + $0x24] sm:$0xf]
  %v25 = vld [vmem:[%s0 + $0x28] sm:$0xf]
  %v26 = vld [vmem:[%s0 + $0x2c] sm:$0xf]
  %v27 = vld [vmem:[%s0 + $0x30] sm:$0xf]
  %v28 = vld [vmem:[%s0 + $0x34] sm:$0xf]
  %v29 = vld [vmem:[%s0 + $0x38] sm:$0xf]
  %v30 = vld [vmem:[%s0 + $0x3c] sm:$0xf]
  %v31 = vld [vmem:[%s1] sm:$0xf]
  %v32 = vld [vmem:[%s1 + $0x4] sm:$0xf]
  %v33 = vld [vmem:[%s1 + $0x8] sm:$0xf]
  %v34 = vld [vmem:[%s1 + $0xc] sm:$0xf]
  %v35 = vld [vmem:[%s1 + $0x10] sm:$0xf]
  %v36 = vld [vmem:[%s1 + $0x14] sm:$0xf]
  %v37 = vld [vmem:[%s1 + $0x18] sm:$0xf]
  %v38 = vld [vmem:[%s1 + $0x1c] sm:$0xf]
  %v39 = vld [vmem:[%s1 + $0x20] sm:$0xf]
  %v40 = vld [vmem:[%s1 + $0x24] sm:$0xf]
  %v41 = vld [vmem:[%s1 + $0x28] sm:$0xf]
  %v42 = vld [vmem:[%s1 + $0x2c] sm:$0xf]
  %v43 = vld [vmem:[%s1 + $0x30] sm:$0xf]
  %v44 = vld [vmem:[%s1 + $0x34] sm:$0xf]
  %v45 = vld [vmem:[%s1 + $0x38] sm:$0xf]
  %v46 = vld [vmem:[%s1 + $0x3c] sm:$0xf]
  %v63 = vunpack.c.l.b16 %v15
  %v64 = vunpack.c.l.b16 %v16
  %v65 = vunpack.c.l.b16 %v17
  %v66 = vunpack.c.l.b16 %v18
  %v67 = vunpack.c.l.b16 %v19
  %v68 = vunpack.c.l.b16 %v20
  %v69 = vunpack.c.l.b16 %v21
  %v70 = vunpack.c.l.b16 %v22
  %v71 = vunpack.c.l.b16 %v23
  %v72 = vunpack.c.l.b16 %v24
  %v73 = vunpack.c.l.b16 %v25
  %v74 = vunpack.c.l.b16 %v26
  %v75 = vunpack.c.l.b16 %v27
  %v76 = vunpack.c.l.b16 %v28
  %v77 = vunpack.c.l.b16 %v29
  %v78 = vunpack.c.l.b16 %v30
  %v79 = vpack.c.b16 %v64, %v63
  %v80 = vpack.c.b16 %v66, %v65
  %v81 = vpack.c.b16 %v68, %v67
  %v82 = vpack.c.b16 %v70, %v69
  %v83 = vpack.c.b16 %v72, %v71
  %v84 = vpack.c.b16 %v74, %v73
  %v85 = vpack.c.b16 %v76, %v75
  %v86 = vpack.c.b16 %v78, %v77
  %v111 = vunpack.c.l.b16 %v31
  %v112 = vunpack.c.l.b16 %v32
  %v113 = vunpack.c.l.b16 %v33
  %v114 = vunpack.c.l.b16 %v34
  %v115 = vunpack.c.l.b16 %v35
  %v116 = vunpack.c.l.b16 %v36
  %v117 = vunpack.c.l.b16 %v37
  %v118 = vunpack.c.l.b16 %v38
  %v119 = vunpack.c.l.b16 %v39
  %v120 = vunpack.c.l.b16 %v40
  %v121 = vunpack.c.l.b16 %v41
  %v122 = vunpack.c.l.b16 %v42
  %v123 = vunpack.c.l.b16 %v43
  %v124 = vunpack.c.l.b16 %v44
  %v125 = vunpack.c.l.b16 %v45
  %v126 = vunpack.c.l.b16 %v46
  %v127 = vpack.c.b16 %v112, %v111
  %v128 = vpack.c.b16 %v114, %v113
  %v129 = vpack.c.b16 %v116, %v115
  %v130 = vpack.c.b16 %v118, %v117
  %v131 = vpack.c.b16 %v120, %v119
  %v132 = vpack.c.b16 %v122, %v121
  %v133 = vpack.c.b16 %v124, %v123
  %v134 = vpack.c.b16 %v126, %v125
  %143 = vmatprep.subr.bf16.mxu0 0
  %144 = vmatpush1.bf16.msra.mxu0 %v127
  %145 = vmatprep.subr.bf16.mxu0 0
  %146 = vmatpush1.bf16.msra.mxu0 %v128
  %147 = vmatprep.subr.bf16.mxu0 0
  %148 = vmatpush1.bf16.msra.mxu0 %v129
  %149 = vmatprep.subr.bf16.mxu0 0
  %150 = vmatpush1.bf16.msra.mxu0 %v130
  %151 = vmatprep.subr.bf16.mxu0 0
  %152 = vmatpush1.bf16.msra.mxu0 %v131
  %153 = vmatprep.subr.bf16.mxu0 0
  %154 = vmatpush1.bf16.msra.mxu0 %v132
  %155 = vmatprep.subr.bf16.mxu0 0
  %156 = vmatpush1.bf16.msra.mxu0 %v133
  %157 = vmatprep.subr.bf16.mxu0 0
  %158 = vmatpush1.bf16.msra.mxu0 %v134
  %159 = vmatprep.subr.bf16.mxu0 0
  %160 = vmatpush1.bf16.msra.mxu0 0
  %161 = vmatprep.subr.bf16.mxu0 0
  %162 = vmatpush1.bf16.msra.mxu0 0
  %163 = vmatprep.subr.bf16.mxu0 0
  %164 = vmatpush1.bf16.msra.mxu0 0
  %165 = vmatprep.subr.bf16.mxu0 0
  %166 = vmatpush1.bf16.msra.mxu0 0
  %167 = vmatprep.subr.bf16.mxu0 0
  %168 = vmatpush1.bf16.msra.mxu0 0
  %169 = vmatprep.subr.bf16.mxu0 0
  %170 = vmatpush1.bf16.msra.mxu0 0
  %171 = vmatprep.subr.bf16.mxu0 0
  %172 = vmatpush1.bf16.msra.mxu0 0
  %173 = vmatprep.subr.bf16.mxu0 0
  %174 = vmatpush1.bf16.msra.mxu0 0
  %175 = vmatprep.mubr.bf16.mxu0 0
  %176 = vmatmul.mubr.bf16.gmra.mrb[0].mxu0 %v79
  %v177 = vpop.f32.mrb[0].mxu0
  %v178 = vadd.f32 0.0, %v177
  %v179 = vpop.f32.mrb[0].mxu0
  %v180 = vpop.f32.mrb[0].mxu0
  %v181 = vadd.f32 0.0, %v180
  %v182 = vpop.f32.mrb[0].mxu0
  %183 = vmatprep.mubr.bf16.mxu0 0
  %184 = vmatmul.mubr.bf16.gmra.mrb[0].mxu0 %v80
  %v185 = vpop.f32.mrb[0].mxu0
  %v186 = vadd.f32 0.0, %v185
  %v187 = vpop.f32.mrb[0].mxu0
  %v188 = vpop.f32.mrb[0].mxu0
  %v189 = vadd.f32 0.0, %v188
  %v190 = vpop.f32.mrb[0].mxu0
  %191 = vmatprep.mubr.bf16.mxu0 0
  %192 = vmatmul.mubr.bf16.gmra.mrb[0].mxu0 %v81
  %v193 = vpop.f32.mrb[0].mxu0
  %v194 = vadd.f32 0.0, %v193
  %v195 = vpop.f32.mrb[0].mxu0
  %v196 = vpop.f32.mrb[0].mxu0
  %v197 = vadd.f32 0.0, %v196
  %v198 = vpop.f32.mrb[0].mxu0
  %199 = vmatprep.mubr.bf16.mxu0 0
  %200 = vmatmul.mubr.bf16.gmra.mrb[0].mxu0 %v82
  %v201 = vpop.f32.mrb[0].mxu0
  %v202 = vadd.f32 0.0, %v201
  %v203 = vpop.f32.mrb[0].mxu0
  %v204 = vpop.f32.mrb[0].mxu0
  %v205 = vadd.f32 0.0, %v204
  %v206 = vpop.f32.mrb[0].mxu0
  %207 = vmatprep.mubr.bf16.mxu0 0
  %208 = vmatmul.mubr.bf16.gmra.mrb[0].mxu0 %v83
  %v209 = vpop.f32.mrb[0].mxu0
  %v210 = vadd.f32 0.0, %v209
  %v211 = vpop.f32.mrb[0].mxu0
  %v212 = vpop.f32.mrb[0].mxu0
  %v213 = vadd.f32 0.0, %v212
  %v214 = vpop.f32.mrb[0].mxu0
  %215 = vmatprep.mubr.bf16.mxu0 0
  %216 = vmatmul.mubr.bf16.gmra.mrb[0].mxu0 %v84
  %v217 = vpop.f32.mrb[0].mxu0
  %v218 = vadd.f32 0.0, %v217
  %v219 = vpop.f32.mrb[0].mxu0
  %v220 = vpop.f32.mrb[0].mxu0
  %v221 = vadd.f32 0.0, %v220
  %v222 = vpop.f32.mrb[0].mxu0
  %223 = vmatprep.mubr.bf16.mxu0 0
  %224 = vmatmul.mubr.bf16.gmra.mrb[0].mxu0 %v85
  %v225 = vpop.f32.mrb[0].mxu0
  %v226 = vadd.f32 0.0, %v225
  %v227 = vpop.f32.mrb[0].mxu0
  %v228 = vpop.f32.mrb[0].mxu0
  %v229 = vadd.f32 0.0, %v228
  %v230 = vpop.f32.mrb[0].mxu0
  %231 = vmatprep.mubr.bf16.mxu0 0
  %232 = vmatmul.mubr.bf16.gmra.mrb[0].mxu0 %v86
  %v233 = vpop.f32.mrb[0].mxu0
  %v234 = vadd.f32 0.0, %v233
  %v235 = vpop.f32.mrb[0].mxu0
  %v236 = vpop.f32.mrb[0].mxu0
  %v237 = vadd.f32 0.0, %v236
  %v238 = vpop.f32.mrb[0].mxu0
  %239 = vdwg.mxu0
  %v240 = vld [vmem:[%s2] sm:$0x1]
  %v241 = vlaneseq
  %v242 = vshrl.u32 %v241, 7
  %v243 = vsub.s32 0, %v242
  %v244 = vrot.slane %v240, %v243
  %v245 = vmul.f32 %v178, %v244
  %v246 = vmul.f32 %v181, %v244
  %v247 = vmul.f32 %v186, %v244
  %v248 = vmul.f32 %v189, %v244
  %v249 = vmul.f32 %v194, %v244
  %v250 = vmul.f32 %v197, %v244
  %v251 = vmul.f32 %v202, %v244
  %v252 = vmul.f32 %v205, %v244
  %v253 = vmul.f32 %v210, %v244
  %v254 = vmul.f32 %v213, %v244
  %v255 = vmul.f32 %v218, %v244
  %v256 = vmul.f32 %v221, %v244
  %v257 = vmul.f32 %v226, %v244
  %v258 = vmul.f32 %v229, %v244
  %v259 = vmul.f32 %v234, %v244
  %v260 = vmul.f32 %v237, %v244
  %v261 = vld [vmem:[%s2 + $0x1] sm:$0x1]
  %v262 = vlaneseq
  %v263 = vshrl.u32 %v262, 7
  %v264 = vsub.s32 0, %v263
  %v265 = vrot.slane %v261, %v264
  %v266 = vadd.f32 %v245, %v265
  %v267 = vadd.f32 %v246, %v265
  %v268 = vadd.f32 %v247, %v265
  %v269 = vadd.f32 %v248, %v265
  %v270 = vadd.f32 %v249, %v265
  %v271 = vadd.f32 %v250, %v265
  %v272 = vadd.f32 %v251, %v265
  %v273 = vadd.f32 %v252, %v265
  %v274 = vadd.f32 %v253, %v265
  %v275 = vadd.f32 %v254, %v265
  %v276 = vadd.f32 %v255, %v265
  %v277 = vadd.f32 %v256, %v265
  %v278 = vadd.f32 %v257, %v265
  %v279 = vadd.f32 %v258, %v265
  %v280 = vadd.f32 %v259, %v265
  %v281 = vadd.f32 %v260, %v265
  %v282 = vmax.f32 %v266, 0.0
  %v283 = vmax.f32 %v267, 0.0
  %v284 = vmax.f32 %v268, 0.0
  %v285 = vmax.f32 %v269, 0.0
  %v286 = vmax.f32 %v270, 0.0
  %v287 = vmax.f32 %v271, 0.0
  %v288 = vmax.f32 %v272, 0.0
  %v289 = vmax.f32 %v273, 0.0
  %v290 = vmax.f32 %v274, 0.0
  %v291 = vmax.f32 %v275, 0.0
  %v292 = vmax.f32 %v276, 0.0
  %v293 = vmax.f32 %v277, 0.0
  %v294 = vmax.f32 %v278, 0.0
  %v295 = vmax.f32 %v279, 0.0
  %v296 = vmax.f32 %v280, 0.0
  %v297 = vmax.f32 %v281, 0.0
  %v298 = vpack.c.bf16 %v283, %v282
  %v299 = vpack.c.bf16 %v285, %v284
  %v300 = vpack.c.bf16 %v287, %v286
  %v301 = vpack.c.bf16 %v289, %v288
  %v302 = vpack.c.bf16 %v291, %v290
  %v303 = vpack.c.bf16 %v293, %v292
  %v304 = vpack.c.bf16 %v295, %v294
  %v305 = vpack.c.bf16 %v297, %v296
  %v314 = vunpack.c.l.b16 %v298
  %v315 = vunpack.c.h.b16 %v298
  %v316 = vunpack.c.l.b16 %v299
  %v317 = vunpack.c.h.b16 %v299
  %v318 = vunpack.c.l.b16 %v300
  %v319 = vunpack.c.h.b16 %v300
  %v320 = vunpack.c.l.b16 %v301
  %v321 = vunpack.c.h.b16 %v301
  %v322 = vunpack.c.l.b16 %v302
  %v323 = vunpack.c.h.b16 %v302
  %v324 = vunpack.c.l.b16 %v303
  %v325 = vunpack.c.h.b16 %v303
  %v326 = vunpack.c.l.b16 %v304
  %v327 = vunpack.c.h.b16 %v304
  %v328 = vunpack.c.l.b16 %v305
  %v329 = vunpack.c.h.b16 %v305
  %v330 = vpack.c.b16 %v314, %v314
  %v331 = vpack.c.b16 %v315, %v315
  %v332 = vpack.c.b16 %v316, %v316
  %v333 = vpack.c.b16 %v317, %v317
  %v334 = vpack.c.b16 %v318, %v318
  %v335 = vpack.c.b16 %v319, %v319
  %v336 = vpack.c.b16 %v320, %v320
  %v337 = vpack.c.b16 %v321, %v321
  %v338 = vpack.c.b16 %v322, %v322
  %v339 = vpack.c.b16 %v323, %v323
  %v340 = vpack.c.b16 %v324, %v324
  %v341 = vpack.c.b16 %v325, %v325
  %v342 = vpack.c.b16 %v326, %v326
  %v343 = vpack.c.b16 %v327, %v327
  %v344 = vpack.c.b16 %v328, %v328
  %v345 = vpack.c.b16 %v329, %v329
  %362 = vst [vmem:[%s3] sm:$0xf] %v330
  %363 = vst [vmem:[%s3 + $0x4] sm:$0xf] %v331
  %364 = vst [vmem:[%s3 + $0x8] sm:$0xf] %v332
  %365 = vst [vmem:[%s3 + $0xc] sm:$0xf] %v333
  %366 = vst [vmem:[%s3 + $0x10] sm:$0xf] %v334
  %367 = vst [vmem:[%s3 + $0x14] sm:$0xf] %v335
  %368 = vst [vmem:[%s3 + $0x18] sm:$0xf] %v336
  %369 = vst [vmem:[%s3 + $0x1c] sm:$0xf] %v337
  %370 = vst [vmem:[%s3 + $0x20] sm:$0xf] %v338
  %371 = vst [vmem:[%s3 + $0x24] sm:$0xf] %v339
  %372 = vst [vmem:[%s3 + $0x28] sm:$0xf] %v340
  %373 = vst [vmem:[%s3 + $0x2c] sm:$0xf] %v341
  %374 = vst [vmem:[%s3 + $0x30] sm:$0xf] %v342
  %375 = vst [vmem:[%s3 + $0x34] sm:$0xf] %v343
  %376 = vst [vmem:[%s3 + $0x38] sm:$0xf] %v344
  %377 = vst [vmem:[%s3 + $0x3c] sm:$0xf] %v345
  // Predicated region
  $region14: #{resnetfc_forward.49} parent=0 // pred_check
    _
  $region15: #{resnetfc_forward.49} parent=0 // pred_check_branch
    %379 = sbr.rel (0) target = $region17
  $region16: #{resnetfc_forward.49} parent=0 // pred_region
    _
  $region17: #{resnetfc_forward.49} parent=0 // pred_fallthru
    _
  // Predicated region
  $region18: #{resnetfc_forward.49} parent=0 // pred_check
    _
  $region19: #{resnetfc_forward.49} parent=0 // pred_check_branch
    %381 = sbr.rel (0) target = $region21
  $region20: #{resnetfc_forward.49} parent=0 // pred_region
    _
  $region21: #{resnetfc_forward.49} parent=0 // pred_fallthru
    _

// kernel: resnetfc_forward.48
$region0: #{resnetfc_forward.48}
  #allocation0 [shape = 'u32[]', space=smem, size = 0x4, offset = 0x4, fixed_abs, tag = 'smem constant byte address 0x4 - core index']
  #allocation1 [shape = 'u32[144,128]{1,0:T(1,128)}', space=vmem, size = 0x12000, scoped, tag = 'internal scratch']
  %s0 = inlined_call_operand.vmem [shape: bf16[128,1152], index: 0, kind: input, shape index: {}]
  %s1 = inlined_call_operand.vmem [shape: bf16[1152,128], index: 1, kind: input, shape index: {}]
  %s2 = inlined_call_operand.vmem [shape: f32[2,128], index: 2, kind: input, shape index: {}]
  %s3 = inlined_call_operand.vmem [shape: bf16[128,128], index: 3, kind: input, shape index: {}]
  %s4 = inlined_call_operand.vmem [shape: f32[2,128], index: 4, kind: input, shape index: {}]
  %s5 = inlined_call_operand.vmem [shape: bf16[128,128], index: 5, kind: input, shape index: {}]
  %s6 = inlined_call_operand.vmem [shape: bf16[128,128], index: 6, kind: output, shape index: {}]
  %s7 = sld [smem:[#allocation0]]
  $region34: #{resnetfc_forward.48} parent=0
    _
  %s9 = ssub.s32 1, %s7
  %s10 = scalar_select 0, %s9, %s7
  // Predicated region
  $region2: #{resnetfc_forward.48} parent=0 // pred_check
    _
  $region3: #{resnetfc_forward.48} parent=0 // pred_check_branch
    %12 = sbr.rel (0) target = $region5
  $region4: #{resnetfc_forward.48} parent=0 // pred_region
    _
  $region5: #{resnetfc_forward.48} parent=0 // pred_fallthru
    _
  // Predicated region
  $region6: #{resnetfc_forward.48} parent=0 // pred_check
    _
  $region7: #{resnetfc_forward.48} parent=0 // pred_check_branch
    %14 = sbr.rel (0) target = $region9
  $region8: #{resnetfc_forward.48} parent=0 // pred_region
    _
  $region9: #{resnetfc_forward.48} parent=0 // pred_fallthru
    _
  // Predicated region
  $region10: #{resnetfc_forward.48} parent=0 // pred_check
    _
  $region11: #{resnetfc_forward.48} parent=0 // pred_check_branch
    %16 = sbr.rel (0) target = $region13
  $region12: #{resnetfc_forward.48} parent=0 // pred_region
    _
  $region13: #{resnetfc_forward.48} parent=0 // pred_fallthru
    _
  // Predicated region
  $region14: #{resnetfc_forward.48} parent=0 // pred_check
    _
  $region15: #{resnetfc_forward.48} parent=0 // pred_check_branch
    %18 = sbr.rel (0) target = $region17
  $region16: #{resnetfc_forward.48} parent=0 // pred_region
    _
  $region17: #{resnetfc_forward.48} parent=0 // pred_fallthru
    _
  // Predicated region
  $region18: #{resnetfc_forward.48} parent=0 // pred_check
    _
  $region19: #{resnetfc_forward.48} parent=0 // pred_check_branch
    %20 = sbr.rel (0) target = $region21
  $region20: #{resnetfc_forward.48} parent=0 // pred_region
    _
  $region21: #{resnetfc_forward.48} parent=0 // pred_fallthru
    _
  // Predicated region
  $region22: #{resnetfc_forward.48} parent=0 // pred_check
    _
  $region23: #{resnetfc_forward.48} parent=0 // pred_check_branch
    %22 = sbr.rel (0) target = $region25
  $region24: #{resnetfc_forward.48} parent=0 // pred_region
    _
  $region25: #{resnetfc_forward.48} parent=0 // pred_fallthru
    _
  %v24 = vld [vmem:[%s0] sm:$0xff]
  %v25 = vld [vmem:[%s0 + $0x8] sm:$0xff]
  %v26 = vld [vmem:[%s0 + $0x10] sm:$0xff]
  %v27 = vld [vmem:[%s0 + $0x18] sm:$0xff]
  %v28 = vld [vmem:[%s0 + $0x20] sm:$0xf]
  %v29 = vld [vmem:[%s0 + $0x24] sm:$0xff]
  %v30 = vld [vmem:[%s0 + $0x2c] sm:$0xff]
  %v31 = vld [vmem:[%s0 + $0x34] sm:$0xff]
  %v32 = vld [vmem:[%s0 + $0x3c] sm:$0xff]
  %v33 = vld [vmem:[%s0 + $0x44] sm:$0xf]
  %v34 = vld [vmem:[%s0 + $0x48] sm:$0xff]
  %v35 = vld [vmem:[%s0 + $0x50] sm:$0xff]
  %v36 = vld [vmem:[%s0 + $0x58] sm:$0xff]
  %v37 = vld [vmem:[%s0 + $0x60] sm:$0xff]
  %v38 = vld [vmem:[%s0 + $0x68] sm:$0xf]
  %v39 = vld [vmem:[%s0 + $0x6c] sm:$0xff]
  %v40 = vld [vmem:[%s0 + $0x74] sm:$0xff]
  %v41 = vld [vmem:[%s0 + $0x7c] sm:$0xff]
  %v42 = vld [vmem:[%s0 + $0x84] sm:$0xff]
  %v43 = vld [vmem:[%s0 + $0x8c] sm:$0xf]
  %v44 = vld [vmem:[%s0 + $0x90] sm:$0xff]
  %v45 = vld [vmem:[%s0 + $0x98] sm:$0xff]
  %v46 = vld [vmem:[%s0 + $0xa0] sm:$0xff]
  %v47 = vld [vmem:[%s0 + $0xa8] sm:$0xff]
  %v48 = vld [vmem:[%s0 + $0xb0] sm:$0xf]
  %v49 = vld [vmem:[%s0 + $0xb4] sm:$0xff]
  %v50 = vld [vmem:[%s0 + $0xbc] sm:$0xff]
  %v51 = vld [vmem:[%s0 + $0xc4] sm:$0xff]
  %v52 = vld [vmem:[%s0 + $0xcc] sm:$0xff]
  %v53 = vld [vmem:[%s0 + $0xd4] sm:$0xf]
  %v54 = vld [vmem:[%s0 + $0xd8] sm:$0xff]
  %v55 = vld [vmem:[%s0 + $0xe0] sm:$0xff]
  %v56 = vld [vmem:[%s0 + $0xe8] sm:$0xff]
  %v57 = vld [vmem:[%s0 + $0xf0] sm:$0xff]
  %v58 = vld [vmem:[%s0 + $0xf8] sm:$0xf]
  %v59 = vld [vmem:[%s0 + $0xfc] sm:$0xff]
  %v60 = vld [vmem:[%s0 + $0x104] sm:$0xff]
  %v61 = vld [vmem:[%s0 + $0x10c] sm:$0xff]
  %v62 = vld [vmem:[%s0 + $0x114] sm:$0xff]
  %v63 = vld [vmem:[%s0 + $0x11c] sm:$0xf]
  %v64 = vld [vmem:[%s0 + $0x120] sm:$0xff]
  %v65 = vld [vmem:[%s0 + $0x128] sm:$0xff]
  %v66 = vld [vmem:[%s0 + $0x130] sm:$0xff]
  %v67 = vld [vmem:[%s0 + $0x138] sm:$0xff]
  %v68 = vld [vmem:[%s0 + $0x140] sm:$0xf]
  %v69 = vld [vmem:[%s0 + $0x144] sm:$0xff]
  %v70 = vld [vmem:[%s0 + $0x14c] sm:$0xff]
  %v71 = vld [vmem:[%s0 + $0x154] sm:$0xff]
  %v72 = vld [vmem:[%s0 + $0x15c] sm:$0xff]
  %v73 = vld [vmem:[%s0 + $0x164] sm:$0xf]
  %v74 = vld [vmem:[%s0 + $0x168] sm:$0xff]
  %v75 = vld [vmem:[%s0 + $0x170] sm:$0xff]
  %v76 = vld [vmem:[%s0 + $0x178] sm:$0xff]
  %v77 = vld [vmem:[%s0 + $0x180] sm:$0xff]
  %v78 = vld [vmem:[%s0 + $0x188] sm:$0xf]
  %v79 = vld [vmem:[%s0 + $0x18c] sm:$0xff]
  %v80 = vld [vmem:[%s0 + $0x194] sm:$0xff]
  %v81 = vld [vmem:[%s0 + $0x19c] sm:$0xff]
  %v82 = vld [vmem:[%s0 + $0x1a4] sm:$0xff]
  %v83 = vld [vmem:[%s0 + $0x1ac] sm:$0xf]
  %v84 = vld [vmem:[%s0 + $0x1b0] sm:$0xff]
  %v85 = vld [vmem:[%s0 + $0x1b8] sm:$0xff]
  %v86 = vld [vmem:[%s0 + $0x1c0] sm:$0xff]
  %v87 = vld [vmem:[%s0 + $0x1c8] sm:$0xff]
  %v88 = vld [vmem:[%s0 + $0x1d0] sm:$0xf]
  %v89 = vld [vmem:[%s0 + $0x1d4] sm:$0xff]
  %v90 = vld [vmem:[%s0 + $0x1dc] sm:$0xff]
  %v91 = vld [vmem:[%s0 + $0x1e4] sm:$0xff]
  %v92 = vld [vmem:[%s0 + $0x1ec] sm:$0xff]
  %v93 = vld [vmem:[%s0 + $0x1f4] sm:$0xf]
  %v94 = vld [vmem:[%s0 + $0x1f8] sm:$0xff]
  %v95 = vld [vmem:[%s0 + $0x200] sm:$0xff]
  %v96 = vld [vmem:[%s0 + $0x208] sm:$0xff]
  %v97 = vld [vmem:[%s0 + $0x210] sm:$0xff]
  %v98 = vld [vmem:[%s0 + $0x218] sm:$0xf]
  %v99 = vld [vmem:[%s0 + $0x21c] sm:$0xff]
  %v100 = vld [vmem:[%s0 + $0x224] sm:$0xff]
  %v101 = vld [vmem:[%s0 + $0x22c] sm:$0xff]
  %v102 = vld [vmem:[%s0 + $0x234] sm:$0xff]
  %v103 = vld [vmem:[%s0 + $0x23c] sm:$0xf]
  %v104 = vld [vmem:[%s1] sm:$0xf]
  %v105 = vld [vmem:[%s1 + $0x4] sm:$0xf]
  %v106 = vld [vmem:[%s1 + $0x8] sm:$0xf]
  %v107 = vld [vmem:[%s1 + $0xc] sm:$0xf]
  %v108 = vld [vmem:[%s1 + $0x10] sm:$0xf]
  %v109 = vld [vmem:[%s1 + $0x14] sm:$0xf]
  %v110 = vld [vmem:[%s1 + $0x18] sm:$0xf]
  %v111 = vld [vmem:[%s1 + $0x1c] sm:$0xf]
  %v112 = vld [vmem:[%s1 + $0x20] sm:$0xf]
  %v113 = vld [vmem:[%s1 + $0x24] sm:$0xf]
  %v114 = vld [vmem:[%s1 + $0x28] sm:$0xf]
  %v115 = vld [vmem:[%s1 + $0x2c] sm:$0xf]
  %v116 = vld [vmem:[%s1 + $0x30] sm:$0xf]
  %v117 = vld [vmem:[%s1 + $0x34] sm:$0xf]
  %v118 = vld [vmem:[%s1 + $0x38] sm:$0xf]
  %v119 = vld [vmem:[%s1 + $0x3c] sm:$0xf]
  %v120 = vld [vmem:[%s1 + $0x40] sm:$0xf]
  %v121 = vld [vmem:[%s1 + $0x44] sm:$0xf]
  %v122 = vld [vmem:[%s1 + $0x48] sm:$0xf]
  %v123 = vld [vmem:[%s1 + $0x4c] sm:$0xf]
  %v124 = vld [vmem:[%s1 + $0x50] sm:$0xf]
  %v125 = vld [vmem:[%s1 + $0x54] sm:$0xf]
  %v126 = vld [vmem:[%s1 + $0x58] sm:$0xf]
  %v127 = vld [vmem:[%s1 + $0x5c] sm:$0xf]
  %v128 = vld [vmem:[%s1 + $0x60] sm:$0xf]
  %v129 = vld [vmem:[%s1 + $0x64] sm:$0xf]
  %v130 = vld [vmem:[%s1 + $0x68] sm:$0xf]
  %v131 = vld [vmem:[%s1 + $0x6c] sm:$0xf]
  %v132 = vld [vmem:[%s1 + $0x70] sm:$0xf]
  %v133 = vld [vmem:[%s1 + $0x74] sm:$0xf]
  %v134 = vld [vmem:[%s1 + $0x78] sm:$0xf]
  %v135 = vld [vmem:[%s1 + $0x7c] sm:$0xf]
  %v136 = vld [vmem:[%s1 + $0x80] sm:$0xf]
  %v137 = vld [vmem:[%s1 + $0x84] sm:$0xf]
  %v138 = vld [vmem:[%s1 + $0x88] sm:$0xf]
  %v139 = vld [vmem:[%s1 + $0x8c] sm:$0xf]
  %v140 = vld [vmem:[%s1 + $0x90] sm:$0xf]
  %v141 = vld [vmem:[%s1 + $0x94] sm:$0xf]
  %v142 = vld [vmem:[%s1 + $0x98] sm:$0xf]
  %v143 = vld [vmem:[%s1 + $0x9c] sm:$0xf]
  %v144 = vld [vmem:[%s1 + $0xa0] sm:$0xf]
  %v145 = vld [vmem:[%s1 + $0xa4] sm:$0xf]
  %v146 = vld [vmem:[%s1 + $0xa8] sm:$0xf]
  %v147 = vld [vmem:[%s1 + $0xac] sm:$0xf]
  %v148 = vld [vmem:[%s1 + $0xb0] sm:$0xf]
  %v149 = vld [vmem:[%s1 + $0xb4] sm:$0xf]
  %v150 = vld [vmem:[%s1 + $0xb8] sm:$0xf]
  %v151 = vld [vmem:[%s1 + $0xbc] sm:$0xf]
  %v152 = vld [vmem:[%s1 + $0xc0] sm:$0xf]
  %v153 = vld [vmem:[%s1 + $0xc4] sm:$0xf]
  %v154 = vld [vmem:[%s1 + $0xc8] sm:$0xf]
  %v155 = vld [vmem:[%s1 + $0xcc] sm:$0xf]
  %v156 = vld [vmem:[%s1 + $0xd0] sm:$0xf]
  %v157 = vld [vmem:[%s1 + $0xd4] sm:$0xf]
  %v158 = vld [vmem:[%s1 + $0xd8] sm:$0xf]
  %v159 = vld [vmem:[%s1 + $0xdc] sm:$0xf]
  %v160 = vld [vmem:[%s1 + $0xe0] sm:$0xf]
  %v161 = vld [vmem:[%s1 + $0xe4] sm:$0xf]
  %v162 = vld [vmem:[%s1 + $0xe8] sm:$0xf]
  %v163 = vld [vmem:[%s1 + $0xec] sm:$0xf]
  %v164 = vld [vmem:[%s1 + $0xf0] sm:$0xf]
  %v165 = vld [vmem:[%s1 + $0xf4] sm:$0xf]
  %v166 = vld [vmem:[%s1 + $0xf8] sm:$0xf]
  %v167 = vld [vmem:[%s1 + $0xfc] sm:$0xf]
  %v168 = vld [vmem:[%s1 + $0x100] sm:$0xf]
  %v169 = vld [vmem:[%s1 + $0x104] sm:$0xf]
  %v170 = vld [vmem:[%s1 + $0x108] sm:$0xf]
  %v171 = vld [vmem:[%s1 + $0x10c] sm:$0xf]
  %v172 = vld [vmem:[%s1 + $0x110] sm:$0xf]
  %v173 = vld [vmem:[%s1 + $0x114] sm:$0xf]
  %v174 = vld [vmem:[%s1 + $0x118] sm:$0xf]
  %v175 = vld [vmem:[%s1 + $0x11c] sm:$0xf]
  %v176 = vld [vmem:[%s1 + $0x120] sm:$0xf]
  %v177 = vld [vmem:[%s1 + $0x124] sm:$0xf]
  %v178 = vld [vmem:[%s1 + $0x128] sm:$0xf]
  %v179 = vld [vmem:[%s1 + $0x12c] sm:$0xf]
  %v180 = vld [vmem:[%s1 + $0x130] sm:$0xf]
  %v181 = vld [vmem:[%s1 + $0x134] sm:$0xf]
  %v182 = vld [vmem:[%s1 + $0x138] sm:$0xf]
  %v183 = vld [vmem:[%s1 + $0x13c] sm:$0xf]
  %v184 = vld [vmem:[%s1 + $0x140] sm:$0xf]
  %v185 = vld [vmem:[%s1 + $0x144] sm:$0xf]
  %v186 = vld [vmem:[%s1 + $0x148] sm:$0xf]
  %v187 = vld [vmem:[%s1 + $0x14c] sm:$0xf]
  %v188 = vld [vmem:[%s1 + $0x150] sm:$0xf]
  %v189 = vld [vmem:[%s1 + $0x154] sm:$0xf]
  %v190 = vld [vmem:[%s1 + $0x158] sm:$0xf]
  %v191 = vld [vmem:[%s1 + $0x15c] sm:$0xf]
  %v192 = vld [vmem:[%s1 + $0x160] sm:$0xf]
  %v193 = vld [vmem:[%s1 + $0x164] sm:$0xf]
  %v194 = vld [vmem:[%s1 + $0x168] sm:$0xf]
  %v195 = vld [vmem:[%s1 + $0x16c] sm:$0xf]
  %v196 = vld [vmem:[%s1 + $0x170] sm:$0xf]
  %v197 = vld [vmem:[%s1 + $0x174] sm:$0xf]
  %v198 = vld [vmem:[%s1 + $0x178] sm:$0xf]
  %v199 = vld [vmem:[%s1 + $0x17c] sm:$0xf]
  %v200 = vld [vmem:[%s1 + $0x180] sm:$0xf]
  %v201 = vld [vmem:[%s1 + $0x184] sm:$0xf]
  %v202 = vld [vmem:[%s1 + $0x188] sm:$0xf]
  %v203 = vld [vmem:[%s1 + $0x18c] sm:$0xf]
  %v204 = vld [vmem:[%s1 + $0x190] sm:$0xf]
  %v205 = vld [vmem:[%s1 + $0x194] sm:$0xf]
  %v206 = vld [vmem:[%s1 + $0x198] sm:$0xf]
  %v207 = vld [vmem:[%s1 + $0x19c] sm:$0xf]
  %v208 = vld [vmem:[%s1 + $0x1a0] sm:$0xf]
  %v209 = vld [vmem:[%s1 + $0x1a4] sm:$0xf]
  %v210 = vld [vmem:[%s1 + $0x1a8] sm:$0xf]
  %v211 = vld [vmem:[%s1 + $0x1ac] sm:$0xf]
  %v212 = vld [vmem:[%s1 + $0x1b0] sm:$0xf]
  %v213 = vld [vmem:[%s1 + $0x1b4] sm:$0xf]
  %v214 = vld [vmem:[%s1 + $0x1b8] sm:$0xf]
  %v215 = vld [vmem:[%s1 + $0x1bc] sm:$0xf]
  %v216 = vld [vmem:[%s1 + $0x1c0] sm:$0xf]
  %v217 = vld [vmem:[%s1 + $0x1c4] sm:$0xf]
  %v218 = vld [vmem:[%s1 + $0x1c8] sm:$0xf]
  %v219 = vld [vmem:[%s1 + $0x1cc] sm:$0xf]
  %v220 = vld [vmem:[%s1 + $0x1d0] sm:$0xf]
  %v221 = vld [vmem:[%s1 + $0x1d4] sm:$0xf]
  %v222 = vld [vmem:[%s1 + $0x1d8] sm:$0xf]
  %v223 = vld [vmem:[%s1 + $0x1dc] sm:$0xf]
  %v224 = vld [vmem:[%s1 + $0x1e0] sm:$0xf]
  %v225 = vld [vmem:[%s1 + $0x1e4] sm:$0xf]
  %v226 = vld [vmem:[%s1 + $0x1e8] sm:$0xf]
  %v227 = vld [vmem:[%s1 + $0x1ec] sm:$0xf]
  %v228 = vld [vmem:[%s1 + $0x1f0] sm:$0xf]
  %v229 = vld [vmem:[%s1 + $0x1f4] sm:$0xf]
  %v230 = vld [vmem:[%s1 + $0x1f8] sm:$0xf]
  %v231 = vld [vmem:[%s1 + $0x1fc] sm:$0xf]
  %v232 = vld [vmem:[%s1 + $0x200] sm:$0xf]
  %v233 = vld [vmem:[%s1 + $0x204] sm:$0xf]
  %v234 = vld [vmem:[%s1 + $0x208] sm:$0xf]
  %v235 = vld [vmem:[%s1 + $0x20c] sm:$0xf]
  %v236 = vld [vmem:[%s1 + $0x210] sm:$0xf]
  %v237 = vld [vmem:[%s1 + $0x214] sm:$0xf]
  %v238 = vld [vmem:[%s1 + $0x218] sm:$0xf]
  %v239 = vld [vmem:[%s1 + $0x21c] sm:$0xf]
  %v240 = vld [vmem:[%s1 + $0x220] sm:$0xf]
  %v241 = vld [vmem:[%s1 + $0x224] sm:$0xf]
  %v242 = vld [vmem:[%s1 + $0x228] sm:$0xf]
  %v243 = vld [vmem:[%s1 + $0x22c] sm:$0xf]
  %v244 = vld [vmem:[%s1 + $0x230] sm:$0xf]
  %v245 = vld [vmem:[%s1 + $0x234] sm:$0xf]
  %v246 = vld [vmem:[%s1 + $0x238] sm:$0xf]
  %v247 = vld [vmem:[%s1 + $0x23c] sm:$0xf]
  %v328 = vunpack.c.l.b16 %v24
  %v329 = vunpack.c.h.b16 %v24
  %v330 = vunpack.c.l.b16 %v25
  %v331 = vunpack.c.h.b16 %v25
  %v332 = vunpack.c.l.b16 %v26
  %v333 = vunpack.c.h.b16 %v26
  %v334 = vunpack.c.l.b16 %v27
  %v335 = vunpack.c.h.b16 %v27
  %v336 = vunpack.c.l.b16 %v28
  %v337 = vunpack.c.l.b16 %v29
  %v338 = vunpack.c.h.b16 %v29
  %v339 = vunpack.c.l.b16 %v30
  %v340 = vunpack.c.h.b16 %v30
  %v341 = vunpack.c.l.b16 %v31
  %v342 = vunpack.c.h.b16 %v31
  %v343 = vunpack.c.l.b16 %v32
  %v344 = vunpack.c.h.b16 %v32
  %v345 = vunpack.c.l.b16 %v33
  %v346 = vunpack.c.l.b16 %v34
  %v347 = vunpack.c.h.b16 %v34
  %v348 = vunpack.c.l.b16 %v35
  %v349 = vunpack.c.h.b16 %v35
  %v350 = vunpack.c.l.b16 %v36
  %v351 = vunpack.c.h.b16 %v36
  %v352 = vunpack.c.l.b16 %v37
  %v353 = vunpack.c.h.b16 %v37
  %v354 = vunpack.c.l.b16 %v38
  %v355 = vunpack.c.l.b16 %v39
  %v356 = vunpack.c.h.b16 %v39
  %v357 = vunpack.c.l.b16 %v40
  %v358 = vunpack.c.h.b16 %v40
  %v359 = vunpack.c.l.b16 %v41
  %v360 = vunpack.c.h.b16 %v41
  %v361 = vunpack.c.l.b16 %v42
  %v362 = vunpack.c.h.b16 %v42
  %v363 = vunpack.c.l.b16 %v43
  %v364 = vunpack.c.l.b16 %v44
  %v365 = vunpack.c.h.b16 %v44
  %v366 = vunpack.c.l.b16 %v45
  %v367 = vunpack.c.h.b16 %v45
  %v368 = vunpack.c.l.b16 %v46
  %v369 = vunpack.c.h.b16 %v46
  %v370 = vunpack.c.l.b16 %v47
  %v371 = vunpack.c.h.b16 %v47
  %v372 = vunpack.c.l.b16 %v48
  %v373 = vunpack.c.l.b16 %v49
  %v374 = vunpack.c.h.b16 %v49
  %v375 = vunpack.c.l.b16 %v50
  %v376 = vunpack.c.h.b16 %v50
  %v377 = vunpack.c.l.b16 %v51
  %v378 = vunpack.c.h.b16 %v51
  %v379 = vunpack.c.l.b16 %v52
  %v380 = vunpack.c.h.b16 %v52
  %v381 = vunpack.c.l.b16 %v53
  %v382 = vunpack.c.l.b16 %v54
  %v383 = vunpack.c.h.b16 %v54
  %v384 = vunpack.c.l.b16 %v55
  %v385 = vunpack.c.h.b16 %v55
  %v386 = vunpack.c.l.b16 %v56
  %v387 = vunpack.c.h.b16 %v56
  %v388 = vunpack.c.l.b16 %v57
  %v389 = vunpack.c.h.b16 %v57
  %v390 = vunpack.c.l.b16 %v58
  %v391 = vunpack.c.l.b16 %v59
  %v392 = vunpack.c.h.b16 %v59
  %v393 = vunpack.c.l.b16 %v60
  %v394 = vunpack.c.h.b16 %v60
  %v395 = vunpack.c.l.b16 %v61
  %v396 = vunpack.c.h.b16 %v61
  %v397 = vunpack.c.l.b16 %v62
  %v398 = vunpack.c.h.b16 %v62
  %v399 = vunpack.c.l.b16 %v63
  %v400 = vunpack.c.l.b16 %v64
  %v401 = vunpack.c.h.b16 %v64
  %v402 = vunpack.c.l.b16 %v65
  %v403 = vunpack.c.h.b16 %v65
  %v404 = vunpack.c.l.b16 %v66
  %v405 = vunpack.c.h.b16 %v66
  %v406 = vunpack.c.l.b16 %v67
  %v407 = vunpack.c.h.b16 %v67
  %v408 = vunpack.c.l.b16 %v68
  %v409 = vunpack.c.l.b16 %v69
  %v410 = vunpack.c.h.b16 %v69
  %v411 = vunpack.c.l.b16 %v70
  %v412 = vunpack.c.h.b16 %v70
  %v413 = vunpack.c.l.b16 %v71
  %v414 = vunpack.c.h.b16 %v71
  %v415 = vunpack.c.l.b16 %v72
  %v416 = vunpack.c.h.b16 %v72
  %v417 = vunpack.c.l.b16 %v73
  %v418 = vunpack.c.l.b16 %v74
  %v419 = vunpack.c.h.b16 %v74
  %v420 = vunpack.c.l.b16 %v75
  %v421 = vunpack.c.h.b16 %v75
  %v422 = vunpack.c.l.b16 %v76
  %v423 = vunpack.c.h.b16 %v76
  %v424 = vunpack.c.l.b16 %v77
  %v425 = vunpack.c.h.b16 %v77
  %v426 = vunpack.c.l.b16 %v78
  %v427 = vunpack.c.l.b16 %v79
  %v428 = vunpack.c.h.b16 %v79
  %v429 = vunpack.c.l.b16 %v80
  %v430 = vunpack.c.h.b16 %v80
  %v431 = vunpack.c.l.b16 %v81
  %v432 = vunpack.c.h.b16 %v81
  %v433 = vunpack.c.l.b16 %v82
  %v434 = vunpack.c.h.b16 %v82
  %v435 = vunpack.c.l.b16 %v83
  %v436 = vunpack.c.l.b16 %v84
  %v437 = vunpack.c.h.b16 %v84
  %v438 = vunpack.c.l.b16 %v85
  %v439 = vunpack.c.h.b16 %v85
  %v440 = vunpack.c.l.b16 %v86
  %v441 = vunpack.c.h.b16 %v86
  %v442 = vunpack.c.l.b16 %v87
  %v443 = vunpack.c.h.b16 %v87
  %v444 = vunpack.c.l.b16 %v88
  %v445 = vunpack.c.l.b16 %v89
  %v446 = vunpack.c.h.b16 %v89
  %v447 = vunpack.c.l.b16 %v90
  %v448 = vunpack.c.h.b16 %v90
  %v449 = vunpack.c.l.b16 %v91
  %v450 = vunpack.c.h.b16 %v91
  %v451 = vunpack.c.l.b16 %v92
  %v452 = vunpack.c.h.b16 %v92
  %v453 = vunpack.c.l.b16 %v93
  %v454 = vunpack.c.l.b16 %v94
  %v455 = vunpack.c.h.b16 %v94
  %v456 = vunpack.c.l.b16 %v95
  %v457 = vunpack.c.h.b16 %v95
  %v458 = vunpack.c.l.b16 %v96
  %v459 = vunpack.c.h.b16 %v96
  %v460 = vunpack.c.l.b16 %v97
  %v461 = vunpack.c.h.b16 %v97
  %v462 = vunpack.c.l.b16 %v98
  %v463 = vunpack.c.l.b16 %v99
  %v464 = vunpack.c.h.b16 %v99
  %v465 = vunpack.c.l.b16 %v100
  %v466 = vunpack.c.h.b16 %v100
  %v467 = vunpack.c.l.b16 %v101
  %v468 = vunpack.c.h.b16 %v101
  %v469 = vunpack.c.l.b16 %v102
  %v470 = vunpack.c.h.b16 %v102
  %v471 = vunpack.c.l.b16 %v103
  %v472 = vpack.c.b16 %v337, %v328
  %v473 = vpack.c.b16 %v338, %v329
  %v474 = vpack.c.b16 %v339, %v330
  %v475 = vpack.c.b16 %v340, %v331
  %v476 = vpack.c.b16 %v341, %v332
  %v477 = vpack.c.b16 %v342, %v333
  %v478 = vpack.c.b16 %v343, %v334
  %v479 = vpack.c.b16 %v344, %v335
  %v480 = vpack.c.b16 %v345, %v336
  %v481 = vpack.c.b16 %v355, %v346
  %v482 = vpack.c.b16 %v356, %v347
  %v483 = vpack.c.b16 %v357, %v348
  %v484 = vpack.c.b16 %v358, %v349
  %v485 = vpack.c.b16 %v359, %v350
  %v486 = vpack.c.b16 %v360, %v351
  %v487 = vpack.c.b16 %v361, %v352
  %v488 = vpack.c.b16 %v362, %v353
  %v489 = vpack.c.b16 %v363, %v354
  %v490 = vpack.c.b16 %v373, %v364
  %v491 = vpack.c.b16 %v374, %v365
  %v492 = vpack.c.b16 %v375, %v366
  %v493 = vpack.c.b16 %v376, %v367
  %v494 = vpack.c.b16 %v377, %v368
  %v495 = vpack.c.b16 %v378, %v369
  %v496 = vpack.c.b16 %v379, %v370
  %v497 = vpack.c.b16 %v380, %v371
  %v498 = vpack.c.b16 %v381, %v372
  %v499 = vpack.c.b16 %v391, %v382
  %v500 = vpack.c.b16 %v392, %v383
  %v501 = vpack.c.b16 %v393, %v384
  %v502 = vpack.c.b16 %v394, %v385
  %v503 = vpack.c.b16 %v395, %v386
  %v504 = vpack.c.b16 %v396, %v387
  %v505 = vpack.c.b16 %v397, %v388
  %v506 = vpack.c.b16 %v398, %v389
  %v507 = vpack.c.b16 %v399, %v390
  %v508 = vpack.c.b16 %v409, %v400
  %v509 = vpack.c.b16 %v410, %v401
  %v510 = vpack.c.b16 %v411, %v402
  %v511 = vpack.c.b16 %v412, %v403
  %v512 = vpack.c.b16 %v413, %v404
  %v513 = vpack.c.b16 %v414, %v405
  %v514 = vpack.c.b16 %v415, %v406
  %v515 = vpack.c.b16 %v416, %v407
  %v516 = vpack.c.b16 %v417, %v408
  %v517 = vpack.c.b16 %v427, %v418
  %v518 = vpack.c.b16 %v428, %v419
  %v519 = vpack.c.b16 %v429, %v420
  %v520 = vpack.c.b16 %v430, %v421
  %v521 = vpack.c.b16 %v431, %v422
  %v522 = vpack.c.b16 %v432, %v423
  %v523 = vpack.c.b16 %v433, %v424
  %v524 = vpack.c.b16 %v434, %v425
  %v525 = vpack.c.b16 %v435, %v426
  %v526 = vpack.c.b16 %v445, %v436
  %v527 = vpack.c.b16 %v446, %v437
  %v528 = vpack.c.b16 %v447, %v438
  %v529 = vpack.c.b16 %v448, %v439
  %v530 = vpack.c.b16 %v449, %v440
  %v531 = vpack.c.b16 %v450, %v441
  %v532 = vpack.c.b16 %v451, %v442
  %v533 = vpack.c.b16 %v452, %v443
  %v534 = vpack.c.b16 %v453, %v444
  %v535 = vpack.c.b16 %v463, %v454
  %v536 = vpack.c.b16 %v464, %v455
  %v537 = vpack.c.b16 %v465, %v456
  %v538 = vpack.c.b16 %v466, %v457
  %v539 = vpack.c.b16 %v467, %v458
  %v540 = vpack.c.b16 %v468, %v459
  %v541 = vpack.c.b16 %v469, %v460
  %v542 = vpack.c.b16 %v470, %v461
  %v543 = vpack.c.b16 %v471, %v462
  %v760 = vunpack.c.l.b16 %v104
  %v761 = vunpack.c.l.b16 %v105
  %v762 = vunpack.c.l.b16 %v106
  %v763 = vunpack.c.l.b16 %v107
  %v764 = vunpack.c.l.b16 %v108
  %v765 = vunpack.c.l.b16 %v109
  %v766 = vunpack.c.l.b16 %v110
  %v767 = vunpack.c.l.b16 %v111
  %v768 = vunpack.c.l.b16 %v112
  %v769 = vunpack.c.l.b16 %v113
  %v770 = vunpack.c.l.b16 %v114
  %v771 = vunpack.c.l.b16 %v115
  %v772 = vunpack.c.l.b16 %v116
  %v773 = vunpack.c.l.b16 %v117
  %v774 = vunpack.c.l.b16 %v118
  %v775 = vunpack.c.l.b16 %v119
  %v776 = vunpack.c.l.b16 %v120
  %v777 = vunpack.c.l.b16 %v121
  %v778 = vunpack.c.l.b16 %v122
  %v779 = vunpack.c.l.b16 %v123
  %v780 = vunpack.c.l.b16 %v124
  %v781 = vunpack.c.l.b16 %v125
  %v782 = vunpack.c.l.b16 %v126
  %v783 = vunpack.c.l.b16 %v127
  %v784 = vunpack.c.l.b16 %v128
  %v785 = vunpack.c.l.b16 %v129
  %v786 = vunpack.c.l.b16 %v130
  %v787 = vunpack.c.l.b16 %v131
  %v788 = vunpack.c.l.b16 %v132
  %v789 = vunpack.c.l.b16 %v133
  %v790 = vunpack.c.l.b16 %v134
  %v791 = vunpack.c.l.b16 %v135
  %v792 = vunpack.c.l.b16 %v136
  %v793 = vunpack.c.l.b16 %v137
  %v794 = vunpack.c.l.b16 %v138
  %v795 = vunpack.c.l.b16 %v139
  %v796 = vunpack.c.l.b16 %v140
  %v797 = vunpack.c.l.b16 %v141
  %v798 = vunpack.c.l.b16 %v142
  %v799 = vunpack.c.l.b16 %v143
  %v800 = vunpack.c.l.b16 %v144
  %v801 = vunpack.c.l.b16 %v145
  %v802 = vunpack.c.l.b16 %v146
  %v803 = vunpack.c.l.b16 %v147
  %v804 = vunpack.c.l.b16 %v148
  %v805 = vunpack.c.l.b16 %v149
  %v806 = vunpack.c.l.b16 %v150
  %v807 = vunpack.c.l.b16 %v151
  %v808 = vunpack.c.l.b16 %v152
  %v809 = vunpack.c.l.b16 %v153
  %v810 = vunpack.c.l.b16 %v154
  %v811 = vunpack.c.l.b16 %v155
  %v812 = vunpack.c.l.b16 %v156
  %v813 = vunpack.c.l.b16 %v157
  %v814 = vunpack.c.l.b16 %v158
  %v815 = vunpack.c.l.b16 %v159
  %v816 = vunpack.c.l.b16 %v160
  %v817 = vunpack.c.l.b16 %v161
  %v818 = vunpack.c.l.b16 %v162
  %v819 = vunpack.c.l.b16 %v163
  %v820 = vunpack.c.l.b16 %v164
  %v821 = vunpack.c.l.b16 %v165
  %v822 = vunpack.c.l.b16 %v166
  %v823 = vunpack.c.l.b16 %v167
  %v824 = vunpack.c.l.b16 %v168
  %v825 = vunpack.c.l.b16 %v169
  %v826 = vunpack.c.l.b16 %v170
  %v827 = vunpack.c.l.b16 %v171
  %v828 = vunpack.c.l.b16 %v172
  %v829 = vunpack.c.l.b16 %v173
  %v830 = vunpack.c.l.b16 %v174
  %v831 = vunpack.c.l.b16 %v175
  %v832 = vunpack.c.l.b16 %v176
  %v833 = vunpack.c.l.b16 %v177
  %v834 = vunpack.c.l.b16 %v178
  %v835 = vunpack.c.l.b16 %v179
  %v836 = vunpack.c.l.b16 %v180
  %v837 = vunpack.c.l.b16 %v181
  %v838 = vunpack.c.l.b16 %v182
  %v839 = vunpack.c.l.b16 %v183
  %v840 = vunpack.c.l.b16 %v184
  %v841 = vunpack.c.l.b16 %v185
  %v842 = vunpack.c.l.b16 %v186
  %v843 = vunpack.c.l.b16 %v187
  %v844 = vunpack.c.l.b16 %v188
  %v845 = vunpack.c.l.b16 %v189
  %v846 = vunpack.c.l.b16 %v190
  %v847 = vunpack.c.l.b16 %v191
  %v848 = vunpack.c.l.b16 %v192
  %v849 = vunpack.c.l.b16 %v193
  %v850 = vunpack.c.l.b16 %v194
  %v851 = vunpack.c.l.b16 %v195
  %v852 = vunpack.c.l.b16 %v196
  %v853 = vunpack.c.l.b16 %v197
  %v854 = vunpack.c.l.b16 %v198
  %v855 = vunpack.c.l.b16 %v199
  %v856 = vunpack.c.l.b16 %v200
  %v857 = vunpack.c.l.b16 %v201
  %v858 = vunpack.c.l.b16 %v202
  %v859 = vunpack.c.l.b16 %v203
  %v860 = vunpack.c.l.b16 %v204
  %v861 = vunpack.c.l.b16 %v205
  %v862 = vunpack.c.l.b16 %v206
  %v863 = vunpack.c.l.b16 %v207
  %v864 = vunpack.c.l.b16 %v208
  %v865 = vunpack.c.l.b16 %v209
  %v866 = vunpack.c.l.b16 %v210
  %v867 = vunpack.c.l.b16 %v211
  %v868 = vunpack.c.l.b16 %v212
  %v869 = vunpack.c.l.b16 %v213
  %v870 = vunpack.c.l.b16 %v214
  %v871 = vunpack.c.l.b16 %v215
  %v872 = vunpack.c.l.b16 %v216
  %v873 = vunpack.c.l.b16 %v217
  %v874 = vunpack.c.l.b16 %v218
  %v875 = vunpack.c.l.b16 %v219
  %v876 = vunpack.c.l.b16 %v220
  %v877 = vunpack.c.l.b16 %v221
  %v878 = vunpack.c.l.b16 %v222
  %v879 = vunpack.c.l.b16 %v223
  %v880 = vunpack.c.l.b16 %v224
  %v881 = vunpack.c.l.b16 %v225
  %v882 = vunpack.c.l.b16 %v226
  %v883 = vunpack.c.l.b16 %v227
  %v884 = vunpack.c.l.b16 %v228
  %v885 = vunpack.c.l.b16 %v229
  %v886 = vunpack.c.l.b16 %v230
  %v887 = vunpack.c.l.b16 %v231
  %v888 = vunpack.c.l.b16 %v232
  %v889 = vunpack.c.l.b16 %v233
  %v890 = vunpack.c.l.b16 %v234
  %v891 = vunpack.c.l.b16 %v235
  %v892 = vunpack.c.l.b16 %v236
  %v893 = vunpack.c.l.b16 %v237
  %v894 = vunpack.c.l.b16 %v238
  %v895 = vunpack.c.l.b16 %v239
  %v896 = vunpack.c.l.b16 %v240
  %v897 = vunpack.c.l.b16 %v241
  %v898 = vunpack.c.l.b16 %v242
  %v899 = vunpack.c.l.b16 %v243
  %v900 = vunpack.c.l.b16 %v244
  %v901 = vunpack.c.l.b16 %v245
  %v902 = vunpack.c.l.b16 %v246
  %v903 = vunpack.c.l.b16 %v247
  %v904 = vpack.c.b16 %v761, %v760
  %v905 = vpack.c.b16 %v763, %v762
  %v906 = vpack.c.b16 %v765, %v764
  %v907 = vpack.c.b16 %v767, %v766
  %v908 = vpack.c.b16 %v769, %v768
  %v909 = vpack.c.b16 %v771, %v770
  %v910 = vpack.c.b16 %v773, %v772
  %v911 = vpack.c.b16 %v775, %v774
  %v912 = vpack.c.b16 %v777, %v776
  %v913 = vpack.c.b16 %v779, %v778
  %v914 = vpack.c.b16 %v781, %v780
  %v915 = vpack.c.b16 %v783, %v782
  %v916 = vpack.c.b16 %v785, %v784
  %v917 = vpack.c.b16 %v787, %v786
  %v918 = vpack.c.b16 %v789, %v788
  %v919 = vpack.c.b16 %v791, %v790
  %v920 = vpack.c.b16 %v793, %v792
  %v921 = vpack.c.b16 %v795, %v794
  %v922 = vpack.c.b16 %v797, %v796
  %v923 = vpack.c.b16 %v799, %v798
  %v924 = vpack.c.b16 %v801, %v800
  %v925 = vpack.c.b16 %v803, %v802
  %v926 = vpack.c.b16 %v805, %v804
  %v927 = vpack.c.b16 %v807, %v806
  %v928 = vpack.c.b16 %v809, %v808
  %v929 = vpack.c.b16 %v811, %v810
  %v930 = vpack.c.b16 %v813, %v812
  %v931 = vpack.c.b16 %v815, %v814
  %v932 = vpack.c.b16 %v817, %v816
  %v933 = vpack.c.b16 %v819, %v818
  %v934 = vpack.c.b16 %v821, %v820
  %v935 = vpack.c.b16 %v823, %v822
  %v936 = vpack.c.b16 %v825, %v824
  %v937 = vpack.c.b16 %v827, %v826
  %v938 = vpack.c.b16 %v829, %v828
  %v939 = vpack.c.b16 %v831, %v830
  %v940 = vpack.c.b16 %v833, %v832
  %v941 = vpack.c.b16 %v835, %v834
  %v942 = vpack.c.b16 %v837, %v836
  %v943 = vpack.c.b16 %v839, %v838
  %v944 = vpack.c.b16 %v841, %v840
  %v945 = vpack.c.b16 %v843, %v842
  %v946 = vpack.c.b16 %v845, %v844
  %v947 = vpack.c.b16 %v847, %v846
  %v948 = vpack.c.b16 %v849, %v848
  %v949 = vpack.c.b16 %v851, %v850
  %v950 = vpack.c.b16 %v853, %v852
  %v951 = vpack.c.b16 %v855, %v854
  %v952 = vpack.c.b16 %v857, %v856
  %v953 = vpack.c.b16 %v859, %v858
  %v954 = vpack.c.b16 %v861, %v860
  %v955 = vpack.c.b16 %v863, %v862
  %v956 = vpack.c.b16 %v865, %v864
  %v957 = vpack.c.b16 %v867, %v866
  %v958 = vpack.c.b16 %v869, %v868
  %v959 = vpack.c.b16 %v871, %v870
  %v960 = vpack.c.b16 %v873, %v872
  %v961 = vpack.c.b16 %v875, %v874
  %v962 = vpack.c.b16 %v877, %v876
  %v963 = vpack.c.b16 %v879, %v878
  %v964 = vpack.c.b16 %v881, %v880
  %v965 = vpack.c.b16 %v883, %v882
  %v966 = vpack.c.b16 %v885, %v884
  %v967 = vpack.c.b16 %v887, %v886
  %v968 = vpack.c.b16 %v889, %v888
  %v969 = vpack.c.b16 %v891, %v890
  %v970 = vpack.c.b16 %v893, %v892
  %v971 = vpack.c.b16 %v895, %v894
  %v972 = vpack.c.b16 %v897, %v896
  %v973 = vpack.c.b16 %v899, %v898
  %v974 = vpack.c.b16 %v901, %v900
  %v975 = vpack.c.b16 %v903, %v902
  %1048 = vmatprep.subr.bf16.mxu0 0
  %1049 = vmatpush1.bf16.msra.mxu0 %v904
  %1050 = vmatprep.subr.bf16.mxu0 0
  %1051 = vmatpush1.bf16.msra.mxu0 %v905
  %1052 = vmatprep.subr.bf16.mxu0 0
  %1053 = vmatpush1.bf16.msra.mxu0 %v906
  %1054 = vmatprep.subr.bf16.mxu0 0
  %1055 = vmatpush1.bf16.msra.mxu0 %v907
  %1056 = vmatprep.subr.bf16.mxu0 0
  %1057 = vmatpush1.bf16.msra.mxu0 %v908
  %1058 = vmatprep.subr.bf16.mxu0 0
  %1059 = vmatpush1.bf16.msra.mxu0 %v909
  %1060 = vmatprep.subr.bf16.mxu0 0
  %1061 = vmatpush1.bf16.msra.mxu0 %v910
  %1062 = vmatprep.subr.bf16.mxu0 0
  %1063 = vmatpush1.bf16.msra.mxu0 %v911
  %1064 = vmatprep.subr.bf16.mxu0 0
  %1065 = vmatpush1.bf16.msra.mxu0 %v912
  %1066 = vmatprep.subr.bf16.mxu0 0
  %1067 = vmatpush1.bf16.msra.mxu0 %v913
  %1068 = vmatprep.subr.bf16.mxu0 0
  %1069 = vmatpush1.bf16.msra.mxu0 %v914
  %1070 = vmatprep.subr.bf16.mxu0 0
  %1071 = vmatpush1.bf16.msra.mxu0 %v915
  %1072 = vmatprep.subr.bf16.mxu0 0
  %1073 = vmatpush1.bf16.msra.mxu0 %v916
  %1074 = vmatprep.subr.bf16.mxu0 0
  %1075 = vmatpush1.bf16.msra.mxu0 %v917
  %1076 = vmatprep.subr.bf16.mxu0 0
  %1077 = vmatpush1.bf16.msra.mxu0 %v918
  %1078 = vmatprep.subr.bf16.mxu0 0
  %1079 = vmatpush1.bf16.msra.mxu0 %v919
  %1080 = vmatprep.mubr.bf16.mxu0 %v473
  %1081 = vmatmul.mubr.bf16.gmra.mrb[0].mxu0 %v472
  %v1082 = vpop.f32.mrb[0].mxu0
  %v1083 = vadd.f32 0.0, %v1082
  %v1084 = vpop.f32.mrb[0].mxu0
  %v1085 = vpop.f32.mrb[0].mxu0
  %v1086 = vadd.f32 0.0, %v1085
  %v1087 = vpop.f32.mrb[0].mxu0
  %1088 = vmatprep.mubr.bf16.mxu0 %v482
  %1089 = vmatmul.mubr.bf16.gmra.mrb[0].mxu0 %v481
  %v1090 = vpop.f32.mrb[0].mxu0
  %v1091 = vadd.f32 0.0, %v1090
  %v1092 = vpop.f32.mrb[0].mxu0
  %v1093 = vpop.f32.mrb[0].mxu0
  %v1094 = vadd.f32 0.0, %v1093
  %v1095 = vpop.f32.mrb[0].mxu0
  %1096 = vmatprep.mubr.bf16.mxu0 %v491
  %1097 = vmatmul.mubr.bf16.gmra.mrb[0].mxu0 %v490
  %v1098 = vpop.f32.mrb[0].mxu0
  %v1099 = vadd.f32 0.0, %v1098
  %v1100 = vpop.f32.mrb[0].mxu0
  %v1101 = vpop.f32.mrb[0].mxu0
  %v1102 = vadd.f32 0.0, %v1101
  %v1103 = vpop.f32.mrb[0].mxu0
  %1104 = vmatprep.mubr.bf16.mxu0 %v500
  %1105 = vmatmul.mubr.bf16.gmra.mrb[0].mxu0 %v499
  %v1106 = vpop.f32.mrb[0].mxu0
  %v1107 = vadd.f32 0.0, %v1106
  %v1108 = vpop.f32.mrb[0].mxu0
  %v1109 = vpop.f32.mrb[0].mxu0
  %v1110 = vadd.f32 0.0, %v1109
  %v1111 = vpop.f32.mrb[0].mxu0
  %1112 = vmatprep.mubr.bf16.mxu0 %v509
  %1113 = vmatmul.mubr.bf16.gmra.mrb[0].mxu0 %v508
  %v1114 = vpop.f32.mrb[0].mxu0
  %v1115 = vadd.f32 0.0, %v1114
  %v1116 = vpop.f32.mrb[0].mxu0
  %v1117 = vpop.f32.mrb[0].mxu0
  %v1118 = vadd.f32 0.0, %v1117
  %v1119 = vpop.f32.mrb[0].mxu0
  %1120 = vmatprep.mubr.bf16.mxu0 %v518
  %1121 = vmatmul.mubr.bf16.gmra.mrb[0].mxu0 %v517
  %v1122 = vpop.f32.mrb[0].mxu0
  %v1123 = vadd.f32 0.0, %v1122
  %v1124 = vpop.f32.mrb[0].mxu0
  %v1125 = vpop.f32.mrb[0].mxu0
  %v1126 = vadd.f32 0.0, %v1125
  %v1127 = vpop.f32.mrb[0].mxu0
  %1128 = vmatprep.mubr.bf16.mxu0 %v527
  %1129 = vmatmul.mubr.bf16.gmra.mrb[0].mxu0 %v526
  %v1130 = vpop.f32.mrb[0].mxu0
  %v1131 = vadd.f32 0.0, %v1130
  %v1132 = vpop.f32.mrb[0].mxu0
  %v1133 = vpop.f32.mrb[0].mxu0
  %v1134 = vadd.f32 0.0, %v1133
  %v1135 = vpop.f32.mrb[0].mxu0
  %1136 = vmatprep.mubr.bf16.mxu0 %v536
  %1137 = vmatmul.mubr.bf16.gmra.mrb[0].mxu0 %v535
  %v1138 = vpop.f32.mrb[0].mxu0
  %v1139 = vadd.f32 0.0, %v1138
  %v1140 = vpop.f32.mrb[0].mxu0
  %v1141 = vpop.f32.mrb[0].mxu0
  %v1142 = vadd.f32 0.0, %v1141
  %v1143 = vpop.f32.mrb[0].mxu0
  %1144 = vdwg.mxu0
  %1145 = vmatprep.subr.bf16.mxu0 0
  %1146 = vmatpush1.bf16.msra.mxu0 %v920
  %1147 = vmatprep.subr.bf16.mxu0 0
  %1148 = vmatpush1.bf16.msra.mxu0 %v921
  %1149 = vmatprep.subr.bf16.mxu0 0
  %1150 = vmatpush1.bf16.msra.mxu0 %v922
  %1151 = vmatprep.subr.bf16.mxu0 0
  %1152 = vmatpush1.bf16.msra.mxu0 %v923
  %1153 = vmatprep.subr.bf16.mxu0 0
  %1154 = vmatpush1.bf16.msra.mxu0 %v924
  %1155 = vmatprep.subr.bf16.mxu0 0
  %1156 = vmatpush1.bf16.msra.mxu0 %v925
  %1157 = vmatprep.subr.bf16.mxu0 0
  %1158 = vmatpush1.bf16.msra.mxu0 %v926
  %1159 = vmatprep.subr.bf16.mxu0 0
  %1160 = vmatpush1.bf16.msra.mxu0 %v927
  %1161 = vmatprep.subr.bf16.mxu0 0
  %1162 = vmatpush1.bf16.msra.mxu0 %v928
  %1163 = vmatprep.subr.bf16.mxu0 0
  %1164 = vmatpush1.bf16.msra.mxu0 %v929
  %1165 = vmatprep.subr.bf16.mxu0 0
  %1166 = vmatpush1.bf16.msra.mxu0 %v930
  %1167 = vmatprep.subr.bf16.mxu0 0
  %1168 = vmatpush1.bf16.msra.mxu0 %v931
  %1169 = vmatprep.subr.bf16.mxu0 0
  %1170 = vmatpush1.bf16.msra.mxu0 %v932
  %1171 = vmatprep.subr.bf16.mxu0 0
  %1172 = vmatpush1.bf16.msra.mxu0 %v933
  %1173 = vmatprep.subr.bf16.mxu0 0
  %1174 = vmatpush1.bf16.msra.mxu0 %v934
  %1175 = vmatprep.subr.bf16.mxu0 0
  %1176 = vmatpush1.bf16.msra.mxu0 %v935
  %1177 = vmatprep.mubr.bf16.mxu0 %v475
  %1178 = vmatmul.mubr.bf16.gmra.mrb[0].mxu0 %v474
  %v1179 = vpop.f32.mrb[0].mxu0
  %v1180 = vadd.f32 %v1083, %v1179
  %v1181 = vpop.f32.mrb[0].mxu0
  %v1182 = vpop.f32.mrb[0].mxu0
  %v1183 = vadd.f32 %v1086, %v1182
  %v1184 = vpop.f32.mrb[0].mxu0
  %1185 = vmatprep.mubr.bf16.mxu0 %v484
  %1186 = vmatmul.mubr.bf16.gmra.mrb[0].mxu0 %v483
  %v1187 = vpop.f32.mrb[0].mxu0
  %v1188 = vadd.f32 %v1091, %v1187
  %v1189 = vpop.f32.mrb[0].mxu0
  %v1190 = vpop.f32.mrb[0].mxu0
  %v1191 = vadd.f32 %v1094, %v1190
  %v1192 = vpop.f32.mrb[0].mxu0
  %1193 = vmatprep.mubr.bf16.mxu0 %v493
  %1194 = vmatmul.mubr.bf16.gmra.mrb[0].mxu0 %v492
  %v1195 = vpop.f32.mrb[0].mxu0
  %v1196 = vadd.f32 %v1099, %v1195
  %v1197 = vpop.f32.mrb[0].mxu0
  %v1198 = vpop.f32.mrb[0].mxu0
  %v1199 = vadd.f32 %v1102, %v1198
  %v1200 = vpop.f32.mrb[0].mxu0
  %1201 = vmatprep.mubr.bf16.mxu0 %v502
  %1202 = vmatmul.mubr.bf16.gmra.mrb[0].mxu0 %v501
  %v1203 = vpop.f32.mrb[0].mxu0
  %v1204 = vadd.f32 %v1107, %v1203
  %v1205 = vpop.f32.mrb[0].mxu0
  %v1206 = vpop.f32.mrb[0].mxu0
  %v1207 = vadd.f32 %v1110, %v1206
  %v1208 = vpop.f32.mrb[0].mxu0
  %1209 = vmatprep.mubr.bf16.mxu0 %v511
  %1210 = vmatmul.mubr.bf16.gmra.mrb[0].mxu0 %v510
  %v1211 = vpop.f32.mrb[0].mxu0
  %v1212 = vadd.f32 %v1115, %v1211
  %v1213 = vpop.f32.mrb[0].mxu0
  %v1214 = vpop.f32.mrb[0].mxu0
  %v1215 = vadd.f32 %v1118, %v1214
  %v1216 = vpop.f32.mrb[0].mxu0
  %1217 = vmatprep.mubr.bf16.mxu0 %v520
  %1218 = vmatmul.mubr.bf16.gmra.mrb[0].mxu0 %v519
  %v1219 = vpop.f32.mrb[0].mxu0
  %v1220 = vadd.f32 %v1123, %v1219
  %v1221 = vpop.f32.mrb[0].mxu0
  %v1222 = vpop.f32.mrb[0].mxu0
  %v1223 = vadd.f32 %v1126, %v1222
  %v1224 = vpop.f32.mrb[0].mxu0
  %1225 = vmatprep.mubr.bf16.mxu0 %v529
  %1226 = vmatmul.mubr.bf16.gmra.mrb[0].mxu0 %v528
  %v1227 = vpop.f32.mrb[0].mxu0
  %v1228 = vadd.f32 %v1131, %v1227
  %v1229 = vpop.f32.mrb[0].mxu0
  %v1230 = vpop.f32.mrb[0].mxu0
  %v1231 = vadd.f32 %v1134, %v1230
  %v1232 = vpop.f32.mrb[0].mxu0
  %1233 = vmatprep.mubr.bf16.mxu0 %v538
  %1234 = vmatmul.mubr.bf16.gmra.mrb[0].mxu0 %v537
  %v1235 = vpop.f32.mrb[0].mxu0
  %v1236 = vadd.f32 %v1139, %v1235
  %v1237 = vpop.f32.mrb[0].mxu0
  %v1238 = vpop.f32.mrb[0].mxu0
  %v1239 = vadd.f32 %v1142, %v1238
  %v1240 = vpop.f32.mrb[0].mxu0
  %1241 = vdwg.mxu0
  %1242 = vmatprep.subr.bf16.mxu0 0
  %1243 = vmatpush1.bf16.msra.mxu0 %v936
  %1244 = vmatprep.subr.bf16.mxu0 0
  %1245 = vmatpush1.bf16.msra.mxu0 %v937
  %1246 = vmatprep.subr.bf16.mxu0 0
  %1247 = vmatpush1.bf16.msra.mxu0 %v938
  %1248 = vmatprep.subr.bf16.mxu0 0
  %1249 = vmatpush1.bf16.msra.mxu0 %v939
  %1250 = vmatprep.subr.bf16.mxu0 0
  %1251 = vmatpush1.bf16.msra.mxu0 %v940
  %1252 = vmatprep.subr.bf16.mxu0 0
  %1253 = vmatpush1.bf16.msra.mxu0 %v941
  %1254 = vmatprep.subr.bf16.mxu0 0
  %1255 = vmatpush1.bf16.msra.mxu0 %v942
  %1256 = vmatprep.subr.bf16.mxu0 0
  %1257 = vmatpush1.bf16.msra.mxu0 %v943
  %1258 = vmatprep.subr.bf16.mxu0 0
  %1259 = vmatpush1.bf16.msra.mxu0 %v944
  %1260 = vmatprep.subr.bf16.mxu0 0
  %1261 = vmatpush1.bf16.msra.mxu0 %v945
  %1262 = vmatprep.subr.bf16.mxu0 0
  %1263 = vmatpush1.bf16.msra.mxu0 %v946
  %1264 = vmatprep.subr.bf16.mxu0 0
  %1265 = vmatpush1.bf16.msra.mxu0 %v947
  %1266 = vmatprep.subr.bf16.mxu0 0
  %1267 = vmatpush1.bf16.msra.mxu0 %v948
  %1268 = vmatprep.subr.bf16.mxu0 0
  %1269 = vmatpush1.bf16.msra.mxu0 %v949
  %1270 = vmatprep.subr.bf16.mxu0 0
  %1271 = vmatpush1.bf16.msra.mxu0 %v950
  %1272 = vmatprep.subr.bf16.mxu0 0
  %1273 = vmatpush1.bf16.msra.mxu0 %v951
  %1274 = vmatprep.mubr.bf16.mxu0 %v477
  %1275 = vmatmul.mubr.bf16.gmra.mrb[0].mxu0 %v476
  %v1276 = vpop.f32.mrb[0].mxu0
  %v1277 = vadd.f32 %v1180, %v1276
  %v1278 = vpop.f32.mrb[0].mxu0
  %v1279 = vpop.f32.mrb[0].mxu0
  %v1280 = vadd.f32 %v1183, %v1279
  %v1281 = vpop.f32.mrb[0].mxu0
  %1282 = vmatprep.mubr.bf16.mxu0 %v486
  %1283 = vmatmul.mubr.bf16.gmra.mrb[0].mxu0 %v485
  %v1284 = vpop.f32.mrb[0].mxu0
  %v1285 = vadd.f32 %v1188, %v1284
  %v1286 = vpop.f32.mrb[0].mxu0
  %v1287 = vpop.f32.mrb[0].mxu0
  %v1288 = vadd.f32 %v1191, %v1287
  %v1289 = vpop.f32.mrb[0].mxu0
  %1290 = vmatprep.mubr.bf16.mxu0 %v495
  %1291 = vmatmul.mubr.bf16.gmra.mrb[0].mxu0 %v494
  %v1292 = vpop.f32.mrb[0].mxu0
  %v1293 = vadd.f32 %v1196, %v1292
  %v1294 = vpop.f32.mrb[0].mxu0
  %v1295 = vpop.f32.mrb[0].mxu0
  %v1296 = vadd.f32 %v1199, %v1295
  %v1297 = vpop.f32.mrb[0].mxu0
  %1298 = vmatprep.mubr.bf16.mxu0 %v504
  %1299 = vmatmul.mubr.bf16.gmra.mrb[0].mxu0 %v503
  %v1300 = vpop.f32.mrb[0].mxu0
  %v1301 = vadd.f32 %v1204, %v1300
  %v1302 = vpop.f32.mrb[0].mxu0
  %v1303 = vpop.f32.mrb[0].mxu0
  %v1304 = vadd.f32 %v1207, %v1303
  %v1305 = vpop.f32.mrb[0].mxu0
  %1306 = vmatprep.mubr.bf16.mxu0 %v513
  %1307 = vmatmul.mubr.bf16.gmra.mrb[0].mxu0 %v512
  %v1308 = vpop.f32.mrb[0].mxu0
  %v1309 = vadd.f32 %v1212, %v1308
  %v1310 = vpop.f32.mrb[0].mxu0
  %v1311 = vpop.f32.mrb[0].mxu0
  %v1312 = vadd.f32 %v1215, %v1311
  %v1313 = vpop.f32.mrb[0].mxu0
  %1314 = vmatprep.mubr.bf16.mxu0 %v522
  %1315 = vmatmul.mubr.bf16.gmra.mrb[0].mxu0 %v521
  %v1316 = vpop.f32.mrb[0].mxu0
  %v1317 = vadd.f32 %v1220, %v1316
  %v1318 = vpop.f32.mrb[0].mxu0
  %v1319 = vpop.f32.mrb[0].mxu0
  %v1320 = vadd.f32 %v1223, %v1319
  %v1321 = vpop.f32.mrb[0].mxu0
  %1322 = vmatprep.mubr.bf16.mxu0 %v531
  %1323 = vmatmul.mubr.bf16.gmra.mrb[0].mxu0 %v530
  %v1324 = vpop.f32.mrb[0].mxu0
  %v1325 = vadd.f32 %v1228, %v1324
  %v1326 = vpop.f32.mrb[0].mxu0
  %v1327 = vpop.f32.mrb[0].mxu0
  %v1328 = vadd.f32 %v1231, %v1327
  %v1329 = vpop.f32.mrb[0].mxu0
  %1330 = vmatprep.mubr.bf16.mxu0 %v540
  %1331 = vmatmul.mubr.bf16.gmra.mrb[0].mxu0 %v539
  %v1332 = vpop.f32.mrb[0].mxu0
  %v1333 = vadd.f32 %v1236, %v1332
  %v1334 = vpop.f32.mrb[0].mxu0
  %v1335 = vpop.f32.mrb[0].mxu0
  %v1336 = vadd.f32 %v1239, %v1335
  %v1337 = vpop.f32.mrb[0].mxu0
  %1338 = vdwg.mxu0
  %1339 = vmatprep.subr.bf16.mxu0 0
  %1340 = vmatpush1.bf16.msra.mxu0 %v952
  %1341 = vmatprep.subr.bf16.mxu0 0
  %1342 = vmatpush1.bf16.msra.mxu0 %v953
  %1343 = vmatprep.subr.bf16.mxu0 0
  %1344 = vmatpush1.bf16.msra.mxu0 %v954
  %1345 = vmatprep.subr.bf16.mxu0 0
  %1346 = vmatpush1.bf16.msra.mxu0 %v955
  %1347 = vmatprep.subr.bf16.mxu0 0
  %1348 = vmatpush1.bf16.msra.mxu0 %v956
  %1349 = vmatprep.subr.bf16.mxu0 0
  %1350 = vmatpush1.bf16.msra.mxu0 %v957
  %1351 = vmatprep.subr.bf16.mxu0 0
  %1352 = vmatpush1.bf16.msra.mxu0 %v958
  %1353 = vmatprep.subr.bf16.mxu0 0
  %1354 = vmatpush1.bf16.msra.mxu0 %v959
  %1355 = vmatprep.subr.bf16.mxu0 0
  %1356 = vmatpush1.bf16.msra.mxu0 %v960
  %1357 = vmatprep.subr.bf16.mxu0 0
  %1358 = vmatpush1.bf16.msra.mxu0 %v961
  %1359 = vmatprep.subr.bf16.mxu0 0
  %1360 = vmatpush1.bf16.msra.mxu0 %v962
  %1361 = vmatprep.subr.bf16.mxu0 0
  %1362 = vmatpush1.bf16.msra.mxu0 %v963
  %1363 = vmatprep.subr.bf16.mxu0 0
  %1364 = vmatpush1.bf16.msra.mxu0 %v964
  %1365 = vmatprep.subr.bf16.mxu0 0
  %1366 = vmatpush1.bf16.msra.mxu0 %v965
  %1367 = vmatprep.subr.bf16.mxu0 0
  %1368 = vmatpush1.bf16.msra.mxu0 %v966
  %1369 = vmatprep.subr.bf16.mxu0 0
  %1370 = vmatpush1.bf16.msra.mxu0 %v967
  %1371 = vmatprep.mubr.bf16.mxu0 %v479
  %1372 = vmatmul.mubr.bf16.gmra.mrb[0].mxu0 %v478
  %v1373 = vpop.f32.mrb[0].mxu0
  %v1374 = vadd.f32 %v1277, %v1373
  %v1375 = vpop.f32.mrb[0].mxu0
  %v1376 = vpop.f32.mrb[0].mxu0
  %v1377 = vadd.f32 %v1280, %v1376
  %v1378 = vpop.f32.mrb[0].mxu0
  %1379 = vmatprep.mubr.bf16.mxu0 %v488
  %1380 = vmatmul.mubr.bf16.gmra.mrb[0].mxu0 %v487
  %v1381 = vpop.f32.mrb[0].mxu0
  %v1382 = vadd.f32 %v1285, %v1381
  %v1383 = vpop.f32.mrb[0].mxu0
  %v1384 = vpop.f32.mrb[0].mxu0
  %v1385 = vadd.f32 %v1288, %v1384
  %v1386 = vpop.f32.mrb[0].mxu0
  %1387 = vmatprep.mubr.bf16.mxu0 %v497
  %1388 = vmatmul.mubr.bf16.gmra.mrb[0].mxu0 %v496
  %v1389 = vpop.f32.mrb[0].mxu0
  %v1390 = vadd.f32 %v1293, %v1389
  %v1391 = vpop.f32.mrb[0].mxu0
  %v1392 = vpop.f32.mrb[0].mxu0
  %v1393 = vadd.f32 %v1296, %v1392
  %v1394 = vpop.f32.mrb[0].mxu0
  %1395 = vmatprep.mubr.bf16.mxu0 %v506
  %1396 = vmatmul.mubr.bf16.gmra.mrb[0].mxu0 %v505
  %v1397 = vpop.f32.mrb[0].mxu0
  %v1398 = vadd.f32 %v1301, %v1397
  %v1399 = vpop.f32.mrb[0].mxu0
  %v1400 = vpop.f32.mrb[0].mxu0
  %v1401 = vadd.f32 %v1304, %v1400
  %v1402 = vpop.f32.mrb[0].mxu0
  %1403 = vmatprep.mubr.bf16.mxu0 %v515
  %1404 = vmatmul.mubr.bf16.gmra.mrb[0].mxu0 %v514
  %v1405 = vpop.f32.mrb[0].mxu0
  %v1406 = vadd.f32 %v1309, %v1405
  %v1407 = vpop.f32.mrb[0].mxu0
  %v1408 = vpop.f32.mrb[0].mxu0
  %v1409 = vadd.f32 %v1312, %v1408
  %v1410 = vpop.f32.mrb[0].mxu0
  %1411 = vmatprep.mubr.bf16.mxu0 %v524
  %1412 = vmatmul.mubr.bf16.gmra.mrb[0].mxu0 %v523
  %v1413 = vpop.f32.mrb[0].mxu0
  %v1414 = vadd.f32 %v1317, %v1413
  %v1415 = vpop.f32.mrb[0].mxu0
  %v1416 = vpop.f32.mrb[0].mxu0
  %v1417 = vadd.f32 %v1320, %v1416
  %v1418 = vpop.f32.mrb[0].mxu0
  %1419 = vmatprep.mubr.bf16.mxu0 %v533
  %1420 = vmatmul.mubr.bf16.gmra.mrb[0].mxu0 %v532
  %v1421 = vpop.f32.mrb[0].mxu0
  %v1422 = vadd.f32 %v1325, %v1421
  %v1423 = vpop.f32.mrb[0].mxu0
  %v1424 = vpop.f32.mrb[0].mxu0
  %v1425 = vadd.f32 %v1328, %v1424
  %v1426 = vpop.f32.mrb[0].mxu0
  %1427 = vmatprep.mubr.bf16.mxu0 %v542
  %1428 = vmatmul.mubr.bf16.gmra.mrb[0].mxu0 %v541
  %v1429 = vpop.f32.mrb[0].mxu0
  %v1430 = vadd.f32 %v1333, %v1429
  %v1431 = vpop.f32.mrb[0].mxu0
  %v1432 = vpop.f32.mrb[0].mxu0
  %v1433 = vadd.f32 %v1336, %v1432
  %v1434 = vpop.f32.mrb[0].mxu0
  %1435 = vdwg.mxu0
  %1436 = vmatprep.subr.bf16.mxu0 0
  %1437 = vmatpush1.bf16.msra.mxu0 %v968
  %1438 = vmatprep.subr.bf16.mxu0 0
  %1439 = vmatpush1.bf16.msra.mxu0 %v969
  %1440 = vmatprep.subr.bf16.mxu0 0
  %1441 = vmatpush1.bf16.msra.mxu0 %v970
  %1442 = vmatprep.subr.bf16.mxu0 0
  %1443 = vmatpush1.bf16.msra.mxu0 %v971
  %1444 = vmatprep.subr.bf16.mxu0 0
  %1445 = vmatpush1.bf16.msra.mxu0 %v972
  %1446 = vmatprep.subr.bf16.mxu0 0
  %1447 = vmatpush1.bf16.msra.mxu0 %v973
  %1448 = vmatprep.subr.bf16.mxu0 0
  %1449 = vmatpush1.bf16.msra.mxu0 %v974
  %1450 = vmatprep.subr.bf16.mxu0 0
  %1451 = vmatpush1.bf16.msra.mxu0 %v975
  %1452 = vmatprep.subr.bf16.mxu0 0
  %1453 = vmatpush1.bf16.msra.mxu0 0
  %1454 = vmatprep.subr.bf16.mxu0 0
  %1455 = vmatpush1.bf16.msra.mxu0 0
  %1456 = vmatprep.subr.bf16.mxu0 0
  %1457 = vmatpush1.bf16.msra.mxu0 0
  %1458 = vmatprep.subr.bf16.mxu0 0
  %1459 = vmatpush1.bf16.msra.mxu0 0
  %1460 = vmatprep.subr.bf16.mxu0 0
  %1461 = vmatpush1.bf16.msra.mxu0 0
  %1462 = vmatprep.subr.bf16.mxu0 0
  %1463 = vmatpush1.bf16.msra.mxu0 0
  %1464 = vmatprep.subr.bf16.mxu0 0
  %1465 = vmatpush1.bf16.msra.mxu0 0
  %1466 = vmatprep.subr.bf16.mxu0 0
  %1467 = vmatpush1.bf16.msra.mxu0 0
  %1468 = vmatprep.mubr.bf16.mxu0 0
  %1469 = vmatmul.mubr.bf16.gmra.mrb[0].mxu0 %v480
  %v1470 = vpop.f32.mrb[0].mxu0
  %v1471 = vadd.f32 %v1374, %v1470
  %v1472 = vpop.f32.mrb[0].mxu0
  %v1473 = vpop.f32.mrb[0].mxu0
  %v1474 = vadd.f32 %v1377, %v1473
  %v1475 = vpop.f32.mrb[0].mxu0
  %1476 = vmatprep.mubr.bf16.mxu0 0
  %1477 = vmatmul.mubr.bf16.gmra.mrb[0].mxu0 %v489
  %v1478 = vpop.f32.mrb[0].mxu0
  %v1479 = vadd.f32 %v1382, %v1478
  %v1480 = vpop.f32.mrb[0].mxu0
  %v1481 = vpop.f32.mrb[0].mxu0
  %v1482 = vadd.f32 %v1385, %v1481
  %v1483 = vpop.f32.mrb[0].mxu0
  %1484 = vmatprep.mubr.bf16.mxu0 0
  %1485 = vmatmul.mubr.bf16.gmra.mrb[0].mxu0 %v498
  %v1486 = vpop.f32.mrb[0].mxu0
  %v1487 = vadd.f32 %v1390, %v1486
  %v1488 = vpop.f32.mrb[0].mxu0
  %v1489 = vpop.f32.mrb[0].mxu0
  %v1490 = vadd.f32 %v1393, %v1489
  %v1491 = vpop.f32.mrb[0].mxu0
  %1492 = vmatprep.mubr.bf16.mxu0 0
  %1493 = vmatmul.mubr.bf16.gmra.mrb[0].mxu0 %v507
  %v1494 = vpop.f32.mrb[0].mxu0
  %v1495 = vadd.f32 %v1398, %v1494
  %v1496 = vpop.f32.mrb[0].mxu0
  %v1497 = vpop.f32.mrb[0].mxu0
  %v1498 = vadd.f32 %v1401, %v1497
  %v1499 = vpop.f32.mrb[0].mxu0
  %1500 = vmatprep.mubr.bf16.mxu0 0
  %1501 = vmatmul.mubr.bf16.gmra.mrb[0].mxu0 %v516
  %v1502 = vpop.f32.mrb[0].mxu0
  %v1503 = vadd.f32 %v1406, %v1502
  %v1504 = vpop.f32.mrb[0].mxu0
  %v1505 = vpop.f32.mrb[0].mxu0
  %v1506 = vadd.f32 %v1409, %v1505
  %v1507 = vpop.f32.mrb[0].mxu0
  %1508 = vmatprep.mubr.bf16.mxu0 0
  %1509 = vmatmul.mubr.bf16.gmra.mrb[0].mxu0 %v525
  %v1510 = vpop.f32.mrb[0].mxu0
  %v1511 = vadd.f32 %v1414, %v1510
  %v1512 = vpop.f32.mrb[0].mxu0
  %v1513 = vpop.f32.mrb[0].mxu0
  %v1514 = vadd.f32 %v1417, %v1513
  %v1515 = vpop.f32.mrb[0].mxu0
  %1516 = vmatprep.mubr.bf16.mxu0 0
  %1517 = vmatmul.mubr.bf16.gmra.mrb[0].mxu0 %v534
  %v1518 = vpop.f32.mrb[0].mxu0
  %v1519 = vadd.f32 %v1422, %v1518
  %v1520 = vpop.f32.mrb[0].mxu0
  %v1521 = vpop.f32.mrb[0].mxu0
  %v1522 = vadd.f32 %v1425, %v1521
  %v1523 = vpop.f32.mrb[0].mxu0
  %1524 = vmatprep.mubr.bf16.mxu0 0
  %1525 = vmatmul.mubr.bf16.gmra.mrb[0].mxu0 %v543
  %v1526 = vpop.f32.mrb[0].mxu0
  %v1527 = vadd.f32 %v1430, %v1526
  %v1528 = vpop.f32.mrb[0].mxu0
  %v1529 = vpop.f32.mrb[0].mxu0
  %v1530 = vadd.f32 %v1433, %v1529
  %v1531 = vpop.f32.mrb[0].mxu0
  %1532 = vdwg.mxu0
  %v1533 = vld [vmem:[%s2] sm:$0x1]
  %v1534 = vlaneseq
  %v1535 = vshrl.u32 %v1534, 7
  %v1536 = vsub.s32 0, %v1535
  %v1537 = vrot.slane %v1533, %v1536
  %v1538 = vmul.f32 %v1471, %v1537
  %v1539 = vmul.f32 %v1474, %v1537
  %v1540 = vmul.f32 %v1479, %v1537
  %v1541 = vmul.f32 %v1482, %v1537
  %v1542 = vmul.f32 %v1487, %v1537
  %v1543 = vmul.f32 %v1490, %v1537
  %v1544 = vmul.f32 %v1495, %v1537
  %v1545 = vmul.f32 %v1498, %v1537
  %v1546 = vmul.f32 %v1503, %v1537
  %v1547 = vmul.f32 %v1506, %v1537
  %v1548 = vmul.f32 %v1511, %v1537
  %v1549 = vmul.f32 %v1514, %v1537
  %v1550 = vmul.f32 %v1519, %v1537
  %v1551 = vmul.f32 %v1522, %v1537
  %v1552 = vmul.f32 %v1527, %v1537
  %v1553 = vmul.f32 %v1530, %v1537
  %v1554 = vld [vmem:[%s2 + $0x1] sm:$0x1]
  %v1555 = vlaneseq
  %v1556 = vshrl.u32 %v1555, 7
  %v1557 = vsub.s32 0, %v1556
  %v1558 = vrot.slane %v1554, %v1557
  %v1559 = vadd.f32 %v1538, %v1558
  %v1560 = vadd.f32 %v1539, %v1558
  %v1561 = vadd.f32 %v1540, %v1558
  %v1562 = vadd.f32 %v1541, %v1558
  %v1563 = vadd.f32 %v1542, %v1558
  %v1564 = vadd.f32 %v1543, %v1558
  %v1565 = vadd.f32 %v1544, %v1558
  %v1566 = vadd.f32 %v1545, %v1558
  %v1567 = vadd.f32 %v1546, %v1558
  %v1568 = vadd.f32 %v1547, %v1558
  %v1569 = vadd.f32 %v1548, %v1558
  %v1570 = vadd.f32 %v1549, %v1558
  %v1571 = vadd.f32 %v1550, %v1558
  %v1572 = vadd.f32 %v1551, %v1558
  %v1573 = vadd.f32 %v1552, %v1558
  %v1574 = vadd.f32 %v1553, %v1558
  %v1575 = vmax.f32 %v1559, 0.0
  %v1576 = vmax.f32 %v1560, 0.0
  %v1577 = vmax.f32 %v1561, 0.0
  %v1578 = vmax.f32 %v1562, 0.0
  %v1579 = vmax.f32 %v1563, 0.0
  %v1580 = vmax.f32 %v1564, 0.0
  %v1581 = vmax.f32 %v1565, 0.0
  %v1582 = vmax.f32 %v1566, 0.0
  %v1583 = vmax.f32 %v1567, 0.0
  %v1584 = vmax.f32 %v1568, 0.0
  %v1585 = vmax.f32 %v1569, 0.0
  %v1586 = vmax.f32 %v1570, 0.0
  %v1587 = vmax.f32 %v1571, 0.0
  %v1588 = vmax.f32 %v1572, 0.0
  %v1589 = vmax.f32 %v1573, 0.0
  %v1590 = vmax.f32 %v1574, 0.0
  %v1591 = vpack.c.bf16 %v1576, %v1575
  %v1592 = vpack.c.bf16 %v1578, %v1577
  %v1593 = vpack.c.bf16 %v1580, %v1579
  %v1594 = vpack.c.bf16 %v1582, %v1581
  %v1595 = vpack.c.bf16 %v1584, %v1583
  %v1596 = vpack.c.bf16 %v1586, %v1585
  %v1597 = vpack.c.bf16 %v1588, %v1587
  %v1598 = vpack.c.bf16 %v1590, %v1589
  %v1599 = vld [vmem:[%s3] sm:$0xf]
  %v1600 = vld [vmem:[%s3 + $0x4] sm:$0xf]
  %v1601 = vld [vmem:[%s3 + $0x8] sm:$0xf]
  %v1602 = vld [vmem:[%s3 + $0xc] sm:$0xf]
  %v1603 = vld [vmem:[%s3 + $0x10] sm:$0xf]
  %v1604 = vld [vmem:[%s3 + $0x14] sm:$0xf]
  %v1605 = vld [vmem:[%s3 + $0x18] sm:$0xf]
  %v1606 = vld [vmem:[%s3 + $0x1c] sm:$0xf]
  %v1607 = vld [vmem:[%s3 + $0x20] sm:$0xf]
  %v1608 = vld [vmem:[%s3 + $0x24] sm:$0xf]
  %v1609 = vld [vmem:[%s3 + $0x28] sm:$0xf]
  %v1610 = vld [vmem:[%s3 + $0x2c] sm:$0xf]
  %v1611 = vld [vmem:[%s3 + $0x30] sm:$0xf]
  %v1612 = vld [vmem:[%s3 + $0x34] sm:$0xf]
  %v1613 = vld [vmem:[%s3 + $0x38] sm:$0xf]
  %v1614 = vld [vmem:[%s3 + $0x3c] sm:$0xf]
  %v1631 = vunpack.c.l.b16 %v1599
  %v1632 = vunpack.c.l.b16 %v1600
  %v1633 = vunpack.c.l.b16 %v1601
  %v1634 = vunpack.c.l.b16 %v1602
  %v1635 = vunpack.c.l.b16 %v1603
  %v1636 = vunpack.c.l.b16 %v1604
  %v1637 = vunpack.c.l.b16 %v1605
  %v1638 = vunpack.c.l.b16 %v1606
  %v1639 = vunpack.c.l.b16 %v1607
  %v1640 = vunpack.c.l.b16 %v1608
  %v1641 = vunpack.c.l.b16 %v1609
  %v1642 = vunpack.c.l.b16 %v1610
  %v1643 = vunpack.c.l.b16 %v1611
  %v1644 = vunpack.c.l.b16 %v1612
  %v1645 = vunpack.c.l.b16 %v1613
  %v1646 = vunpack.c.l.b16 %v1614
  %v1647 = vpack.c.b16 %v1632, %v1631
  %v1648 = vpack.c.b16 %v1634, %v1633
  %v1649 = vpack.c.b16 %v1636, %v1635
  %v1650 = vpack.c.b16 %v1638, %v1637
  %v1651 = vpack.c.b16 %v1640, %v1639
  %v1652 = vpack.c.b16 %v1642, %v1641
  %v1653 = vpack.c.b16 %v1644, %v1643
  %v1654 = vpack.c.b16 %v1646, %v1645
  %1663 = vmatprep.subr.bf16.mxu0 0
  %1664 = vmatpush1.bf16.msra.mxu0 %v1647
  %1665 = vmatprep.subr.bf16.mxu0 0
  %1666 = vmatpush1.bf16.msra.mxu0 %v1648
  %1667 = vmatprep.subr.bf16.mxu0 0
  %1668 = vmatpush1.bf16.msra.mxu0 %v1649
  %1669 = vmatprep.subr.bf16.mxu0 0
  %1670 = vmatpush1.bf16.msra.mxu0 %v1650
  %1671 = vmatprep.subr.bf16.mxu0 0
  %1672 = vmatpush1.bf16.msra.mxu0 %v1651
  %1673 = vmatprep.subr.bf16.mxu0 0
  %1674 = vmatpush1.bf16.msra.mxu0 %v1652
  %1675 = vmatprep.subr.bf16.mxu0 0
  %1676 = vmatpush1.bf16.msra.mxu0 %v1653
  %1677 = vmatprep.subr.bf16.mxu0 0
  %1678 = vmatpush1.bf16.msra.mxu0 %v1654
  %1679 = vmatprep.subr.bf16.mxu0 0
  %1680 = vmatpush1.bf16.msra.mxu0 0
  %1681 = vmatprep.subr.bf16.mxu0 0
  %1682 = vmatpush1.bf16.msra.mxu0 0
  %1683 = vmatprep.subr.bf16.mxu0 0
  %1684 = vmatpush1.bf16.msra.mxu0 0
  %1685 = vmatprep.subr.bf16.mxu0 0
  %1686 = vmatpush1.bf16.msra.mxu0 0
  %1687 = vmatprep.subr.bf16.mxu0 0
  %1688 = vmatpush1.bf16.msra.mxu0 0
  %1689 = vmatprep.subr.bf16.mxu0 0
  %1690 = vmatpush1.bf16.msra.mxu0 0
  %1691 = vmatprep.subr.bf16.mxu0 0
  %1692 = vmatpush1.bf16.msra.mxu0 0
  %1693 = vmatprep.subr.bf16.mxu0 0
  %1694 = vmatpush1.bf16.msra.mxu0 0
  %1695 = vmatprep.mubr.bf16.mxu0 0
  %1696 = vmatmul.mubr.bf16.gmra.mrb[0].mxu0 %v1591
  %v1697 = vpop.f32.mrb[0].mxu0
  %v1698 = vadd.f32 0.0, %v1697
  %v1699 = vpop.f32.mrb[0].mxu0
  %v1700 = vpop.f32.mrb[0].mxu0
  %v1701 = vadd.f32 0.0, %v1700
  %v1702 = vpop.f32.mrb[0].mxu0
  %1703 = vmatprep.mubr.bf16.mxu0 0
  %1704 = vmatmul.mubr.bf16.gmra.mrb[0].mxu0 %v1592
  %v1705 = vpop.f32.mrb[0].mxu0
  %v1706 = vadd.f32 0.0, %v1705
  %v1707 = vpop.f32.mrb[0].mxu0
  %v1708 = vpop.f32.mrb[0].mxu0
  %v1709 = vadd.f32 0.0, %v1708
  %v1710 = vpop.f32.mrb[0].mxu0
  %1711 = vmatprep.mubr.bf16.mxu0 0
  %1712 = vmatmul.mubr.bf16.gmra.mrb[0].mxu0 %v1593
  %v1713 = vpop.f32.mrb[0].mxu0
  %v1714 = vadd.f32 0.0, %v1713
  %v1715 = vpop.f32.mrb[0].mxu0
  %v1716 = vpop.f32.mrb[0].mxu0
  %v1717 = vadd.f32 0.0, %v1716
  %v1718 = vpop.f32.mrb[0].mxu0
  %1719 = vmatprep.mubr.bf16.mxu0 0
  %1720 = vmatmul.mubr.bf16.gmra.mrb[0].mxu0 %v1594
  %v1721 = vpop.f32.mrb[0].mxu0
  %v1722 = vadd.f32 0.0, %v1721
  %v1723 = vpop.f32.mrb[0].mxu0
  %v1724 = vpop.f32.mrb[0].mxu0
  %v1725 = vadd.f32 0.0, %v1724
  %v1726 = vpop.f32.mrb[0].mxu0
  %1727 = vmatprep.mubr.bf16.mxu0 0
  %1728 = vmatmul.mubr.bf16.gmra.mrb[0].mxu0 %v1595
  %v1729 = vpop.f32.mrb[0].mxu0
  %v1730 = vadd.f32 0.0, %v1729
  %v1731 = vpop.f32.mrb[0].mxu0
  %v1732 = vpop.f32.mrb[0].mxu0
  %v1733 = vadd.f32 0.0, %v1732
  %v1734 = vpop.f32.mrb[0].mxu0
  %1735 = vmatprep.mubr.bf16.mxu0 0
  %1736 = vmatmul.mubr.bf16.gmra.mrb[0].mxu0 %v1596
  %v1737 = vpop.f32.mrb[0].mxu0
  %v1738 = vadd.f32 0.0, %v1737
  %v1739 = vpop.f32.mrb[0].mxu0
  %v1740 = vpop.f32.mrb[0].mxu0
  %v1741 = vadd.f32 0.0, %v1740
  %v1742 = vpop.f32.mrb[0].mxu0
  %1743 = vmatprep.mubr.bf16.mxu0 0
  %1744 = vmatmul.mubr.bf16.gmra.mrb[0].mxu0 %v1597
  %v1745 = vpop.f32.mrb[0].mxu0
  %v1746 = vadd.f32 0.0, %v1745
  %v1747 = vpop.f32.mrb[0].mxu0
  %v1748 = vpop.f32.mrb[0].mxu0
  %v1749 = vadd.f32 0.0, %v1748
  %v1750 = vpop.f32.mrb[0].mxu0
  %1751 = vmatprep.mubr.bf16.mxu0 0
  %1752 = vmatmul.mubr.bf16.gmra.mrb[0].mxu0 %v1598
  %v1753 = vpop.f32.mrb[0].mxu0
  %v1754 = vadd.f32 0.0, %v1753
  %v1755 = vpop.f32.mrb[0].mxu0
  %v1756 = vpop.f32.mrb[0].mxu0
  %v1757 = vadd.f32 0.0, %v1756
  %v1758 = vpop.f32.mrb[0].mxu0
  %1759 = vdwg.mxu0
  %v1760 = vld [vmem:[%s4] sm:$0x1]
  %v1761 = vlaneseq
  %v1762 = vshrl.u32 %v1761, 7
  %v1763 = vsub.s32 0, %v1762
  %v1764 = vrot.slane %v1760, %v1763
  %v1765 = vmul.f32 %v1698, %v1764
  %v1766 = vmul.f32 %v1701, %v1764
  %v1767 = vmul.f32 %v1706, %v1764
  %v1768 = vmul.f32 %v1709, %v1764
  %v1769 = vmul.f32 %v1714, %v1764
  %v1770 = vmul.f32 %v1717, %v1764
  %v1771 = vmul.f32 %v1722, %v1764
  %v1772 = vmul.f32 %v1725, %v1764
  %v1773 = vmul.f32 %v1730, %v1764
  %v1774 = vmul.f32 %v1733, %v1764
  %v1775 = vmul.f32 %v1738, %v1764
  %v1776 = vmul.f32 %v1741, %v1764
  %v1777 = vmul.f32 %v1746, %v1764
  %v1778 = vmul.f32 %v1749, %v1764
  %v1779 = vmul.f32 %v1754, %v1764
  %v1780 = vmul.f32 %v1757, %v1764
  %v1781 = vld [vmem:[%s4 + $0x1] sm:$0x1]
  %v1782 = vlaneseq
  %v1783 = vshrl.u32 %v1782, 7
  %v1784 = vsub.s32 0, %v1783
  %v1785 = vrot.slane %v1781, %v1784
  %v1786 = vadd.f32 %v1765, %v1785
  %v1787 = vadd.f32 %v1766, %v1785
  %v1788 = vadd.f32 %v1767, %v1785
  %v1789 = vadd.f32 %v1768, %v1785
  %v1790 = vadd.f32 %v1769, %v1785
  %v1791 = vadd.f32 %v1770, %v1785
  %v1792 = vadd.f32 %v1771, %v1785
  %v1793 = vadd.f32 %v1772, %v1785
  %v1794 = vadd.f32 %v1773, %v1785
  %v1795 = vadd.f32 %v1774, %v1785
  %v1796 = vadd.f32 %v1775, %v1785
  %v1797 = vadd.f32 %v1776, %v1785
  %v1798 = vadd.f32 %v1777, %v1785
  %v1799 = vadd.f32 %v1778, %v1785
  %v1800 = vadd.f32 %v1779, %v1785
  %v1801 = vadd.f32 %v1780, %v1785
  %v1802 = vld [vmem:[%s5] sm:$0xf]
  %v1803 = vld [vmem:[%s5 + $0x4] sm:$0xf]
  %v1804 = vld [vmem:[%s5 + $0x8] sm:$0xf]
  %v1805 = vld [vmem:[%s5 + $0xc] sm:$0xf]
  %v1806 = vld [vmem:[%s5 + $0x10] sm:$0xf]
  %v1807 = vld [vmem:[%s5 + $0x14] sm:$0xf]
  %v1808 = vld [vmem:[%s5 + $0x18] sm:$0xf]
  %v1809 = vld [vmem:[%s5 + $0x1c] sm:$0xf]
  %v1810 = vld [vmem:[%s5 + $0x20] sm:$0xf]
  %v1811 = vld [vmem:[%s5 + $0x24] sm:$0xf]
  %v1812 = vld [vmem:[%s5 + $0x28] sm:$0xf]
  %v1813 = vld [vmem:[%s5 + $0x2c] sm:$0xf]
  %v1814 = vld [vmem:[%s5 + $0x30] sm:$0xf]
  %v1815 = vld [vmem:[%s5 + $0x34] sm:$0xf]
  %v1816 = vld [vmem:[%s5 + $0x38] sm:$0xf]
  %v1817 = vld [vmem:[%s5 + $0x3c] sm:$0xf]
  %v1818 = vunpack.c.l.bf16 %v1802
  %v1819 = vunpack.c.l.bf16 %v1803
  %v1820 = vunpack.c.l.bf16 %v1804
  %v1821 = vunpack.c.l.bf16 %v1805
  %v1822 = vunpack.c.l.bf16 %v1806
  %v1823 = vunpack.c.l.bf16 %v1807
  %v1824 = vunpack.c.l.bf16 %v1808
  %v1825 = vunpack.c.l.bf16 %v1809
  %v1826 = vunpack.c.l.bf16 %v1810
  %v1827 = vunpack.c.l.bf16 %v1811
  %v1828 = vunpack.c.l.bf16 %v1812
  %v1829 = vunpack.c.l.bf16 %v1813
  %v1830 = vunpack.c.l.bf16 %v1814
  %v1831 = vunpack.c.l.bf16 %v1815
  %v1832 = vunpack.c.l.bf16 %v1816
  %v1833 = vunpack.c.l.bf16 %v1817
  %v1834 = vadd.f32 %v1786, %v1818
  %v1835 = vadd.f32 %v1787, %v1819
  %v1836 = vadd.f32 %v1788, %v1820
  %v1837 = vadd.f32 %v1789, %v1821
  %v1838 = vadd.f32 %v1790, %v1822
  %v1839 = vadd.f32 %v1791, %v1823
  %v1840 = vadd.f32 %v1792, %v1824
  %v1841 = vadd.f32 %v1793, %v1825
  %v1842 = vadd.f32 %v1794, %v1826
  %v1843 = vadd.f32 %v1795, %v1827
  %v1844 = vadd.f32 %v1796, %v1828
  %v1845 = vadd.f32 %v1797, %v1829
  %v1846 = vadd.f32 %v1798, %v1830
  %v1847 = vadd.f32 %v1799, %v1831
  %v1848 = vadd.f32 %v1800, %v1832
  %v1849 = vadd.f32 %v1801, %v1833
  %v1850 = vmax.f32 %v1834, 0.0
  %v1851 = vmax.f32 %v1835, 0.0
  %v1852 = vmax.f32 %v1836, 0.0
  %v1853 = vmax.f32 %v1837, 0.0
  %v1854 = vmax.f32 %v1838, 0.0
  %v1855 = vmax.f32 %v1839, 0.0
  %v1856 = vmax.f32 %v1840, 0.0
  %v1857 = vmax.f32 %v1841, 0.0
  %v1858 = vmax.f32 %v1842, 0.0
  %v1859 = vmax.f32 %v1843, 0.0
  %v1860 = vmax.f32 %v1844, 0.0
  %v1861 = vmax.f32 %v1845, 0.0
  %v1862 = vmax.f32 %v1846, 0.0
  %v1863 = vmax.f32 %v1847, 0.0
  %v1864 = vmax.f32 %v1848, 0.0
  %v1865 = vmax.f32 %v1849, 0.0
  %v1866 = vpack.c.bf16 %v1851, %v1850
  %v1867 = vpack.c.bf16 %v1853, %v1852
  %v1868 = vpack.c.bf16 %v1855, %v1854
  %v1869 = vpack.c.bf16 %v1857, %v1856
  %v1870 = vpack.c.bf16 %v1859, %v1858
  %v1871 = vpack.c.bf16 %v1861, %v1860
  %v1872 = vpack.c.bf16 %v1863, %v1862
  %v1873 = vpack.c.bf16 %v1865, %v1864
  %v1882 = vunpack.c.l.b16 %v1866
  %v1883 = vunpack.c.h.b16 %v1866
  %v1884 = vunpack.c.l.b16 %v1867
  %v1885 = vunpack.c.h.b16 %v1867
  %v1886 = vunpack.c.l.b16 %v1868
  %v1887 = vunpack.c.h.b16 %v1868
  %v1888 = vunpack.c.l.b16 %v1869
  %v1889 = vunpack.c.h.b16 %v1869
  %v1890 = vunpack.c.l.b16 %v1870
  %v1891 = vunpack.c.h.b16 %v1870
  %v1892 = vunpack.c.l.b16 %v1871
  %v1893 = vunpack.c.h.b16 %v1871
  %v1894 = vunpack.c.l.b16 %v1872
  %v1895 = vunpack.c.h.b16 %v1872
  %v1896 = vunpack.c.l.b16 %v1873
  %v1897 = vunpack.c.h.b16 %v1873
  %v1898 = vpack.c.b16 %v1882, %v1882
  %v1899 = vpack.c.b16 %v1883, %v1883
  %v1900 = vpack.c.b16 %v1884, %v1884
  %v1901 = vpack.c.b16 %v1885, %v1885
  %v1902 = vpack.c.b16 %v1886, %v1886
  %v1903 = vpack.c.b16 %v1887, %v1887
  %v1904 = vpack.c.b16 %v1888, %v1888
  %v1905 = vpack.c.b16 %v1889, %v1889
  %v1906 = vpack.c.b16 %v1890, %v1890
  %v1907 = vpack.c.b16 %v1891, %v1891
  %v1908 = vpack.c.b16 %v1892, %v1892
  %v1909 = vpack.c.b16 %v1893, %v1893
  %v1910 = vpack.c.b16 %v1894, %v1894
  %v1911 = vpack.c.b16 %v1895, %v1895
  %v1912 = vpack.c.b16 %v1896, %v1896
  %v1913 = vpack.c.b16 %v1897, %v1897
  %1930 = vst [vmem:[%s6] sm:$0xf] %v1898
  %1931 = vst [vmem:[%s6 + $0x4] sm:$0xf] %v1899
  %1932 = vst [vmem:[%s6 + $0x8] sm:$0xf] %v1900
  %1933 = vst [vmem:[%s6 + $0xc] sm:$0xf] %v1901
  %1934 = vst [vmem:[%s6 + $0x10] sm:$0xf] %v1902
  %1935 = vst [vmem:[%s6 + $0x14] sm:$0xf] %v1903
  %1936 = vst [vmem:[%s6 + $0x18] sm:$0xf] %v1904
  %1937 = vst [vmem:[%s6 + $0x1c] sm:$0xf] %v1905
  %1938 = vst [vmem:[%s6 + $0x20] sm:$0xf] %v1906
  %1939 = vst [vmem:[%s6 + $0x24] sm:$0xf] %v1907
  %1940 = vst [vmem:[%s6 + $0x28] sm:$0xf] %v1908
  %1941 = vst [vmem:[%s6 + $0x2c] sm:$0xf] %v1909
  %1942 = vst [vmem:[%s6 + $0x30] sm:$0xf] %v1910
  %1943 = vst [vmem:[%s6 + $0x34] sm:$0xf] %v1911
  %1944 = vst [vmem:[%s6 + $0x38] sm:$0xf] %v1912
  %1945 = vst [vmem:[%s6 + $0x3c] sm:$0xf] %v1913
  // Predicated region
  $region26: #{resnetfc_forward.48} parent=0 // pred_check
    _
  $region27: #{resnetfc_forward.48} parent=0 // pred_check_branch
    %1947 = sbr.rel (0) target = $region29
  $region28: #{resnetfc_forward.48} parent=0 // pred_region
    _
  $region29: #{resnetfc_forward.48} parent=0 // pred_fallthru
    _
  // Predicated region
  $region30: #{resnetfc_forward.48} parent=0 // pred_check
    _
  $region31: #{resnetfc_forward.48} parent=0 // pred_check_branch
    %1949 = sbr.rel (0) target = $region33
  $region32: #{resnetfc_forward.48} parent=0 // pred_region
    _
  $region33: #{resnetfc_forward.48} parent=0 // pred_fallthru
    _

// kernel: resnetfc_forward.56
$region0: #{resnetfc_forward.56}
  #allocation0 [shape = 'u32[]', space=smem, size = 0x4, offset = 0x4, fixed_abs, tag = 'smem constant byte address 0x4 - core index']
  #allocation1 [shape = 'u32[144,128]{1,0:T(1,128)}', space=vmem, size = 0x12000, scoped, tag = 'internal scratch']
  %s0 = inlined_call_operand.vmem [shape: bf16[32,128], index: 0, kind: input, shape index: {}]
  %s1 = inlined_call_operand.vmem [shape: bf16[128,128], index: 1, kind: input, shape index: {}]
  %s2 = inlined_call_operand.vmem [shape: f32[2,128], index: 2, kind: input, shape index: {}]
  %s3 = inlined_call_operand.vmem [shape: bf16[32,128], index: 3, kind: output, shape index: {}]
  %s4 = sld [smem:[#allocation0]]
  $region22: #{resnetfc_forward.56} parent=0
    _
  %s6 = ssub.s32 1, %s4
  %s7 = scalar_select 0, %s6, %s4
  // Predicated region
  $region2: #{resnetfc_forward.56} parent=0 // pred_check
    _
  $region3: #{resnetfc_forward.56} parent=0 // pred_check_branch
    %9 = sbr.rel (0) target = $region5
  $region4: #{resnetfc_forward.56} parent=0 // pred_region
    _
  $region5: #{resnetfc_forward.56} parent=0 // pred_fallthru
    _
  // Predicated region
  $region6: #{resnetfc_forward.56} parent=0 // pred_check
    _
  $region7: #{resnetfc_forward.56} parent=0 // pred_check_branch
    %11 = sbr.rel (0) target = $region9
  $region8: #{resnetfc_forward.56} parent=0 // pred_region
    _
  $region9: #{resnetfc_forward.56} parent=0 // pred_fallthru
    _
  // Predicated region
  $region10: #{resnetfc_forward.56} parent=0 // pred_check
    _
  $region11: #{resnetfc_forward.56} parent=0 // pred_check_branch
    %13 = sbr.rel (0) target = $region13
  $region12: #{resnetfc_forward.56} parent=0 // pred_region
    _
  $region13: #{resnetfc_forward.56} parent=0 // pred_fallthru
    _
  %v15 = vld [vmem:[%s0] sm:$0xf]
  %v16 = vld [vmem:[%s0 + $0x4] sm:$0xf]
  %v17 = vld [vmem:[%s0 + $0x8] sm:$0xf]
  %v18 = vld [vmem:[%s0 + $0xc] sm:$0xf]
  %v19 = vld [vmem:[%s1] sm:$0xf]
  %v20 = vld [vmem:[%s1 + $0x4] sm:$0xf]
  %v21 = vld [vmem:[%s1 + $0x8] sm:$0xf]
  %v22 = vld [vmem:[%s1 + $0xc] sm:$0xf]
  %v23 = vld [vmem:[%s1 + $0x10] sm:$0xf]
  %v24 = vld [vmem:[%s1 + $0x14] sm:$0xf]
  %v25 = vld [vmem:[%s1 + $0x18] sm:$0xf]
  %v26 = vld [vmem:[%s1 + $0x1c] sm:$0xf]
  %v27 = vld [vmem:[%s1 + $0x20] sm:$0xf]
  %v28 = vld [vmem:[%s1 + $0x24] sm:$0xf]
  %v29 = vld [vmem:[%s1 + $0x28] sm:$0xf]
  %v30 = vld [vmem:[%s1 + $0x2c] sm:$0xf]
  %v31 = vld [vmem:[%s1 + $0x30] sm:$0xf]
  %v32 = vld [vmem:[%s1 + $0x34] sm:$0xf]
  %v33 = vld [vmem:[%s1 + $0x38] sm:$0xf]
  %v34 = vld [vmem:[%s1 + $0x3c] sm:$0xf]
  %v39 = vunpack.c.l.b16 %v15
  %v40 = vunpack.c.l.b16 %v16
  %v41 = vunpack.c.l.b16 %v17
  %v42 = vunpack.c.l.b16 %v18
  %v43 = vpack.c.b16 %v40, %v39
  %v44 = vpack.c.b16 %v42, %v41
  %v63 = vunpack.c.l.b16 %v19
  %v64 = vunpack.c.l.b16 %v20
  %v65 = vunpack.c.l.b16 %v21
  %v66 = vunpack.c.l.b16 %v22
  %v67 = vunpack.c.l.b16 %v23
  %v68 = vunpack.c.l.b16 %v24
  %v69 = vunpack.c.l.b16 %v25
  %v70 = vunpack.c.l.b16 %v26
  %v71 = vunpack.c.l.b16 %v27
  %v72 = vunpack.c.l.b16 %v28
  %v73 = vunpack.c.l.b16 %v29
  %v74 = vunpack.c.l.b16 %v30
  %v75 = vunpack.c.l.b16 %v31
  %v76 = vunpack.c.l.b16 %v32
  %v77 = vunpack.c.l.b16 %v33
  %v78 = vunpack.c.l.b16 %v34
  %v79 = vpack.c.b16 %v64, %v63
  %v80 = vpack.c.b16 %v66, %v65
  %v81 = vpack.c.b16 %v68, %v67
  %v82 = vpack.c.b16 %v70, %v69
  %v83 = vpack.c.b16 %v72, %v71
  %v84 = vpack.c.b16 %v74, %v73
  %v85 = vpack.c.b16 %v76, %v75
  %v86 = vpack.c.b16 %v78, %v77
  %95 = vmatprep.subr.bf16.mxu0 0
  %96 = vmatpush1.bf16.msra.mxu0 %v79
  %97 = vmatprep.subr.bf16.mxu0 0
  %98 = vmatpush1.bf16.msra.mxu0 %v80
  %99 = vmatprep.subr.bf16.mxu0 0
  %100 = vmatpush1.bf16.msra.mxu0 %v81
  %101 = vmatprep.subr.bf16.mxu0 0
  %102 = vmatpush1.bf16.msra.mxu0 %v82
  %103 = vmatprep.subr.bf16.mxu0 0
  %104 = vmatpush1.bf16.msra.mxu0 %v83
  %105 = vmatprep.subr.bf16.mxu0 0
  %106 = vmatpush1.bf16.msra.mxu0 %v84
  %107 = vmatprep.subr.bf16.mxu0 0
  %108 = vmatpush1.bf16.msra.mxu0 %v85
  %109 = vmatprep.subr.bf16.mxu0 0
  %110 = vmatpush1.bf16.msra.mxu0 %v86
  %111 = vmatprep.subr.bf16.mxu0 0
  %112 = vmatpush1.bf16.msra.mxu0 0
  %113 = vmatprep.subr.bf16.mxu0 0
  %114 = vmatpush1.bf16.msra.mxu0 0
  %115 = vmatprep.subr.bf16.mxu0 0
  %116 = vmatpush1.bf16.msra.mxu0 0
  %117 = vmatprep.subr.bf16.mxu0 0
  %118 = vmatpush1.bf16.msra.mxu0 0
  %119 = vmatprep.subr.bf16.mxu0 0
  %120 = vmatpush1.bf16.msra.mxu0 0
  %121 = vmatprep.subr.bf16.mxu0 0
  %122 = vmatpush1.bf16.msra.mxu0 0
  %123 = vmatprep.subr.bf16.mxu0 0
  %124 = vmatpush1.bf16.msra.mxu0 0
  %125 = vmatprep.subr.bf16.mxu0 0
  %126 = vmatpush1.bf16.msra.mxu0 0
  %127 = vmatprep.mubr.bf16.mxu0 0
  %128 = vmatmul.mubr.bf16.gmra.mrb[0].mxu0 %v43
  %v129 = vpop.f32.mrb[0].mxu0
  %v130 = vadd.f32 0.0, %v129
  %v131 = vpop.f32.mrb[0].mxu0
  %v132 = vpop.f32.mrb[0].mxu0
  %v133 = vadd.f32 0.0, %v132
  %v134 = vpop.f32.mrb[0].mxu0
  %135 = vmatprep.mubr.bf16.mxu0 0
  %136 = vmatmul.mubr.bf16.gmra.mrb[0].mxu0 %v44
  %v137 = vpop.f32.mrb[0].mxu0
  %v138 = vadd.f32 0.0, %v137
  %v139 = vpop.f32.mrb[0].mxu0
  %v140 = vpop.f32.mrb[0].mxu0
  %v141 = vadd.f32 0.0, %v140
  %v142 = vpop.f32.mrb[0].mxu0
  %143 = vdwg.mxu0
  %v144 = vld [vmem:[%s2] sm:$0x1]
  %v145 = vlaneseq
  %v146 = vshrl.u32 %v145, 7
  %v147 = vsub.s32 0, %v146
  %v148 = vrot.slane %v144, %v147
  %v149 = vmul.f32 %v130, %v148
  %v150 = vmul.f32 %v133, %v148
  %v151 = vmul.f32 %v138, %v148
  %v152 = vmul.f32 %v141, %v148
  %v153 = vld [vmem:[%s2 + $0x1] sm:$0x1]
  %v154 = vlaneseq
  %v155 = vshrl.u32 %v154, 7
  %v156 = vsub.s32 0, %v155
  %v157 = vrot.slane %v153, %v156
  %v158 = vadd.f32 %v149, %v157
  %v159 = vadd.f32 %v150, %v157
  %v160 = vadd.f32 %v151, %v157
  %v161 = vadd.f32 %v152, %v157
  %v162 = vpack.c.bf16 %v159, %v158
  %v163 = vpack.c.bf16 %v161, %v160
  %v166 = vunpack.c.l.b16 %v162
  %v167 = vunpack.c.h.b16 %v162
  %v168 = vunpack.c.l.b16 %v163
  %v169 = vunpack.c.h.b16 %v163
  %v170 = vpack.c.b16 %v166, %v166
  %v171 = vpack.c.b16 %v167, %v167
  %v172 = vpack.c.b16 %v168, %v168
  %v173 = vpack.c.b16 %v169, %v169
  %178 = vst [vmem:[%s3] sm:$0xf] %v170
  %179 = vst [vmem:[%s3 + $0x4] sm:$0xf] %v171
  %180 = vst [vmem:[%s3 + $0x8] sm:$0xf] %v172
  %181 = vst [vmem:[%s3 + $0xc] sm:$0xf] %v173
  // Predicated region
  $region14: #{resnetfc_forward.56} parent=0 // pred_check
    _
  $region15: #{resnetfc_forward.56} parent=0 // pred_check_branch
    %183 = sbr.rel (0) target = $region17
  $region16: #{resnetfc_forward.56} parent=0 // pred_region
    _
  $region17: #{resnetfc_forward.56} parent=0 // pred_fallthru
    _
  // Predicated region
  $region18: #{resnetfc_forward.56} parent=0 // pred_check
    _
  $region19: #{resnetfc_forward.56} parent=0 // pred_check_branch
    %185 = sbr.rel (0) target = $region21
  $region20: #{resnetfc_forward.56} parent=0 // pred_region
    _
  $region21: #{resnetfc_forward.56} parent=0 // pred_fallthru
    _

// kernel: resnetfc_forward.58
$region0: #{resnetfc_forward.58}
  #allocation0 [shape = 'u32[]', space=smem, size = 0x4, offset = 0x4, fixed_abs, tag = 'smem constant byte address 0x4 - core index']
  #allocation1 [shape = 'u32[144,128]{1,0:T(1,128)}', space=vmem, size = 0x12000, scoped, tag = 'internal scratch']
  %s0 = inlined_call_operand.vmem [shape: bf16[32,128], index: 0, kind: input, shape index: {}]
  %s1 = inlined_call_operand.vmem [shape: bf16[128,128], index: 1, kind: input, shape index: {}]
  %s2 = inlined_call_operand.vmem [shape: f32[2,128], index: 2, kind: input, shape index: {}]
  %s3 = inlined_call_operand.vmem [shape: bf16[32,128], index: 3, kind: output, shape index: {}]
  %s4 = sld [smem:[#allocation0]]
  $region22: #{resnetfc_forward.58} parent=0
    _
  %s6 = ssub.s32 1, %s4
  %s7 = scalar_select 0, %s6, %s4
  // Predicated region
  $region2: #{resnetfc_forward.58} parent=0 // pred_check
    _
  $region3: #{resnetfc_forward.58} parent=0 // pred_check_branch
    %9 = sbr.rel (0) target = $region5
  $region4: #{resnetfc_forward.58} parent=0 // pred_region
    _
  $region5: #{resnetfc_forward.58} parent=0 // pred_fallthru
    _
  // Predicated region
  $region6: #{resnetfc_forward.58} parent=0 // pred_check
    _
  $region7: #{resnetfc_forward.58} parent=0 // pred_check_branch
    %11 = sbr.rel (0) target = $region9
  $region8: #{resnetfc_forward.58} parent=0 // pred_region
    _
  $region9: #{resnetfc_forward.58} parent=0 // pred_fallthru
    _
  // Predicated region
  $region10: #{resnetfc_forward.58} parent=0 // pred_check
    _
  $region11: #{resnetfc_forward.58} parent=0 // pred_check_branch
    %13 = sbr.rel (0) target = $region13
  $region12: #{resnetfc_forward.58} parent=0 // pred_region
    _
  $region13: #{resnetfc_forward.58} parent=0 // pred_fallthru
    _
  %v15 = vld [vmem:[%s0] sm:$0xf]
  %v16 = vld [vmem:[%s0 + $0x4] sm:$0xf]
  %v17 = vld [vmem:[%s0 + $0x8] sm:$0xf]
  %v18 = vld [vmem:[%s0 + $0xc] sm:$0xf]
  %v19 = vld [vmem:[%s1] sm:$0xf]
  %v20 = vld [vmem:[%s1 + $0x4] sm:$0xf]
  %v21 = vld [vmem:[%s1 + $0x8] sm:$0xf]
  %v22 = vld [vmem:[%s1 + $0xc] sm:$0xf]
  %v23 = vld [vmem:[%s1 + $0x10] sm:$0xf]
  %v24 = vld [vmem:[%s1 + $0x14] sm:$0xf]
  %v25 = vld [vmem:[%s1 + $0x18] sm:$0xf]
  %v26 = vld [vmem:[%s1 + $0x1c] sm:$0xf]
  %v27 = vld [vmem:[%s1 + $0x20] sm:$0xf]
  %v28 = vld [vmem:[%s1 + $0x24] sm:$0xf]
  %v29 = vld [vmem:[%s1 + $0x28] sm:$0xf]
  %v30 = vld [vmem:[%s1 + $0x2c] sm:$0xf]
  %v31 = vld [vmem:[%s1 + $0x30] sm:$0xf]
  %v32 = vld [vmem:[%s1 + $0x34] sm:$0xf]
  %v33 = vld [vmem:[%s1 + $0x38] sm:$0xf]
  %v34 = vld [vmem:[%s1 + $0x3c] sm:$0xf]
  %v39 = vunpack.c.l.b16 %v15
  %v40 = vunpack.c.l.b16 %v16
  %v41 = vunpack.c.l.b16 %v17
  %v42 = vunpack.c.l.b16 %v18
  %v43 = vpack.c.b16 %v40, %v39
  %v44 = vpack.c.b16 %v42, %v41
  %v63 = vunpack.c.l.b16 %v19
  %v64 = vunpack.c.l.b16 %v20
  %v65 = vunpack.c.l.b16 %v21
  %v66 = vunpack.c.l.b16 %v22
  %v67 = vunpack.c.l.b16 %v23
  %v68 = vunpack.c.l.b16 %v24
  %v69 = vunpack.c.l.b16 %v25
  %v70 = vunpack.c.l.b16 %v26
  %v71 = vunpack.c.l.b16 %v27
  %v72 = vunpack.c.l.b16 %v28
  %v73 = vunpack.c.l.b16 %v29
  %v74 = vunpack.c.l.b16 %v30
  %v75 = vunpack.c.l.b16 %v31
  %v76 = vunpack.c.l.b16 %v32
  %v77 = vunpack.c.l.b16 %v33
  %v78 = vunpack.c.l.b16 %v34
  %v79 = vpack.c.b16 %v64, %v63
  %v80 = vpack.c.b16 %v66, %v65
  %v81 = vpack.c.b16 %v68, %v67
  %v82 = vpack.c.b16 %v70, %v69
  %v83 = vpack.c.b16 %v72, %v71
  %v84 = vpack.c.b16 %v74, %v73
  %v85 = vpack.c.b16 %v76, %v75
  %v86 = vpack.c.b16 %v78, %v77
  %95 = vmatprep.subr.bf16.mxu0 0
  %96 = vmatpush1.bf16.msra.mxu0 %v79
  %97 = vmatprep.subr.bf16.mxu0 0
  %98 = vmatpush1.bf16.msra.mxu0 %v80
  %99 = vmatprep.subr.bf16.mxu0 0
  %100 = vmatpush1.bf16.msra.mxu0 %v81
  %101 = vmatprep.subr.bf16.mxu0 0
  %102 = vmatpush1.bf16.msra.mxu0 %v82
  %103 = vmatprep.subr.bf16.mxu0 0
  %104 = vmatpush1.bf16.msra.mxu0 %v83
  %105 = vmatprep.subr.bf16.mxu0 0
  %106 = vmatpush1.bf16.msra.mxu0 %v84
  %107 = vmatprep.subr.bf16.mxu0 0
  %108 = vmatpush1.bf16.msra.mxu0 %v85
  %109 = vmatprep.subr.bf16.mxu0 0
  %110 = vmatpush1.bf16.msra.mxu0 %v86
  %111 = vmatprep.subr.bf16.mxu0 0
  %112 = vmatpush1.bf16.msra.mxu0 0
  %113 = vmatprep.subr.bf16.mxu0 0
  %114 = vmatpush1.bf16.msra.mxu0 0
  %115 = vmatprep.subr.bf16.mxu0 0
  %116 = vmatpush1.bf16.msra.mxu0 0
  %117 = vmatprep.subr.bf16.mxu0 0
  %118 = vmatpush1.bf16.msra.mxu0 0
  %119 = vmatprep.subr.bf16.mxu0 0
  %120 = vmatpush1.bf16.msra.mxu0 0
  %121 = vmatprep.subr.bf16.mxu0 0
  %122 = vmatpush1.bf16.msra.mxu0 0
  %123 = vmatprep.subr.bf16.mxu0 0
  %124 = vmatpush1.bf16.msra.mxu0 0
  %125 = vmatprep.subr.bf16.mxu0 0
  %126 = vmatpush1.bf16.msra.mxu0 0
  %127 = vmatprep.mubr.bf16.mxu0 0
  %128 = vmatmul.mubr.bf16.gmra.mrb[0].mxu0 %v43
  %v129 = vpop.f32.mrb[0].mxu0
  %v130 = vadd.f32 0.0, %v129
  %v131 = vpop.f32.mrb[0].mxu0
  %v132 = vpop.f32.mrb[0].mxu0
  %v133 = vadd.f32 0.0, %v132
  %v134 = vpop.f32.mrb[0].mxu0
  %135 = vmatprep.mubr.bf16.mxu0 0
  %136 = vmatmul.mubr.bf16.gmra.mrb[0].mxu0 %v44
  %v137 = vpop.f32.mrb[0].mxu0
  %v138 = vadd.f32 0.0, %v137
  %v139 = vpop.f32.mrb[0].mxu0
  %v140 = vpop.f32.mrb[0].mxu0
  %v141 = vadd.f32 0.0, %v140
  %v142 = vpop.f32.mrb[0].mxu0
  %143 = vdwg.mxu0
  %v144 = vld [vmem:[%s2] sm:$0x1]
  %v145 = vlaneseq
  %v146 = vshrl.u32 %v145, 7
  %v147 = vsub.s32 0, %v146
  %v148 = vrot.slane %v144, %v147
  %v149 = vmul.f32 %v130, %v148
  %v150 = vmul.f32 %v133, %v148
  %v151 = vmul.f32 %v138, %v148
  %v152 = vmul.f32 %v141, %v148
  %v153 = vld [vmem:[%s2 + $0x1] sm:$0x1]
  %v154 = vlaneseq
  %v155 = vshrl.u32 %v154, 7
  %v156 = vsub.s32 0, %v155
  %v157 = vrot.slane %v153, %v156
  %v158 = vadd.f32 %v149, %v157
  %v159 = vadd.f32 %v150, %v157
  %v160 = vadd.f32 %v151, %v157
  %v161 = vadd.f32 %v152, %v157
  %v162 = vmax.f32 %v158, 0.0
  %v163 = vmax.f32 %v159, 0.0
  %v164 = vmax.f32 %v160, 0.0
  %v165 = vmax.f32 %v161, 0.0
  %v166 = vpack.c.bf16 %v163, %v162
  %v167 = vpack.c.bf16 %v165, %v164
  %v170 = vunpack.c.l.b16 %v166
  %v171 = vunpack.c.h.b16 %v166
  %v172 = vunpack.c.l.b16 %v167
  %v173 = vunpack.c.h.b16 %v167
  %v174 = vpack.c.b16 %v170, %v170
  %v175 = vpack.c.b16 %v171, %v171
  %v176 = vpack.c.b16 %v172, %v172
  %v177 = vpack.c.b16 %v173, %v173
  %182 = vst [vmem:[%s3] sm:$0xf] %v174
  %183 = vst [vmem:[%s3 + $0x4] sm:$0xf] %v175
  %184 = vst [vmem:[%s3 + $0x8] sm:$0xf] %v176
  %185 = vst [vmem:[%s3 + $0xc] sm:$0xf] %v177
  // Predicated region
  $region14: #{resnetfc_forward.58} parent=0 // pred_check
    _
  $region15: #{resnetfc_forward.58} parent=0 // pred_check_branch
    %187 = sbr.rel (0) target = $region17
  $region16: #{resnetfc_forward.58} parent=0 // pred_region
    _
  $region17: #{resnetfc_forward.58} parent=0 // pred_fallthru
    _
  // Predicated region
  $region18: #{resnetfc_forward.58} parent=0 // pred_check
    _
  $region19: #{resnetfc_forward.58} parent=0 // pred_check_branch
    %189 = sbr.rel (0) target = $region21
  $region20: #{resnetfc_forward.58} parent=0 // pred_region
    _
  $region21: #{resnetfc_forward.58} parent=0 // pred_fallthru
    _

// kernel: resnetfc_forward.57
$region0: #{resnetfc_forward.57}
  #allocation0 [shape = 'u32[]', space=smem, size = 0x4, offset = 0x4, fixed_abs, tag = 'smem constant byte address 0x4 - core index']
  #allocation1 [shape = 'u32[144,128]{1,0:T(1,128)}', space=vmem, size = 0x12000, scoped, tag = 'internal scratch']
  %s0 = inlined_call_operand.vmem [shape: bf16[32,1152], index: 0, kind: input, shape index: {}]
  %s1 = inlined_call_operand.vmem [shape: bf16[1152,128], index: 1, kind: input, shape index: {}]
  %s2 = inlined_call_operand.vmem [shape: f32[2,128], index: 2, kind: input, shape index: {}]
  %s3 = inlined_call_operand.vmem [shape: bf16[128,128], index: 3, kind: input, shape index: {}]
  %s4 = inlined_call_operand.vmem [shape: f32[2,128], index: 4, kind: input, shape index: {}]
  %s5 = inlined_call_operand.vmem [shape: bf16[32,128], index: 5, kind: input, shape index: {}]
  %s6 = inlined_call_operand.vmem [shape: bf16[32,128], index: 6, kind: output, shape index: {}]
  %s7 = sld [smem:[#allocation0]]
  $region34: #{resnetfc_forward.57} parent=0
    _
  %s9 = ssub.s32 1, %s7
  %s10 = scalar_select 0, %s9, %s7
  // Predicated region
  $region2: #{resnetfc_forward.57} parent=0 // pred_check
    _
  $region3: #{resnetfc_forward.57} parent=0 // pred_check_branch
    %12 = sbr.rel (0) target = $region5
  $region4: #{resnetfc_forward.57} parent=0 // pred_region
    _
  $region5: #{resnetfc_forward.57} parent=0 // pred_fallthru
    _
  // Predicated region
  $region6: #{resnetfc_forward.57} parent=0 // pred_check
    _
  $region7: #{resnetfc_forward.57} parent=0 // pred_check_branch
    %14 = sbr.rel (0) target = $region9
  $region8: #{resnetfc_forward.57} parent=0 // pred_region
    _
  $region9: #{resnetfc_forward.57} parent=0 // pred_fallthru
    _
  // Predicated region
  $region10: #{resnetfc_forward.57} parent=0 // pred_check
    _
  $region11: #{resnetfc_forward.57} parent=0 // pred_check_branch
    %16 = sbr.rel (0) target = $region13
  $region12: #{resnetfc_forward.57} parent=0 // pred_region
    _
  $region13: #{resnetfc_forward.57} parent=0 // pred_fallthru
    _
  // Predicated region
  $region14: #{resnetfc_forward.57} parent=0 // pred_check
    _
  $region15: #{resnetfc_forward.57} parent=0 // pred_check_branch
    %18 = sbr.rel (0) target = $region17
  $region16: #{resnetfc_forward.57} parent=0 // pred_region
    _
  $region17: #{resnetfc_forward.57} parent=0 // pred_fallthru
    _
  // Predicated region
  $region18: #{resnetfc_forward.57} parent=0 // pred_check
    _
  $region19: #{resnetfc_forward.57} parent=0 // pred_check_branch
    %20 = sbr.rel (0) target = $region21
  $region20: #{resnetfc_forward.57} parent=0 // pred_region
    _
  $region21: #{resnetfc_forward.57} parent=0 // pred_fallthru
    _
  // Predicated region
  $region22: #{resnetfc_forward.57} parent=0 // pred_check
    _
  $region23: #{resnetfc_forward.57} parent=0 // pred_check_branch
    %22 = sbr.rel (0) target = $region25
  $region24: #{resnetfc_forward.57} parent=0 // pred_region
    _
  $region25: #{resnetfc_forward.57} parent=0 // pred_fallthru
    _
  %v24 = vld [vmem:[%s0] sm:$0xff]
  %v25 = vld [vmem:[%s0 + $0x8] sm:$0xff]
  %v26 = vld [vmem:[%s0 + $0x10] sm:$0xff]
  %v27 = vld [vmem:[%s0 + $0x18] sm:$0xff]
  %v28 = vld [vmem:[%s0 + $0x20] sm:$0xf]
  %v29 = vld [vmem:[%s0 + $0x24] sm:$0xff]
  %v30 = vld [vmem:[%s0 + $0x2c] sm:$0xff]
  %v31 = vld [vmem:[%s0 + $0x34] sm:$0xff]
  %v32 = vld [vmem:[%s0 + $0x3c] sm:$0xff]
  %v33 = vld [vmem:[%s0 + $0x44] sm:$0xf]
  %v34 = vld [vmem:[%s0 + $0x48] sm:$0xff]
  %v35 = vld [vmem:[%s0 + $0x50] sm:$0xff]
  %v36 = vld [vmem:[%s0 + $0x58] sm:$0xff]
  %v37 = vld [vmem:[%s0 + $0x60] sm:$0xff]
  %v38 = vld [vmem:[%s0 + $0x68] sm:$0xf]
  %v39 = vld [vmem:[%s0 + $0x6c] sm:$0xff]
  %v40 = vld [vmem:[%s0 + $0x74] sm:$0xff]
  %v41 = vld [vmem:[%s0 + $0x7c] sm:$0xff]
  %v42 = vld [vmem:[%s0 + $0x84] sm:$0xff]
  %v43 = vld [vmem:[%s0 + $0x8c] sm:$0xf]
  %v44 = vld [vmem:[%s1] sm:$0xf]
  %v45 = vld [vmem:[%s1 + $0x4] sm:$0xf]
  %v46 = vld [vmem:[%s1 + $0x8] sm:$0xf]
  %v47 = vld [vmem:[%s1 + $0xc] sm:$0xf]
  %v48 = vld [vmem:[%s1 + $0x10] sm:$0xf]
  %v49 = vld [vmem:[%s1 + $0x14] sm:$0xf]
  %v50 = vld [vmem:[%s1 + $0x18] sm:$0xf]
  %v51 = vld [vmem:[%s1 + $0x1c] sm:$0xf]
  %v52 = vld [vmem:[%s1 + $0x20] sm:$0xf]
  %v53 = vld [vmem:[%s1 + $0x24] sm:$0xf]
  %v54 = vld [vmem:[%s1 + $0x28] sm:$0xf]
  %v55 = vld [vmem:[%s1 + $0x2c] sm:$0xf]
  %v56 = vld [vmem:[%s1 + $0x30] sm:$0xf]
  %v57 = vld [vmem:[%s1 + $0x34] sm:$0xf]
  %v58 = vld [vmem:[%s1 + $0x38] sm:$0xf]
  %v59 = vld [vmem:[%s1 + $0x3c] sm:$0xf]
  %v60 = vld [vmem:[%s1 + $0x40] sm:$0xf]
  %v61 = vld [vmem:[%s1 + $0x44] sm:$0xf]
  %v62 = vld [vmem:[%s1 + $0x48] sm:$0xf]
  %v63 = vld [vmem:[%s1 + $0x4c] sm:$0xf]
  %v64 = vld [vmem:[%s1 + $0x50] sm:$0xf]
  %v65 = vld [vmem:[%s1 + $0x54] sm:$0xf]
  %v66 = vld [vmem:[%s1 + $0x58] sm:$0xf]
  %v67 = vld [vmem:[%s1 + $0x5c] sm:$0xf]
  %v68 = vld [vmem:[%s1 + $0x60] sm:$0xf]
  %v69 = vld [vmem:[%s1 + $0x64] sm:$0xf]
  %v70 = vld [vmem:[%s1 + $0x68] sm:$0xf]
  %v71 = vld [vmem:[%s1 + $0x6c] sm:$0xf]
  %v72 = vld [vmem:[%s1 + $0x70] sm:$0xf]
  %v73 = vld [vmem:[%s1 + $0x74] sm:$0xf]
  %v74 = vld [vmem:[%s1 + $0x78] sm:$0xf]
  %v75 = vld [vmem:[%s1 + $0x7c] sm:$0xf]
  %v76 = vld [vmem:[%s1 + $0x80] sm:$0xf]
  %v77 = vld [vmem:[%s1 + $0x84] sm:$0xf]
  %v78 = vld [vmem:[%s1 + $0x88] sm:$0xf]
  %v79 = vld [vmem:[%s1 + $0x8c] sm:$0xf]
  %v80 = vld [vmem:[%s1 + $0x90] sm:$0xf]
  %v81 = vld [vmem:[%s1 + $0x94] sm:$0xf]
  %v82 = vld [vmem:[%s1 + $0x98] sm:$0xf]
  %v83 = vld [vmem:[%s1 + $0x9c] sm:$0xf]
  %v84 = vld [vmem:[%s1 + $0xa0] sm:$0xf]
  %v85 = vld [vmem:[%s1 + $0xa4] sm:$0xf]
  %v86 = vld [vmem:[%s1 + $0xa8] sm:$0xf]
  %v87 = vld [vmem:[%s1 + $0xac] sm:$0xf]
  %v88 = vld [vmem:[%s1 + $0xb0] sm:$0xf]
  %v89 = vld [vmem:[%s1 + $0xb4] sm:$0xf]
  %v90 = vld [vmem:[%s1 + $0xb8] sm:$0xf]
  %v91 = vld [vmem:[%s1 + $0xbc] sm:$0xf]
  %v92 = vld [vmem:[%s1 + $0xc0] sm:$0xf]
  %v93 = vld [vmem:[%s1 + $0xc4] sm:$0xf]
  %v94 = vld [vmem:[%s1 + $0xc8] sm:$0xf]
  %v95 = vld [vmem:[%s1 + $0xcc] sm:$0xf]
  %v96 = vld [vmem:[%s1 + $0xd0] sm:$0xf]
  %v97 = vld [vmem:[%s1 + $0xd4] sm:$0xf]
  %v98 = vld [vmem:[%s1 + $0xd8] sm:$0xf]
  %v99 = vld [vmem:[%s1 + $0xdc] sm:$0xf]
  %v100 = vld [vmem:[%s1 + $0xe0] sm:$0xf]
  %v101 = vld [vmem:[%s1 + $0xe4] sm:$0xf]
  %v102 = vld [vmem:[%s1 + $0xe8] sm:$0xf]
  %v103 = vld [vmem:[%s1 + $0xec] sm:$0xf]
  %v104 = vld [vmem:[%s1 + $0xf0] sm:$0xf]
  %v105 = vld [vmem:[%s1 + $0xf4] sm:$0xf]
  %v106 = vld [vmem:[%s1 + $0xf8] sm:$0xf]
  %v107 = vld [vmem:[%s1 + $0xfc] sm:$0xf]
  %v108 = vld [vmem:[%s1 + $0x100] sm:$0xf]
  %v109 = vld [vmem:[%s1 + $0x104] sm:$0xf]
  %v110 = vld [vmem:[%s1 + $0x108] sm:$0xf]
  %v111 = vld [vmem:[%s1 + $0x10c] sm:$0xf]
  %v112 = vld [vmem:[%s1 + $0x110] sm:$0xf]
  %v113 = vld [vmem:[%s1 + $0x114] sm:$0xf]
  %v114 = vld [vmem:[%s1 + $0x118] sm:$0xf]
  %v115 = vld [vmem:[%s1 + $0x11c] sm:$0xf]
  %v116 = vld [vmem:[%s1 + $0x120] sm:$0xf]
  %v117 = vld [vmem:[%s1 + $0x124] sm:$0xf]
  %v118 = vld [vmem:[%s1 + $0x128] sm:$0xf]
  %v119 = vld [vmem:[%s1 + $0x12c] sm:$0xf]
  %v120 = vld [vmem:[%s1 + $0x130] sm:$0xf]
  %v121 = vld [vmem:[%s1 + $0x134] sm:$0xf]
  %v122 = vld [vmem:[%s1 + $0x138] sm:$0xf]
  %v123 = vld [vmem:[%s1 + $0x13c] sm:$0xf]
  %v124 = vld [vmem:[%s1 + $0x140] sm:$0xf]
  %v125 = vld [vmem:[%s1 + $0x144] sm:$0xf]
  %v126 = vld [vmem:[%s1 + $0x148] sm:$0xf]
  %v127 = vld [vmem:[%s1 + $0x14c] sm:$0xf]
  %v128 = vld [vmem:[%s1 + $0x150] sm:$0xf]
  %v129 = vld [vmem:[%s1 + $0x154] sm:$0xf]
  %v130 = vld [vmem:[%s1 + $0x158] sm:$0xf]
  %v131 = vld [vmem:[%s1 + $0x15c] sm:$0xf]
  %v132 = vld [vmem:[%s1 + $0x160] sm:$0xf]
  %v133 = vld [vmem:[%s1 + $0x164] sm:$0xf]
  %v134 = vld [vmem:[%s1 + $0x168] sm:$0xf]
  %v135 = vld [vmem:[%s1 + $0x16c] sm:$0xf]
  %v136 = vld [vmem:[%s1 + $0x170] sm:$0xf]
  %v137 = vld [vmem:[%s1 + $0x174] sm:$0xf]
  %v138 = vld [vmem:[%s1 + $0x178] sm:$0xf]
  %v139 = vld [vmem:[%s1 + $0x17c] sm:$0xf]
  %v140 = vld [vmem:[%s1 + $0x180] sm:$0xf]
  %v141 = vld [vmem:[%s1 + $0x184] sm:$0xf]
  %v142 = vld [vmem:[%s1 + $0x188] sm:$0xf]
  %v143 = vld [vmem:[%s1 + $0x18c] sm:$0xf]
  %v144 = vld [vmem:[%s1 + $0x190] sm:$0xf]
  %v145 = vld [vmem:[%s1 + $0x194] sm:$0xf]
  %v146 = vld [vmem:[%s1 + $0x198] sm:$0xf]
  %v147 = vld [vmem:[%s1 + $0x19c] sm:$0xf]
  %v148 = vld [vmem:[%s1 + $0x1a0] sm:$0xf]
  %v149 = vld [vmem:[%s1 + $0x1a4] sm:$0xf]
  %v150 = vld [vmem:[%s1 + $0x1a8] sm:$0xf]
  %v151 = vld [vmem:[%s1 + $0x1ac] sm:$0xf]
  %v152 = vld [vmem:[%s1 + $0x1b0] sm:$0xf]
  %v153 = vld [vmem:[%s1 + $0x1b4] sm:$0xf]
  %v154 = vld [vmem:[%s1 + $0x1b8] sm:$0xf]
  %v155 = vld [vmem:[%s1 + $0x1bc] sm:$0xf]
  %v156 = vld [vmem:[%s1 + $0x1c0] sm:$0xf]
  %v157 = vld [vmem:[%s1 + $0x1c4] sm:$0xf]
  %v158 = vld [vmem:[%s1 + $0x1c8] sm:$0xf]
  %v159 = vld [vmem:[%s1 + $0x1cc] sm:$0xf]
  %v160 = vld [vmem:[%s1 + $0x1d0] sm:$0xf]
  %v161 = vld [vmem:[%s1 + $0x1d4] sm:$0xf]
  %v162 = vld [vmem:[%s1 + $0x1d8] sm:$0xf]
  %v163 = vld [vmem:[%s1 + $0x1dc] sm:$0xf]
  %v164 = vld [vmem:[%s1 + $0x1e0] sm:$0xf]
  %v165 = vld [vmem:[%s1 + $0x1e4] sm:$0xf]
  %v166 = vld [vmem:[%s1 + $0x1e8] sm:$0xf]
  %v167 = vld [vmem:[%s1 + $0x1ec] sm:$0xf]
  %v168 = vld [vmem:[%s1 + $0x1f0] sm:$0xf]
  %v169 = vld [vmem:[%s1 + $0x1f4] sm:$0xf]
  %v170 = vld [vmem:[%s1 + $0x1f8] sm:$0xf]
  %v171 = vld [vmem:[%s1 + $0x1fc] sm:$0xf]
  %v172 = vld [vmem:[%s1 + $0x200] sm:$0xf]
  %v173 = vld [vmem:[%s1 + $0x204] sm:$0xf]
  %v174 = vld [vmem:[%s1 + $0x208] sm:$0xf]
  %v175 = vld [vmem:[%s1 + $0x20c] sm:$0xf]
  %v176 = vld [vmem:[%s1 + $0x210] sm:$0xf]
  %v177 = vld [vmem:[%s1 + $0x214] sm:$0xf]
  %v178 = vld [vmem:[%s1 + $0x218] sm:$0xf]
  %v179 = vld [vmem:[%s1 + $0x21c] sm:$0xf]
  %v180 = vld [vmem:[%s1 + $0x220] sm:$0xf]
  %v181 = vld [vmem:[%s1 + $0x224] sm:$0xf]
  %v182 = vld [vmem:[%s1 + $0x228] sm:$0xf]
  %v183 = vld [vmem:[%s1 + $0x22c] sm:$0xf]
  %v184 = vld [vmem:[%s1 + $0x230] sm:$0xf]
  %v185 = vld [vmem:[%s1 + $0x234] sm:$0xf]
  %v186 = vld [vmem:[%s1 + $0x238] sm:$0xf]
  %v187 = vld [vmem:[%s1 + $0x23c] sm:$0xf]
  %v208 = vunpack.c.l.b16 %v24
  %v209 = vunpack.c.h.b16 %v24
  %v210 = vunpack.c.l.b16 %v25
  %v211 = vunpack.c.h.b16 %v25
  %v212 = vunpack.c.l.b16 %v26
  %v213 = vunpack.c.h.b16 %v26
  %v214 = vunpack.c.l.b16 %v27
  %v215 = vunpack.c.h.b16 %v27
  %v216 = vunpack.c.l.b16 %v28
  %v217 = vunpack.c.l.b16 %v29
  %v218 = vunpack.c.h.b16 %v29
  %v219 = vunpack.c.l.b16 %v30
  %v220 = vunpack.c.h.b16 %v30
  %v221 = vunpack.c.l.b16 %v31
  %v222 = vunpack.c.h.b16 %v31
  %v223 = vunpack.c.l.b16 %v32
  %v224 = vunpack.c.h.b16 %v32
  %v225 = vunpack.c.l.b16 %v33
  %v226 = vunpack.c.l.b16 %v34
  %v227 = vunpack.c.h.b16 %v34
  %v228 = vunpack.c.l.b16 %v35
  %v229 = vunpack.c.h.b16 %v35
  %v230 = vunpack.c.l.b16 %v36
  %v231 = vunpack.c.h.b16 %v36
  %v232 = vunpack.c.l.b16 %v37
  %v233 = vunpack.c.h.b16 %v37
  %v234 = vunpack.c.l.b16 %v38
  %v235 = vunpack.c.l.b16 %v39
  %v236 = vunpack.c.h.b16 %v39
  %v237 = vunpack.c.l.b16 %v40
  %v238 = vunpack.c.h.b16 %v40
  %v239 = vunpack.c.l.b16 %v41
  %v240 = vunpack.c.h.b16 %v41
  %v241 = vunpack.c.l.b16 %v42
  %v242 = vunpack.c.h.b16 %v42
  %v243 = vunpack.c.l.b16 %v43
  %v244 = vpack.c.b16 %v217, %v208
  %v245 = vpack.c.b16 %v218, %v209
  %v246 = vpack.c.b16 %v219, %v210
  %v247 = vpack.c.b16 %v220, %v211
  %v248 = vpack.c.b16 %v221, %v212
  %v249 = vpack.c.b16 %v222, %v213
  %v250 = vpack.c.b16 %v223, %v214
  %v251 = vpack.c.b16 %v224, %v215
  %v252 = vpack.c.b16 %v225, %v216
  %v253 = vpack.c.b16 %v235, %v226
  %v254 = vpack.c.b16 %v236, %v227
  %v255 = vpack.c.b16 %v237, %v228
  %v256 = vpack.c.b16 %v238, %v229
  %v257 = vpack.c.b16 %v239, %v230
  %v258 = vpack.c.b16 %v240, %v231
  %v259 = vpack.c.b16 %v241, %v232
  %v260 = vpack.c.b16 %v242, %v233
  %v261 = vpack.c.b16 %v243, %v234
  %v424 = vunpack.c.l.b16 %v44
  %v425 = vunpack.c.l.b16 %v45
  %v426 = vunpack.c.l.b16 %v46
  %v427 = vunpack.c.l.b16 %v47
  %v428 = vunpack.c.l.b16 %v48
  %v429 = vunpack.c.l.b16 %v49
  %v430 = vunpack.c.l.b16 %v50
  %v431 = vunpack.c.l.b16 %v51
  %v432 = vunpack.c.l.b16 %v52
  %v433 = vunpack.c.l.b16 %v53
  %v434 = vunpack.c.l.b16 %v54
  %v435 = vunpack.c.l.b16 %v55
  %v436 = vunpack.c.l.b16 %v56
  %v437 = vunpack.c.l.b16 %v57
  %v438 = vunpack.c.l.b16 %v58
  %v439 = vunpack.c.l.b16 %v59
  %v440 = vunpack.c.l.b16 %v60
  %v441 = vunpack.c.l.b16 %v61
  %v442 = vunpack.c.l.b16 %v62
  %v443 = vunpack.c.l.b16 %v63
  %v444 = vunpack.c.l.b16 %v64
  %v445 = vunpack.c.l.b16 %v65
  %v446 = vunpack.c.l.b16 %v66
  %v447 = vunpack.c.l.b16 %v67
  %v448 = vunpack.c.l.b16 %v68
  %v449 = vunpack.c.l.b16 %v69
  %v450 = vunpack.c.l.b16 %v70
  %v451 = vunpack.c.l.b16 %v71
  %v452 = vunpack.c.l.b16 %v72
  %v453 = vunpack.c.l.b16 %v73
  %v454 = vunpack.c.l.b16 %v74
  %v455 = vunpack.c.l.b16 %v75
  %v456 = vunpack.c.l.b16 %v76
  %v457 = vunpack.c.l.b16 %v77
  %v458 = vunpack.c.l.b16 %v78
  %v459 = vunpack.c.l.b16 %v79
  %v460 = vunpack.c.l.b16 %v80
  %v461 = vunpack.c.l.b16 %v81
  %v462 = vunpack.c.l.b16 %v82
  %v463 = vunpack.c.l.b16 %v83
  %v464 = vunpack.c.l.b16 %v84
  %v465 = vunpack.c.l.b16 %v85
  %v466 = vunpack.c.l.b16 %v86
  %v467 = vunpack.c.l.b16 %v87
  %v468 = vunpack.c.l.b16 %v88
  %v469 = vunpack.c.l.b16 %v89
  %v470 = vunpack.c.l.b16 %v90
  %v471 = vunpack.c.l.b16 %v91
  %v472 = vunpack.c.l.b16 %v92
  %v473 = vunpack.c.l.b16 %v93
  %v474 = vunpack.c.l.b16 %v94
  %v475 = vunpack.c.l.b16 %v95
  %v476 = vunpack.c.l.b16 %v96
  %v477 = vunpack.c.l.b16 %v97
  %v478 = vunpack.c.l.b16 %v98
  %v479 = vunpack.c.l.b16 %v99
  %v480 = vunpack.c.l.b16 %v100
  %v481 = vunpack.c.l.b16 %v101
  %v482 = vunpack.c.l.b16 %v102
  %v483 = vunpack.c.l.b16 %v103
  %v484 = vunpack.c.l.b16 %v104
  %v485 = vunpack.c.l.b16 %v105
  %v486 = vunpack.c.l.b16 %v106
  %v487 = vunpack.c.l.b16 %v107
  %v488 = vunpack.c.l.b16 %v108
  %v489 = vunpack.c.l.b16 %v109
  %v490 = vunpack.c.l.b16 %v110
  %v491 = vunpack.c.l.b16 %v111
  %v492 = vunpack.c.l.b16 %v112
  %v493 = vunpack.c.l.b16 %v113
  %v494 = vunpack.c.l.b16 %v114
  %v495 = vunpack.c.l.b16 %v115
  %v496 = vunpack.c.l.b16 %v116
  %v497 = vunpack.c.l.b16 %v117
  %v498 = vunpack.c.l.b16 %v118
  %v499 = vunpack.c.l.b16 %v119
  %v500 = vunpack.c.l.b16 %v120
  %v501 = vunpack.c.l.b16 %v121
  %v502 = vunpack.c.l.b16 %v122
  %v503 = vunpack.c.l.b16 %v123
  %v504 = vunpack.c.l.b16 %v124
  %v505 = vunpack.c.l.b16 %v125
  %v506 = vunpack.c.l.b16 %v126
  %v507 = vunpack.c.l.b16 %v127
  %v508 = vunpack.c.l.b16 %v128
  %v509 = vunpack.c.l.b16 %v129
  %v510 = vunpack.c.l.b16 %v130
  %v511 = vunpack.c.l.b16 %v131
  %v512 = vunpack.c.l.b16 %v132
  %v513 = vunpack.c.l.b16 %v133
  %v514 = vunpack.c.l.b16 %v134
  %v515 = vunpack.c.l.b16 %v135
  %v516 = vunpack.c.l.b16 %v136
  %v517 = vunpack.c.l.b16 %v137
  %v518 = vunpack.c.l.b16 %v138
  %v519 = vunpack.c.l.b16 %v139
  %v520 = vunpack.c.l.b16 %v140
  %v521 = vunpack.c.l.b16 %v141
  %v522 = vunpack.c.l.b16 %v142
  %v523 = vunpack.c.l.b16 %v143
  %v524 = vunpack.c.l.b16 %v144
  %v525 = vunpack.c.l.b16 %v145
  %v526 = vunpack.c.l.b16 %v146
  %v527 = vunpack.c.l.b16 %v147
  %v528 = vunpack.c.l.b16 %v148
  %v529 = vunpack.c.l.b16 %v149
  %v530 = vunpack.c.l.b16 %v150
  %v531 = vunpack.c.l.b16 %v151
  %v532 = vunpack.c.l.b16 %v152
  %v533 = vunpack.c.l.b16 %v153
  %v534 = vunpack.c.l.b16 %v154
  %v535 = vunpack.c.l.b16 %v155
  %v536 = vunpack.c.l.b16 %v156
  %v537 = vunpack.c.l.b16 %v157
  %v538 = vunpack.c.l.b16 %v158
  %v539 = vunpack.c.l.b16 %v159
  %v540 = vunpack.c.l.b16 %v160
  %v541 = vunpack.c.l.b16 %v161
  %v542 = vunpack.c.l.b16 %v162
  %v543 = vunpack.c.l.b16 %v163
  %v544 = vunpack.c.l.b16 %v164
  %v545 = vunpack.c.l.b16 %v165
  %v546 = vunpack.c.l.b16 %v166
  %v547 = vunpack.c.l.b16 %v167
  %v548 = vunpack.c.l.b16 %v168
  %v549 = vunpack.c.l.b16 %v169
  %v550 = vunpack.c.l.b16 %v170
  %v551 = vunpack.c.l.b16 %v171
  %v552 = vunpack.c.l.b16 %v172
  %v553 = vunpack.c.l.b16 %v173
  %v554 = vunpack.c.l.b16 %v174
  %v555 = vunpack.c.l.b16 %v175
  %v556 = vunpack.c.l.b16 %v176
  %v557 = vunpack.c.l.b16 %v177
  %v558 = vunpack.c.l.b16 %v178
  %v559 = vunpack.c.l.b16 %v179
  %v560 = vunpack.c.l.b16 %v180
  %v561 = vunpack.c.l.b16 %v181
  %v562 = vunpack.c.l.b16 %v182
  %v563 = vunpack.c.l.b16 %v183
  %v564 = vunpack.c.l.b16 %v184
  %v565 = vunpack.c.l.b16 %v185
  %v566 = vunpack.c.l.b16 %v186
  %v567 = vunpack.c.l.b16 %v187
  %v568 = vpack.c.b16 %v425, %v424
  %v569 = vpack.c.b16 %v427, %v426
  %v570 = vpack.c.b16 %v429, %v428
  %v571 = vpack.c.b16 %v431, %v430
  %v572 = vpack.c.b16 %v433, %v432
  %v573 = vpack.c.b16 %v435, %v434
  %v574 = vpack.c.b16 %v437, %v436
  %v575 = vpack.c.b16 %v439, %v438
  %v576 = vpack.c.b16 %v441, %v440
  %v577 = vpack.c.b16 %v443, %v442
  %v578 = vpack.c.b16 %v445, %v444
  %v579 = vpack.c.b16 %v447, %v446
  %v580 = vpack.c.b16 %v449, %v448
  %v581 = vpack.c.b16 %v451, %v450
  %v582 = vpack.c.b16 %v453, %v452
  %v583 = vpack.c.b16 %v455, %v454
  %v584 = vpack.c.b16 %v457, %v456
  %v585 = vpack.c.b16 %v459, %v458
  %v586 = vpack.c.b16 %v461, %v460
  %v587 = vpack.c.b16 %v463, %v462
  %v588 = vpack.c.b16 %v465, %v464
  %v589 = vpack.c.b16 %v467, %v466
  %v590 = vpack.c.b16 %v469, %v468
  %v591 = vpack.c.b16 %v471, %v470
  %v592 = vpack.c.b16 %v473, %v472
  %v593 = vpack.c.b16 %v475, %v474
  %v594 = vpack.c.b16 %v477, %v476
  %v595 = vpack.c.b16 %v479, %v478
  %v596 = vpack.c.b16 %v481, %v480
  %v597 = vpack.c.b16 %v483, %v482
  %v598 = vpack.c.b16 %v485, %v484
  %v599 = vpack.c.b16 %v487, %v486
  %v600 = vpack.c.b16 %v489, %v488
  %v601 = vpack.c.b16 %v491, %v490
  %v602 = vpack.c.b16 %v493, %v492
  %v603 = vpack.c.b16 %v495, %v494
  %v604 = vpack.c.b16 %v497, %v496
  %v605 = vpack.c.b16 %v499, %v498
  %v606 = vpack.c.b16 %v501, %v500
  %v607 = vpack.c.b16 %v503, %v502
  %v608 = vpack.c.b16 %v505, %v504
  %v609 = vpack.c.b16 %v507, %v506
  %v610 = vpack.c.b16 %v509, %v508
  %v611 = vpack.c.b16 %v511, %v510
  %v612 = vpack.c.b16 %v513, %v512
  %v613 = vpack.c.b16 %v515, %v514
  %v614 = vpack.c.b16 %v517, %v516
  %v615 = vpack.c.b16 %v519, %v518
  %v616 = vpack.c.b16 %v521, %v520
  %v617 = vpack.c.b16 %v523, %v522
  %v618 = vpack.c.b16 %v525, %v524
  %v619 = vpack.c.b16 %v527, %v526
  %v620 = vpack.c.b16 %v529, %v528
  %v621 = vpack.c.b16 %v531, %v530
  %v622 = vpack.c.b16 %v533, %v532
  %v623 = vpack.c.b16 %v535, %v534
  %v624 = vpack.c.b16 %v537, %v536
  %v625 = vpack.c.b16 %v539, %v538
  %v626 = vpack.c.b16 %v541, %v540
  %v627 = vpack.c.b16 %v543, %v542
  %v628 = vpack.c.b16 %v545, %v544
  %v629 = vpack.c.b16 %v547, %v546
  %v630 = vpack.c.b16 %v549, %v548
  %v631 = vpack.c.b16 %v551, %v550
  %v632 = vpack.c.b16 %v553, %v552
  %v633 = vpack.c.b16 %v555, %v554
  %v634 = vpack.c.b16 %v557, %v556
  %v635 = vpack.c.b16 %v559, %v558
  %v636 = vpack.c.b16 %v561, %v560
  %v637 = vpack.c.b16 %v563, %v562
  %v638 = vpack.c.b16 %v565, %v564
  %v639 = vpack.c.b16 %v567, %v566
  %712 = vmatprep.subr.bf16.mxu0 0
  %713 = vmatpush1.bf16.msra.mxu0 %v568
  %714 = vmatprep.subr.bf16.mxu0 0
  %715 = vmatpush1.bf16.msra.mxu0 %v569
  %716 = vmatprep.subr.bf16.mxu0 0
  %717 = vmatpush1.bf16.msra.mxu0 %v570
  %718 = vmatprep.subr.bf16.mxu0 0
  %719 = vmatpush1.bf16.msra.mxu0 %v571
  %720 = vmatprep.subr.bf16.mxu0 0
  %721 = vmatpush1.bf16.msra.mxu0 %v572
  %722 = vmatprep.subr.bf16.mxu0 0
  %723 = vmatpush1.bf16.msra.mxu0 %v573
  %724 = vmatprep.subr.bf16.mxu0 0
  %725 = vmatpush1.bf16.msra.mxu0 %v574
  %726 = vmatprep.subr.bf16.mxu0 0
  %727 = vmatpush1.bf16.msra.mxu0 %v575
  %728 = vmatprep.subr.bf16.mxu0 0
  %729 = vmatpush1.bf16.msra.mxu0 %v576
  %730 = vmatprep.subr.bf16.mxu0 0
  %731 = vmatpush1.bf16.msra.mxu0 %v577
  %732 = vmatprep.subr.bf16.mxu0 0
  %733 = vmatpush1.bf16.msra.mxu0 %v578
  %734 = vmatprep.subr.bf16.mxu0 0
  %735 = vmatpush1.bf16.msra.mxu0 %v579
  %736 = vmatprep.subr.bf16.mxu0 0
  %737 = vmatpush1.bf16.msra.mxu0 %v580
  %738 = vmatprep.subr.bf16.mxu0 0
  %739 = vmatpush1.bf16.msra.mxu0 %v581
  %740 = vmatprep.subr.bf16.mxu0 0
  %741 = vmatpush1.bf16.msra.mxu0 %v582
  %742 = vmatprep.subr.bf16.mxu0 0
  %743 = vmatpush1.bf16.msra.mxu0 %v583
  %744 = vmatprep.mubr.bf16.mxu0 %v245
  %745 = vmatmul.mubr.bf16.gmra.mrb[0].mxu0 %v244
  %v746 = vpop.f32.mrb[0].mxu0
  %v747 = vadd.f32 0.0, %v746
  %v748 = vpop.f32.mrb[0].mxu0
  %v749 = vpop.f32.mrb[0].mxu0
  %v750 = vadd.f32 0.0, %v749
  %v751 = vpop.f32.mrb[0].mxu0
  %752 = vmatprep.mubr.bf16.mxu0 %v254
  %753 = vmatmul.mubr.bf16.gmra.mrb[0].mxu0 %v253
  %v754 = vpop.f32.mrb[0].mxu0
  %v755 = vadd.f32 0.0, %v754
  %v756 = vpop.f32.mrb[0].mxu0
  %v757 = vpop.f32.mrb[0].mxu0
  %v758 = vadd.f32 0.0, %v757
  %v759 = vpop.f32.mrb[0].mxu0
  %760 = vdwg.mxu0
  %761 = vmatprep.subr.bf16.mxu0 0
  %762 = vmatpush1.bf16.msra.mxu0 %v584
  %763 = vmatprep.subr.bf16.mxu0 0
  %764 = vmatpush1.bf16.msra.mxu0 %v585
  %765 = vmatprep.subr.bf16.mxu0 0
  %766 = vmatpush1.bf16.msra.mxu0 %v586
  %767 = vmatprep.subr.bf16.mxu0 0
  %768 = vmatpush1.bf16.msra.mxu0 %v587
  %769 = vmatprep.subr.bf16.mxu0 0
  %770 = vmatpush1.bf16.msra.mxu0 %v588
  %771 = vmatprep.subr.bf16.mxu0 0
  %772 = vmatpush1.bf16.msra.mxu0 %v589
  %773 = vmatprep.subr.bf16.mxu0 0
  %774 = vmatpush1.bf16.msra.mxu0 %v590
  %775 = vmatprep.subr.bf16.mxu0 0
  %776 = vmatpush1.bf16.msra.mxu0 %v591
  %777 = vmatprep.subr.bf16.mxu0 0
  %778 = vmatpush1.bf16.msra.mxu0 %v592
  %779 = vmatprep.subr.bf16.mxu0 0
  %780 = vmatpush1.bf16.msra.mxu0 %v593
  %781 = vmatprep.subr.bf16.mxu0 0
  %782 = vmatpush1.bf16.msra.mxu0 %v594
  %783 = vmatprep.subr.bf16.mxu0 0
  %784 = vmatpush1.bf16.msra.mxu0 %v595
  %785 = vmatprep.subr.bf16.mxu0 0
  %786 = vmatpush1.bf16.msra.mxu0 %v596
  %787 = vmatprep.subr.bf16.mxu0 0
  %788 = vmatpush1.bf16.msra.mxu0 %v597
  %789 = vmatprep.subr.bf16.mxu0 0
  %790 = vmatpush1.bf16.msra.mxu0 %v598
  %791 = vmatprep.subr.bf16.mxu0 0
  %792 = vmatpush1.bf16.msra.mxu0 %v599
  %793 = vmatprep.mubr.bf16.mxu0 %v247
  %794 = vmatmul.mubr.bf16.gmra.mrb[0].mxu0 %v246
  %v795 = vpop.f32.mrb[0].mxu0
  %v796 = vadd.f32 %v747, %v795
  %v797 = vpop.f32.mrb[0].mxu0
  %v798 = vpop.f32.mrb[0].mxu0
  %v799 = vadd.f32 %v750, %v798
  %v800 = vpop.f32.mrb[0].mxu0
  %801 = vmatprep.mubr.bf16.mxu0 %v256
  %802 = vmatmul.mubr.bf16.gmra.mrb[0].mxu0 %v255
  %v803 = vpop.f32.mrb[0].mxu0
  %v804 = vadd.f32 %v755, %v803
  %v805 = vpop.f32.mrb[0].mxu0
  %v806 = vpop.f32.mrb[0].mxu0
  %v807 = vadd.f32 %v758, %v806
  %v808 = vpop.f32.mrb[0].mxu0
  %809 = vdwg.mxu0
  %810 = vmatprep.subr.bf16.mxu0 0
  %811 = vmatpush1.bf16.msra.mxu0 %v600
  %812 = vmatprep.subr.bf16.mxu0 0
  %813 = vmatpush1.bf16.msra.mxu0 %v601
  %814 = vmatprep.subr.bf16.mxu0 0
  %815 = vmatpush1.bf16.msra.mxu0 %v602
  %816 = vmatprep.subr.bf16.mxu0 0
  %817 = vmatpush1.bf16.msra.mxu0 %v603
  %818 = vmatprep.subr.bf16.mxu0 0
  %819 = vmatpush1.bf16.msra.mxu0 %v604
  %820 = vmatprep.subr.bf16.mxu0 0
  %821 = vmatpush1.bf16.msra.mxu0 %v605
  %822 = vmatprep.subr.bf16.mxu0 0
  %823 = vmatpush1.bf16.msra.mxu0 %v606
  %824 = vmatprep.subr.bf16.mxu0 0
  %825 = vmatpush1.bf16.msra.mxu0 %v607
  %826 = vmatprep.subr.bf16.mxu0 0
  %827 = vmatpush1.bf16.msra.mxu0 %v608
  %828 = vmatprep.subr.bf16.mxu0 0
  %829 = vmatpush1.bf16.msra.mxu0 %v609
  %830 = vmatprep.subr.bf16.mxu0 0
  %831 = vmatpush1.bf16.msra.mxu0 %v610
  %832 = vmatprep.subr.bf16.mxu0 0
  %833 = vmatpush1.bf16.msra.mxu0 %v611
  %834 = vmatprep.subr.bf16.mxu0 0
  %835 = vmatpush1.bf16.msra.mxu0 %v612
  %836 = vmatprep.subr.bf16.mxu0 0
  %837 = vmatpush1.bf16.msra.mxu0 %v613
  %838 = vmatprep.subr.bf16.mxu0 0
  %839 = vmatpush1.bf16.msra.mxu0 %v614
  %840 = vmatprep.subr.bf16.mxu0 0
  %841 = vmatpush1.bf16.msra.mxu0 %v615
  %842 = vmatprep.mubr.bf16.mxu0 %v249
  %843 = vmatmul.mubr.bf16.gmra.mrb[0].mxu0 %v248
  %v844 = vpop.f32.mrb[0].mxu0
  %v845 = vadd.f32 %v796, %v844
  %v846 = vpop.f32.mrb[0].mxu0
  %v847 = vpop.f32.mrb[0].mxu0
  %v848 = vadd.f32 %v799, %v847
  %v849 = vpop.f32.mrb[0].mxu0
  %850 = vmatprep.mubr.bf16.mxu0 %v258
  %851 = vmatmul.mubr.bf16.gmra.mrb[0].mxu0 %v257
  %v852 = vpop.f32.mrb[0].mxu0
  %v853 = vadd.f32 %v804, %v852
  %v854 = vpop.f32.mrb[0].mxu0
  %v855 = vpop.f32.mrb[0].mxu0
  %v856 = vadd.f32 %v807, %v855
  %v857 = vpop.f32.mrb[0].mxu0
  %858 = vdwg.mxu0
  %859 = vmatprep.subr.bf16.mxu0 0
  %860 = vmatpush1.bf16.msra.mxu0 %v616
  %861 = vmatprep.subr.bf16.mxu0 0
  %862 = vmatpush1.bf16.msra.mxu0 %v617
  %863 = vmatprep.subr.bf16.mxu0 0
  %864 = vmatpush1.bf16.msra.mxu0 %v618
  %865 = vmatprep.subr.bf16.mxu0 0
  %866 = vmatpush1.bf16.msra.mxu0 %v619
  %867 = vmatprep.subr.bf16.mxu0 0
  %868 = vmatpush1.bf16.msra.mxu0 %v620
  %869 = vmatprep.subr.bf16.mxu0 0
  %870 = vmatpush1.bf16.msra.mxu0 %v621
  %871 = vmatprep.subr.bf16.mxu0 0
  %872 = vmatpush1.bf16.msra.mxu0 %v622
  %873 = vmatprep.subr.bf16.mxu0 0
  %874 = vmatpush1.bf16.msra.mxu0 %v623
  %875 = vmatprep.subr.bf16.mxu0 0
  %876 = vmatpush1.bf16.msra.mxu0 %v624
  %877 = vmatprep.subr.bf16.mxu0 0
  %878 = vmatpush1.bf16.msra.mxu0 %v625
  %879 = vmatprep.subr.bf16.mxu0 0
  %880 = vmatpush1.bf16.msra.mxu0 %v626
  %881 = vmatprep.subr.bf16.mxu0 0
  %882 = vmatpush1.bf16.msra.mxu0 %v627
  %883 = vmatprep.subr.bf16.mxu0 0
  %884 = vmatpush1.bf16.msra.mxu0 %v628
  %885 = vmatprep.subr.bf16.mxu0 0
  %886 = vmatpush1.bf16.msra.mxu0 %v629
  %887 = vmatprep.subr.bf16.mxu0 0
  %888 = vmatpush1.bf16.msra.mxu0 %v630
  %889 = vmatprep.subr.bf16.mxu0 0
  %890 = vmatpush1.bf16.msra.mxu0 %v631
  %891 = vmatprep.mubr.bf16.mxu0 %v251
  %892 = vmatmul.mubr.bf16.gmra.mrb[0].mxu0 %v250
  %v893 = vpop.f32.mrb[0].mxu0
  %v894 = vadd.f32 %v845, %v893
  %v895 = vpop.f32.mrb[0].mxu0
  %v896 = vpop.f32.mrb[0].mxu0
  %v897 = vadd.f32 %v848, %v896
  %v898 = vpop.f32.mrb[0].mxu0
  %899 = vmatprep.mubr.bf16.mxu0 %v260
  %900 = vmatmul.mubr.bf16.gmra.mrb[0].mxu0 %v259
  %v901 = vpop.f32.mrb[0].mxu0
  %v902 = vadd.f32 %v853, %v901
  %v903 = vpop.f32.mrb[0].mxu0
  %v904 = vpop.f32.mrb[0].mxu0
  %v905 = vadd.f32 %v856, %v904
  %v906 = vpop.f32.mrb[0].mxu0
  %907 = vdwg.mxu0
  %908 = vmatprep.subr.bf16.mxu0 0
  %909 = vmatpush1.bf16.msra.mxu0 %v632
  %910 = vmatprep.subr.bf16.mxu0 0
  %911 = vmatpush1.bf16.msra.mxu0 %v633
  %912 = vmatprep.subr.bf16.mxu0 0
  %913 = vmatpush1.bf16.msra.mxu0 %v634
  %914 = vmatprep.subr.bf16.mxu0 0
  %915 = vmatpush1.bf16.msra.mxu0 %v635
  %916 = vmatprep.subr.bf16.mxu0 0
  %917 = vmatpush1.bf16.msra.mxu0 %v636
  %918 = vmatprep.subr.bf16.mxu0 0
  %919 = vmatpush1.bf16.msra.mxu0 %v637
  %920 = vmatprep.subr.bf16.mxu0 0
  %921 = vmatpush1.bf16.msra.mxu0 %v638
  %922 = vmatprep.subr.bf16.mxu0 0
  %923 = vmatpush1.bf16.msra.mxu0 %v639
  %924 = vmatprep.subr.bf16.mxu0 0
  %925 = vmatpush1.bf16.msra.mxu0 0
  %926 = vmatprep.subr.bf16.mxu0 0
  %927 = vmatpush1.bf16.msra.mxu0 0
  %928 = vmatprep.subr.bf16.mxu0 0
  %929 = vmatpush1.bf16.msra.mxu0 0
  %930 = vmatprep.subr.bf16.mxu0 0
  %931 = vmatpush1.bf16.msra.mxu0 0
  %932 = vmatprep.subr.bf16.mxu0 0
  %933 = vmatpush1.bf16.msra.mxu0 0
  %934 = vmatprep.subr.bf16.mxu0 0
  %935 = vmatpush1.bf16.msra.mxu0 0
  %936 = vmatprep.subr.bf16.mxu0 0
  %937 = vmatpush1.bf16.msra.mxu0 0
  %938 = vmatprep.subr.bf16.mxu0 0
  %939 = vmatpush1.bf16.msra.mxu0 0
  %940 = vmatprep.mubr.bf16.mxu0 0
  %941 = vmatmul.mubr.bf16.gmra.mrb[0].mxu0 %v252
  %v942 = vpop.f32.mrb[0].mxu0
  %v943 = vadd.f32 %v894, %v942
  %v944 = vpop.f32.mrb[0].mxu0
  %v945 = vpop.f32.mrb[0].mxu0
  %v946 = vadd.f32 %v897, %v945
  %v947 = vpop.f32.mrb[0].mxu0
  %948 = vmatprep.mubr.bf16.mxu0 0
  %949 = vmatmul.mubr.bf16.gmra.mrb[0].mxu0 %v261
  %v950 = vpop.f32.mrb[0].mxu0
  %v951 = vadd.f32 %v902, %v950
  %v952 = vpop.f32.mrb[0].mxu0
  %v953 = vpop.f32.mrb[0].mxu0
  %v954 = vadd.f32 %v905, %v953
  %v955 = vpop.f32.mrb[0].mxu0
  %956 = vdwg.mxu0
  %v957 = vld [vmem:[%s2] sm:$0x1]
  %v958 = vlaneseq
  %v959 = vshrl.u32 %v958, 7
  %v960 = vsub.s32 0, %v959
  %v961 = vrot.slane %v957, %v960
  %v962 = vmul.f32 %v943, %v961
  %v963 = vmul.f32 %v946, %v961
  %v964 = vmul.f32 %v951, %v961
  %v965 = vmul.f32 %v954, %v961
  %v966 = vld [vmem:[%s2 + $0x1] sm:$0x1]
  %v967 = vlaneseq
  %v968 = vshrl.u32 %v967, 7
  %v969 = vsub.s32 0, %v968
  %v970 = vrot.slane %v966, %v969
  %v971 = vadd.f32 %v962, %v970
  %v972 = vadd.f32 %v963, %v970
  %v973 = vadd.f32 %v964, %v970
  %v974 = vadd.f32 %v965, %v970
  %v975 = vmax.f32 %v971, 0.0
  %v976 = vmax.f32 %v972, 0.0
  %v977 = vmax.f32 %v973, 0.0
  %v978 = vmax.f32 %v974, 0.0
  %v979 = vpack.c.bf16 %v976, %v975
  %v980 = vpack.c.bf16 %v978, %v977
  %v981 = vld [vmem:[%s3] sm:$0xf]
  %v982 = vld [vmem:[%s3 + $0x4] sm:$0xf]
  %v983 = vld [vmem:[%s3 + $0x8] sm:$0xf]
  %v984 = vld [vmem:[%s3 + $0xc] sm:$0xf]
  %v985 = vld [vmem:[%s3 + $0x10] sm:$0xf]
  %v986 = vld [vmem:[%s3 + $0x14] sm:$0xf]
  %v987 = vld [vmem:[%s3 + $0x18] sm:$0xf]
  %v988 = vld [vmem:[%s3 + $0x1c] sm:$0xf]
  %v989 = vld [vmem:[%s3 + $0x20] sm:$0xf]
  %v990 = vld [vmem:[%s3 + $0x24] sm:$0xf]
  %v991 = vld [vmem:[%s3 + $0x28] sm:$0xf]
  %v992 = vld [vmem:[%s3 + $0x2c] sm:$0xf]
  %v993 = vld [vmem:[%s3 + $0x30] sm:$0xf]
  %v994 = vld [vmem:[%s3 + $0x34] sm:$0xf]
  %v995 = vld [vmem:[%s3 + $0x38] sm:$0xf]
  %v996 = vld [vmem:[%s3 + $0x3c] sm:$0xf]
  %v1013 = vunpack.c.l.b16 %v981
  %v1014 = vunpack.c.l.b16 %v982
  %v1015 = vunpack.c.l.b16 %v983
  %v1016 = vunpack.c.l.b16 %v984
  %v1017 = vunpack.c.l.b16 %v985
  %v1018 = vunpack.c.l.b16 %v986
  %v1019 = vunpack.c.l.b16 %v987
  %v1020 = vunpack.c.l.b16 %v988
  %v1021 = vunpack.c.l.b16 %v989
  %v1022 = vunpack.c.l.b16 %v990
  %v1023 = vunpack.c.l.b16 %v991
  %v1024 = vunpack.c.l.b16 %v992
  %v1025 = vunpack.c.l.b16 %v993
  %v1026 = vunpack.c.l.b16 %v994
  %v1027 = vunpack.c.l.b16 %v995
  %v1028 = vunpack.c.l.b16 %v996
  %v1029 = vpack.c.b16 %v1014, %v1013
  %v1030 = vpack.c.b16 %v1016, %v1015
  %v1031 = vpack.c.b16 %v1018, %v1017
  %v1032 = vpack.c.b16 %v1020, %v1019
  %v1033 = vpack.c.b16 %v1022, %v1021
  %v1034 = vpack.c.b16 %v1024, %v1023
  %v1035 = vpack.c.b16 %v1026, %v1025
  %v1036 = vpack.c.b16 %v1028, %v1027
  %1045 = vmatprep.subr.bf16.mxu0 0
  %1046 = vmatpush1.bf16.msra.mxu0 %v1029
  %1047 = vmatprep.subr.bf16.mxu0 0
  %1048 = vmatpush1.bf16.msra.mxu0 %v1030
  %1049 = vmatprep.subr.bf16.mxu0 0
  %1050 = vmatpush1.bf16.msra.mxu0 %v1031
  %1051 = vmatprep.subr.bf16.mxu0 0
  %1052 = vmatpush1.bf16.msra.mxu0 %v1032
  %1053 = vmatprep.subr.bf16.mxu0 0
  %1054 = vmatpush1.bf16.msra.mxu0 %v1033
  %1055 = vmatprep.subr.bf16.mxu0 0
  %1056 = vmatpush1.bf16.msra.mxu0 %v1034
  %1057 = vmatprep.subr.bf16.mxu0 0
  %1058 = vmatpush1.bf16.msra.mxu0 %v1035
  %1059 = vmatprep.subr.bf16.mxu0 0
  %1060 = vmatpush1.bf16.msra.mxu0 %v1036
  %1061 = vmatprep.subr.bf16.mxu0 0
  %1062 = vmatpush1.bf16.msra.mxu0 0
  %1063 = vmatprep.subr.bf16.mxu0 0
  %1064 = vmatpush1.bf16.msra.mxu0 0
  %1065 = vmatprep.subr.bf16.mxu0 0
  %1066 = vmatpush1.bf16.msra.mxu0 0
  %1067 = vmatprep.subr.bf16.mxu0 0
  %1068 = vmatpush1.bf16.msra.mxu0 0
  %1069 = vmatprep.subr.bf16.mxu0 0
  %1070 = vmatpush1.bf16.msra.mxu0 0
  %1071 = vmatprep.subr.bf16.mxu0 0
  %1072 = vmatpush1.bf16.msra.mxu0 0
  %1073 = vmatprep.subr.bf16.mxu0 0
  %1074 = vmatpush1.bf16.msra.mxu0 0
  %1075 = vmatprep.subr.bf16.mxu0 0
  %1076 = vmatpush1.bf16.msra.mxu0 0
  %1077 = vmatprep.mubr.bf16.mxu0 0
  %1078 = vmatmul.mubr.bf16.gmra.mrb[0].mxu0 %v979
  %v1079 = vpop.f32.mrb[0].mxu0
  %v1080 = vadd.f32 0.0, %v1079
  %v1081 = vpop.f32.mrb[0].mxu0
  %v1082 = vpop.f32.mrb[0].mxu0
  %v1083 = vadd.f32 0.0, %v1082
  %v1084 = vpop.f32.mrb[0].mxu0
  %1085 = vmatprep.mubr.bf16.mxu0 0
  %1086 = vmatmul.mubr.bf16.gmra.mrb[0].mxu0 %v980
  %v1087 = vpop.f32.mrb[0].mxu0
  %v1088 = vadd.f32 0.0, %v1087
  %v1089 = vpop.f32.mrb[0].mxu0
  %v1090 = vpop.f32.mrb[0].mxu0
  %v1091 = vadd.f32 0.0, %v1090
  %v1092 = vpop.f32.mrb[0].mxu0
  %1093 = vdwg.mxu0
  %v1094 = vld [vmem:[%s4] sm:$0x1]
  %v1095 = vlaneseq
  %v1096 = vshrl.u32 %v1095, 7
  %v1097 = vsub.s32 0, %v1096
  %v1098 = vrot.slane %v1094, %v1097
  %v1099 = vmul.f32 %v1080, %v1098
  %v1100 = vmul.f32 %v1083, %v1098
  %v1101 = vmul.f32 %v1088, %v1098
  %v1102 = vmul.f32 %v1091, %v1098
  %v1103 = vld [vmem:[%s4 + $0x1] sm:$0x1]
  %v1104 = vlaneseq
  %v1105 = vshrl.u32 %v1104, 7
  %v1106 = vsub.s32 0, %v1105
  %v1107 = vrot.slane %v1103, %v1106
  %v1108 = vadd.f32 %v1099, %v1107
  %v1109 = vadd.f32 %v1100, %v1107
  %v1110 = vadd.f32 %v1101, %v1107
  %v1111 = vadd.f32 %v1102, %v1107
  %v1112 = vld [vmem:[%s5] sm:$0xf]
  %v1113 = vld [vmem:[%s5 + $0x4] sm:$0xf]
  %v1114 = vld [vmem:[%s5 + $0x8] sm:$0xf]
  %v1115 = vld [vmem:[%s5 + $0xc] sm:$0xf]
  %v1116 = vunpack.c.l.bf16 %v1112
  %v1117 = vunpack.c.l.bf16 %v1113
  %v1118 = vunpack.c.l.bf16 %v1114
  %v1119 = vunpack.c.l.bf16 %v1115
  %v1120 = vadd.f32 %v1108, %v1116
  %v1121 = vadd.f32 %v1109, %v1117
  %v1122 = vadd.f32 %v1110, %v1118
  %v1123 = vadd.f32 %v1111, %v1119
  %v1124 = vmax.f32 %v1120, 0.0
  %v1125 = vmax.f32 %v1121, 0.0
  %v1126 = vmax.f32 %v1122, 0.0
  %v1127 = vmax.f32 %v1123, 0.0
  %v1128 = vpack.c.bf16 %v1125, %v1124
  %v1129 = vpack.c.bf16 %v1127, %v1126
  %v1132 = vunpack.c.l.b16 %v1128
  %v1133 = vunpack.c.h.b16 %v1128
  %v1134 = vunpack.c.l.b16 %v1129
  %v1135 = vunpack.c.h.b16 %v1129
  %v1136 = vpack.c.b16 %v1132, %v1132
  %v1137 = vpack.c.b16 %v1133, %v1133
  %v1138 = vpack.c.b16 %v1134, %v1134
  %v1139 = vpack.c.b16 %v1135, %v1135
  %1144 = vst [vmem:[%s6] sm:$0xf] %v1136
  %1145 = vst [vmem:[%s6 + $0x4] sm:$0xf] %v1137
  %1146 = vst [vmem:[%s6 + $0x8] sm:$0xf] %v1138
  %1147 = vst [vmem:[%s6 + $0xc] sm:$0xf] %v1139
  // Predicated region
  $region26: #{resnetfc_forward.57} parent=0 // pred_check
    _
  $region27: #{resnetfc_forward.57} parent=0 // pred_check_branch
    %1149 = sbr.rel (0) target = $region29
  $region28: #{resnetfc_forward.57} parent=0 // pred_region
    _
  $region29: #{resnetfc_forward.57} parent=0 // pred_fallthru
    _
  // Predicated region
  $region30: #{resnetfc_forward.57} parent=0 // pred_check
    _
  $region31: #{resnetfc_forward.57} parent=0 // pred_check_branch
    %1151 = sbr.rel (0) target = $region33
  $region32: #{resnetfc_forward.57} parent=0 // pred_region
    _
  $region33: #{resnetfc_forward.57} parent=0 // pred_fallthru
    _

// kernel: resnetfc_forward.71
$region0: #{resnetfc_forward.71}
  #allocation0 [shape = 'u32[]', space=smem, size = 0x4, offset = 0x4, fixed_abs, tag = 'smem constant byte address 0x4 - core index']
  #allocation1 [shape = 'u32[144,128]{1,0:T(1,128)}', space=vmem, size = 0x12000, scoped, tag = 'internal scratch']
  %s0 = inlined_call_operand.vmem [shape: bf16[8,256], index: 0, kind: input, shape index: {}]
  %s1 = inlined_call_operand.vmem [shape: bf16[256,128], index: 1, kind: input, shape index: {}]
  %s2 = inlined_call_operand.vmem [shape: f32[2,128], index: 2, kind: input, shape index: {}]
  %s3 = inlined_call_operand.vmem [shape: bf16[8,128], index: 3, kind: output, shape index: {}]
  %s4 = sld [smem:[#allocation0]]
  $region22: #{resnetfc_forward.71} parent=0
    _
  %s6 = ssub.s32 1, %s4
  %s7 = scalar_select 0, %s6, %s4
  // Predicated region
  $region2: #{resnetfc_forward.71} parent=0 // pred_check
    _
  $region3: #{resnetfc_forward.71} parent=0 // pred_check_branch
    %9 = sbr.rel (0) target = $region5
  $region4: #{resnetfc_forward.71} parent=0 // pred_region
    _
  $region5: #{resnetfc_forward.71} parent=0 // pred_fallthru
    _
  // Predicated region
  $region6: #{resnetfc_forward.71} parent=0 // pred_check
    _
  $region7: #{resnetfc_forward.71} parent=0 // pred_check_branch
    %11 = sbr.rel (0) target = $region9
  $region8: #{resnetfc_forward.71} parent=0 // pred_region
    _
  $region9: #{resnetfc_forward.71} parent=0 // pred_fallthru
    _
  // Predicated region
  $region10: #{resnetfc_forward.71} parent=0 // pred_check
    _
  $region11: #{resnetfc_forward.71} parent=0 // pred_check_branch
    %13 = sbr.rel (0) target = $region13
  $region12: #{resnetfc_forward.71} parent=0 // pred_region
    _
  $region13: #{resnetfc_forward.71} parent=0 // pred_fallthru
    _
  %v15 = vld [vmem:[%s0] sm:$0xff]
  %v16 = vld [vmem:[%s1] sm:$0xf]
  %v17 = vld [vmem:[%s1 + $0x4] sm:$0xf]
  %v18 = vld [vmem:[%s1 + $0x8] sm:$0xf]
  %v19 = vld [vmem:[%s1 + $0xc] sm:$0xf]
  %v20 = vld [vmem:[%s1 + $0x10] sm:$0xf]
  %v21 = vld [vmem:[%s1 + $0x14] sm:$0xf]
  %v22 = vld [vmem:[%s1 + $0x18] sm:$0xf]
  %v23 = vld [vmem:[%s1 + $0x1c] sm:$0xf]
  %v24 = vld [vmem:[%s1 + $0x20] sm:$0xf]
  %v25 = vld [vmem:[%s1 + $0x24] sm:$0xf]
  %v26 = vld [vmem:[%s1 + $0x28] sm:$0xf]
  %v27 = vld [vmem:[%s1 + $0x2c] sm:$0xf]
  %v28 = vld [vmem:[%s1 + $0x30] sm:$0xf]
  %v29 = vld [vmem:[%s1 + $0x34] sm:$0xf]
  %v30 = vld [vmem:[%s1 + $0x38] sm:$0xf]
  %v31 = vld [vmem:[%s1 + $0x3c] sm:$0xf]
  %v32 = vld [vmem:[%s1 + $0x40] sm:$0xf]
  %v33 = vld [vmem:[%s1 + $0x44] sm:$0xf]
  %v34 = vld [vmem:[%s1 + $0x48] sm:$0xf]
  %v35 = vld [vmem:[%s1 + $0x4c] sm:$0xf]
  %v36 = vld [vmem:[%s1 + $0x50] sm:$0xf]
  %v37 = vld [vmem:[%s1 + $0x54] sm:$0xf]
  %v38 = vld [vmem:[%s1 + $0x58] sm:$0xf]
  %v39 = vld [vmem:[%s1 + $0x5c] sm:$0xf]
  %v40 = vld [vmem:[%s1 + $0x60] sm:$0xf]
  %v41 = vld [vmem:[%s1 + $0x64] sm:$0xf]
  %v42 = vld [vmem:[%s1 + $0x68] sm:$0xf]
  %v43 = vld [vmem:[%s1 + $0x6c] sm:$0xf]
  %v44 = vld [vmem:[%s1 + $0x70] sm:$0xf]
  %v45 = vld [vmem:[%s1 + $0x74] sm:$0xf]
  %v46 = vld [vmem:[%s1 + $0x78] sm:$0xf]
  %v47 = vld [vmem:[%s1 + $0x7c] sm:$0xf]
  %v49 = vunpack.c.l.b16 %v15
  %v50 = vunpack.c.h.b16 %v15
  %v51 = vpack.c.b16 %v49, %v49
  %v52 = vpack.c.b16 %v50, %v50
  %v87 = vunpack.c.l.b16 %v16
  %v88 = vunpack.c.l.b16 %v17
  %v89 = vunpack.c.l.b16 %v18
  %v90 = vunpack.c.l.b16 %v19
  %v91 = vunpack.c.l.b16 %v20
  %v92 = vunpack.c.l.b16 %v21
  %v93 = vunpack.c.l.b16 %v22
  %v94 = vunpack.c.l.b16 %v23
  %v95 = vunpack.c.l.b16 %v24
  %v96 = vunpack.c.l.b16 %v25
  %v97 = vunpack.c.l.b16 %v26
  %v98 = vunpack.c.l.b16 %v27
  %v99 = vunpack.c.l.b16 %v28
  %v100 = vunpack.c.l.b16 %v29
  %v101 = vunpack.c.l.b16 %v30
  %v102 = vunpack.c.l.b16 %v31
  %v103 = vunpack.c.l.b16 %v32
  %v104 = vunpack.c.l.b16 %v33
  %v105 = vunpack.c.l.b16 %v34
  %v106 = vunpack.c.l.b16 %v35
  %v107 = vunpack.c.l.b16 %v36
  %v108 = vunpack.c.l.b16 %v37
  %v109 = vunpack.c.l.b16 %v38
  %v110 = vunpack.c.l.b16 %v39
  %v111 = vunpack.c.l.b16 %v40
  %v112 = vunpack.c.l.b16 %v41
  %v113 = vunpack.c.l.b16 %v42
  %v114 = vunpack.c.l.b16 %v43
  %v115 = vunpack.c.l.b16 %v44
  %v116 = vunpack.c.l.b16 %v45
  %v117 = vunpack.c.l.b16 %v46
  %v118 = vunpack.c.l.b16 %v47
  %v119 = vpack.c.b16 %v88, %v87
  %v120 = vpack.c.b16 %v90, %v89
  %v121 = vpack.c.b16 %v92, %v91
  %v122 = vpack.c.b16 %v94, %v93
  %v123 = vpack.c.b16 %v96, %v95
  %v124 = vpack.c.b16 %v98, %v97
  %v125 = vpack.c.b16 %v100, %v99
  %v126 = vpack.c.b16 %v102, %v101
  %v127 = vpack.c.b16 %v104, %v103
  %v128 = vpack.c.b16 %v106, %v105
  %v129 = vpack.c.b16 %v108, %v107
  %v130 = vpack.c.b16 %v110, %v109
  %v131 = vpack.c.b16 %v112, %v111
  %v132 = vpack.c.b16 %v114, %v113
  %v133 = vpack.c.b16 %v116, %v115
  %v134 = vpack.c.b16 %v118, %v117
  %151 = vmatprep.subr.bf16.mxu0 0
  %152 = vmatpush1.bf16.msra.mxu0 %v119
  %153 = vmatprep.subr.bf16.mxu0 0
  %154 = vmatpush1.bf16.msra.mxu0 %v120
  %155 = vmatprep.subr.bf16.mxu0 0
  %156 = vmatpush1.bf16.msra.mxu0 %v121
  %157 = vmatprep.subr.bf16.mxu0 0
  %158 = vmatpush1.bf16.msra.mxu0 %v122
  %159 = vmatprep.subr.bf16.mxu0 0
  %160 = vmatpush1.bf16.msra.mxu0 %v123
  %161 = vmatprep.subr.bf16.mxu0 0
  %162 = vmatpush1.bf16.msra.mxu0 %v124
  %163 = vmatprep.subr.bf16.mxu0 0
  %164 = vmatpush1.bf16.msra.mxu0 %v125
  %165 = vmatprep.subr.bf16.mxu0 0
  %166 = vmatpush1.bf16.msra.mxu0 %v126
  %167 = vmatprep.subr.bf16.mxu0 0
  %168 = vmatpush1.bf16.msra.mxu0 %v127
  %169 = vmatprep.subr.bf16.mxu0 0
  %170 = vmatpush1.bf16.msra.mxu0 %v128
  %171 = vmatprep.subr.bf16.mxu0 0
  %172 = vmatpush1.bf16.msra.mxu0 %v129
  %173 = vmatprep.subr.bf16.mxu0 0
  %174 = vmatpush1.bf16.msra.mxu0 %v130
  %175 = vmatprep.subr.bf16.mxu0 0
  %176 = vmatpush1.bf16.msra.mxu0 %v131
  %177 = vmatprep.subr.bf16.mxu0 0
  %178 = vmatpush1.bf16.msra.mxu0 %v132
  %179 = vmatprep.subr.bf16.mxu0 0
  %180 = vmatpush1.bf16.msra.mxu0 %v133
  %181 = vmatprep.subr.bf16.mxu0 0
  %182 = vmatpush1.bf16.msra.mxu0 %v134
  %183 = vmatprep.mubr.bf16.mxu0 %v52
  %184 = vmatmul.mubr.bf16.gmra.mrb[0].mxu0 %v51
  %v185 = vpop.f32.mrb[0].mxu0
  %v186 = vadd.f32 0.0, %v185
  %v187 = vpop.f32.mrb[0].mxu0
  %v188 = vpop.f32.mrb[0].mxu0
  %v189 = vpop.f32.mrb[0].mxu0
  %190 = vdwg.mxu0
  %v191 = vld [vmem:[%s2] sm:$0x1]
  %v192 = vlaneseq
  %v193 = vshrl.u32 %v192, 7
  %v194 = vsub.s32 0, %v193
  %v195 = vrot.slane %v191, %v194
  %v196 = vmul.f32 %v186, %v195
  %v197 = vld [vmem:[%s2 + $0x1] sm:$0x1]
  %v198 = vlaneseq
  %v199 = vshrl.u32 %v198, 7
  %v200 = vsub.s32 0, %v199
  %v201 = vrot.slane %v197, %v200
  %v202 = vadd.f32 %v196, %v201
  %v203 = vmax.f32 %v202, 0.0
  %v204 = vpack.c.bf16 %v203, %v203
  %205 = vst [vmem:[%s3] sm:$0xf] %v204
  // Predicated region
  $region14: #{resnetfc_forward.71} parent=0 // pred_check
    _
  $region15: #{resnetfc_forward.71} parent=0 // pred_check_branch
    %207 = sbr.rel (0) target = $region17
  $region16: #{resnetfc_forward.71} parent=0 // pred_region
    _
  $region17: #{resnetfc_forward.71} parent=0 // pred_fallthru
    _
  // Predicated region
  $region18: #{resnetfc_forward.71} parent=0 // pred_check
    _
  $region19: #{resnetfc_forward.71} parent=0 // pred_check_branch
    %209 = sbr.rel (0) target = $region21
  $region20: #{resnetfc_forward.71} parent=0 // pred_region
    _
  $region21: #{resnetfc_forward.71} parent=0 // pred_fallthru
    _

// kernel: resnetfc_forward.69
$region0: #{resnetfc_forward.69}
  #allocation0 [shape = 'u32[]', space=smem, size = 0x4, offset = 0x4, fixed_abs, tag = 'smem constant byte address 0x4 - core index']
  #allocation1 [shape = 'u32[144,128]{1,0:T(1,128)}', space=vmem, size = 0x12000, scoped, tag = 'internal scratch']
  %s0 = inlined_call_operand.vmem [shape: bf16[8,128], index: 0, kind: input, shape index: {}]
  %s1 = inlined_call_operand.vmem [shape: bf16[128,256], index: 1, kind: input, shape index: {}]
  %s2 = inlined_call_operand.vmem [shape: f32[2,256], index: 2, kind: input, shape index: {}]
  %s3 = inlined_call_operand.vmem [shape: bf16[8,256], index: 3, kind: output, shape index: {}]
  %s4 = sld [smem:[#allocation0]]
  $region22: #{resnetfc_forward.69} parent=0
    _
  %s6 = ssub.s32 1, %s4
  %s7 = scalar_select 0, %s6, %s4
  // Predicated region
  $region2: #{resnetfc_forward.69} parent=0 // pred_check
    _
  $region3: #{resnetfc_forward.69} parent=0 // pred_check_branch
    %9 = sbr.rel (0) target = $region5
  $region4: #{resnetfc_forward.69} parent=0 // pred_region
    _
  $region5: #{resnetfc_forward.69} parent=0 // pred_fallthru
    _
  // Predicated region
  $region6: #{resnetfc_forward.69} parent=0 // pred_check
    _
  $region7: #{resnetfc_forward.69} parent=0 // pred_check_branch
    %11 = sbr.rel (0) target = $region9
  $region8: #{resnetfc_forward.69} parent=0 // pred_region
    _
  $region9: #{resnetfc_forward.69} parent=0 // pred_fallthru
    _
  // Predicated region
  $region10: #{resnetfc_forward.69} parent=0 // pred_check
    _
  $region11: #{resnetfc_forward.69} parent=0 // pred_check_branch
    %13 = sbr.rel (0) target = $region13
  $region12: #{resnetfc_forward.69} parent=0 // pred_region
    _
  $region13: #{resnetfc_forward.69} parent=0 // pred_fallthru
    _
  %v15 = vld [vmem:[%s0] sm:$0xf]
  %v16 = vld [vmem:[%s1] sm:$0xff]
  %v17 = vld [vmem:[%s1 + $0x8] sm:$0xff]
  %v18 = vld [vmem:[%s1 + $0x10] sm:$0xff]
  %v19 = vld [vmem:[%s1 + $0x18] sm:$0xff]
  %v20 = vld [vmem:[%s1 + $0x20] sm:$0xff]
  %v21 = vld [vmem:[%s1 + $0x28] sm:$0xff]
  %v22 = vld [vmem:[%s1 + $0x30] sm:$0xff]
  %v23 = vld [vmem:[%s1 + $0x38] sm:$0xff]
  %v24 = vld [vmem:[%s1 + $0x40] sm:$0xff]
  %v25 = vld [vmem:[%s1 + $0x48] sm:$0xff]
  %v26 = vld [vmem:[%s1 + $0x50] sm:$0xff]
  %v27 = vld [vmem:[%s1 + $0x58] sm:$0xff]
  %v28 = vld [vmem:[%s1 + $0x60] sm:$0xff]
  %v29 = vld [vmem:[%s1 + $0x68] sm:$0xff]
  %v30 = vld [vmem:[%s1 + $0x70] sm:$0xff]
  %v31 = vld [vmem:[%s1 + $0x78] sm:$0xff]
  %v48 = vunpack.c.l.b16 %v16
  %v49 = vunpack.c.h.b16 %v16
  %v50 = vunpack.c.l.b16 %v17
  %v51 = vunpack.c.h.b16 %v17
  %v52 = vunpack.c.l.b16 %v18
  %v53 = vunpack.c.h.b16 %v18
  %v54 = vunpack.c.l.b16 %v19
  %v55 = vunpack.c.h.b16 %v19
  %v56 = vunpack.c.l.b16 %v20
  %v57 = vunpack.c.h.b16 %v20
  %v58 = vunpack.c.l.b16 %v21
  %v59 = vunpack.c.h.b16 %v21
  %v60 = vunpack.c.l.b16 %v22
  %v61 = vunpack.c.h.b16 %v22
  %v62 = vunpack.c.l.b16 %v23
  %v63 = vunpack.c.h.b16 %v23
  %v64 = vunpack.c.l.b16 %v24
  %v65 = vunpack.c.h.b16 %v24
  %v66 = vunpack.c.l.b16 %v25
  %v67 = vunpack.c.h.b16 %v25
  %v68 = vunpack.c.l.b16 %v26
  %v69 = vunpack.c.h.b16 %v26
  %v70 = vunpack.c.l.b16 %v27
  %v71 = vunpack.c.h.b16 %v27
  %v72 = vunpack.c.l.b16 %v28
  %v73 = vunpack.c.h.b16 %v28
  %v74 = vunpack.c.l.b16 %v29
  %v75 = vunpack.c.h.b16 %v29
  %v76 = vunpack.c.l.b16 %v30
  %v77 = vunpack.c.h.b16 %v30
  %v78 = vunpack.c.l.b16 %v31
  %v79 = vunpack.c.h.b16 %v31
  %v80 = vpack.c.b16 %v50, %v48
  %v81 = vpack.c.b16 %v51, %v49
  %v82 = vpack.c.b16 %v54, %v52
  %v83 = vpack.c.b16 %v55, %v53
  %v84 = vpack.c.b16 %v58, %v56
  %v85 = vpack.c.b16 %v59, %v57
  %v86 = vpack.c.b16 %v62, %v60
  %v87 = vpack.c.b16 %v63, %v61
  %v88 = vpack.c.b16 %v66, %v64
  %v89 = vpack.c.b16 %v67, %v65
  %v90 = vpack.c.b16 %v70, %v68
  %v91 = vpack.c.b16 %v71, %v69
  %v92 = vpack.c.b16 %v74, %v72
  %v93 = vpack.c.b16 %v75, %v73
  %v94 = vpack.c.b16 %v78, %v76
  %v95 = vpack.c.b16 %v79, %v77
  %112 = vmatprep.subr.bf16.mxu0 %v81
  %113 = vmatpush1.bf16.msra.mxu0 %v80
  %114 = vmatprep.subr.bf16.mxu0 %v83
  %115 = vmatpush1.bf16.msra.mxu0 %v82
  %116 = vmatprep.subr.bf16.mxu0 %v85
  %117 = vmatpush1.bf16.msra.mxu0 %v84
  %118 = vmatprep.subr.bf16.mxu0 %v87
  %119 = vmatpush1.bf16.msra.mxu0 %v86
  %120 = vmatprep.subr.bf16.mxu0 %v89
  %121 = vmatpush1.bf16.msra.mxu0 %v88
  %122 = vmatprep.subr.bf16.mxu0 %v91
  %123 = vmatpush1.bf16.msra.mxu0 %v90
  %124 = vmatprep.subr.bf16.mxu0 %v93
  %125 = vmatpush1.bf16.msra.mxu0 %v92
  %126 = vmatprep.subr.bf16.mxu0 %v95
  %127 = vmatpush1.bf16.msra.mxu0 %v94
  %128 = vmatprep.subr.bf16.mxu0 0
  %129 = vmatpush1.bf16.msra.mxu0 0
  %130 = vmatprep.subr.bf16.mxu0 0
  %131 = vmatpush1.bf16.msra.mxu0 0
  %132 = vmatprep.subr.bf16.mxu0 0
  %133 = vmatpush1.bf16.msra.mxu0 0
  %134 = vmatprep.subr.bf16.mxu0 0
  %135 = vmatpush1.bf16.msra.mxu0 0
  %136 = vmatprep.subr.bf16.mxu0 0
  %137 = vmatpush1.bf16.msra.mxu0 0
  %138 = vmatprep.subr.bf16.mxu0 0
  %139 = vmatpush1.bf16.msra.mxu0 0
  %140 = vmatprep.subr.bf16.mxu0 0
  %141 = vmatpush1.bf16.msra.mxu0 0
  %142 = vmatprep.subr.bf16.mxu0 0
  %143 = vmatpush1.bf16.msra.mxu0 0
  %144 = vmatprep.mubr.bf16.mxu0 0
  %145 = vmatmul.mubr.bf16.gmra.mrb[0].mxu0 %v15
  %v146 = vpop.f32.mrb[0].mxu0
  %v147 = vadd.f32 0.0, %v146
  %v148 = vpop.f32.mrb[0].mxu0
  %v149 = vadd.f32 0.0, %v148
  %v150 = vpop.f32.mrb[0].mxu0
  %v151 = vpop.f32.mrb[0].mxu0
  %152 = vdwg.mxu0
  %v153 = vld [vmem:[%s2] ss:$2 sm:$0x3]
  %v155 = vlaneseq
  %v156 = vshrl.u32 %v155, 7
  %v157 = vsub.s32 0, %v156
  %v158 = vrot.slane %v153, %v157
  %v159 = vlaneseq
  %v160 = vshrl.u32 %v159, 7
  %v161 = vsub.s32 1, %v160
  %v162 = vrot.slane %v153, %v161
  %v165 = vmul.f32 %v147, %v158
  %v166 = vmul.f32 %v149, %v162
  %s167 = scalar_lea.vmem %s2, 1
  %v168 = vld [vmem:[%s167] ss:$2 sm:$0x3]
  %v170 = vlaneseq
  %v171 = vshrl.u32 %v170, 7
  %v172 = vsub.s32 0, %v171
  %v173 = vrot.slane %v168, %v172
  %v174 = vlaneseq
  %v175 = vshrl.u32 %v174, 7
  %v176 = vsub.s32 1, %v175
  %v177 = vrot.slane %v168, %v176
  %v180 = vadd.f32 %v165, %v173
  %v181 = vadd.f32 %v166, %v177
  %v182 = vpack.c.bf16 %v180, %v180
  %v183 = vpack.c.bf16 %v181, %v181
  %v186 = vunpack.c.l.b16 %v182
  %v187 = vunpack.c.l.b16 %v183
  %v188 = vpack.c.b16 %v187, %v186
  %190 = vst [vmem:[%s3] sm:$0xff] %v188
  // Predicated region
  $region14: #{resnetfc_forward.69} parent=0 // pred_check
    _
  $region15: #{resnetfc_forward.69} parent=0 // pred_check_branch
    %192 = sbr.rel (0) target = $region17
  $region16: #{resnetfc_forward.69} parent=0 // pred_region
    _
  $region17: #{resnetfc_forward.69} parent=0 // pred_fallthru
    _
  // Predicated region
  $region18: #{resnetfc_forward.69} parent=0 // pred_check
    _
  $region19: #{resnetfc_forward.69} parent=0 // pred_check_branch
    %194 = sbr.rel (0) target = $region21
  $region20: #{resnetfc_forward.69} parent=0 // pred_region
    _
  $region21: #{resnetfc_forward.69} parent=0 // pred_fallthru
    _

// kernel: resnetfc_forward.70
$region0: #{resnetfc_forward.70}
  #allocation0 [shape = 'u32[]', space=smem, size = 0x4, offset = 0x4, fixed_abs, tag = 'smem constant byte address 0x4 - core index']
  #allocation1 [shape = 'u32[144,128]{1,0:T(1,128)}', space=vmem, size = 0x12000, scoped, tag = 'internal scratch']
  %s0 = inlined_call_operand.vmem [shape: bf16[8,1152], index: 0, kind: input, shape index: {}]
  %s1 = inlined_call_operand.vmem [shape: bf16[1152,128], index: 1, kind: input, shape index: {}]
  %s2 = inlined_call_operand.vmem [shape: f32[2,128], index: 2, kind: input, shape index: {}]
  %s3 = inlined_call_operand.vmem [shape: bf16[128,256], index: 3, kind: input, shape index: {}]
  %s4 = inlined_call_operand.vmem [shape: f32[2,256], index: 4, kind: input, shape index: {}]
  %s5 = inlined_call_operand.vmem [shape: bf16[8,256], index: 5, kind: input, shape index: {}]
  %s6 = inlined_call_operand.vmem [shape: bf16[8,256], index: 6, kind: output, shape index: {}]
  %s7 = sld [smem:[#allocation0]]
  $region34: #{resnetfc_forward.70} parent=0
    _
  %s9 = ssub.s32 1, %s7
  %s10 = scalar_select 0, %s9, %s7
  // Predicated region
  $region2: #{resnetfc_forward.70} parent=0 // pred_check
    _
  $region3: #{resnetfc_forward.70} parent=0 // pred_check_branch
    %12 = sbr.rel (0) target = $region5
  $region4: #{resnetfc_forward.70} parent=0 // pred_region
    _
  $region5: #{resnetfc_forward.70} parent=0 // pred_fallthru
    _
  // Predicated region
  $region6: #{resnetfc_forward.70} parent=0 // pred_check
    _
  $region7: #{resnetfc_forward.70} parent=0 // pred_check_branch
    %14 = sbr.rel (0) target = $region9
  $region8: #{resnetfc_forward.70} parent=0 // pred_region
    _
  $region9: #{resnetfc_forward.70} parent=0 // pred_fallthru
    _
  // Predicated region
  $region10: #{resnetfc_forward.70} parent=0 // pred_check
    _
  $region11: #{resnetfc_forward.70} parent=0 // pred_check_branch
    %16 = sbr.rel (0) target = $region13
  $region12: #{resnetfc_forward.70} parent=0 // pred_region
    _
  $region13: #{resnetfc_forward.70} parent=0 // pred_fallthru
    _
  // Predicated region
  $region14: #{resnetfc_forward.70} parent=0 // pred_check
    _
  $region15: #{resnetfc_forward.70} parent=0 // pred_check_branch
    %18 = sbr.rel (0) target = $region17
  $region16: #{resnetfc_forward.70} parent=0 // pred_region
    _
  $region17: #{resnetfc_forward.70} parent=0 // pred_fallthru
    _
  // Predicated region
  $region18: #{resnetfc_forward.70} parent=0 // pred_check
    _
  $region19: #{resnetfc_forward.70} parent=0 // pred_check_branch
    %20 = sbr.rel (0) target = $region21
  $region20: #{resnetfc_forward.70} parent=0 // pred_region
    _
  $region21: #{resnetfc_forward.70} parent=0 // pred_fallthru
    _
  // Predicated region
  $region22: #{resnetfc_forward.70} parent=0 // pred_check
    _
  $region23: #{resnetfc_forward.70} parent=0 // pred_check_branch
    %22 = sbr.rel (0) target = $region25
  $region24: #{resnetfc_forward.70} parent=0 // pred_region
    _
  $region25: #{resnetfc_forward.70} parent=0 // pred_fallthru
    _
  %v24 = vld [vmem:[%s0] sm:$0xff]
  %v25 = vld [vmem:[%s0 + $0x8] sm:$0xff]
  %v26 = vld [vmem:[%s0 + $0x10] sm:$0xff]
  %v27 = vld [vmem:[%s0 + $0x18] sm:$0xff]
  %v28 = vld [vmem:[%s0 + $0x20] sm:$0xf]
  %v29 = vld [vmem:[%s1] sm:$0xf]
  %v30 = vld [vmem:[%s1 + $0x4] sm:$0xf]
  %v31 = vld [vmem:[%s1 + $0x8] sm:$0xf]
  %v32 = vld [vmem:[%s1 + $0xc] sm:$0xf]
  %v33 = vld [vmem:[%s1 + $0x10] sm:$0xf]
  %v34 = vld [vmem:[%s1 + $0x14] sm:$0xf]
  %v35 = vld [vmem:[%s1 + $0x18] sm:$0xf]
  %v36 = vld [vmem:[%s1 + $0x1c] sm:$0xf]
  %v37 = vld [vmem:[%s1 + $0x20] sm:$0xf]
  %v38 = vld [vmem:[%s1 + $0x24] sm:$0xf]
  %v39 = vld [vmem:[%s1 + $0x28] sm:$0xf]
  %v40 = vld [vmem:[%s1 + $0x2c] sm:$0xf]
  %v41 = vld [vmem:[%s1 + $0x30] sm:$0xf]
  %v42 = vld [vmem:[%s1 + $0x34] sm:$0xf]
  %v43 = vld [vmem:[%s1 + $0x38] sm:$0xf]
  %v44 = vld [vmem:[%s1 + $0x3c] sm:$0xf]
  %v45 = vld [vmem:[%s1 + $0x40] sm:$0xf]
  %v46 = vld [vmem:[%s1 + $0x44] sm:$0xf]
  %v47 = vld [vmem:[%s1 + $0x48] sm:$0xf]
  %v48 = vld [vmem:[%s1 + $0x4c] sm:$0xf]
  %v49 = vld [vmem:[%s1 + $0x50] sm:$0xf]
  %v50 = vld [vmem:[%s1 + $0x54] sm:$0xf]
  %v51 = vld [vmem:[%s1 + $0x58] sm:$0xf]
  %v52 = vld [vmem:[%s1 + $0x5c] sm:$0xf]
  %v53 = vld [vmem:[%s1 + $0x60] sm:$0xf]
  %v54 = vld [vmem:[%s1 + $0x64] sm:$0xf]
  %v55 = vld [vmem:[%s1 + $0x68] sm:$0xf]
  %v56 = vld [vmem:[%s1 + $0x6c] sm:$0xf]
  %v57 = vld [vmem:[%s1 + $0x70] sm:$0xf]
  %v58 = vld [vmem:[%s1 + $0x74] sm:$0xf]
  %v59 = vld [vmem:[%s1 + $0x78] sm:$0xf]
  %v60 = vld [vmem:[%s1 + $0x7c] sm:$0xf]
  %v61 = vld [vmem:[%s1 + $0x80] sm:$0xf]
  %v62 = vld [vmem:[%s1 + $0x84] sm:$0xf]
  %v63 = vld [vmem:[%s1 + $0x88] sm:$0xf]
  %v64 = vld [vmem:[%s1 + $0x8c] sm:$0xf]
  %v65 = vld [vmem:[%s1 + $0x90] sm:$0xf]
  %v66 = vld [vmem:[%s1 + $0x94] sm:$0xf]
  %v67 = vld [vmem:[%s1 + $0x98] sm:$0xf]
  %v68 = vld [vmem:[%s1 + $0x9c] sm:$0xf]
  %v69 = vld [vmem:[%s1 + $0xa0] sm:$0xf]
  %v70 = vld [vmem:[%s1 + $0xa4] sm:$0xf]
  %v71 = vld [vmem:[%s1 + $0xa8] sm:$0xf]
  %v72 = vld [vmem:[%s1 + $0xac] sm:$0xf]
  %v73 = vld [vmem:[%s1 + $0xb0] sm:$0xf]
  %v74 = vld [vmem:[%s1 + $0xb4] sm:$0xf]
  %v75 = vld [vmem:[%s1 + $0xb8] sm:$0xf]
  %v76 = vld [vmem:[%s1 + $0xbc] sm:$0xf]
  %v77 = vld [vmem:[%s1 + $0xc0] sm:$0xf]
  %v78 = vld [vmem:[%s1 + $0xc4] sm:$0xf]
  %v79 = vld [vmem:[%s1 + $0xc8] sm:$0xf]
  %v80 = vld [vmem:[%s1 + $0xcc] sm:$0xf]
  %v81 = vld [vmem:[%s1 + $0xd0] sm:$0xf]
  %v82 = vld [vmem:[%s1 + $0xd4] sm:$0xf]
  %v83 = vld [vmem:[%s1 + $0xd8] sm:$0xf]
  %v84 = vld [vmem:[%s1 + $0xdc] sm:$0xf]
  %v85 = vld [vmem:[%s1 + $0xe0] sm:$0xf]
  %v86 = vld [vmem:[%s1 + $0xe4] sm:$0xf]
  %v87 = vld [vmem:[%s1 + $0xe8] sm:$0xf]
  %v88 = vld [vmem:[%s1 + $0xec] sm:$0xf]
  %v89 = vld [vmem:[%s1 + $0xf0] sm:$0xf]
  %v90 = vld [vmem:[%s1 + $0xf4] sm:$0xf]
  %v91 = vld [vmem:[%s1 + $0xf8] sm:$0xf]
  %v92 = vld [vmem:[%s1 + $0xfc] sm:$0xf]
  %v93 = vld [vmem:[%s1 + $0x100] sm:$0xf]
  %v94 = vld [vmem:[%s1 + $0x104] sm:$0xf]
  %v95 = vld [vmem:[%s1 + $0x108] sm:$0xf]
  %v96 = vld [vmem:[%s1 + $0x10c] sm:$0xf]
  %v97 = vld [vmem:[%s1 + $0x110] sm:$0xf]
  %v98 = vld [vmem:[%s1 + $0x114] sm:$0xf]
  %v99 = vld [vmem:[%s1 + $0x118] sm:$0xf]
  %v100 = vld [vmem:[%s1 + $0x11c] sm:$0xf]
  %v101 = vld [vmem:[%s1 + $0x120] sm:$0xf]
  %v102 = vld [vmem:[%s1 + $0x124] sm:$0xf]
  %v103 = vld [vmem:[%s1 + $0x128] sm:$0xf]
  %v104 = vld [vmem:[%s1 + $0x12c] sm:$0xf]
  %v105 = vld [vmem:[%s1 + $0x130] sm:$0xf]
  %v106 = vld [vmem:[%s1 + $0x134] sm:$0xf]
  %v107 = vld [vmem:[%s1 + $0x138] sm:$0xf]
  %v108 = vld [vmem:[%s1 + $0x13c] sm:$0xf]
  %v109 = vld [vmem:[%s1 + $0x140] sm:$0xf]
  %v110 = vld [vmem:[%s1 + $0x144] sm:$0xf]
  %v111 = vld [vmem:[%s1 + $0x148] sm:$0xf]
  %v112 = vld [vmem:[%s1 + $0x14c] sm:$0xf]
  %v113 = vld [vmem:[%s1 + $0x150] sm:$0xf]
  %v114 = vld [vmem:[%s1 + $0x154] sm:$0xf]
  %v115 = vld [vmem:[%s1 + $0x158] sm:$0xf]
  %v116 = vld [vmem:[%s1 + $0x15c] sm:$0xf]
  %v117 = vld [vmem:[%s1 + $0x160] sm:$0xf]
  %v118 = vld [vmem:[%s1 + $0x164] sm:$0xf]
  %v119 = vld [vmem:[%s1 + $0x168] sm:$0xf]
  %v120 = vld [vmem:[%s1 + $0x16c] sm:$0xf]
  %v121 = vld [vmem:[%s1 + $0x170] sm:$0xf]
  %v122 = vld [vmem:[%s1 + $0x174] sm:$0xf]
  %v123 = vld [vmem:[%s1 + $0x178] sm:$0xf]
  %v124 = vld [vmem:[%s1 + $0x17c] sm:$0xf]
  %v125 = vld [vmem:[%s1 + $0x180] sm:$0xf]
  %v126 = vld [vmem:[%s1 + $0x184] sm:$0xf]
  %v127 = vld [vmem:[%s1 + $0x188] sm:$0xf]
  %v128 = vld [vmem:[%s1 + $0x18c] sm:$0xf]
  %v129 = vld [vmem:[%s1 + $0x190] sm:$0xf]
  %v130 = vld [vmem:[%s1 + $0x194] sm:$0xf]
  %v131 = vld [vmem:[%s1 + $0x198] sm:$0xf]
  %v132 = vld [vmem:[%s1 + $0x19c] sm:$0xf]
  %v133 = vld [vmem:[%s1 + $0x1a0] sm:$0xf]
  %v134 = vld [vmem:[%s1 + $0x1a4] sm:$0xf]
  %v135 = vld [vmem:[%s1 + $0x1a8] sm:$0xf]
  %v136 = vld [vmem:[%s1 + $0x1ac] sm:$0xf]
  %v137 = vld [vmem:[%s1 + $0x1b0] sm:$0xf]
  %v138 = vld [vmem:[%s1 + $0x1b4] sm:$0xf]
  %v139 = vld [vmem:[%s1 + $0x1b8] sm:$0xf]
  %v140 = vld [vmem:[%s1 + $0x1bc] sm:$0xf]
  %v141 = vld [vmem:[%s1 + $0x1c0] sm:$0xf]
  %v142 = vld [vmem:[%s1 + $0x1c4] sm:$0xf]
  %v143 = vld [vmem:[%s1 + $0x1c8] sm:$0xf]
  %v144 = vld [vmem:[%s1 + $0x1cc] sm:$0xf]
  %v145 = vld [vmem:[%s1 + $0x1d0] sm:$0xf]
  %v146 = vld [vmem:[%s1 + $0x1d4] sm:$0xf]
  %v147 = vld [vmem:[%s1 + $0x1d8] sm:$0xf]
  %v148 = vld [vmem:[%s1 + $0x1dc] sm:$0xf]
  %v149 = vld [vmem:[%s1 + $0x1e0] sm:$0xf]
  %v150 = vld [vmem:[%s1 + $0x1e4] sm:$0xf]
  %v151 = vld [vmem:[%s1 + $0x1e8] sm:$0xf]
  %v152 = vld [vmem:[%s1 + $0x1ec] sm:$0xf]
  %v153 = vld [vmem:[%s1 + $0x1f0] sm:$0xf]
  %v154 = vld [vmem:[%s1 + $0x1f4] sm:$0xf]
  %v155 = vld [vmem:[%s1 + $0x1f8] sm:$0xf]
  %v156 = vld [vmem:[%s1 + $0x1fc] sm:$0xf]
  %v157 = vld [vmem:[%s1 + $0x200] sm:$0xf]
  %v158 = vld [vmem:[%s1 + $0x204] sm:$0xf]
  %v159 = vld [vmem:[%s1 + $0x208] sm:$0xf]
  %v160 = vld [vmem:[%s1 + $0x20c] sm:$0xf]
  %v161 = vld [vmem:[%s1 + $0x210] sm:$0xf]
  %v162 = vld [vmem:[%s1 + $0x214] sm:$0xf]
  %v163 = vld [vmem:[%s1 + $0x218] sm:$0xf]
  %v164 = vld [vmem:[%s1 + $0x21c] sm:$0xf]
  %v165 = vld [vmem:[%s1 + $0x220] sm:$0xf]
  %v166 = vld [vmem:[%s1 + $0x224] sm:$0xf]
  %v167 = vld [vmem:[%s1 + $0x228] sm:$0xf]
  %v168 = vld [vmem:[%s1 + $0x22c] sm:$0xf]
  %v169 = vld [vmem:[%s1 + $0x230] sm:$0xf]
  %v170 = vld [vmem:[%s1 + $0x234] sm:$0xf]
  %v171 = vld [vmem:[%s1 + $0x238] sm:$0xf]
  %v172 = vld [vmem:[%s1 + $0x23c] sm:$0xf]
  %v178 = vunpack.c.l.b16 %v24
  %v179 = vunpack.c.h.b16 %v24
  %v180 = vunpack.c.l.b16 %v25
  %v181 = vunpack.c.h.b16 %v25
  %v182 = vunpack.c.l.b16 %v26
  %v183 = vunpack.c.h.b16 %v26
  %v184 = vunpack.c.l.b16 %v27
  %v185 = vunpack.c.h.b16 %v27
  %v186 = vunpack.c.l.b16 %v28
  %v187 = vpack.c.b16 %v178, %v178
  %v188 = vpack.c.b16 %v179, %v179
  %v189 = vpack.c.b16 %v180, %v180
  %v190 = vpack.c.b16 %v181, %v181
  %v191 = vpack.c.b16 %v182, %v182
  %v192 = vpack.c.b16 %v183, %v183
  %v193 = vpack.c.b16 %v184, %v184
  %v194 = vpack.c.b16 %v185, %v185
  %v195 = vpack.c.b16 %v186, %v186
  %v349 = vunpack.c.l.b16 %v29
  %v350 = vunpack.c.l.b16 %v30
  %v351 = vunpack.c.l.b16 %v31
  %v352 = vunpack.c.l.b16 %v32
  %v353 = vunpack.c.l.b16 %v33
  %v354 = vunpack.c.l.b16 %v34
  %v355 = vunpack.c.l.b16 %v35
  %v356 = vunpack.c.l.b16 %v36
  %v357 = vunpack.c.l.b16 %v37
  %v358 = vunpack.c.l.b16 %v38
  %v359 = vunpack.c.l.b16 %v39
  %v360 = vunpack.c.l.b16 %v40
  %v361 = vunpack.c.l.b16 %v41
  %v362 = vunpack.c.l.b16 %v42
  %v363 = vunpack.c.l.b16 %v43
  %v364 = vunpack.c.l.b16 %v44
  %v365 = vunpack.c.l.b16 %v45
  %v366 = vunpack.c.l.b16 %v46
  %v367 = vunpack.c.l.b16 %v47
  %v368 = vunpack.c.l.b16 %v48
  %v369 = vunpack.c.l.b16 %v49
  %v370 = vunpack.c.l.b16 %v50
  %v371 = vunpack.c.l.b16 %v51
  %v372 = vunpack.c.l.b16 %v52
  %v373 = vunpack.c.l.b16 %v53
  %v374 = vunpack.c.l.b16 %v54
  %v375 = vunpack.c.l.b16 %v55
  %v376 = vunpack.c.l.b16 %v56
  %v377 = vunpack.c.l.b16 %v57
  %v378 = vunpack.c.l.b16 %v58
  %v379 = vunpack.c.l.b16 %v59
  %v380 = vunpack.c.l.b16 %v60
  %v381 = vunpack.c.l.b16 %v61
  %v382 = vunpack.c.l.b16 %v62
  %v383 = vunpack.c.l.b16 %v63
  %v384 = vunpack.c.l.b16 %v64
  %v385 = vunpack.c.l.b16 %v65
  %v386 = vunpack.c.l.b16 %v66
  %v387 = vunpack.c.l.b16 %v67
  %v388 = vunpack.c.l.b16 %v68
  %v389 = vunpack.c.l.b16 %v69
  %v390 = vunpack.c.l.b16 %v70
  %v391 = vunpack.c.l.b16 %v71
  %v392 = vunpack.c.l.b16 %v72
  %v393 = vunpack.c.l.b16 %v73
  %v394 = vunpack.c.l.b16 %v74
  %v395 = vunpack.c.l.b16 %v75
  %v396 = vunpack.c.l.b16 %v76
  %v397 = vunpack.c.l.b16 %v77
  %v398 = vunpack.c.l.b16 %v78
  %v399 = vunpack.c.l.b16 %v79
  %v400 = vunpack.c.l.b16 %v80
  %v401 = vunpack.c.l.b16 %v81
  %v402 = vunpack.c.l.b16 %v82
  %v403 = vunpack.c.l.b16 %v83
  %v404 = vunpack.c.l.b16 %v84
  %v405 = vunpack.c.l.b16 %v85
  %v406 = vunpack.c.l.b16 %v86
  %v407 = vunpack.c.l.b16 %v87
  %v408 = vunpack.c.l.b16 %v88
  %v409 = vunpack.c.l.b16 %v89
  %v410 = vunpack.c.l.b16 %v90
  %v411 = vunpack.c.l.b16 %v91
  %v412 = vunpack.c.l.b16 %v92
  %v413 = vunpack.c.l.b16 %v93
  %v414 = vunpack.c.l.b16 %v94
  %v415 = vunpack.c.l.b16 %v95
  %v416 = vunpack.c.l.b16 %v96
  %v417 = vunpack.c.l.b16 %v97
  %v418 = vunpack.c.l.b16 %v98
  %v419 = vunpack.c.l.b16 %v99
  %v420 = vunpack.c.l.b16 %v100
  %v421 = vunpack.c.l.b16 %v101
  %v422 = vunpack.c.l.b16 %v102
  %v423 = vunpack.c.l.b16 %v103
  %v424 = vunpack.c.l.b16 %v104
  %v425 = vunpack.c.l.b16 %v105
  %v426 = vunpack.c.l.b16 %v106
  %v427 = vunpack.c.l.b16 %v107
  %v428 = vunpack.c.l.b16 %v108
  %v429 = vunpack.c.l.b16 %v109
  %v430 = vunpack.c.l.b16 %v110
  %v431 = vunpack.c.l.b16 %v111
  %v432 = vunpack.c.l.b16 %v112
  %v433 = vunpack.c.l.b16 %v113
  %v434 = vunpack.c.l.b16 %v114
  %v435 = vunpack.c.l.b16 %v115
  %v436 = vunpack.c.l.b16 %v116
  %v437 = vunpack.c.l.b16 %v117
  %v438 = vunpack.c.l.b16 %v118
  %v439 = vunpack.c.l.b16 %v119
  %v440 = vunpack.c.l.b16 %v120
  %v441 = vunpack.c.l.b16 %v121
  %v442 = vunpack.c.l.b16 %v122
  %v443 = vunpack.c.l.b16 %v123
  %v444 = vunpack.c.l.b16 %v124
  %v445 = vunpack.c.l.b16 %v125
  %v446 = vunpack.c.l.b16 %v126
  %v447 = vunpack.c.l.b16 %v127
  %v448 = vunpack.c.l.b16 %v128
  %v449 = vunpack.c.l.b16 %v129
  %v450 = vunpack.c.l.b16 %v130
  %v451 = vunpack.c.l.b16 %v131
  %v452 = vunpack.c.l.b16 %v132
  %v453 = vunpack.c.l.b16 %v133
  %v454 = vunpack.c.l.b16 %v134
  %v455 = vunpack.c.l.b16 %v135
  %v456 = vunpack.c.l.b16 %v136
  %v457 = vunpack.c.l.b16 %v137
  %v458 = vunpack.c.l.b16 %v138
  %v459 = vunpack.c.l.b16 %v139
  %v460 = vunpack.c.l.b16 %v140
  %v461 = vunpack.c.l.b16 %v141
  %v462 = vunpack.c.l.b16 %v142
  %v463 = vunpack.c.l.b16 %v143
  %v464 = vunpack.c.l.b16 %v144
  %v465 = vunpack.c.l.b16 %v145
  %v466 = vunpack.c.l.b16 %v146
  %v467 = vunpack.c.l.b16 %v147
  %v468 = vunpack.c.l.b16 %v148
  %v469 = vunpack.c.l.b16 %v149
  %v470 = vunpack.c.l.b16 %v150
  %v471 = vunpack.c.l.b16 %v151
  %v472 = vunpack.c.l.b16 %v152
  %v473 = vunpack.c.l.b16 %v153
  %v474 = vunpack.c.l.b16 %v154
  %v475 = vunpack.c.l.b16 %v155
  %v476 = vunpack.c.l.b16 %v156
  %v477 = vunpack.c.l.b16 %v157
  %v478 = vunpack.c.l.b16 %v158
  %v479 = vunpack.c.l.b16 %v159
  %v480 = vunpack.c.l.b16 %v160
  %v481 = vunpack.c.l.b16 %v161
  %v482 = vunpack.c.l.b16 %v162
  %v483 = vunpack.c.l.b16 %v163
  %v484 = vunpack.c.l.b16 %v164
  %v485 = vunpack.c.l.b16 %v165
  %v486 = vunpack.c.l.b16 %v166
  %v487 = vunpack.c.l.b16 %v167
  %v488 = vunpack.c.l.b16 %v168
  %v489 = vunpack.c.l.b16 %v169
  %v490 = vunpack.c.l.b16 %v170
  %v491 = vunpack.c.l.b16 %v171
  %v492 = vunpack.c.l.b16 %v172
  %v493 = vpack.c.b16 %v350, %v349
  %v494 = vpack.c.b16 %v352, %v351
  %v495 = vpack.c.b16 %v354, %v353
  %v496 = vpack.c.b16 %v356, %v355
  %v497 = vpack.c.b16 %v358, %v357
  %v498 = vpack.c.b16 %v360, %v359
  %v499 = vpack.c.b16 %v362, %v361
  %v500 = vpack.c.b16 %v364, %v363
  %v501 = vpack.c.b16 %v366, %v365
  %v502 = vpack.c.b16 %v368, %v367
  %v503 = vpack.c.b16 %v370, %v369
  %v504 = vpack.c.b16 %v372, %v371
  %v505 = vpack.c.b16 %v374, %v373
  %v506 = vpack.c.b16 %v376, %v375
  %v507 = vpack.c.b16 %v378, %v377
  %v508 = vpack.c.b16 %v380, %v379
  %v509 = vpack.c.b16 %v382, %v381
  %v510 = vpack.c.b16 %v384, %v383
  %v511 = vpack.c.b16 %v386, %v385
  %v512 = vpack.c.b16 %v388, %v387
  %v513 = vpack.c.b16 %v390, %v389
  %v514 = vpack.c.b16 %v392, %v391
  %v515 = vpack.c.b16 %v394, %v393
  %v516 = vpack.c.b16 %v396, %v395
  %v517 = vpack.c.b16 %v398, %v397
  %v518 = vpack.c.b16 %v400, %v399
  %v519 = vpack.c.b16 %v402, %v401
  %v520 = vpack.c.b16 %v404, %v403
  %v521 = vpack.c.b16 %v406, %v405
  %v522 = vpack.c.b16 %v408, %v407
  %v523 = vpack.c.b16 %v410, %v409
  %v524 = vpack.c.b16 %v412, %v411
  %v525 = vpack.c.b16 %v414, %v413
  %v526 = vpack.c.b16 %v416, %v415
  %v527 = vpack.c.b16 %v418, %v417
  %v528 = vpack.c.b16 %v420, %v419
  %v529 = vpack.c.b16 %v422, %v421
  %v530 = vpack.c.b16 %v424, %v423
  %v531 = vpack.c.b16 %v426, %v425
  %v532 = vpack.c.b16 %v428, %v427
  %v533 = vpack.c.b16 %v430, %v429
  %v534 = vpack.c.b16 %v432, %v431
  %v535 = vpack.c.b16 %v434, %v433
  %v536 = vpack.c.b16 %v436, %v435
  %v537 = vpack.c.b16 %v438, %v437
  %v538 = vpack.c.b16 %v440, %v439
  %v539 = vpack.c.b16 %v442, %v441
  %v540 = vpack.c.b16 %v444, %v443
  %v541 = vpack.c.b16 %v446, %v445
  %v542 = vpack.c.b16 %v448, %v447
  %v543 = vpack.c.b16 %v450, %v449
  %v544 = vpack.c.b16 %v452, %v451
  %v545 = vpack.c.b16 %v454, %v453
  %v546 = vpack.c.b16 %v456, %v455
  %v547 = vpack.c.b16 %v458, %v457
  %v548 = vpack.c.b16 %v460, %v459
  %v549 = vpack.c.b16 %v462, %v461
  %v550 = vpack.c.b16 %v464, %v463
  %v551 = vpack.c.b16 %v466, %v465
  %v552 = vpack.c.b16 %v468, %v467
  %v553 = vpack.c.b16 %v470, %v469
  %v554 = vpack.c.b16 %v472, %v471
  %v555 = vpack.c.b16 %v474, %v473
  %v556 = vpack.c.b16 %v476, %v475
  %v557 = vpack.c.b16 %v478, %v477
  %v558 = vpack.c.b16 %v480, %v479
  %v559 = vpack.c.b16 %v482, %v481
  %v560 = vpack.c.b16 %v484, %v483
  %v561 = vpack.c.b16 %v486, %v485
  %v562 = vpack.c.b16 %v488, %v487
  %v563 = vpack.c.b16 %v490, %v489
  %v564 = vpack.c.b16 %v492, %v491
  %637 = vmatprep.subr.bf16.mxu0 0
  %638 = vmatpush1.bf16.msra.mxu0 %v493
  %639 = vmatprep.subr.bf16.mxu0 0
  %640 = vmatpush1.bf16.msra.mxu0 %v494
  %641 = vmatprep.subr.bf16.mxu0 0
  %642 = vmatpush1.bf16.msra.mxu0 %v495
  %643 = vmatprep.subr.bf16.mxu0 0
  %644 = vmatpush1.bf16.msra.mxu0 %v496
  %645 = vmatprep.subr.bf16.mxu0 0
  %646 = vmatpush1.bf16.msra.mxu0 %v497
  %647 = vmatprep.subr.bf16.mxu0 0
  %648 = vmatpush1.bf16.msra.mxu0 %v498
  %649 = vmatprep.subr.bf16.mxu0 0
  %650 = vmatpush1.bf16.msra.mxu0 %v499
  %651 = vmatprep.subr.bf16.mxu0 0
  %652 = vmatpush1.bf16.msra.mxu0 %v500
  %653 = vmatprep.subr.bf16.mxu0 0
  %654 = vmatpush1.bf16.msra.mxu0 %v501
  %655 = vmatprep.subr.bf16.mxu0 0
  %656 = vmatpush1.bf16.msra.mxu0 %v502
  %657 = vmatprep.subr.bf16.mxu0 0
  %658 = vmatpush1.bf16.msra.mxu0 %v503
  %659 = vmatprep.subr.bf16.mxu0 0
  %660 = vmatpush1.bf16.msra.mxu0 %v504
  %661 = vmatprep.subr.bf16.mxu0 0
  %662 = vmatpush1.bf16.msra.mxu0 %v505
  %663 = vmatprep.subr.bf16.mxu0 0
  %664 = vmatpush1.bf16.msra.mxu0 %v506
  %665 = vmatprep.subr.bf16.mxu0 0
  %666 = vmatpush1.bf16.msra.mxu0 %v507
  %667 = vmatprep.subr.bf16.mxu0 0
  %668 = vmatpush1.bf16.msra.mxu0 %v508
  %669 = vmatprep.mubr.bf16.mxu0 %v188
  %670 = vmatmul.mubr.bf16.gmra.mrb[0].mxu0 %v187
  %v671 = vpop.f32.mrb[0].mxu0
  %v672 = vadd.f32 0.0, %v671
  %v673 = vpop.f32.mrb[0].mxu0
  %v674 = vpop.f32.mrb[0].mxu0
  %v675 = vpop.f32.mrb[0].mxu0
  %676 = vdwg.mxu0
  %677 = vmatprep.subr.bf16.mxu0 0
  %678 = vmatpush1.bf16.msra.mxu0 %v509
  %679 = vmatprep.subr.bf16.mxu0 0
  %680 = vmatpush1.bf16.msra.mxu0 %v510
  %681 = vmatprep.subr.bf16.mxu0 0
  %682 = vmatpush1.bf16.msra.mxu0 %v511
  %683 = vmatprep.subr.bf16.mxu0 0
  %684 = vmatpush1.bf16.msra.mxu0 %v512
  %685 = vmatprep.subr.bf16.mxu0 0
  %686 = vmatpush1.bf16.msra.mxu0 %v513
  %687 = vmatprep.subr.bf16.mxu0 0
  %688 = vmatpush1.bf16.msra.mxu0 %v514
  %689 = vmatprep.subr.bf16.mxu0 0
  %690 = vmatpush1.bf16.msra.mxu0 %v515
  %691 = vmatprep.subr.bf16.mxu0 0
  %692 = vmatpush1.bf16.msra.mxu0 %v516
  %693 = vmatprep.subr.bf16.mxu0 0
  %694 = vmatpush1.bf16.msra.mxu0 %v517
  %695 = vmatprep.subr.bf16.mxu0 0
  %696 = vmatpush1.bf16.msra.mxu0 %v518
  %697 = vmatprep.subr.bf16.mxu0 0
  %698 = vmatpush1.bf16.msra.mxu0 %v519
  %699 = vmatprep.subr.bf16.mxu0 0
  %700 = vmatpush1.bf16.msra.mxu0 %v520
  %701 = vmatprep.subr.bf16.mxu0 0
  %702 = vmatpush1.bf16.msra.mxu0 %v521
  %703 = vmatprep.subr.bf16.mxu0 0
  %704 = vmatpush1.bf16.msra.mxu0 %v522
  %705 = vmatprep.subr.bf16.mxu0 0
  %706 = vmatpush1.bf16.msra.mxu0 %v523
  %707 = vmatprep.subr.bf16.mxu0 0
  %708 = vmatpush1.bf16.msra.mxu0 %v524
  %709 = vmatprep.mubr.bf16.mxu0 %v190
  %710 = vmatmul.mubr.bf16.gmra.mrb[0].mxu0 %v189
  %v711 = vpop.f32.mrb[0].mxu0
  %v712 = vadd.f32 %v672, %v711
  %v713 = vpop.f32.mrb[0].mxu0
  %v714 = vpop.f32.mrb[0].mxu0
  %v715 = vpop.f32.mrb[0].mxu0
  %716 = vdwg.mxu0
  %717 = vmatprep.subr.bf16.mxu0 0
  %718 = vmatpush1.bf16.msra.mxu0 %v525
  %719 = vmatprep.subr.bf16.mxu0 0
  %720 = vmatpush1.bf16.msra.mxu0 %v526
  %721 = vmatprep.subr.bf16.mxu0 0
  %722 = vmatpush1.bf16.msra.mxu0 %v527
  %723 = vmatprep.subr.bf16.mxu0 0
  %724 = vmatpush1.bf16.msra.mxu0 %v528
  %725 = vmatprep.subr.bf16.mxu0 0
  %726 = vmatpush1.bf16.msra.mxu0 %v529
  %727 = vmatprep.subr.bf16.mxu0 0
  %728 = vmatpush1.bf16.msra.mxu0 %v530
  %729 = vmatprep.subr.bf16.mxu0 0
  %730 = vmatpush1.bf16.msra.mxu0 %v531
  %731 = vmatprep.subr.bf16.mxu0 0
  %732 = vmatpush1.bf16.msra.mxu0 %v532
  %733 = vmatprep.subr.bf16.mxu0 0
  %734 = vmatpush1.bf16.msra.mxu0 %v533
  %735 = vmatprep.subr.bf16.mxu0 0
  %736 = vmatpush1.bf16.msra.mxu0 %v534
  %737 = vmatprep.subr.bf16.mxu0 0
  %738 = vmatpush1.bf16.msra.mxu0 %v535
  %739 = vmatprep.subr.bf16.mxu0 0
  %740 = vmatpush1.bf16.msra.mxu0 %v536
  %741 = vmatprep.subr.bf16.mxu0 0
  %742 = vmatpush1.bf16.msra.mxu0 %v537
  %743 = vmatprep.subr.bf16.mxu0 0
  %744 = vmatpush1.bf16.msra.mxu0 %v538
  %745 = vmatprep.subr.bf16.mxu0 0
  %746 = vmatpush1.bf16.msra.mxu0 %v539
  %747 = vmatprep.subr.bf16.mxu0 0
  %748 = vmatpush1.bf16.msra.mxu0 %v540
  %749 = vmatprep.mubr.bf16.mxu0 %v192
  %750 = vmatmul.mubr.bf16.gmra.mrb[0].mxu0 %v191
  %v751 = vpop.f32.mrb[0].mxu0
  %v752 = vadd.f32 %v712, %v751
  %v753 = vpop.f32.mrb[0].mxu0
  %v754 = vpop.f32.mrb[0].mxu0
  %v755 = vpop.f32.mrb[0].mxu0
  %756 = vdwg.mxu0
  %757 = vmatprep.subr.bf16.mxu0 0
  %758 = vmatpush1.bf16.msra.mxu0 %v541
  %759 = vmatprep.subr.bf16.mxu0 0
  %760 = vmatpush1.bf16.msra.mxu0 %v542
  %761 = vmatprep.subr.bf16.mxu0 0
  %762 = vmatpush1.bf16.msra.mxu0 %v543
  %763 = vmatprep.subr.bf16.mxu0 0
  %764 = vmatpush1.bf16.msra.mxu0 %v544
  %765 = vmatprep.subr.bf16.mxu0 0
  %766 = vmatpush1.bf16.msra.mxu0 %v545
  %767 = vmatprep.subr.bf16.mxu0 0
  %768 = vmatpush1.bf16.msra.mxu0 %v546
  %769 = vmatprep.subr.bf16.mxu0 0
  %770 = vmatpush1.bf16.msra.mxu0 %v547
  %771 = vmatprep.subr.bf16.mxu0 0
  %772 = vmatpush1.bf16.msra.mxu0 %v548
  %773 = vmatprep.subr.bf16.mxu0 0
  %774 = vmatpush1.bf16.msra.mxu0 %v549
  %775 = vmatprep.subr.bf16.mxu0 0
  %776 = vmatpush1.bf16.msra.mxu0 %v550
  %777 = vmatprep.subr.bf16.mxu0 0
  %778 = vmatpush1.bf16.msra.mxu0 %v551
  %779 = vmatprep.subr.bf16.mxu0 0
  %780 = vmatpush1.bf16.msra.mxu0 %v552
  %781 = vmatprep.subr.bf16.mxu0 0
  %782 = vmatpush1.bf16.msra.mxu0 %v553
  %783 = vmatprep.subr.bf16.mxu0 0
  %784 = vmatpush1.bf16.msra.mxu0 %v554
  %785 = vmatprep.subr.bf16.mxu0 0
  %786 = vmatpush1.bf16.msra.mxu0 %v555
  %787 = vmatprep.subr.bf16.mxu0 0
  %788 = vmatpush1.bf16.msra.mxu0 %v556
  %789 = vmatprep.mubr.bf16.mxu0 %v194
  %790 = vmatmul.mubr.bf16.gmra.mrb[0].mxu0 %v193
  %v791 = vpop.f32.mrb[0].mxu0
  %v792 = vadd.f32 %v752, %v791
  %v793 = vpop.f32.mrb[0].mxu0
  %v794 = vpop.f32.mrb[0].mxu0
  %v795 = vpop.f32.mrb[0].mxu0
  %796 = vdwg.mxu0
  %797 = vmatprep.subr.bf16.mxu0 0
  %798 = vmatpush1.bf16.msra.mxu0 %v557
  %799 = vmatprep.subr.bf16.mxu0 0
  %800 = vmatpush1.bf16.msra.mxu0 %v558
  %801 = vmatprep.subr.bf16.mxu0 0
  %802 = vmatpush1.bf16.msra.mxu0 %v559
  %803 = vmatprep.subr.bf16.mxu0 0
  %804 = vmatpush1.bf16.msra.mxu0 %v560
  %805 = vmatprep.subr.bf16.mxu0 0
  %806 = vmatpush1.bf16.msra.mxu0 %v561
  %807 = vmatprep.subr.bf16.mxu0 0
  %808 = vmatpush1.bf16.msra.mxu0 %v562
  %809 = vmatprep.subr.bf16.mxu0 0
  %810 = vmatpush1.bf16.msra.mxu0 %v563
  %811 = vmatprep.subr.bf16.mxu0 0
  %812 = vmatpush1.bf16.msra.mxu0 %v564
  %813 = vmatprep.subr.bf16.mxu0 0
  %814 = vmatpush1.bf16.msra.mxu0 0
  %815 = vmatprep.subr.bf16.mxu0 0
  %816 = vmatpush1.bf16.msra.mxu0 0
  %817 = vmatprep.subr.bf16.mxu0 0
  %818 = vmatpush1.bf16.msra.mxu0 0
  %819 = vmatprep.subr.bf16.mxu0 0
  %820 = vmatpush1.bf16.msra.mxu0 0
  %821 = vmatprep.subr.bf16.mxu0 0
  %822 = vmatpush1.bf16.msra.mxu0 0
  %823 = vmatprep.subr.bf16.mxu0 0
  %824 = vmatpush1.bf16.msra.mxu0 0
  %825 = vmatprep.subr.bf16.mxu0 0
  %826 = vmatpush1.bf16.msra.mxu0 0
  %827 = vmatprep.subr.bf16.mxu0 0
  %828 = vmatpush1.bf16.msra.mxu0 0
  %829 = vmatprep.mubr.bf16.mxu0 0
  %830 = vmatmul.mubr.bf16.gmra.mrb[0].mxu0 %v195
  %v831 = vpop.f32.mrb[0].mxu0
  %v832 = vadd.f32 %v792, %v831
  %v833 = vpop.f32.mrb[0].mxu0
  %v834 = vpop.f32.mrb[0].mxu0
  %v835 = vpop.f32.mrb[0].mxu0
  %836 = vdwg.mxu0
  %v837 = vld [vmem:[%s2] sm:$0x1]
  %v838 = vlaneseq
  %v839 = vshrl.u32 %v838, 7
  %v840 = vsub.s32 0, %v839
  %v841 = vrot.slane %v837, %v840
  %v842 = vmul.f32 %v832, %v841
  %v843 = vld [vmem:[%s2 + $0x1] sm:$0x1]
  %v844 = vlaneseq
  %v845 = vshrl.u32 %v844, 7
  %v846 = vsub.s32 0, %v845
  %v847 = vrot.slane %v843, %v846
  %v848 = vadd.f32 %v842, %v847
  %v849 = vmax.f32 %v848, 0.0
  %v850 = vpack.c.bf16 %v849, %v849
  %v851 = vld [vmem:[%s3] sm:$0xff]
  %v852 = vld [vmem:[%s3 + $0x8] sm:$0xff]
  %v853 = vld [vmem:[%s3 + $0x10] sm:$0xff]
  %v854 = vld [vmem:[%s3 + $0x18] sm:$0xff]
  %v855 = vld [vmem:[%s3 + $0x20] sm:$0xff]
  %v856 = vld [vmem:[%s3 + $0x28] sm:$0xff]
  %v857 = vld [vmem:[%s3 + $0x30] sm:$0xff]
  %v858 = vld [vmem:[%s3 + $0x38] sm:$0xff]
  %v859 = vld [vmem:[%s3 + $0x40] sm:$0xff]
  %v860 = vld [vmem:[%s3 + $0x48] sm:$0xff]
  %v861 = vld [vmem:[%s3 + $0x50] sm:$0xff]
  %v862 = vld [vmem:[%s3 + $0x58] sm:$0xff]
  %v863 = vld [vmem:[%s3 + $0x60] sm:$0xff]
  %v864 = vld [vmem:[%s3 + $0x68] sm:$0xff]
  %v865 = vld [vmem:[%s3 + $0x70] sm:$0xff]
  %v866 = vld [vmem:[%s3 + $0x78] sm:$0xff]
  %v883 = vunpack.c.l.b16 %v851
  %v884 = vunpack.c.h.b16 %v851
  %v885 = vunpack.c.l.b16 %v852
  %v886 = vunpack.c.h.b16 %v852
  %v887 = vunpack.c.l.b16 %v853
  %v888 = vunpack.c.h.b16 %v853
  %v889 = vunpack.c.l.b16 %v854
  %v890 = vunpack.c.h.b16 %v854
  %v891 = vunpack.c.l.b16 %v855
  %v892 = vunpack.c.h.b16 %v855
  %v893 = vunpack.c.l.b16 %v856
  %v894 = vunpack.c.h.b16 %v856
  %v895 = vunpack.c.l.b16 %v857
  %v896 = vunpack.c.h.b16 %v857
  %v897 = vunpack.c.l.b16 %v858
  %v898 = vunpack.c.h.b16 %v858
  %v899 = vunpack.c.l.b16 %v859
  %v900 = vunpack.c.h.b16 %v859
  %v901 = vunpack.c.l.b16 %v860
  %v902 = vunpack.c.h.b16 %v860
  %v903 = vunpack.c.l.b16 %v861
  %v904 = vunpack.c.h.b16 %v861
  %v905 = vunpack.c.l.b16 %v862
  %v906 = vunpack.c.h.b16 %v862
  %v907 = vunpack.c.l.b16 %v863
  %v908 = vunpack.c.h.b16 %v863
  %v909 = vunpack.c.l.b16 %v864
  %v910 = vunpack.c.h.b16 %v864
  %v911 = vunpack.c.l.b16 %v865
  %v912 = vunpack.c.h.b16 %v865
  %v913 = vunpack.c.l.b16 %v866
  %v914 = vunpack.c.h.b16 %v866
  %v915 = vpack.c.b16 %v885, %v883
  %v916 = vpack.c.b16 %v886, %v884
  %v917 = vpack.c.b16 %v889, %v887
  %v918 = vpack.c.b16 %v890, %v888
  %v919 = vpack.c.b16 %v893, %v891
  %v920 = vpack.c.b16 %v894, %v892
  %v921 = vpack.c.b16 %v897, %v895
  %v922 = vpack.c.b16 %v898, %v896
  %v923 = vpack.c.b16 %v901, %v899
  %v924 = vpack.c.b16 %v902, %v900
  %v925 = vpack.c.b16 %v905, %v903
  %v926 = vpack.c.b16 %v906, %v904
  %v927 = vpack.c.b16 %v909, %v907
  %v928 = vpack.c.b16 %v910, %v908
  %v929 = vpack.c.b16 %v913, %v911
  %v930 = vpack.c.b16 %v914, %v912
  %947 = vmatprep.subr.bf16.mxu0 %v916
  %948 = vmatpush1.bf16.msra.mxu0 %v915
  %949 = vmatprep.subr.bf16.mxu0 %v918
  %950 = vmatpush1.bf16.msra.mxu0 %v917
  %951 = vmatprep.subr.bf16.mxu0 %v920
  %952 = vmatpush1.bf16.msra.mxu0 %v919
  %953 = vmatprep.subr.bf16.mxu0 %v922
  %954 = vmatpush1.bf16.msra.mxu0 %v921
  %955 = vmatprep.subr.bf16.mxu0 %v924
  %956 = vmatpush1.bf16.msra.mxu0 %v923
  %957 = vmatprep.subr.bf16.mxu0 %v926
  %958 = vmatpush1.bf16.msra.mxu0 %v925
  %959 = vmatprep.subr.bf16.mxu0 %v928
  %960 = vmatpush1.bf16.msra.mxu0 %v927
  %961 = vmatprep.subr.bf16.mxu0 %v930
  %962 = vmatpush1.bf16.msra.mxu0 %v929
  %963 = vmatprep.subr.bf16.mxu0 0
  %964 = vmatpush1.bf16.msra.mxu0 0
  %965 = vmatprep.subr.bf16.mxu0 0
  %966 = vmatpush1.bf16.msra.mxu0 0
  %967 = vmatprep.subr.bf16.mxu0 0
  %968 = vmatpush1.bf16.msra.mxu0 0
  %969 = vmatprep.subr.bf16.mxu0 0
  %970 = vmatpush1.bf16.msra.mxu0 0
  %971 = vmatprep.subr.bf16.mxu0 0
  %972 = vmatpush1.bf16.msra.mxu0 0
  %973 = vmatprep.subr.bf16.mxu0 0
  %974 = vmatpush1.bf16.msra.mxu0 0
  %975 = vmatprep.subr.bf16.mxu0 0
  %976 = vmatpush1.bf16.msra.mxu0 0
  %977 = vmatprep.subr.bf16.mxu0 0
  %978 = vmatpush1.bf16.msra.mxu0 0
  %979 = vmatprep.mubr.bf16.mxu0 0
  %980 = vmatmul.mubr.bf16.gmra.mrb[0].mxu0 %v850
  %v981 = vpop.f32.mrb[0].mxu0
  %v982 = vadd.f32 0.0, %v981
  %v983 = vpop.f32.mrb[0].mxu0
  %v984 = vadd.f32 0.0, %v983
  %v985 = vpop.f32.mrb[0].mxu0
  %v986 = vpop.f32.mrb[0].mxu0
  %987 = vdwg.mxu0
  %v988 = vld [vmem:[%s4] ss:$2 sm:$0x3]
  %v990 = vlaneseq
  %v991 = vshrl.u32 %v990, 7
  %v992 = vsub.s32 0, %v991
  %v993 = vrot.slane %v988, %v992
  %v994 = vlaneseq
  %v995 = vshrl.u32 %v994, 7
  %v996 = vsub.s32 1, %v995
  %v997 = vrot.slane %v988, %v996
  %v1000 = vmul.f32 %v982, %v993
  %v1001 = vmul.f32 %v984, %v997
  %s1002 = scalar_lea.vmem %s4, 1
  %v1003 = vld [vmem:[%s1002] ss:$2 sm:$0x3]
  %v1005 = vlaneseq
  %v1006 = vshrl.u32 %v1005, 7
  %v1007 = vsub.s32 0, %v1006
  %v1008 = vrot.slane %v1003, %v1007
  %v1009 = vlaneseq
  %v1010 = vshrl.u32 %v1009, 7
  %v1011 = vsub.s32 1, %v1010
  %v1012 = vrot.slane %v1003, %v1011
  %v1015 = vadd.f32 %v1000, %v1008
  %v1016 = vadd.f32 %v1001, %v1012
  %v1017 = vld [vmem:[%s5] sm:$0xff]
  %v1018 = vunpack.c.l.bf16 %v1017
  %v1019 = vunpack.c.h.bf16 %v1017
  %v1020 = vadd.f32 %v1015, %v1018
  %v1021 = vadd.f32 %v1016, %v1019
  %v1022 = vmax.f32 %v1020, 0.0
  %v1023 = vmax.f32 %v1021, 0.0
  %v1024 = vpack.c.bf16 %v1022, %v1022
  %v1025 = vpack.c.bf16 %v1023, %v1023
  %v1028 = vunpack.c.l.b16 %v1024
  %v1029 = vunpack.c.l.b16 %v1025
  %v1030 = vpack.c.b16 %v1029, %v1028
  %1032 = vst [vmem:[%s6] sm:$0xff] %v1030
  // Predicated region
  $region26: #{resnetfc_forward.70} parent=0 // pred_check
    _
  $region27: #{resnetfc_forward.70} parent=0 // pred_check_branch
    %1034 = sbr.rel (0) target = $region29
  $region28: #{resnetfc_forward.70} parent=0 // pred_region
    _
  $region29: #{resnetfc_forward.70} parent=0 // pred_fallthru
    _
  // Predicated region
  $region30: #{resnetfc_forward.70} parent=0 // pred_check
    _
  $region31: #{resnetfc_forward.70} parent=0 // pred_check_branch
    %1036 = sbr.rel (0) target = $region33
  $region32: #{resnetfc_forward.70} parent=0 // pred_region
    _
  $region33: #{resnetfc_forward.70} parent=0 // pred_fallthru
    _

// kernel: resnetfc_forward.75
$region0: #{resnetfc_forward.75}
  #allocation0 [shape = 'u32[]', space=smem, size = 0x4, offset = 0x4, fixed_abs, tag = 'smem constant byte address 0x4 - core index']
  #allocation1 [shape = 'u32[144,128]{1,0:T(1,128)}', space=vmem, size = 0x12000, scoped, tag = 'internal scratch']
  %s0 = inlined_call_operand.vmem [shape: bf16[2,256], index: 0, kind: input, shape index: {}]
  %s1 = inlined_call_operand.vmem [shape: bf16[256,1024], index: 1, kind: input, shape index: {}]
  %s2 = inlined_call_operand.vmem [shape: f32[2,1024], index: 2, kind: input, shape index: {}]
  %s3 = inlined_call_operand.hbm [shape: f32[2,1024], index: 3, kind: output, shape index: {}]
  %s4 = sld [smem:[#allocation0]]
  $region22: #{resnetfc_forward.75} parent=0
    _
  %s6 = ssub.s32 1, %s4
  %s7 = scalar_select 0, %s6, %s4
  $region1: #{resnetfc_forward.75} parent=0
    #allocation2 [shape = 'u8[8192]{0}', space=vmem, size = 0x2000, scoped, tag = 'output window, operand 0, single buffered']
    #allocation3 [shape = 's32[1]{0}', space=sflag, size = 0x4, scoped, tag = 'scoped memory for resnetfc_forward.75']
    %8 = vsyncpa [#allocation3], 0
    // Predicated region
    $region2: #{resnetfc_forward.75} parent=1 // pred_check
      _
    $region3: #{resnetfc_forward.75} parent=1 // pred_check_branch
      %10 = sbr.rel (0) target = $region5
    $region4: #{resnetfc_forward.75} parent=1 // pred_region
      _
    $region5: #{resnetfc_forward.75} parent=1 // pred_fallthru
      _
    // Predicated region
    $region6: #{resnetfc_forward.75} parent=1 // pred_check
      _
    $region7: #{resnetfc_forward.75} parent=1 // pred_check_branch
      %12 = sbr.rel (0) target = $region9
    $region8: #{resnetfc_forward.75} parent=1 // pred_region
      _
    $region9: #{resnetfc_forward.75} parent=1 // pred_fallthru
      _
    // Predicated region
    $region10: #{resnetfc_forward.75} parent=1 // pred_check
      _
    $region11: #{resnetfc_forward.75} parent=1 // pred_check_branch
      %14 = sbr.rel (0) target = $region13
    $region12: #{resnetfc_forward.75} parent=1 // pred_region
      _
    $region13: #{resnetfc_forward.75} parent=1 // pred_fallthru
      _
    %v15 = vld [vmem:[%s0] sm:$0x3]
    %v16 = vld [vmem:[%s1] sm:$0xff]
    %v17 = vld [vmem:[%s1 + $0x8] sm:$0xff]
    %v18 = vld [vmem:[%s1 + $0x10] sm:$0xff]
    %v19 = vld [vmem:[%s1 + $0x18] sm:$0xff]
    %v20 = vld [vmem:[%s1 + $0x20] sm:$0xff]
    %v21 = vld [vmem:[%s1 + $0x28] sm:$0xff]
    %v22 = vld [vmem:[%s1 + $0x30] sm:$0xff]
    %v23 = vld [vmem:[%s1 + $0x38] sm:$0xff]
    %v24 = vld [vmem:[%s1 + $0x40] sm:$0xff]
    %v25 = vld [vmem:[%s1 + $0x48] sm:$0xff]
    %v26 = vld [vmem:[%s1 + $0x50] sm:$0xff]
    %v27 = vld [vmem:[%s1 + $0x58] sm:$0xff]
    %v28 = vld [vmem:[%s1 + $0x60] sm:$0xff]
    %v29 = vld [vmem:[%s1 + $0x68] sm:$0xff]
    %v30 = vld [vmem:[%s1 + $0x70] sm:$0xff]
    %v31 = vld [vmem:[%s1 + $0x78] sm:$0xff]
    %v32 = vld [vmem:[%s1 + $0x80] sm:$0xff]
    %v33 = vld [vmem:[%s1 + $0x88] sm:$0xff]
    %v34 = vld [vmem:[%s1 + $0x90] sm:$0xff]
    %v35 = vld [vmem:[%s1 + $0x98] sm:$0xff]
    %v36 = vld [vmem:[%s1 + $0xa0] sm:$0xff]
    %v37 = vld [vmem:[%s1 + $0xa8] sm:$0xff]
    %v38 = vld [vmem:[%s1 + $0xb0] sm:$0xff]
    %v39 = vld [vmem:[%s1 + $0xb8] sm:$0xff]
    %v40 = vld [vmem:[%s1 + $0xc0] sm:$0xff]
    %v41 = vld [vmem:[%s1 + $0xc8] sm:$0xff]
    %v42 = vld [vmem:[%s1 + $0xd0] sm:$0xff]
    %v43 = vld [vmem:[%s1 + $0xd8] sm:$0xff]
    %v44 = vld [vmem:[%s1 + $0xe0] sm:$0xff]
    %v45 = vld [vmem:[%s1 + $0xe8] sm:$0xff]
    %v46 = vld [vmem:[%s1 + $0xf0] sm:$0xff]
    %v47 = vld [vmem:[%s1 + $0xf8] sm:$0xff]
    %v48 = vld [vmem:[%s1 + $0x100] sm:$0xff]
    %v49 = vld [vmem:[%s1 + $0x108] sm:$0xff]
    %v50 = vld [vmem:[%s1 + $0x110] sm:$0xff]
    %v51 = vld [vmem:[%s1 + $0x118] sm:$0xff]
    %v52 = vld [vmem:[%s1 + $0x120] sm:$0xff]
    %v53 = vld [vmem:[%s1 + $0x128] sm:$0xff]
    %v54 = vld [vmem:[%s1 + $0x130] sm:$0xff]
    %v55 = vld [vmem:[%s1 + $0x138] sm:$0xff]
    %v56 = vld [vmem:[%s1 + $0x140] sm:$0xff]
    %v57 = vld [vmem:[%s1 + $0x148] sm:$0xff]
    %v58 = vld [vmem:[%s1 + $0x150] sm:$0xff]
    %v59 = vld [vmem:[%s1 + $0x158] sm:$0xff]
    %v60 = vld [vmem:[%s1 + $0x160] sm:$0xff]
    %v61 = vld [vmem:[%s1 + $0x168] sm:$0xff]
    %v62 = vld [vmem:[%s1 + $0x170] sm:$0xff]
    %v63 = vld [vmem:[%s1 + $0x178] sm:$0xff]
    %v64 = vld [vmem:[%s1 + $0x180] sm:$0xff]
    %v65 = vld [vmem:[%s1 + $0x188] sm:$0xff]
    %v66 = vld [vmem:[%s1 + $0x190] sm:$0xff]
    %v67 = vld [vmem:[%s1 + $0x198] sm:$0xff]
    %v68 = vld [vmem:[%s1 + $0x1a0] sm:$0xff]
    %v69 = vld [vmem:[%s1 + $0x1a8] sm:$0xff]
    %v70 = vld [vmem:[%s1 + $0x1b0] sm:$0xff]
    %v71 = vld [vmem:[%s1 + $0x1b8] sm:$0xff]
    %v72 = vld [vmem:[%s1 + $0x1c0] sm:$0xff]
    %v73 = vld [vmem:[%s1 + $0x1c8] sm:$0xff]
    %v74 = vld [vmem:[%s1 + $0x1d0] sm:$0xff]
    %v75 = vld [vmem:[%s1 + $0x1d8] sm:$0xff]
    %v76 = vld [vmem:[%s1 + $0x1e0] sm:$0xff]
    %v77 = vld [vmem:[%s1 + $0x1e8] sm:$0xff]
    %v78 = vld [vmem:[%s1 + $0x1f0] sm:$0xff]
    %v79 = vld [vmem:[%s1 + $0x1f8] sm:$0xff]
    %v80 = vld [vmem:[%s1 + $0x200] sm:$0xff]
    %v81 = vld [vmem:[%s1 + $0x208] sm:$0xff]
    %v82 = vld [vmem:[%s1 + $0x210] sm:$0xff]
    %v83 = vld [vmem:[%s1 + $0x218] sm:$0xff]
    %v84 = vld [vmem:[%s1 + $0x220] sm:$0xff]
    %v85 = vld [vmem:[%s1 + $0x228] sm:$0xff]
    %v86 = vld [vmem:[%s1 + $0x230] sm:$0xff]
    %v87 = vld [vmem:[%s1 + $0x238] sm:$0xff]
    %v88 = vld [vmem:[%s1 + $0x240] sm:$0xff]
    %v89 = vld [vmem:[%s1 + $0x248] sm:$0xff]
    %v90 = vld [vmem:[%s1 + $0x250] sm:$0xff]
    %v91 = vld [vmem:[%s1 + $0x258] sm:$0xff]
    %v92 = vld [vmem:[%s1 + $0x260] sm:$0xff]
    %v93 = vld [vmem:[%s1 + $0x268] sm:$0xff]
    %v94 = vld [vmem:[%s1 + $0x270] sm:$0xff]
    %v95 = vld [vmem:[%s1 + $0x278] sm:$0xff]
    %v96 = vld [vmem:[%s1 + $0x280] sm:$0xff]
    %v97 = vld [vmem:[%s1 + $0x288] sm:$0xff]
    %v98 = vld [vmem:[%s1 + $0x290] sm:$0xff]
    %v99 = vld [vmem:[%s1 + $0x298] sm:$0xff]
    %v100 = vld [vmem:[%s1 + $0x2a0] sm:$0xff]
    %v101 = vld [vmem:[%s1 + $0x2a8] sm:$0xff]
    %v102 = vld [vmem:[%s1 + $0x2b0] sm:$0xff]
    %v103 = vld [vmem:[%s1 + $0x2b8] sm:$0xff]
    %v104 = vld [vmem:[%s1 + $0x2c0] sm:$0xff]
    %v105 = vld [vmem:[%s1 + $0x2c8] sm:$0xff]
    %v106 = vld [vmem:[%s1 + $0x2d0] sm:$0xff]
    %v107 = vld [vmem:[%s1 + $0x2d8] sm:$0xff]
    %v108 = vld [vmem:[%s1 + $0x2e0] sm:$0xff]
    %v109 = vld [vmem:[%s1 + $0x2e8] sm:$0xff]
    %v110 = vld [vmem:[%s1 + $0x2f0] sm:$0xff]
    %v111 = vld [vmem:[%s1 + $0x2f8] sm:$0xff]
    %v112 = vld [vmem:[%s1 + $0x300] sm:$0xff]
    %v113 = vld [vmem:[%s1 + $0x308] sm:$0xff]
    %v114 = vld [vmem:[%s1 + $0x310] sm:$0xff]
    %v115 = vld [vmem:[%s1 + $0x318] sm:$0xff]
    %v116 = vld [vmem:[%s1 + $0x320] sm:$0xff]
    %v117 = vld [vmem:[%s1 + $0x328] sm:$0xff]
    %v118 = vld [vmem:[%s1 + $0x330] sm:$0xff]
    %v119 = vld [vmem:[%s1 + $0x338] sm:$0xff]
    %v120 = vld [vmem:[%s1 + $0x340] sm:$0xff]
    %v121 = vld [vmem:[%s1 + $0x348] sm:$0xff]
    %v122 = vld [vmem:[%s1 + $0x350] sm:$0xff]
    %v123 = vld [vmem:[%s1 + $0x358] sm:$0xff]
    %v124 = vld [vmem:[%s1 + $0x360] sm:$0xff]
    %v125 = vld [vmem:[%s1 + $0x368] sm:$0xff]
    %v126 = vld [vmem:[%s1 + $0x370] sm:$0xff]
    %v127 = vld [vmem:[%s1 + $0x378] sm:$0xff]
    %v128 = vld [vmem:[%s1 + $0x380] sm:$0xff]
    %v129 = vld [vmem:[%s1 + $0x388] sm:$0xff]
    %v130 = vld [vmem:[%s1 + $0x390] sm:$0xff]
    %v131 = vld [vmem:[%s1 + $0x398] sm:$0xff]
    %v132 = vld [vmem:[%s1 + $0x3a0] sm:$0xff]
    %v133 = vld [vmem:[%s1 + $0x3a8] sm:$0xff]
    %v134 = vld [vmem:[%s1 + $0x3b0] sm:$0xff]
    %v135 = vld [vmem:[%s1 + $0x3b8] sm:$0xff]
    %v136 = vld [vmem:[%s1 + $0x3c0] sm:$0xff]
    %v137 = vld [vmem:[%s1 + $0x3c8] sm:$0xff]
    %v138 = vld [vmem:[%s1 + $0x3d0] sm:$0xff]
    %v139 = vld [vmem:[%s1 + $0x3d8] sm:$0xff]
    %v140 = vld [vmem:[%s1 + $0x3e0] sm:$0xff]
    %v141 = vld [vmem:[%s1 + $0x3e8] sm:$0xff]
    %v142 = vld [vmem:[%s1 + $0x3f0] sm:$0xff]
    %v143 = vld [vmem:[%s1 + $0x3f8] sm:$0xff]
    %v146 = vunpack.c.l.s4 1966171168
    %v147 = vunpack.c.0.s8 %v146
    %v148 = vlaneseq
    %v149 = vshrl.u32 %v148, 7
    %v150 = vsub.s32 %v147, %v149
    %v151 = vrot.slane %v15, %v150
    %v152 = vcombine.high %v151, %v151
    %v154 = vunpack.c.l.s4 1966171168
    %v155 = vunpack.c.0.s8 %v154
    %v156 = vlaneseq
    %v157 = vshrl.u32 %v156, 7
    %v158 = vsub.s32 %v155, %v157
    %v159 = vrot.slane %v151, %v158
    %v161 = vunpack.c.l.s4 1966171168
    %v162 = vunpack.c.0.s8 %v161
    %v163 = vlaneseq
    %v164 = vshrl.u32 %v163, 7
    %v165 = vsub.s32 %v162, %v164
    %v166 = vrot.slane %v152, %v165
    %v297 = vunpack.c.l.b16 %v16
    %v298 = vunpack.c.h.b16 %v16
    %v299 = vunpack.c.l.b16 %v17
    %v300 = vunpack.c.h.b16 %v17
    %v301 = vunpack.c.l.b16 %v18
    %v302 = vunpack.c.h.b16 %v18
    %v303 = vunpack.c.l.b16 %v19
    %v304 = vunpack.c.h.b16 %v19
    %v305 = vunpack.c.l.b16 %v20
    %v306 = vunpack.c.h.b16 %v20
    %v307 = vunpack.c.l.b16 %v21
    %v308 = vunpack.c.h.b16 %v21
    %v309 = vunpack.c.l.b16 %v22
    %v310 = vunpack.c.h.b16 %v22
    %v311 = vunpack.c.l.b16 %v23
    %v312 = vunpack.c.h.b16 %v23
    %v313 = vunpack.c.l.b16 %v24
    %v314 = vunpack.c.h.b16 %v24
    %v315 = vunpack.c.l.b16 %v25
    %v316 = vunpack.c.h.b16 %v25
    %v317 = vunpack.c.l.b16 %v26
    %v318 = vunpack.c.h.b16 %v26
    %v319 = vunpack.c.l.b16 %v27
    %v320 = vunpack.c.h.b16 %v27
    %v321 = vunpack.c.l.b16 %v28
    %v322 = vunpack.c.h.b16 %v28
    %v323 = vunpack.c.l.b16 %v29
    %v324 = vunpack.c.h.b16 %v29
    %v325 = vunpack.c.l.b16 %v30
    %v326 = vunpack.c.h.b16 %v30
    %v327 = vunpack.c.l.b16 %v31
    %v328 = vunpack.c.h.b16 %v31
    %v329 = vunpack.c.l.b16 %v32
    %v330 = vunpack.c.h.b16 %v32
    %v331 = vunpack.c.l.b16 %v33
    %v332 = vunpack.c.h.b16 %v33
    %v333 = vunpack.c.l.b16 %v34
    %v334 = vunpack.c.h.b16 %v34
    %v335 = vunpack.c.l.b16 %v35
    %v336 = vunpack.c.h.b16 %v35
    %v337 = vunpack.c.l.b16 %v36
    %v338 = vunpack.c.h.b16 %v36
    %v339 = vunpack.c.l.b16 %v37
    %v340 = vunpack.c.h.b16 %v37
    %v341 = vunpack.c.l.b16 %v38
    %v342 = vunpack.c.h.b16 %v38
    %v343 = vunpack.c.l.b16 %v39
    %v344 = vunpack.c.h.b16 %v39
    %v345 = vunpack.c.l.b16 %v40
    %v346 = vunpack.c.h.b16 %v40
    %v347 = vunpack.c.l.b16 %v41
    %v348 = vunpack.c.h.b16 %v41
    %v349 = vunpack.c.l.b16 %v42
    %v350 = vunpack.c.h.b16 %v42
    %v351 = vunpack.c.l.b16 %v43
    %v352 = vunpack.c.h.b16 %v43
    %v353 = vunpack.c.l.b16 %v44
    %v354 = vunpack.c.h.b16 %v44
    %v355 = vunpack.c.l.b16 %v45
    %v356 = vunpack.c.h.b16 %v45
    %v357 = vunpack.c.l.b16 %v46
    %v358 = vunpack.c.h.b16 %v46
    %v359 = vunpack.c.l.b16 %v47
    %v360 = vunpack.c.h.b16 %v47
    %v361 = vunpack.c.l.b16 %v48
    %v362 = vunpack.c.h.b16 %v48
    %v363 = vunpack.c.l.b16 %v49
    %v364 = vunpack.c.h.b16 %v49
    %v365 = vunpack.c.l.b16 %v50
    %v366 = vunpack.c.h.b16 %v50
    %v367 = vunpack.c.l.b16 %v51
    %v368 = vunpack.c.h.b16 %v51
    %v369 = vunpack.c.l.b16 %v52
    %v370 = vunpack.c.h.b16 %v52
    %v371 = vunpack.c.l.b16 %v53
    %v372 = vunpack.c.h.b16 %v53
    %v373 = vunpack.c.l.b16 %v54
    %v374 = vunpack.c.h.b16 %v54
    %v375 = vunpack.c.l.b16 %v55
    %v376 = vunpack.c.h.b16 %v55
    %v377 = vunpack.c.l.b16 %v56
    %v378 = vunpack.c.h.b16 %v56
    %v379 = vunpack.c.l.b16 %v57
    %v380 = vunpack.c.h.b16 %v57
    %v381 = vunpack.c.l.b16 %v58
    %v382 = vunpack.c.h.b16 %v58
    %v383 = vunpack.c.l.b16 %v59
    %v384 = vunpack.c.h.b16 %v59
    %v385 = vunpack.c.l.b16 %v60
    %v386 = vunpack.c.h.b16 %v60
    %v387 = vunpack.c.l.b16 %v61
    %v388 = vunpack.c.h.b16 %v61
    %v389 = vunpack.c.l.b16 %v62
    %v390 = vunpack.c.h.b16 %v62
    %v391 = vunpack.c.l.b16 %v63
    %v392 = vunpack.c.h.b16 %v63
    %v393 = vunpack.c.l.b16 %v64
    %v394 = vunpack.c.h.b16 %v64
    %v395 = vunpack.c.l.b16 %v65
    %v396 = vunpack.c.h.b16 %v65
    %v397 = vunpack.c.l.b16 %v66
    %v398 = vunpack.c.h.b16 %v66
    %v399 = vunpack.c.l.b16 %v67
    %v400 = vunpack.c.h.b16 %v67
    %v401 = vunpack.c.l.b16 %v68
    %v402 = vunpack.c.h.b16 %v68
    %v403 = vunpack.c.l.b16 %v69
    %v404 = vunpack.c.h.b16 %v69
    %v405 = vunpack.c.l.b16 %v70
    %v406 = vunpack.c.h.b16 %v70
    %v407 = vunpack.c.l.b16 %v71
    %v408 = vunpack.c.h.b16 %v71
    %v409 = vunpack.c.l.b16 %v72
    %v410 = vunpack.c.h.b16 %v72
    %v411 = vunpack.c.l.b16 %v73
    %v412 = vunpack.c.h.b16 %v73
    %v413 = vunpack.c.l.b16 %v74
    %v414 = vunpack.c.h.b16 %v74
    %v415 = vunpack.c.l.b16 %v75
    %v416 = vunpack.c.h.b16 %v75
    %v417 = vunpack.c.l.b16 %v76
    %v418 = vunpack.c.h.b16 %v76
    %v419 = vunpack.c.l.b16 %v77
    %v420 = vunpack.c.h.b16 %v77
    %v421 = vunpack.c.l.b16 %v78
    %v422 = vunpack.c.h.b16 %v78
    %v423 = vunpack.c.l.b16 %v79
    %v424 = vunpack.c.h.b16 %v79
    %v425 = vunpack.c.l.b16 %v80
    %v426 = vunpack.c.h.b16 %v80
    %v427 = vunpack.c.l.b16 %v81
    %v428 = vunpack.c.h.b16 %v81
    %v429 = vunpack.c.l.b16 %v82
    %v430 = vunpack.c.h.b16 %v82
    %v431 = vunpack.c.l.b16 %v83
    %v432 = vunpack.c.h.b16 %v83
    %v433 = vunpack.c.l.b16 %v84
    %v434 = vunpack.c.h.b16 %v84
    %v435 = vunpack.c.l.b16 %v85
    %v436 = vunpack.c.h.b16 %v85
    %v437 = vunpack.c.l.b16 %v86
    %v438 = vunpack.c.h.b16 %v86
    %v439 = vunpack.c.l.b16 %v87
    %v440 = vunpack.c.h.b16 %v87
    %v441 = vunpack.c.l.b16 %v88
    %v442 = vunpack.c.h.b16 %v88
    %v443 = vunpack.c.l.b16 %v89
    %v444 = vunpack.c.h.b16 %v89
    %v445 = vunpack.c.l.b16 %v90
    %v446 = vunpack.c.h.b16 %v90
    %v447 = vunpack.c.l.b16 %v91
    %v448 = vunpack.c.h.b16 %v91
    %v449 = vunpack.c.l.b16 %v92
    %v450 = vunpack.c.h.b16 %v92
    %v451 = vunpack.c.l.b16 %v93
    %v452 = vunpack.c.h.b16 %v93
    %v453 = vunpack.c.l.b16 %v94
    %v454 = vunpack.c.h.b16 %v94
    %v455 = vunpack.c.l.b16 %v95
    %v456 = vunpack.c.h.b16 %v95
    %v457 = vunpack.c.l.b16 %v96
    %v458 = vunpack.c.h.b16 %v96
    %v459 = vunpack.c.l.b16 %v97
    %v460 = vunpack.c.h.b16 %v97
    %v461 = vunpack.c.l.b16 %v98
    %v462 = vunpack.c.h.b16 %v98
    %v463 = vunpack.c.l.b16 %v99
    %v464 = vunpack.c.h.b16 %v99
    %v465 = vunpack.c.l.b16 %v100
    %v466 = vunpack.c.h.b16 %v100
    %v467 = vunpack.c.l.b16 %v101
    %v468 = vunpack.c.h.b16 %v101
    %v469 = vunpack.c.l.b16 %v102
    %v470 = vunpack.c.h.b16 %v102
    %v471 = vunpack.c.l.b16 %v103
    %v472 = vunpack.c.h.b16 %v103
    %v473 = vunpack.c.l.b16 %v104
    %v474 = vunpack.c.h.b16 %v104
    %v475 = vunpack.c.l.b16 %v105
    %v476 = vunpack.c.h.b16 %v105
    %v477 = vunpack.c.l.b16 %v106
    %v478 = vunpack.c.h.b16 %v106
    %v479 = vunpack.c.l.b16 %v107
    %v480 = vunpack.c.h.b16 %v107
    %v481 = vunpack.c.l.b16 %v108
    %v482 = vunpack.c.h.b16 %v108
    %v483 = vunpack.c.l.b16 %v109
    %v484 = vunpack.c.h.b16 %v109
    %v485 = vunpack.c.l.b16 %v110
    %v486 = vunpack.c.h.b16 %v110
    %v487 = vunpack.c.l.b16 %v111
    %v488 = vunpack.c.h.b16 %v111
    %v489 = vunpack.c.l.b16 %v112
    %v490 = vunpack.c.h.b16 %v112
    %v491 = vunpack.c.l.b16 %v113
    %v492 = vunpack.c.h.b16 %v113
    %v493 = vunpack.c.l.b16 %v114
    %v494 = vunpack.c.h.b16 %v114
    %v495 = vunpack.c.l.b16 %v115
    %v496 = vunpack.c.h.b16 %v115
    %v497 = vunpack.c.l.b16 %v116
    %v498 = vunpack.c.h.b16 %v116
    %v499 = vunpack.c.l.b16 %v117
    %v500 = vunpack.c.h.b16 %v117
    %v501 = vunpack.c.l.b16 %v118
    %v502 = vunpack.c.h.b16 %v118
    %v503 = vunpack.c.l.b16 %v119
    %v504 = vunpack.c.h.b16 %v119
    %v505 = vunpack.c.l.b16 %v120
    %v506 = vunpack.c.h.b16 %v120
    %v507 = vunpack.c.l.b16 %v121
    %v508 = vunpack.c.h.b16 %v121
    %v509 = vunpack.c.l.b16 %v122
    %v510 = vunpack.c.h.b16 %v122
    %v511 = vunpack.c.l.b16 %v123
    %v512 = vunpack.c.h.b16 %v123
    %v513 = vunpack.c.l.b16 %v124
    %v514 = vunpack.c.h.b16 %v124
    %v515 = vunpack.c.l.b16 %v125
    %v516 = vunpack.c.h.b16 %v125
    %v517 = vunpack.c.l.b16 %v126
    %v518 = vunpack.c.h.b16 %v126
    %v519 = vunpack.c.l.b16 %v127
    %v520 = vunpack.c.h.b16 %v127
    %v521 = vunpack.c.l.b16 %v128
    %v522 = vunpack.c.h.b16 %v128
    %v523 = vunpack.c.l.b16 %v129
    %v524 = vunpack.c.h.b16 %v129
    %v525 = vunpack.c.l.b16 %v130
    %v526 = vunpack.c.h.b16 %v130
    %v527 = vunpack.c.l.b16 %v131
    %v528 = vunpack.c.h.b16 %v131
    %v529 = vunpack.c.l.b16 %v132
    %v530 = vunpack.c.h.b16 %v132
    %v531 = vunpack.c.l.b16 %v133
    %v532 = vunpack.c.h.b16 %v133
    %v533 = vunpack.c.l.b16 %v134
    %v534 = vunpack.c.h.b16 %v134
    %v535 = vunpack.c.l.b16 %v135
    %v536 = vunpack.c.h.b16 %v135
    %v537 = vunpack.c.l.b16 %v136
    %v538 = vunpack.c.h.b16 %v136
    %v539 = vunpack.c.l.b16 %v137
    %v540 = vunpack.c.h.b16 %v137
    %v541 = vunpack.c.l.b16 %v138
    %v542 = vunpack.c.h.b16 %v138
    %v543 = vunpack.c.l.b16 %v139
    %v544 = vunpack.c.h.b16 %v139
    %v545 = vunpack.c.l.b16 %v140
    %v546 = vunpack.c.h.b16 %v140
    %v547 = vunpack.c.l.b16 %v141
    %v548 = vunpack.c.h.b16 %v141
    %v549 = vunpack.c.l.b16 %v142
    %v550 = vunpack.c.h.b16 %v142
    %v551 = vunpack.c.l.b16 %v143
    %v552 = vunpack.c.h.b16 %v143
    %v553 = vpack.c.b16 %v305, %v297
    %v554 = vpack.c.b16 %v306, %v298
    %v555 = vpack.c.b16 %v307, %v299
    %v556 = vpack.c.b16 %v308, %v300
    %v557 = vpack.c.b16 %v309, %v301
    %v558 = vpack.c.b16 %v310, %v302
    %v559 = vpack.c.b16 %v311, %v303
    %v560 = vpack.c.b16 %v312, %v304
    %v561 = vpack.c.b16 %v321, %v313
    %v562 = vpack.c.b16 %v322, %v314
    %v563 = vpack.c.b16 %v323, %v315
    %v564 = vpack.c.b16 %v324, %v316
    %v565 = vpack.c.b16 %v325, %v317
    %v566 = vpack.c.b16 %v326, %v318
    %v567 = vpack.c.b16 %v327, %v319
    %v568 = vpack.c.b16 %v328, %v320
    %v569 = vpack.c.b16 %v337, %v329
    %v570 = vpack.c.b16 %v338, %v330
    %v571 = vpack.c.b16 %v339, %v331
    %v572 = vpack.c.b16 %v340, %v332
    %v573 = vpack.c.b16 %v341, %v333
    %v574 = vpack.c.b16 %v342, %v334
    %v575 = vpack.c.b16 %v343, %v335
    %v576 = vpack.c.b16 %v344, %v336
    %v577 = vpack.c.b16 %v353, %v345
    %v578 = vpack.c.b16 %v354, %v346
    %v579 = vpack.c.b16 %v355, %v347
    %v580 = vpack.c.b16 %v356, %v348
    %v581 = vpack.c.b16 %v357, %v349
    %v582 = vpack.c.b16 %v358, %v350
    %v583 = vpack.c.b16 %v359, %v351
    %v584 = vpack.c.b16 %v360, %v352
    %v585 = vpack.c.b16 %v369, %v361
    %v586 = vpack.c.b16 %v370, %v362
    %v587 = vpack.c.b16 %v371, %v363
    %v588 = vpack.c.b16 %v372, %v364
    %v589 = vpack.c.b16 %v373, %v365
    %v590 = vpack.c.b16 %v374, %v366
    %v591 = vpack.c.b16 %v375, %v367
    %v592 = vpack.c.b16 %v376, %v368
    %v593 = vpack.c.b16 %v385, %v377
    %v594 = vpack.c.b16 %v386, %v378
    %v595 = vpack.c.b16 %v387, %v379
    %v596 = vpack.c.b16 %v388, %v380
    %v597 = vpack.c.b16 %v389, %v381
    %v598 = vpack.c.b16 %v390, %v382
    %v599 = vpack.c.b16 %v391, %v383
    %v600 = vpack.c.b16 %v392, %v384
    %v601 = vpack.c.b16 %v401, %v393
    %v602 = vpack.c.b16 %v402, %v394
    %v603 = vpack.c.b16 %v403, %v395
    %v604 = vpack.c.b16 %v404, %v396
    %v605 = vpack.c.b16 %v405, %v397
    %v606 = vpack.c.b16 %v406, %v398
    %v607 = vpack.c.b16 %v407, %v399
    %v608 = vpack.c.b16 %v408, %v400
    %v609 = vpack.c.b16 %v417, %v409
    %v610 = vpack.c.b16 %v418, %v410
    %v611 = vpack.c.b16 %v419, %v411
    %v612 = vpack.c.b16 %v420, %v412
    %v613 = vpack.c.b16 %v421, %v413
    %v614 = vpack.c.b16 %v422, %v414
    %v615 = vpack.c.b16 %v423, %v415
    %v616 = vpack.c.b16 %v424, %v416
    %v617 = vpack.c.b16 %v433, %v425
    %v618 = vpack.c.b16 %v434, %v426
    %v619 = vpack.c.b16 %v435, %v427
    %v620 = vpack.c.b16 %v436, %v428
    %v621 = vpack.c.b16 %v437, %v429
    %v622 = vpack.c.b16 %v438, %v430
    %v623 = vpack.c.b16 %v439, %v431
    %v624 = vpack.c.b16 %v440, %v432
    %v625 = vpack.c.b16 %v449, %v441
    %v626 = vpack.c.b16 %v450, %v442
    %v627 = vpack.c.b16 %v451, %v443
    %v628 = vpack.c.b16 %v452, %v444
    %v629 = vpack.c.b16 %v453, %v445
    %v630 = vpack.c.b16 %v454, %v446
    %v631 = vpack.c.b16 %v455, %v447
    %v632 = vpack.c.b16 %v456, %v448
    %v633 = vpack.c.b16 %v465, %v457
    %v634 = vpack.c.b16 %v466, %v458
    %v635 = vpack.c.b16 %v467, %v459
    %v636 = vpack.c.b16 %v468, %v460
    %v637 = vpack.c.b16 %v469, %v461
    %v638 = vpack.c.b16 %v470, %v462
    %v639 = vpack.c.b16 %v471, %v463
    %v640 = vpack.c.b16 %v472, %v464
    %v641 = vpack.c.b16 %v481, %v473
    %v642 = vpack.c.b16 %v482, %v474
    %v643 = vpack.c.b16 %v483, %v475
    %v644 = vpack.c.b16 %v484, %v476
    %v645 = vpack.c.b16 %v485, %v477
    %v646 = vpack.c.b16 %v486, %v478
    %v647 = vpack.c.b16 %v487, %v479
    %v648 = vpack.c.b16 %v488, %v480
    %v649 = vpack.c.b16 %v497, %v489
    %v650 = vpack.c.b16 %v498, %v490
    %v651 = vpack.c.b16 %v499, %v491
    %v652 = vpack.c.b16 %v500, %v492
    %v653 = vpack.c.b16 %v501, %v493
    %v654 = vpack.c.b16 %v502, %v494
    %v655 = vpack.c.b16 %v503, %v495
    %v656 = vpack.c.b16 %v504, %v496
    %v657 = vpack.c.b16 %v513, %v505
    %v658 = vpack.c.b16 %v514, %v506
    %v659 = vpack.c.b16 %v515, %v507
    %v660 = vpack.c.b16 %v516, %v508
    %v661 = vpack.c.b16 %v517, %v509
    %v662 = vpack.c.b16 %v518, %v510
    %v663 = vpack.c.b16 %v519, %v511
    %v664 = vpack.c.b16 %v520, %v512
    %v665 = vpack.c.b16 %v529, %v521
    %v666 = vpack.c.b16 %v530, %v522
    %v667 = vpack.c.b16 %v531, %v523
    %v668 = vpack.c.b16 %v532, %v524
    %v669 = vpack.c.b16 %v533, %v525
    %v670 = vpack.c.b16 %v534, %v526
    %v671 = vpack.c.b16 %v535, %v527
    %v672 = vpack.c.b16 %v536, %v528
    %v673 = vpack.c.b16 %v545, %v537
    %v674 = vpack.c.b16 %v546, %v538
    %v675 = vpack.c.b16 %v547, %v539
    %v676 = vpack.c.b16 %v548, %v540
    %v677 = vpack.c.b16 %v549, %v541
    %v678 = vpack.c.b16 %v550, %v542
    %v679 = vpack.c.b16 %v551, %v543
    %v680 = vpack.c.b16 %v552, %v544
    %809 = vmatprep.subr.bf16.mxu0 %v554
    %810 = vmatpush1.bf16.msra.mxu0 %v553
    %811 = vmatprep.subr.bf16.mxu0 %v562
    %812 = vmatpush1.bf16.msra.mxu0 %v561
    %813 = vmatprep.subr.bf16.mxu0 %v570
    %814 = vmatpush1.bf16.msra.mxu0 %v569
    %815 = vmatprep.subr.bf16.mxu0 %v578
    %816 = vmatpush1.bf16.msra.mxu0 %v577
    %817 = vmatprep.subr.bf16.mxu0 %v586
    %818 = vmatpush1.bf16.msra.mxu0 %v585
    %819 = vmatprep.subr.bf16.mxu0 %v594
    %820 = vmatpush1.bf16.msra.mxu0 %v593
    %821 = vmatprep.subr.bf16.mxu0 %v602
    %822 = vmatpush1.bf16.msra.mxu0 %v601
    %823 = vmatprep.subr.bf16.mxu0 %v610
    %824 = vmatpush1.bf16.msra.mxu0 %v609
    %825 = vmatprep.subr.bf16.mxu0 %v618
    %826 = vmatpush1.bf16.msra.mxu0 %v617
    %827 = vmatprep.subr.bf16.mxu0 %v626
    %828 = vmatpush1.bf16.msra.mxu0 %v625
    %829 = vmatprep.subr.bf16.mxu0 %v634
    %830 = vmatpush1.bf16.msra.mxu0 %v633
    %831 = vmatprep.subr.bf16.mxu0 %v642
    %832 = vmatpush1.bf16.msra.mxu0 %v641
    %833 = vmatprep.subr.bf16.mxu0 %v650
    %834 = vmatpush1.bf16.msra.mxu0 %v649
    %835 = vmatprep.subr.bf16.mxu0 %v658
    %836 = vmatpush1.bf16.msra.mxu0 %v657
    %837 = vmatprep.subr.bf16.mxu0 %v666
    %838 = vmatpush1.bf16.msra.mxu0 %v665
    %839 = vmatprep.subr.bf16.mxu0 %v674
    %840 = vmatpush1.bf16.msra.mxu0 %v673
    %841 = vmatprep.mubr.bf16.mxu0 %v166
    %842 = vmatmul.mubr.bf16.gmra.mrb[0].mxu0 %v159
    %v843 = vpop.f32.mrb[0].mxu0
    %v844 = vadd.f32 0.0, %v843
    %v845 = vpop.f32.mrb[0].mxu0
    %v846 = vadd.f32 0.0, %v845
    %v847 = vpop.f32.mrb[0].mxu0
    %v848 = vpop.f32.mrb[0].mxu0
    %849 = vdwg.mxu0
    %850 = vmatprep.subr.bf16.mxu0 %v556
    %851 = vmatpush1.bf16.msra.mxu0 %v555
    %852 = vmatprep.subr.bf16.mxu0 %v564
    %853 = vmatpush1.bf16.msra.mxu0 %v563
    %854 = vmatprep.subr.bf16.mxu0 %v572
    %855 = vmatpush1.bf16.msra.mxu0 %v571
    %856 = vmatprep.subr.bf16.mxu0 %v580
    %857 = vmatpush1.bf16.msra.mxu0 %v579
    %858 = vmatprep.subr.bf16.mxu0 %v588
    %859 = vmatpush1.bf16.msra.mxu0 %v587
    %860 = vmatprep.subr.bf16.mxu0 %v596
    %861 = vmatpush1.bf16.msra.mxu0 %v595
    %862 = vmatprep.subr.bf16.mxu0 %v604
    %863 = vmatpush1.bf16.msra.mxu0 %v603
    %864 = vmatprep.subr.bf16.mxu0 %v612
    %865 = vmatpush1.bf16.msra.mxu0 %v611
    %866 = vmatprep.subr.bf16.mxu0 %v620
    %867 = vmatpush1.bf16.msra.mxu0 %v619
    %868 = vmatprep.subr.bf16.mxu0 %v628
    %869 = vmatpush1.bf16.msra.mxu0 %v627
    %870 = vmatprep.subr.bf16.mxu0 %v636
    %871 = vmatpush1.bf16.msra.mxu0 %v635
    %872 = vmatprep.subr.bf16.mxu0 %v644
    %873 = vmatpush1.bf16.msra.mxu0 %v643
    %874 = vmatprep.subr.bf16.mxu0 %v652
    %875 = vmatpush1.bf16.msra.mxu0 %v651
    %876 = vmatprep.subr.bf16.mxu0 %v660
    %877 = vmatpush1.bf16.msra.mxu0 %v659
    %878 = vmatprep.subr.bf16.mxu0 %v668
    %879 = vmatpush1.bf16.msra.mxu0 %v667
    %880 = vmatprep.subr.bf16.mxu0 %v676
    %881 = vmatpush1.bf16.msra.mxu0 %v675
    %882 = vmatprep.mubr.bf16.mxu0 %v166
    %883 = vmatmul.mubr.bf16.gmra.mrb[0].mxu0 %v159
    %v884 = vpop.f32.mrb[0].mxu0
    %v885 = vadd.f32 0.0, %v884
    %v886 = vpop.f32.mrb[0].mxu0
    %v887 = vadd.f32 0.0, %v886
    %v888 = vpop.f32.mrb[0].mxu0
    %v889 = vpop.f32.mrb[0].mxu0
    %890 = vdwg.mxu0
    %891 = vmatprep.subr.bf16.mxu0 %v558
    %892 = vmatpush1.bf16.msra.mxu0 %v557
    %893 = vmatprep.subr.bf16.mxu0 %v566
    %894 = vmatpush1.bf16.msra.mxu0 %v565
    %895 = vmatprep.subr.bf16.mxu0 %v574
    %896 = vmatpush1.bf16.msra.mxu0 %v573
    %897 = vmatprep.subr.bf16.mxu0 %v582
    %898 = vmatpush1.bf16.msra.mxu0 %v581
    %899 = vmatprep.subr.bf16.mxu0 %v590
    %900 = vmatpush1.bf16.msra.mxu0 %v589
    %901 = vmatprep.subr.bf16.mxu0 %v598
    %902 = vmatpush1.bf16.msra.mxu0 %v597
    %903 = vmatprep.subr.bf16.mxu0 %v606
    %904 = vmatpush1.bf16.msra.mxu0 %v605
    %905 = vmatprep.subr.bf16.mxu0 %v614
    %906 = vmatpush1.bf16.msra.mxu0 %v613
    %907 = vmatprep.subr.bf16.mxu0 %v622
    %908 = vmatpush1.bf16.msra.mxu0 %v621
    %909 = vmatprep.subr.bf16.mxu0 %v630
    %910 = vmatpush1.bf16.msra.mxu0 %v629
    %911 = vmatprep.subr.bf16.mxu0 %v638
    %912 = vmatpush1.bf16.msra.mxu0 %v637
    %913 = vmatprep.subr.bf16.mxu0 %v646
    %914 = vmatpush1.bf16.msra.mxu0 %v645
    %915 = vmatprep.subr.bf16.mxu0 %v654
    %916 = vmatpush1.bf16.msra.mxu0 %v653
    %917 = vmatprep.subr.bf16.mxu0 %v662
    %918 = vmatpush1.bf16.msra.mxu0 %v661
    %919 = vmatprep.subr.bf16.mxu0 %v670
    %920 = vmatpush1.bf16.msra.mxu0 %v669
    %921 = vmatprep.subr.bf16.mxu0 %v678
    %922 = vmatpush1.bf16.msra.mxu0 %v677
    %923 = vmatprep.mubr.bf16.mxu0 %v166
    %924 = vmatmul.mubr.bf16.gmra.mrb[0].mxu0 %v159
    %v925 = vpop.f32.mrb[0].mxu0
    %v926 = vadd.f32 0.0, %v925
    %v927 = vpop.f32.mrb[0].mxu0
    %v928 = vadd.f32 0.0, %v927
    %v929 = vpop.f32.mrb[0].mxu0
    %v930 = vpop.f32.mrb[0].mxu0
    %931 = vdwg.mxu0
    %932 = vmatprep.subr.bf16.mxu0 %v560
    %933 = vmatpush1.bf16.msra.mxu0 %v559
    %934 = vmatprep.subr.bf16.mxu0 %v568
    %935 = vmatpush1.bf16.msra.mxu0 %v567
    %936 = vmatprep.subr.bf16.mxu0 %v576
    %937 = vmatpush1.bf16.msra.mxu0 %v575
    %938 = vmatprep.subr.bf16.mxu0 %v584
    %939 = vmatpush1.bf16.msra.mxu0 %v583
    %940 = vmatprep.subr.bf16.mxu0 %v592
    %941 = vmatpush1.bf16.msra.mxu0 %v591
    %942 = vmatprep.subr.bf16.mxu0 %v600
    %943 = vmatpush1.bf16.msra.mxu0 %v599
    %944 = vmatprep.subr.bf16.mxu0 %v608
    %945 = vmatpush1.bf16.msra.mxu0 %v607
    %946 = vmatprep.subr.bf16.mxu0 %v616
    %947 = vmatpush1.bf16.msra.mxu0 %v615
    %948 = vmatprep.subr.bf16.mxu0 %v624
    %949 = vmatpush1.bf16.msra.mxu0 %v623
    %950 = vmatprep.subr.bf16.mxu0 %v632
    %951 = vmatpush1.bf16.msra.mxu0 %v631
    %952 = vmatprep.subr.bf16.mxu0 %v640
    %953 = vmatpush1.bf16.msra.mxu0 %v639
    %954 = vmatprep.subr.bf16.mxu0 %v648
    %955 = vmatpush1.bf16.msra.mxu0 %v647
    %956 = vmatprep.subr.bf16.mxu0 %v656
    %957 = vmatpush1.bf16.msra.mxu0 %v655
    %958 = vmatprep.subr.bf16.mxu0 %v664
    %959 = vmatpush1.bf16.msra.mxu0 %v663
    %960 = vmatprep.subr.bf16.mxu0 %v672
    %961 = vmatpush1.bf16.msra.mxu0 %v671
    %962 = vmatprep.subr.bf16.mxu0 %v680
    %963 = vmatpush1.bf16.msra.mxu0 %v679
    %964 = vmatprep.mubr.bf16.mxu0 %v166
    %965 = vmatmul.mubr.bf16.gmra.mrb[0].mxu0 %v159
    %v966 = vpop.f32.mrb[0].mxu0
    %v967 = vadd.f32 0.0, %v966
    %v968 = vpop.f32.mrb[0].mxu0
    %v969 = vadd.f32 0.0, %v968
    %v970 = vpop.f32.mrb[0].mxu0
    %v971 = vpop.f32.mrb[0].mxu0
    %972 = vdwg.mxu0
    %v973 = vld [vmem:[%s2] ss:$2 sm:$0xff]
    %v975 = vlaneseq
    %v976 = vshrl.u32 %v975, 7
    %v977 = vsub.s32 0, %v976
    %v978 = vrot.slane %v973, %v977
    %v979 = vlaneseq
    %v980 = vshrl.u32 %v979, 7
    %v981 = vsub.s32 1, %v980
    %v982 = vrot.slane %v973, %v981
    %v983 = vlaneseq
    %v984 = vshrl.u32 %v983, 7
    %v985 = vsub.s32 2, %v984
    %v986 = vrot.slane %v973, %v985
    %v987 = vlaneseq
    %v988 = vshrl.u32 %v987, 7
    %v989 = vsub.s32 3, %v988
    %v990 = vrot.slane %v973, %v989
    %v991 = vlaneseq
    %v992 = vshrl.u32 %v991, 7
    %v993 = vsub.s32 4, %v992
    %v994 = vrot.slane %v973, %v993
    %v995 = vlaneseq
    %v996 = vshrl.u32 %v995, 7
    %v997 = vsub.s32 5, %v996
    %v998 = vrot.slane %v973, %v997
    %v999 = vlaneseq
    %v1000 = vshrl.u32 %v999, 7
    %v1001 = vsub.s32 6, %v1000
    %v1002 = vrot.slane %v973, %v1001
    %v1003 = vlaneseq
    %v1004 = vshrl.u32 %v1003, 7
    %v1005 = vsub.s32 7, %v1004
    %v1006 = vrot.slane %v973, %v1005
    %v1015 = vmul.f32 %v844, %v978
    %v1016 = vmul.f32 %v846, %v982
    %v1017 = vmul.f32 %v885, %v986
    %v1018 = vmul.f32 %v887, %v990
    %v1019 = vmul.f32 %v926, %v994
    %v1020 = vmul.f32 %v928, %v998
    %v1021 = vmul.f32 %v967, %v1002
    %v1022 = vmul.f32 %v969, %v1006
    %s1023 = scalar_lea.vmem %s2, 1
    %v1024 = vld [vmem:[%s1023] ss:$2 sm:$0xff]
    %v1026 = vlaneseq
    %v1027 = vshrl.u32 %v1026, 7
    %v1028 = vsub.s32 0, %v1027
    %v1029 = vrot.slane %v1024, %v1028
    %v1030 = vlaneseq
    %v1031 = vshrl.u32 %v1030, 7
    %v1032 = vsub.s32 1, %v1031
    %v1033 = vrot.slane %v1024, %v1032
    %v1034 = vlaneseq
    %v1035 = vshrl.u32 %v1034, 7
    %v1036 = vsub.s32 2, %v1035
    %v1037 = vrot.slane %v1024, %v1036
    %v1038 = vlaneseq
    %v1039 = vshrl.u32 %v1038, 7
    %v1040 = vsub.s32 3, %v1039
    %v1041 = vrot.slane %v1024, %v1040
    %v1042 = vlaneseq
    %v1043 = vshrl.u32 %v1042, 7
    %v1044 = vsub.s32 4, %v1043
    %v1045 = vrot.slane %v1024, %v1044
    %v1046 = vlaneseq
    %v1047 = vshrl.u32 %v1046, 7
    %v1048 = vsub.s32 5, %v1047
    %v1049 = vrot.slane %v1024, %v1048
    %v1050 = vlaneseq
    %v1051 = vshrl.u32 %v1050, 7
    %v1052 = vsub.s32 6, %v1051
    %v1053 = vrot.slane %v1024, %v1052
    %v1054 = vlaneseq
    %v1055 = vshrl.u32 %v1054, 7
    %v1056 = vsub.s32 7, %v1055
    %v1057 = vrot.slane %v1024, %v1056
    %v1066 = vadd.f32 %v1015, %v1029
    %v1067 = vadd.f32 %v1016, %v1033
    %v1068 = vadd.f32 %v1017, %v1037
    %v1069 = vadd.f32 %v1018, %v1041
    %v1070 = vadd.f32 %v1019, %v1045
    %v1071 = vadd.f32 %v1020, %v1049
    %v1072 = vadd.f32 %v1021, %v1053
    %v1073 = vadd.f32 %v1022, %v1057
    %v1082 = vcombine.low %v1066, %v1067
    %v1083 = vcombine.low %v1068, %v1069
    %v1085 = vunpack.c.l.s4 1983009808
    %v1086 = vunpack.c.0.s8 %v1085
    %v1087 = vlaneseq
    %v1088 = vshrl.u32 %v1087, 7
    %v1089 = vsub.s32 %v1086, %v1088
    %v1090 = vrot.slane %v1082, %v1089
    %v1092 = vunpack.c.l.s4 1983009808
    %v1093 = vunpack.c.0.s8 %v1092
    %v1094 = vlaneseq
    %v1095 = vshrl.u32 %v1094, 7
    %v1096 = vsub.s32 %v1093, %v1095
    %v1097 = vrot.slane %v1083, %v1096
    %v1098 = vcombine.low %v1090, %v1097
    %v1099 = vcombine.low %v1070, %v1071
    %v1100 = vcombine.low %v1072, %v1073
    %v1102 = vunpack.c.l.s4 1983009808
    %v1103 = vunpack.c.0.s8 %v1102
    %v1104 = vlaneseq
    %v1105 = vshrl.u32 %v1104, 7
    %v1106 = vsub.s32 %v1103, %v1105
    %v1107 = vrot.slane %v1099, %v1106
    %v1109 = vunpack.c.l.s4 1983009808
    %v1110 = vunpack.c.0.s8 %v1109
    %v1111 = vlaneseq
    %v1112 = vshrl.u32 %v1111, 7
    %v1113 = vsub.s32 %v1110, %v1112
    %v1114 = vrot.slane %v1100, %v1113
    %v1115 = vcombine.low %v1107, %v1114
    %1118 = vst [vmem:[#allocation2] sm:$0xff] %v1098
    %1119 = vst [vmem:[#allocation2 + $0x8] sm:$0xff] %v1115
    // Predicated region
    $region14: #{resnetfc_forward.75} parent=1 // pred_check
      _
    $region15: #{resnetfc_forward.75} parent=1 // pred_check_branch
      %1121 = sbr.rel (0) target = $region17
    $region16: #{resnetfc_forward.75} parent=1 // pred_region
      %s1123 = ssub.s32 256, 256
      %1124 = vsyncadd [#allocation3], %s1123
      %s1126 = sshll.u32 [#allocation2], 4
      %s1127 = int_to_ptr.vmem [resolvable:$true] %s1126
      %1129 = dma.vmem_to_hbm [thread:$0]  %s1127, 256, %s3, [#allocation3]
    $region17: #{resnetfc_forward.75} parent=1 // pred_fallthru
      _
    // Predicated region
    $region18: #{resnetfc_forward.75} parent=1 // pred_check
      _
    $region19: #{resnetfc_forward.75} parent=1 // pred_check_branch
      %1131 = sbr.rel (0) target = $region21
    $region20: #{resnetfc_forward.75} parent=1 // pred_region
      %1132 = dma.done [#allocation3], 256
    $region21: #{resnetfc_forward.75} parent=1 // pred_fallthru
      _
    %1133 = vsyncpa [#allocation3], 1

</llo_original>
